<compile_context>
chip_gen: v5e
topology: v5e:2x2
jax: 0.10.0
libtpu: 0.0.40
codegen_flags: <defaults>
</compile_context>

<pallas_src>
import functools

import jax
import jax.numpy as jnp
from jax.experimental import pallas as pl
from jax.experimental.pallas import tpu as pltpu


# ----------------------------- Pallas kernels -------------------------------

def fused_conv_kernel(pat0_ref, mask_ref, w_enc_ref, b_enc_ref,
                      w_head_ref, b_head_ref, o_ref, fp_ref, *, W, pad_front):
    """Encoder conv + fused coef/freq head conv for one image; feat stays in VMEM.

    pat0_ref : (1, H*(W+2), 9*Cin) f32   XLA-prepacked im2col of padded input
    mask_ref : (H*(W+2), 1)        f32   1.0 at valid cols x<W, 0.0 at wrap cols
    w_enc    : (9*Cin, ENC) f32,  b_enc : (1, ENC) f32
    w_head   : (9*ENC, 2*HID) bf16, b_head: (1, 2*HID) f32
    o_ref    : (1, H*(W+2), 2*HID) f32   valid at cols x<W of each row
    fp_ref   : (pad_front + (H+3)*(W+2), ENC) f32 scratch: zero-padded feat,
               flat layout; pad_front makes the interior store 8-aligned.
    """
    Wp = W + 2
    HWp = o_ref.shape[1]

    # ---- encoder conv = one matmul on the prepacked taps (f32: the phase path
    #      downstream is precision-sensitive through cos(pi*freq)) ----
    feat = (jnp.dot(pat0_ref[0], w_enc_ref[...],
                    preferred_element_type=jnp.float32) + b_enc_ref[...])
    # zero the flat-layout wrap-around junk columns: they land exactly on the
    # head conv's left/right zero-padding positions of fp below.
    feat = feat * mask_ref[...]

    # ---- zero-padded feat in VMEM (never written to HBM) ----
    fp_ref[...] = jnp.zeros_like(fp_ref)                 # borders / top / bottom
    fp_ref[pl.ds(pad_front + Wp + 1, HWp), :] = feat     # interior at offset (+1,+1)

    # ---- head conv: 9 contiguous sublane slices -> one K=9*ENC matmul ----
    taps = [fp_ref[pl.ds(pad_front + dy * Wp + dx, HWp), :]
            for dy in range(3) for dx in range(3)]
    pat = jnp.concatenate(taps, axis=-1).astype(jnp.bfloat16)
    o_ref[0] = (jnp.dot(pat, w_head_ref[...],
                        preferred_element_type=jnp.float32) + b_head_ref[...])


def gather_mlp_kernel(idx_ref, cell_ref, head_ref,
                      w1h_ref, w1c_ref, b1_ref, w2_ref, b2_ref,
                      w3_ref, b3_ref, o_ref):
    """One-hot MXU gather + freq encoding + 3-layer MLP for one 128-query tile.

    idx_ref : (1, qt, 1) int32  flat row index into head (-1 => out of bounds)
    cell_ref: (1, qt, 1) f32
    head_ref: (1, HWp, 2*hid) f32  fused [coef || phase] conv output (resident)
    o_ref   : (1, 8, qt) f32  lane-dense transposed output (rows >= OUT are pad)
    """
    qt = idx_ref.shape[1]
    hwp = head_ref.shape[1]
    hid = head_ref.shape[2] // 2

    # one-hot gather through the MXU. idx=-1 gives an all-zero row, which
    # reproduces grid_sample zeros padding: coef=0, phase=0 -> coef*cos(0)=0.
    cols = jax.lax.broadcasted_iota(jnp.int32, (qt, hwp), 1)
    onehot = (idx_ref[0] == cols).astype(jnp.float32)          # (qt, HWp)
    g = jnp.dot(onehot, head_ref[0], preferred_element_type=jnp.float32)

    # sin folded into cos at param-prep time (phase already has pi and -pi/2).
    inp = g[:, :hid] * jnp.cos(g[:, hid:])

    h = jnp.maximum(
        jnp.dot(inp, w1h_ref[...], preferred_element_type=jnp.float32)
        + cell_ref[0] * w1c_ref[...]                           # rank-1 cell term
        + b1_ref[...], 0.0)
    h = jnp.maximum(
        jnp.dot(h, w2_ref[...], preferred_element_type=jnp.float32)
        + b2_ref[...], 0.0)
    pred = jnp.dot(h, w3_ref[...], preferred_element_type=jnp.float32) + b3_ref[...]

    # transpose to (8, qt): lane-dense unmasked stores, tanh over 1 vreg only.
    o_ref[0] = (jnp.tanh(pred.T) + 1.0) * 0.5


# ------------------------------- wrappers ------------------------------------

def fused_conv(pat0, colmask, w_enc, b_enc, w_head, b_head, *, H, W):
    """Fused encoder + head conv. Returns (B, H*(W+2), 2*HID) f32; columns
    x>=W of each flat row are junk (never addressed by the query gather)."""
    B, HWp, K0 = pat0.shape
    ENC = w_enc.shape[-1]
    C2 = w_head.shape[-1]
    Wp = W + 2
    pad_front = (-(Wp + 1)) % 8                  # 8-aligned interior store
    fp_rows = pad_front + (H + 3) * Wp
    kern = functools.partial(fused_conv_kernel, W=W, pad_front=pad_front)
    flops = 2 * B * HWp * (K0 * ENC + 9 * ENC * C2)
    bytes_acc = 4 * B * HWp * (K0 + C2) + 4 * K0 * ENC + 2 * 9 * ENC * C2
    # NOTE: raise vmem_limit_bytes toward ~96-110 MiB on v5e/v6e for big images
    # (and row-tile for v7x's 64 MiB); 32 MiB is ample at this scale.
    return pl.pallas_call(
        kern,
        out_shape=jax.ShapeDtypeStruct((B, HWp, C2), jnp.float32),
        grid=(B,),
        in_specs=[
            pl.BlockSpec((1, HWp, K0), lambda b: (b, 0, 0)),
            pl.BlockSpec((HWp, 1), lambda b: (0, 0)),
            pl.BlockSpec(w_enc.shape, lambda b: (0, 0)),
            pl.BlockSpec(b_enc.shape, lambda b: (0, 0)),
            pl.BlockSpec(w_head.shape, lambda b: (0, 0)),
            pl.BlockSpec(b_head.shape, lambda b: (0, 0)),
        ],
        out_specs=pl.BlockSpec((1, HWp, C2), lambda b: (b, 0, 0)),
        scratch_shapes=[pltpu.VMEM((fp_rows, ENC), jnp.float32)],
        compiler_params=pltpu.CompilerParams(
            dimension_semantics=("parallel",),
            vmem_limit_bytes=32 * 1024 * 1024),
        cost_estimate=pl.CostEstimate(flops=int(flops), transcendentals=0,
                                      bytes_accessed=int(bytes_acc)),
    )(pat0, colmask, w_enc, b_enc, w_head, b_head)


def gather_query_mlp(head_flat, flat_idx, cell, kp, *, qt=128):
    """Fused gather + freq-encode + MLP. Returns (B, 8, Qp) transposed output."""
    B, HWp, C2 = head_flat.shape
    Q = flat_idx.shape[1]
    Qp = ((Q + qt - 1) // qt) * qt               # robust Q padding (review item)
    if Qp != Q:
        flat_idx = jnp.pad(flat_idx, ((0, 0), (0, Qp - Q)), constant_values=-1)
        cell = jnp.pad(cell, ((0, 0), (0, Qp - Q), (0, 0)))
    idx3 = flat_idx.astype(jnp.int32)[..., None]                 # (B, Qp, 1)
    T = Qp // qt
    hid = C2 // 2
    MLPH = kp["w2"].shape[0]
    OUTP = kp["w3p"].shape[1]
    flops = 2 * B * Qp * (HWp * C2 + hid * MLPH + MLPH * MLPH + MLPH * OUTP)
    trans = B * Qp * (hid + OUTP)
    bytes_acc = (4 * B * HWp * C2 + 4 * B * Qp * (2 + OUTP)
                 + 4 * (hid * MLPH + MLPH * MLPH + MLPH * OUTP))
    return pl.pallas_call(
        gather_mlp_kernel,
        out_shape=jax.ShapeDtypeStruct((B, OUTP, Qp), jnp.float32),
        grid=(B, T),
        in_specs=[
            pl.BlockSpec((1, qt, 1), lambda b, t: (b, t, 0)),
            pl.BlockSpec((1, qt, 1), lambda b, t: (b, t, 0)),
            pl.BlockSpec((1, HWp, C2), lambda b, t: (b, 0, 0)),   # resident per b
            pl.BlockSpec(kp["w1h"].shape, lambda b, t: (0, 0)),
            pl.BlockSpec(kp["w1c"].shape, lambda b, t: (0, 0)),
            pl.BlockSpec(kp["b1"].shape, lambda b, t: (0, 0)),
            pl.BlockSpec(kp["w2"].shape, lambda b, t: (0, 0)),
            pl.BlockSpec(kp["b2"].shape, lambda b, t: (0, 0)),
            pl.BlockSpec(kp["w3p"].shape, lambda b, t: (0, 0)),
            pl.BlockSpec(kp["b3p"].shape, lambda b, t: (0, 0)),
        ],
        out_specs=pl.BlockSpec((1, OUTP, qt), lambda b, t: (b, 0, t)),
        compiler_params=pltpu.CompilerParams(
            dimension_semantics=("parallel", "parallel"),
            vmem_limit_bytes=32 * 1024 * 1024),
        cost_estimate=pl.CostEstimate(flops=int(flops), transcendentals=int(trans),
                                      bytes_accessed=int(bytes_acc)),
    )(idx3, cell, head_flat, kp["w1h"], kp["w1c"], kp["b1"],
      kp["w2"], kp["b2"], kp["w3p"], kp["b3p"])


def prepare_params(params):
    """Fuse coef/freq heads; fold even/odd perm, pi, and the sin->cos -pi/2
    phase shift into the freq weights/bias; split w1; pad the output head."""
    enc_w = params["enc_w"]                                    # (9, CIN, ENC)
    coef_w, coef_b = params["coef_w"], params["coef_b"]        # (9, ENC, HID)
    freq_w, freq_b = params["freq_w"], params["freq_b"]
    HID = coef_w.shape[-1]
    pi = jnp.float32(jnp.pi)
    freq_wp = jnp.concatenate([freq_w[..., 0::2], freq_w[..., 1::2]], axis=-1) * pi
    freq_bp = jnp.concatenate([freq_b[..., 0::2] * pi,
                               freq_b[..., 1::2] * pi - pi / 2], axis=-1)
    head_w = jnp.concatenate([coef_w, freq_wp], axis=-1)       # (9, ENC, 2*HID)
    head_b = jnp.concatenate([coef_b, freq_bp], axis=-1)       # (1, 2*HID)
    w1 = params["w1"]                                          # (HID+1, MLPH)
    OUT = params["w3"].shape[1]
    OUTP = 8                                                   # sublane-sized pad
    return dict(
        enc_w=enc_w.reshape(-1, enc_w.shape[-1]),              # (9*CIN, ENC) f32
        enc_b=params["enc_b"],
        head_w=head_w.reshape(-1, 2 * HID).astype(jnp.bfloat16),
        head_b=head_b,
        w1h=w1[:HID], w1c=w1[HID:HID + 1], b1=params["b1"],
        w2=params["w2"], b2=params["b2"],
        w3p=jnp.pad(params["w3"], ((0, 0), (0, OUTP - OUT))),
        b3p=jnp.pad(params["b3"], ((0, 0), (0, OUTP - OUT))),
    )


def abcd_forward(inp_nchw, coord, cell, params):
    x = jnp.transpose(inp_nchw, (0, 2, 3, 1)).astype(jnp.float32)    # NHWC
    B, H, W, CIN = x.shape
    Wp = W + 2
    HWp = H * Wp
    OUT = params["w3"].shape[1]
    Q = coord.shape[1]
    kp = prepare_params(params)

    # ---- gen_feat: one fused Pallas kernel (encoder -> VMEM feat -> heads) ----
    xp = jnp.pad(x, ((0, 0), (1, 2), (1, 1), (0, 0))).reshape(B, (H + 3) * Wp, CIN)
    # im2col prepack for the lane-sparse Cin=3 encoder conv (tiny, done in XLA)
    pat0 = jnp.concatenate(
        [xp[:, dy * Wp + dx: dy * Wp + dx + HWp, :]
         for dy in range(3) for dx in range(3)], axis=-1)            # (B,HWp,9*CIN)
    colmask = (jnp.arange(HWp, dtype=jnp.int32) % Wp < W
               ).astype(jnp.float32)[:, None]                        # (HWp, 1)
    head_flat = fused_conv(pat0, colmask, kp["enc_w"], kp["enc_b"],
                           kp["head_w"], kp["head_b"], H=H, W=W)     # (B,HWp,2*HID)

    # ---- nearest-neighbour sample indices (cheap XLA scalar pre-pass) ----
    fx = ((coord[..., 1] + 1.0) * W - 1.0) * 0.5
    fy = ((coord[..., 0] + 1.0) * H - 1.0) * 0.5
    ix = jnp.round(fx).astype(jnp.int32)
    iy = jnp.round(fy).astype(jnp.int32)
    valid = (ix >= 0) & (ix < W) & (iy >= 0) & (iy < H)
    flat_idx = jnp.where(valid, iy * Wp + ix, -1).astype(jnp.int32)  # stride W+2

    # ---- fused one-hot gather + freq encoding + MLP + tanh head ----
    out_t = gather_query_mlp(head_flat, flat_idx, cell, kp)          # (B, 8, Qp)
    return jnp.transpose(out_t[:, :OUT, :Q], (0, 2, 1))              # (B, Q, OUT)


# --------------------------- pure-JAX reference ------------------------------

def reference_forward(inp_nchw, coord, cell, params):
    x = jnp.transpose(inp_nchw, (0, 2, 3, 1)).astype(jnp.float32)
    B, H, W, _ = x.shape

    def conv_ref(xn, w9, b):
        xp = jnp.pad(xn, ((0, 0), (1, 1), (1, 1), (0, 0)))
        pats = jnp.stack([xp[:, dy:dy + H, dx:dx + W, :]
                          for dy in range(3) for dx in range(3)], axis=1)
        return jnp.einsum("bthwc,tco->bhwo", pats, w9) + b

    feat = conv_ref(x, params["enc_w"], params["enc_b"])
    coef = conv_ref(feat, params["coef_w"], params["coef_b"]).reshape(B, H * W, -1)
    freq = conv_ref(feat, params["freq_w"], params["freq_b"]).reshape(B, H * W, -1)

    xq, yq = coord[..., 1], coord[..., 0]
    ix = jnp.round(((xq + 1.0) * W - 1.0) * 0.5).astype(jnp.int32)
    iy = jnp.round(((yq + 1.0) * H - 1.0) * 0.5).astype(jnp.int32)
    valid = ((ix >= 0) & (ix < W) & (iy >= 0) & (iy < H)).astype(jnp.float32)
    flat = jnp.clip(iy * W + ix, 0, H * W - 1)
    q_coef = jnp.take_along_axis(coef, flat[..., None], axis=1) * valid[..., None]
    q_freq = jnp.take_along_axis(freq, flat[..., None], axis=1) * valid[..., None]

    q_freq = jnp.concatenate([jnp.cos(jnp.pi * q_freq[..., 0::2]),
                              jnp.sin(jnp.pi * q_freq[..., 1::2])], axis=-1)
    inp = jnp.concatenate([q_coef * q_freq, cell], axis=-1)
    h = jax.nn.relu(inp @ params["w1"] + params["b1"])
    h = jax.nn.relu(h @ params["w2"] + params["b2"])
    pred = h @ params["w3"] + params["b3"]
    return (jnp.tanh(pred) + 1.0) * 0.5


# --------------------------------- main ---------------------------------------

if __name__ == "__main__":
    B, CIN, H, W = 2, 3, 16, 16
    ENC, HID, MLPH, OUT, Q = 16, 64, 64, 3, 256

    ks = list(jax.random.split(jax.random.PRNGKey(0), 16))

    def winit(kk, shape, fan_in):
        return jax.random.normal(kk, shape, jnp.float32) / jnp.sqrt(fan_in)

    params = {
        "enc_w": winit(ks[0], (9, CIN, ENC), 9 * CIN),
        "enc_b": winit(ks[1], (1, ENC), 9 * CIN),
        "coef_w": winit(ks[2], (9, ENC, HID), 9 * ENC),
        "coef_b": winit(ks[3], (1, HID), 9 * ENC),
        "freq_w": winit(ks[4], (9, ENC, HID), 9 * ENC),
        "freq_b": winit(ks[5], (1, HID), 9 * ENC),
        "w1": winit(ks[6], (HID + 1, MLPH), HID + 1),
        "b1": winit(ks[7], (1, MLPH), HID + 1),
        "w2": winit(ks[8], (MLPH, MLPH), MLPH),
        "b2": winit(ks[9], (1, MLPH), MLPH),
        "w3": winit(ks[10], (MLPH, OUT), MLPH),
        "b3": winit(ks[11], (1, OUT), MLPH),
    }

    inp = jax.random.normal(ks[12], (B, CIN, H, W), jnp.float32)
    coord = jax.random.uniform(ks[13], (B, Q, 2), jnp.float32,
                               minval=-1.0, maxval=1.0)
    cell = jnp.full((B, Q, 1), 2.0 / H, jnp.float32)

    fwd = jax.jit(abcd_forward)
    pred = jax.block_until_ready(fwd(inp, coord, cell, params))
    ref = reference_forward(inp, coord, cell, params)

    assert pred.shape == (B, Q, OUT)
    assert bool(jnp.all(jnp.isfinite(pred)))
    assert bool(jnp.allclose(pred, ref, atol=1e-2, rtol=1e-2))
    print("KERNEL_OK")
</pallas_src>

<mosaic_0001>
module attributes {stable_mosaic.version = 11 : i64} {
  func.func @fused_conv_kernel(%arg0: i32, %arg1: memref<1x288x27xf32, #tpu.memory_space<vmem>>, %arg2: memref<288x1xf32, #tpu.memory_space<vmem>>, %arg3: memref<27x16xf32, #tpu.memory_space<vmem>>, %arg4: memref<1x16xf32, #tpu.memory_space<vmem>>, %arg5: memref<144x128xbf16, #tpu.memory_space<vmem>>, %arg6: memref<1x128xf32, #tpu.memory_space<vmem>>, %arg7: memref<1x288x128xf32, #tpu.memory_space<vmem>>, %arg8: memref<347x16xf32, #tpu.memory_space<vmem>>) attributes {dimension_semantics = [#tpu.dimension_semantics<parallel>], iteration_bounds = array<i64: 2>, scalar_prefetch = 0 : i64, scratch_operands = 1 : i64, tpu.core_type = #tpu.core_type<tc>, window_params = [{transform_indices = @transform_0, window_bounds = array<i64: 1, 288, 27>}, {pipeline_mode = #tpu.pipeline_mode<synchronous>, transform_indices = @transform_1, window_bounds = array<i64: 288, 1>}, {pipeline_mode = #tpu.pipeline_mode<synchronous>, transform_indices = @transform_2, window_bounds = array<i64: 27, 16>}, {pipeline_mode = #tpu.pipeline_mode<synchronous>, transform_indices = @transform_3, window_bounds = array<i64: 1, 16>}, {pipeline_mode = #tpu.pipeline_mode<synchronous>, transform_indices = @transform_4, window_bounds = array<i64: 144, 128>}, {pipeline_mode = #tpu.pipeline_mode<synchronous>, transform_indices = @transform_5, window_bounds = array<i64: 1, 128>}, {transform_indices = @transform_6, window_bounds = array<i64: 1, 288, 128>}]} {
    %c0 = arith.constant 0 : index
    %c0_0 = arith.constant 0 : index
    %c0_1 = arith.constant 0 : index
    %0 = vector.load %arg1[%c0, %c0_0, %c0_1] : memref<1x288x27xf32, #tpu.memory_space<vmem>>, vector<1x288x27xf32>
    %1 = vector.shape_cast %0 : vector<1x288x27xf32> to vector<288x27xf32>
    %c0_2 = arith.constant 0 : index
    %c0_3 = arith.constant 0 : index
    %2 = vector.load %arg3[%c0_2, %c0_3] : memref<27x16xf32, #tpu.memory_space<vmem>>, vector<27x16xf32>
    %cst = arith.constant dense<0.000000e+00> : vector<288x16xf32>
    %3 = tpu.matmul %1, %2, %cst {dimension_numbers = #tpu.dot_dimension_numbers<[1], [0], [0], [1], [0, 0, 1, 1], [], []>} : vector<288x27xf32>, vector<27x16xf32>, vector<288x16xf32> -> vector<288x16xf32>
    %c0_4 = arith.constant 0 : index
    %c0_5 = arith.constant 0 : index
    %4 = vector.load %arg4[%c0_4, %c0_5] : memref<1x16xf32, #tpu.memory_space<vmem>>, vector<1x16xf32>
    %5 = vector.broadcast %4 : vector<1x16xf32> to vector<288x16xf32>
    %6 = arith.addf %3, %5 : vector<288x16xf32>
    %c0_6 = arith.constant 0 : index
    %c0_7 = arith.constant 0 : index
    %7 = vector.load %arg2[%c0_6, %c0_7] : memref<288x1xf32, #tpu.memory_space<vmem>>, vector<288x1xf32>
    %8 = vector.broadcast %7 : vector<288x1xf32> to vector<288x16xf32>
    %9 = arith.mulf %6, %8 : vector<288x16xf32>
    %cst_8 = arith.constant 0.000000e+00 : f32
    %10 = vector.broadcast %cst_8 : f32 to vector<347x16xf32>
    %c0_9 = arith.constant 0 : index
    %c0_10 = arith.constant 0 : index
    %11 = vector.load %arg8[%c0_9, %c0_10] : memref<347x16xf32, #tpu.memory_space<vmem>>, vector<347x16xf32>
    tpu.vector_store %arg8[%c0_9, %c0_10], %10 {strides = array<i32>} : memref<347x16xf32, #tpu.memory_space<vmem>>, vector<347x16xf32>,
    %c24 = arith.constant 24 : index
    %c0_11 = arith.constant 0 : index
    %12 = vector.load %arg8[%c24, %c0_11] : memref<347x16xf32, #tpu.memory_space<vmem>>, vector<288x16xf32>
    tpu.vector_store %arg8[%c24, %c0_11], %9 {strides = array<i32>} : memref<347x16xf32, #tpu.memory_space<vmem>>, vector<288x16xf32>,
    %c5 = arith.constant 5 : index
    %c0_12 = arith.constant 0 : index
    %13 = vector.load %arg8[%c5, %c0_12] : memref<347x16xf32, #tpu.memory_space<vmem>>, vector<288x16xf32>
    %c6 = arith.constant 6 : index
    %c0_13 = arith.constant 0 : index
    %14 = vector.load %arg8[%c6, %c0_13] : memref<347x16xf32, #tpu.memory_space<vmem>>, vector<288x16xf32>
    %c7 = arith.constant 7 : index
    %c0_14 = arith.constant 0 : index
    %15 = vector.load %arg8[%c7, %c0_14] : memref<347x16xf32, #tpu.memory_space<vmem>>, vector<288x16xf32>
    %c23 = arith.constant 23 : index
    %c0_15 = arith.constant 0 : index
    %16 = vector.load %arg8[%c23, %c0_15] : memref<347x16xf32, #tpu.memory_space<vmem>>, vector<288x16xf32>
    %c24_16 = arith.constant 24 : index
    %c0_17 = arith.constant 0 : index
    %17 = vector.load %arg8[%c24_16, %c0_17] : memref<347x16xf32, #tpu.memory_space<vmem>>, vector<288x16xf32>
    %c25 = arith.constant 25 : index
    %c0_18 = arith.constant 0 : index
    %18 = vector.load %arg8[%c25, %c0_18] : memref<347x16xf32, #tpu.memory_space<vmem>>, vector<288x16xf32>
    %c41 = arith.constant 41 : index
    %c0_19 = arith.constant 0 : index
    %19 = vector.load %arg8[%c41, %c0_19] : memref<347x16xf32, #tpu.memory_space<vmem>>, vector<288x16xf32>
    %c42 = arith.constant 42 : index
    %c0_20 = arith.constant 0 : index
    %20 = vector.load %arg8[%c42, %c0_20] : memref<347x16xf32, #tpu.memory_space<vmem>>, vector<288x16xf32>
    %c43 = arith.constant 43 : index
    %c0_21 = arith.constant 0 : index
    %21 = vector.load %arg8[%c43, %c0_21] : memref<347x16xf32, #tpu.memory_space<vmem>>, vector<288x16xf32>
    %22 = tpu.concatenate %13, %14, %15, %16, %17, %18, %19, %20, %21 in 1 : vector<288x16xf32>, vector<288x16xf32>, vector<288x16xf32>, vector<288x16xf32>, vector<288x16xf32>, vector<288x16xf32>, vector<288x16xf32>, vector<288x16xf32>, vector<288x16xf32> -> vector<288x144xf32>
    %23 = arith.truncf %22 : vector<288x144xf32> to vector<288x144xbf16>
    %c0_22 = arith.constant 0 : index
    %c0_23 = arith.constant 0 : index
    %24 = vector.load %arg5[%c0_22, %c0_23] : memref<144x128xbf16, #tpu.memory_space<vmem>>, vector<144x128xbf16>
    %cst_24 = arith.constant dense<0.000000e+00> : vector<288x128xf32>
    %25 = tpu.matmul %23, %24, %cst_24 {dimension_numbers = #tpu.dot_dimension_numbers<[1], [0], [0], [1], [0, 0, 1, 1], [], []>} : vector<288x144xbf16>, vector<144x128xbf16>, vector<288x128xf32> -> vector<288x128xf32>
    %c0_25 = arith.constant 0 : index
    %c0_26 = arith.constant 0 : index
    %26 = vector.load %arg6[%c0_25, %c0_26] : memref<1x128xf32, #tpu.memory_space<vmem>>, vector<1x128xf32>
    %27 = vector.broadcast %26 : vector<1x128xf32> to vector<288x128xf32>
    %28 = arith.addf %25, %27 : vector<288x128xf32>
    %c0_27 = arith.constant 0 : index
    %c0_28 = arith.constant 0 : index
    %c0_29 = arith.constant 0 : index
    %29 = vector.load %arg7[%c0_27, %c0_28, %c0_29] : memref<1x288x128xf32, #tpu.memory_space<vmem>>, vector<1x288x128xf32>
    %30 = vector.shape_cast %29 : vector<1x288x128xf32> to vector<288x128xf32>
    %31 = vector.shape_cast %28 : vector<288x128xf32> to vector<1x288x128xf32>
    tpu.vector_store %arg7[%c0_27, %c0_28, %c0_29], %31 {strides = array<i32>} : memref<1x288x128xf32, #tpu.memory_space<vmem>>, vector<1x288x128xf32>,
    return
  }
  func.func @transform_0(%arg0: i32) -> (i32, i32, i32) {
    %c0_i32 = arith.constant 0 : i32
    %c0_i32_0 = arith.constant 0 : i32
    %c0_i32_1 = arith.constant 0 : i32
    return %arg0, %c0_i32, %c0_i32_0 : i32, i32, i32
  }
  func.func @transform_1(%arg0: i32) -> (i32, i32) {
    %c0_i32 = arith.constant 0 : i32
    %c0_i32_0 = arith.constant 0 : i32
    %c0_i32_1 = arith.constant 0 : i32
    return %c0_i32, %c0_i32_0 : i32, i32
  }
  func.func @transform_2(%arg0: i32) -> (i32, i32) {
    %c0_i32 = arith.constant 0 : i32
    %c0_i32_0 = arith.constant 0 : i32
    %c0_i32_1 = arith.constant 0 : i32
    return %c0_i32, %c0_i32_0 : i32, i32
  }
  func.func @transform_3(%arg0: i32) -> (i32, i32) {
    %c0_i32 = arith.constant 0 : i32
    %c0_i32_0 = arith.constant 0 : i32
    %c0_i32_1 = arith.constant 0 : i32
    return %c0_i32, %c0_i32_0 : i32, i32
  }
  func.func @transform_4(%arg0: i32) -> (i32, i32) {
    %c0_i32 = arith.constant 0 : i32
    %c0_i32_0 = arith.constant 0 : i32
    %c0_i32_1 = arith.constant 0 : i32
    return %c0_i32, %c0_i32_0 : i32, i32
  }
  func.func @transform_5(%arg0: i32) -> (i32, i32) {
    %c0_i32 = arith.constant 0 : i32
    %c0_i32_0 = arith.constant 0 : i32
    %c0_i32_1 = arith.constant 0 : i32
    return %c0_i32, %c0_i32_0 : i32, i32
  }
  func.func @transform_6(%arg0: i32) -> (i32, i32, i32) {
    %c0_i32 = arith.constant 0 : i32
    %c0_i32_0 = arith.constant 0 : i32
    %c0_i32_1 = arith.constant 0 : i32
    return %arg0, %c0_i32, %c0_i32_0 : i32, i32, i32
  }
}

module attributes {stable_mosaic.version = 11 : i64} {
  func.func @gather_mlp_kernel(%arg0: i32, %arg1: i32, %arg2: memref<1x128x1xi32, #tpu.memory_space<vmem>>, %arg3: memref<1x128x1xf32, #tpu.memory_space<vmem>>, %arg4: memref<1x288x128xf32, #tpu.memory_space<vmem>>, %arg5: memref<64x64xf32, #tpu.memory_space<vmem>>, %arg6: memref<1x64xf32, #tpu.memory_space<vmem>>, %arg7: memref<1x64xf32, #tpu.memory_space<vmem>>, %arg8: memref<64x64xf32, #tpu.memory_space<vmem>>, %arg9: memref<1x64xf32, #tpu.memory_space<vmem>>, %arg10: memref<64x8xf32, #tpu.memory_space<vmem>>, %arg11: memref<1x8xf32, #tpu.memory_space<vmem>>, %arg12: memref<1x8x128xf32, #tpu.memory_space<vmem>>) attributes {dimension_semantics = [#tpu.dimension_semantics<parallel>, #tpu.dimension_semantics<parallel>], iteration_bounds = array<i64: 2, 2>, scalar_prefetch = 0 : i64, scratch_operands = 0 : i64, tpu.core_type = #tpu.core_type<tc>, window_params = [{transform_indices = @transform_0, window_bounds = array<i64: 1, 128, 1>}, {transform_indices = @transform_1, window_bounds = array<i64: 1, 128, 1>}, {transform_indices = @transform_2, window_bounds = array<i64: 1, 288, 128>}, {pipeline_mode = #tpu.pipeline_mode<synchronous>, transform_indices = @transform_3, window_bounds = array<i64: 64, 64>}, {pipeline_mode = #tpu.pipeline_mode<synchronous>, transform_indices = @transform_4, window_bounds = array<i64: 1, 64>}, {pipeline_mode = #tpu.pipeline_mode<synchronous>, transform_indices = @transform_5, window_bounds = array<i64: 1, 64>}, {pipeline_mode = #tpu.pipeline_mode<synchronous>, transform_indices = @transform_6, window_bounds = array<i64: 64, 64>}, {pipeline_mode = #tpu.pipeline_mode<synchronous>, transform_indices = @transform_7, window_bounds = array<i64: 1, 64>}, {pipeline_mode = #tpu.pipeline_mode<synchronous>, transform_indices = @transform_8, window_bounds = array<i64: 64, 8>}, {pipeline_mode = #tpu.pipeline_mode<synchronous>, transform_indices = @transform_9, window_bounds = array<i64: 1, 8>}, {transform_indices = @transform_10, window_bounds = array<i64: 1, 8, 128>}]} {
    %0 = tpu.iota {dimensions = array<i32: 1>} : vector<128x288xi32>
    %c0 = arith.constant 0 : index
    %c0_0 = arith.constant 0 : index
    %c0_1 = arith.constant 0 : index
    %1 = vector.load %arg2[%c0, %c0_0, %c0_1] : memref<1x128x1xi32, #tpu.memory_space<vmem>>, vector<1x128x1xi32>
    %2 = vector.shape_cast %1 : vector<1x128x1xi32> to vector<128x1xi32>
    %3 = vector.broadcast %2 : vector<128x1xi32> to vector<128x288xi32>
    %4 = arith.cmpi eq, %3, %0 : vector<128x288xi32>
    %5 = arith.extui %4 : vector<128x288xi1> to vector<128x288xi32>
    %6 = arith.sitofp %5 : vector<128x288xi32> to vector<128x288xf32>
    %c0_2 = arith.constant 0 : index
    %c0_3 = arith.constant 0 : index
    %c0_4 = arith.constant 0 : index
    %7 = vector.load %arg4[%c0_2, %c0_3, %c0_4] : memref<1x288x128xf32, #tpu.memory_space<vmem>>, vector<1x288x128xf32>
    %8 = vector.shape_cast %7 : vector<1x288x128xf32> to vector<288x128xf32>
    %cst = arith.constant dense<0.000000e+00> : vector<128x128xf32>
    %9 = tpu.matmul %6, %8, %cst {dimension_numbers = #tpu.dot_dimension_numbers<[1], [0], [0], [1], [0, 0, 1, 1], [], []>} : vector<128x288xf32>, vector<288x128xf32>, vector<128x128xf32> -> vector<128x128xf32>
    %10 = vector.extract_strided_slice %9 {offsets = [0, 0], sizes = [128, 64], strides = [1, 1]} : vector<128x128xf32> to vector<128x64xf32>
    %11 = vector.extract_strided_slice %9 {offsets = [0, 64], sizes = [128, 64], strides = [1, 1]} : vector<128x128xf32> to vector<128x64xf32>
    %12 = math.cos %11 : vector<128x64xf32>
    %13 = arith.mulf %10, %12 : vector<128x64xf32>
    %c0_5 = arith.constant 0 : index
    %c0_6 = arith.constant 0 : index
    %14 = vector.load %arg5[%c0_5, %c0_6] : memref<64x64xf32, #tpu.memory_space<vmem>>, vector<64x64xf32>
    %cst_7 = arith.constant dense<0.000000e+00> : vector<128x64xf32>
    %15 = tpu.matmul %13, %14, %cst_7 {dimension_numbers = #tpu.dot_dimension_numbers<[1], [0], [0], [1], [0, 0, 1, 1], [], []>} : vector<128x64xf32>, vector<64x64xf32>, vector<128x64xf32> -> vector<128x64xf32>
    %c0_8 = arith.constant 0 : index
    %c0_9 = arith.constant 0 : index
    %c0_10 = arith.constant 0 : index
    %16 = vector.load %arg3[%c0_8, %c0_9, %c0_10] : memref<1x128x1xf32, #tpu.memory_space<vmem>>, vector<1x128x1xf32>
    %17 = vector.shape_cast %16 : vector<1x128x1xf32> to vector<128x1xf32>
    %c0_11 = arith.constant 0 : index
    %c0_12 = arith.constant 0 : index
    %18 = vector.load %arg6[%c0_11, %c0_12] : memref<1x64xf32, #tpu.memory_space<vmem>>, vector<1x64xf32>
    %19 = vector.broadcast %17 : vector<128x1xf32> to vector<128x64xf32>
    %20 = vector.broadcast %18 : vector<1x64xf32> to vector<128x64xf32>
    %21 = arith.mulf %19, %20 : vector<128x64xf32>
    %22 = arith.addf %15, %21 : vector<128x64xf32>
    %c0_13 = arith.constant 0 : index
    %c0_14 = arith.constant 0 : index
    %23 = vector.load %arg7[%c0_13, %c0_14] : memref<1x64xf32, #tpu.memory_space<vmem>>, vector<1x64xf32>
    %24 = vector.broadcast %23 : vector<1x64xf32> to vector<128x64xf32>
    %25 = arith.addf %22, %24 : vector<128x64xf32>
    %cst_15 = arith.constant 0.000000e+00 : f32
    %26 = vector.broadcast %cst_15 : f32 to vector<128x64xf32>
    %27 = arith.maximumf %25, %26 : vector<128x64xf32>
    %c0_16 = arith.constant 0 : index
    %c0_17 = arith.constant 0 : index
    %28 = vector.load %arg8[%c0_16, %c0_17] : memref<64x64xf32, #tpu.memory_space<vmem>>, vector<64x64xf32>
    %cst_18 = arith.constant dense<0.000000e+00> : vector<128x64xf32>
    %29 = tpu.matmul %27, %28, %cst_18 {dimension_numbers = #tpu.dot_dimension_numbers<[1], [0], [0], [1], [0, 0, 1, 1], [], []>} : vector<128x64xf32>, vector<64x64xf32>, vector<128x64xf32> -> vector<128x64xf32>
    %c0_19 = arith.constant 0 : index
    %c0_20 = arith.constant 0 : index
    %30 = vector.load %arg9[%c0_19, %c0_20] : memref<1x64xf32, #tpu.memory_space<vmem>>, vector<1x64xf32>
    %31 = vector.broadcast %30 : vector<1x64xf32> to vector<128x64xf32>
    %32 = arith.addf %29, %31 : vector<128x64xf32>
    %cst_21 = arith.constant 0.000000e+00 : f32
    %33 = vector.broadcast %cst_21 : f32 to vector<128x64xf32>
    %34 = arith.maximumf %32, %33 : vector<128x64xf32>
    %c0_22 = arith.constant 0 : index
    %c0_23 = arith.constant 0 : index
    %35 = vector.load %arg10[%c0_22, %c0_23] : memref<64x8xf32, #tpu.memory_space<vmem>>, vector<64x8xf32>
    %cst_24 = arith.constant dense<0.000000e+00> : vector<128x8xf32>
    %36 = tpu.matmul %34, %35, %cst_24 {dimension_numbers = #tpu.dot_dimension_numbers<[1], [0], [0], [1], [0, 0, 1, 1], [], []>} : vector<128x64xf32>, vector<64x8xf32>, vector<128x8xf32> -> vector<128x8xf32>
    %c0_25 = arith.constant 0 : index
    %c0_26 = arith.constant 0 : index
    %37 = vector.load %arg11[%c0_25, %c0_26] : memref<1x8xf32, #tpu.memory_space<vmem>>, vector<1x8xf32>
    %38 = vector.broadcast %37 : vector<1x8xf32> to vector<128x8xf32>
    %39 = arith.addf %36, %38 : vector<128x8xf32>
    %40 = tpu.transpose %39, [1, 0] : vector<128x8xf32> -> vector<8x128xf32>
    %41 = math.tanh %40 : vector<8x128xf32>
    %cst_27 = arith.constant 1.000000e+00 : f32
    %42 = vector.broadcast %cst_27 : f32 to vector<8x128xf32>
    %43 = arith.addf %41, %42 : vector<8x128xf32>
    %cst_28 = arith.constant 5.000000e-01 : f32
    %44 = vector.broadcast %cst_28 : f32 to vector<8x128xf32>
    %45 = arith.mulf %43, %44 : vector<8x128xf32>
    %c0_29 = arith.constant 0 : index
    %c0_30 = arith.constant 0 : index
    %c0_31 = arith.constant 0 : index
    %46 = vector.load %arg12[%c0_29, %c0_30, %c0_31] : memref<1x8x128xf32, #tpu.memory_space<vmem>>, vector<1x8x128xf32>
    %47 = vector.shape_cast %46 : vector<1x8x128xf32> to vector<8x128xf32>
    %48 = vector.shape_cast %45 : vector<8x128xf32> to vector<1x8x128xf32>
    tpu.vector_store %arg12[%c0_29, %c0_30, %c0_31], %48 {strides = array<i32>} : memref<1x8x128xf32, #tpu.memory_space<vmem>>, vector<1x8x128xf32>,
    return
  }
  func.func @transform_0(%arg0: i32, %arg1: i32) -> (i32, i32, i32) {
    %c0_i32 = arith.constant 0 : i32
    %c0_i32_0 = arith.constant 0 : i32
    return %arg0, %arg1, %c0_i32 : i32, i32, i32
  }
  func.func @transform_1(%arg0: i32, %arg1: i32) -> (i32, i32, i32) {
    %c0_i32 = arith.constant 0 : i32
    %c0_i32_0 = arith.constant 0 : i32
    return %arg0, %arg1, %c0_i32 : i32, i32, i32
  }
  func.func @transform_2(%arg0: i32, %arg1: i32) -> (i32, i32, i32) {
    %c0_i32 = arith.constant 0 : i32
    %c0_i32_0 = arith.constant 0 : i32
    %c0_i32_1 = arith.constant 0 : i32
    return %arg0, %c0_i32, %c0_i32_0 : i32, i32, i32
  }
  func.func @transform_3(%arg0: i32, %arg1: i32) -> (i32, i32) {
    %c0_i32 = arith.constant 0 : i32
    %c0_i32_0 = arith.constant 0 : i32
    %c0_i32_1 = arith.constant 0 : i32
    return %c0_i32, %c0_i32_0 : i32, i32
  }
  func.func @transform_4(%arg0: i32, %arg1: i32) -> (i32, i32) {
    %c0_i32 = arith.constant 0 : i32
    %c0_i32_0 = arith.constant 0 : i32
    %c0_i32_1 = arith.constant 0 : i32
    return %c0_i32, %c0_i32_0 : i32, i32
  }
  func.func @transform_5(%arg0: i32, %arg1: i32) -> (i32, i32) {
    %c0_i32 = arith.constant 0 : i32
    %c0_i32_0 = arith.constant 0 : i32
    %c0_i32_1 = arith.constant 0 : i32
    return %c0_i32, %c0_i32_0 : i32, i32
  }
  func.func @transform_6(%arg0: i32, %arg1: i32) -> (i32, i32) {
    %c0_i32 = arith.constant 0 : i32
    %c0_i32_0 = arith.constant 0 : i32
    %c0_i32_1 = arith.constant 0 : i32
    return %c0_i32, %c0_i32_0 : i32, i32
  }
  func.func @transform_7(%arg0: i32, %arg1: i32) -> (i32, i32) {
    %c0_i32 = arith.constant 0 : i32
    %c0_i32_0 = arith.constant 0 : i32
    %c0_i32_1 = arith.constant 0 : i32
    return %c0_i32, %c0_i32_0 : i32, i32
  }
  func.func @transform_8(%arg0: i32, %arg1: i32) -> (i32, i32) {
    %c0_i32 = arith.constant 0 : i32
    %c0_i32_0 = arith.constant 0 : i32
    %c0_i32_1 = arith.constant 0 : i32
    return %c0_i32, %c0_i32_0 : i32, i32
  }
  func.func @transform_9(%arg0: i32, %arg1: i32) -> (i32, i32) {
    %c0_i32 = arith.constant 0 : i32
    %c0_i32_0 = arith.constant 0 : i32
    %c0_i32_1 = arith.constant 0 : i32
    return %c0_i32, %c0_i32_0 : i32, i32
  }
  func.func @transform_10(%arg0: i32, %arg1: i32) -> (i32, i32, i32) {
    %c0_i32 = arith.constant 0 : i32
    %c0_i32_0 = arith.constant 0 : i32
    return %arg0, %c0_i32, %arg1 : i32, i32, i32
  }
}

</mosaic_0001>

<llo_original>
// kernel: abcd_forward.2
$region0: #{abcd_forward.2}
  #allocation0 [shape = 'u32[]', space=smem, size = 0x4, offset = 0x4, fixed_abs, tag = 'smem constant byte address 0x4 - core index']
  #allocation1 [shape = 'u32[72,128]{1,0:T(1,128)}', space=vmem, size = 0x9000, scoped, tag = 'internal scratch']
  #allocation2 [shape = 'f32[347,16]{1,0:T(8,128)}', space=vmem, size = 0x2c000, scoped, tag = 'scratch operand']
  %s0 = inlined_call_operand.vmem [shape: f32[2,288,27], index: 0, kind: input, shape index: {}]
  %s1 = inlined_call_operand.vmem [shape: f32[288,1], index: 1, kind: input, shape index: {}]
  %s2 = inlined_call_operand.vmem [shape: f32[27,16], index: 2, kind: input, shape index: {}]
  %s3 = inlined_call_operand.vmem [shape: f32[1,16], index: 3, kind: input, shape index: {}]
  %s4 = inlined_call_operand.vmem [shape: bf16[144,128], index: 4, kind: input, shape index: {}]
  %s5 = inlined_call_operand.vmem [shape: f32[1,128], index: 5, kind: input, shape index: {}]
  %s6 = inlined_call_operand.vmem [shape: f32[2,288,128], index: 6, kind: output, shape index: {}]
  %s7 = sld [smem:[#allocation0]]
  $region57: #{abcd_forward.2} parent=0
    _
  %s9 = ssub.s32 1, %s7
  %s10 = scalar_select 0, %s9, %s7
  loop: start=0, step=1, limit=4
  $region2: #{abcd_forward.2} parent=0 // loop_pre_header
    _
  $region3: #{abcd_forward.2} parent=0 // loop_header
    %s12 = sphi 0, %s16
    %p13 = scmp.ge.s32.totalorder %s12, 4
    %s22 = sphi 0, %s24
    %s25 = sphi 0, %s22
    %s26 = sphi 0, %s25
    %s42 = sphi 0, %s26
    %s46 = sphi 0, %s46
    %s48 = sphi 0, %s46
    %s49 = sphi 0, %s48
    %s63 = sphi 0, %s49
    %s67 = sphi 0, %s67
    %s69 = sphi 0, %s67
    %s70 = sphi 0, %s69
    %s84 = sphi 0, %s70
    %s88 = sphi 0, %s88
    %s90 = sphi 0, %s88
    %s91 = sphi 0, %s90
    %s105 = sphi 0, %s91
    %s109 = sphi 0, %s109
    %s111 = sphi 0, %s109
    %s112 = sphi 0, %s111
    %s126 = sphi 0, %s112
    %s130 = sphi 0, %s130
    %s132 = sphi 0, %s130
    %s133 = sphi 0, %s132
    %s147 = sphi 0, %s133
    %s153 = sphi 0, %s155
    %s156 = sphi 0, %s153
    %s157 = sphi 0, %s156
    %s173 = sphi 0, %s157
  $region4: #{abcd_forward.2} parent=0 // loop_header_branch
    %15 = sbr.rel (%p13) target = $region8
  $region5: #{abcd_forward.2} parent=0 // loop_body
    %s17 = ssub.s32 %s12, 1
    %s18 = ssub.s32 %s12, 2
    %s19 = sadd.s32 %s12, 1
    %s20 = ssub.s32 %s12, %s19
    %p21 = scmp.eq.s32.totalorder %s20, 0
    %s23 = sadd.s32 %s22, 1
    %s24 = scalar_select %p21, %s22, %s23
    %p27 = pneg %p21
    %p28 = scmp.eq.s32.totalorder %s12, 1
    %p29 = por %p27, %p28
    %p30 = scmp.ne.s32.totalorder %s22, %s25
    %p31 = scmp.eq.s32.totalorder %s12, 0
    %p32 = por %p30, %p31
    %p33 = scmp.ne.s32.totalorder %s22, %s25
    %p34 = scmp.eq.s32.totalorder %s17, 1
    %p35 = por %p33, %p34
    %p36 = scmp.ne.s32.totalorder %s25, %s26
    %p37 = scmp.eq.s32.totalorder %s17, 0
    %p38 = por %p36, %p37
    %p39 = scmp.ne.s32.totalorder %s25, %s26
    %p40 = scmp.eq.s32.totalorder %s18, 1
    %p41 = por %p39, %p40
    %p43 = scmp.ne.s32.totalorder %s26, %s42
    %p44 = scmp.eq.s32.totalorder %s18, 0
    %p45 = por %p43, %p44
    %s47 = sadd.s32 %s46, 1
    %p50 = scmp.eq.s32.totalorder %s12, 1
    %p51 = scmp.ne.s32.totalorder %s46, %s48
    %p52 = scmp.eq.s32.totalorder %s12, 0
    %p53 = por %p51, %p52
    %p54 = scmp.ne.s32.totalorder %s46, %s48
    %p55 = scmp.eq.s32.totalorder %s17, 1
    %p56 = por %p54, %p55
    %p57 = scmp.ne.s32.totalorder %s48, %s49
    %p58 = scmp.eq.s32.totalorder %s17, 0
    %p59 = por %p57, %p58
    %p60 = scmp.ne.s32.totalorder %s48, %s49
    %p61 = scmp.eq.s32.totalorder %s18, 1
    %p62 = por %p60, %p61
    %p64 = scmp.ne.s32.totalorder %s49, %s63
    %p65 = scmp.eq.s32.totalorder %s18, 0
    %p66 = por %p64, %p65
    %s68 = sadd.s32 %s67, 1
    %p71 = scmp.eq.s32.totalorder %s12, 1
    %p72 = scmp.ne.s32.totalorder %s67, %s69
    %p73 = scmp.eq.s32.totalorder %s12, 0
    %p74 = por %p72, %p73
    %p75 = scmp.ne.s32.totalorder %s67, %s69
    %p76 = scmp.eq.s32.totalorder %s17, 1
    %p77 = por %p75, %p76
    %p78 = scmp.ne.s32.totalorder %s69, %s70
    %p79 = scmp.eq.s32.totalorder %s17, 0
    %p80 = por %p78, %p79
    %p81 = scmp.ne.s32.totalorder %s69, %s70
    %p82 = scmp.eq.s32.totalorder %s18, 1
    %p83 = por %p81, %p82
    %p85 = scmp.ne.s32.totalorder %s70, %s84
    %p86 = scmp.eq.s32.totalorder %s18, 0
    %p87 = por %p85, %p86
    %s89 = sadd.s32 %s88, 1
    %p92 = scmp.eq.s32.totalorder %s12, 1
    %p93 = scmp.ne.s32.totalorder %s88, %s90
    %p94 = scmp.eq.s32.totalorder %s12, 0
    %p95 = por %p93, %p94
    %p96 = scmp.ne.s32.totalorder %s88, %s90
    %p97 = scmp.eq.s32.totalorder %s17, 1
    %p98 = por %p96, %p97
    %p99 = scmp.ne.s32.totalorder %s90, %s91
    %p100 = scmp.eq.s32.totalorder %s17, 0
    %p101 = por %p99, %p100
    %p102 = scmp.ne.s32.totalorder %s90, %s91
    %p103 = scmp.eq.s32.totalorder %s18, 1
    %p104 = por %p102, %p103
    %p106 = scmp.ne.s32.totalorder %s91, %s105
    %p107 = scmp.eq.s32.totalorder %s18, 0
    %p108 = por %p106, %p107
    %s110 = sadd.s32 %s109, 1
    %p113 = scmp.eq.s32.totalorder %s12, 1
    %p114 = scmp.ne.s32.totalorder %s109, %s111
    %p115 = scmp.eq.s32.totalorder %s12, 0
    %p116 = por %p114, %p115
    %p117 = scmp.ne.s32.totalorder %s109, %s111
    %p118 = scmp.eq.s32.totalorder %s17, 1
    %p119 = por %p117, %p118
    %p120 = scmp.ne.s32.totalorder %s111, %s112
    %p121 = scmp.eq.s32.totalorder %s17, 0
    %p122 = por %p120, %p121
    %p123 = scmp.ne.s32.totalorder %s111, %s112
    %p124 = scmp.eq.s32.totalorder %s18, 1
    %p125 = por %p123, %p124
    %p127 = scmp.ne.s32.totalorder %s112, %s126
    %p128 = scmp.eq.s32.totalorder %s18, 0
    %p129 = por %p127, %p128
    %s131 = sadd.s32 %s130, 1
    %p134 = scmp.eq.s32.totalorder %s12, 1
    %p135 = scmp.ne.s32.totalorder %s130, %s132
    %p136 = scmp.eq.s32.totalorder %s12, 0
    %p137 = por %p135, %p136
    %p138 = scmp.ne.s32.totalorder %s130, %s132
    %p139 = scmp.eq.s32.totalorder %s17, 1
    %p140 = por %p138, %p139
    %p141 = scmp.ne.s32.totalorder %s132, %s133
    %p142 = scmp.eq.s32.totalorder %s17, 0
    %p143 = por %p141, %p142
    %p144 = scmp.ne.s32.totalorder %s132, %s133
    %p145 = scmp.eq.s32.totalorder %s18, 1
    %p146 = por %p144, %p145
    %p148 = scmp.ne.s32.totalorder %s133, %s147
    %p149 = scmp.eq.s32.totalorder %s18, 0
    %p150 = por %p148, %p149
    %s151 = ssub.s32 %s12, %s19
    %p152 = scmp.eq.s32.totalorder %s151, 0
    %s154 = sadd.s32 %s153, 1
    %s155 = scalar_select %p152, %s153, %s154
    %p158 = pneg %p152
    %p159 = scmp.eq.s32.totalorder %s12, 1
    %p160 = por %p158, %p159
    %p161 = scmp.ne.s32.totalorder %s153, %s156
    %p162 = scmp.eq.s32.totalorder %s12, 0
    %p163 = por %p161, %p162
    %p164 = scmp.ne.s32.totalorder %s153, %s156
    %p165 = scmp.eq.s32.totalorder %s17, 1
    %p166 = por %p164, %p165
    %p167 = scmp.ne.s32.totalorder %s156, %s157
    %p168 = scmp.eq.s32.totalorder %s17, 0
    %p169 = por %p167, %p168
    %p170 = scmp.ne.s32.totalorder %s156, %s157
    %p171 = scmp.eq.s32.totalorder %s18, 1
    %p172 = por %p170, %p171
    %p174 = scmp.ne.s32.totalorder %s157, %s173
    %p175 = scmp.eq.s32.totalorder %s18, 0
    %p176 = por %p174, %p175
    %p177 = scmp.le.s32.totalorder 1, %s12
    %p178 = scmp.lt.s32.totalorder %s12, 3
    %p179 = pnand %p177, %p178
    %p180 = pneg %p179
    // Predicated region
    $region9: #{abcd_forward.2} parent=5 // pred_check
      _
    $region10: #{abcd_forward.2} parent=5 // pred_check_branch
      %182 = sbr.rel (%p179) target = $region12
    $region11: #{abcd_forward.2} parent=5 // pred_region
      %s183 = ssub.s32 %s12, 1
      // Predicated region
      $region13: #{abcd_forward.2} parent=11 // pred_check
        %p184 = pneg %p59
      $region14: #{abcd_forward.2} parent=11 // pred_check_branch
        %186 = sbr.rel (%p184) target = $region16
      $region15: #{abcd_forward.2} parent=11 // pred_region
        _
      $region16: #{abcd_forward.2} parent=11 // pred_fallthru
        _
      // Predicated region
      $region17: #{abcd_forward.2} parent=11 // pred_check
        %p187 = pneg %p80
      $region18: #{abcd_forward.2} parent=11 // pred_check_branch
        %189 = sbr.rel (%p187) target = $region20
      $region19: #{abcd_forward.2} parent=11 // pred_region
        _
      $region20: #{abcd_forward.2} parent=11 // pred_fallthru
        _
      // Predicated region
      $region21: #{abcd_forward.2} parent=11 // pred_check
        %p190 = pneg %p101
      $region22: #{abcd_forward.2} parent=11 // pred_check_branch
        %192 = sbr.rel (%p190) target = $region24
      $region23: #{abcd_forward.2} parent=11 // pred_region
        _
      $region24: #{abcd_forward.2} parent=11 // pred_fallthru
        _
      // Predicated region
      $region25: #{abcd_forward.2} parent=11 // pred_check
        %p193 = pneg %p122
      $region26: #{abcd_forward.2} parent=11 // pred_check_branch
        %195 = sbr.rel (%p193) target = $region28
      $region27: #{abcd_forward.2} parent=11 // pred_region
        _
      $region28: #{abcd_forward.2} parent=11 // pred_fallthru
        _
      // Predicated region
      $region29: #{abcd_forward.2} parent=11 // pred_check
        %p196 = pneg %p143
      $region30: #{abcd_forward.2} parent=11 // pred_check_branch
        %198 = sbr.rel (%p196) target = $region32
      $region31: #{abcd_forward.2} parent=11 // pred_region
        _
      $region32: #{abcd_forward.2} parent=11 // pred_fallthru
        _
    $region12: #{abcd_forward.2} parent=5 // pred_fallthru
      _
    %p199 = scmp.lt.s32.totalorder %s12, 2
    // Predicated region
    $region33: #{abcd_forward.2} parent=5 // pred_check
      %p200 = pneg %p199
    $region34: #{abcd_forward.2} parent=5 // pred_check_branch
      %202 = sbr.rel (%p200) target = $region36
    $region35: #{abcd_forward.2} parent=5 // pred_region
      // Predicated region
      $region37: #{abcd_forward.2} parent=35 // pred_check
        %p203 = pneg %p32
      $region38: #{abcd_forward.2} parent=35 // pred_check_branch
        %205 = sbr.rel (%p203) target = $region40
      $region39: #{abcd_forward.2} parent=35 // pred_region
        %p206 = scmp.lt.s32.totalorder %s12, 1
        %s207 = scalar_select %p206, %s12, 1
        %s208 = smul.addr %s207, 36
        %s209 = smul.addr %s208, 8
        %s210 = scalar_lea.vmem %s0, %s209
      $region40: #{abcd_forward.2} parent=35 // pred_fallthru
        _
    $region36: #{abcd_forward.2} parent=5 // pred_fallthru
      _
    %p211 = scmp.le.s32.totalorder 1, %s12
    %p212 = scmp.lt.s32.totalorder %s12, 3
    %p213 = pnand %p211, %p212
    %p214 = pneg %p213
    // Predicated region
    $region41: #{abcd_forward.2} parent=5 // pred_check
      _
    $region42: #{abcd_forward.2} parent=5 // pred_check_branch
      %216 = sbr.rel (%p213) target = $region44
    $region43: #{abcd_forward.2} parent=5 // pred_region
      %s217 = ssub.s32 %s12, 1
      %p218 = scmp.lt.s32.totalorder %s17, 1
      %s219 = scalar_select %p218, %s17, 1
      %s220 = smul.addr %s219, 36
      %s221 = smul.addr %s220, 8
      %s222 = scalar_lea.vmem %s0, %s221
      %p223 = pneg %p38
      %p224 = pneg %p35
      %p225 = pneg %p59
      %p226 = pneg %p56
      %p227 = pneg %p80
      %p228 = pneg %p77
      %p229 = pneg %p101
      %p230 = pneg %p98
      %p231 = pneg %p122
      %p232 = pneg %p119
      %p233 = pneg %p143
      %p234 = pneg %p140
      %p235 = pneg %p169
      %p236 = pneg %p166
      %p237 = scmp.lt.s32.totalorder %s17, 1
      %s238 = scalar_select %p237, %s17, 1
      %s239 = smul.addr %s238, 36
      %s240 = smul.addr %s239, 8
      %s241 = scalar_lea.vmem %s6, %s240
      %p242 = scmp.lt.s32.totalorder %s17, 1
      %s243 = scalar_select %p242, %s17, 1
      %s244 = smul.addr %s243, 36
      %s245 = smul.addr %s244, 8
      %s246 = scalar_lea.vmem %s0, %s245
      %p247 = scmp.lt.s32.totalorder %s17, 1
      %s248 = scalar_select %p247, %s17, 1
      %s249 = smul.addr %s248, 36
      %s250 = smul.addr %s249, 8
      %s251 = scalar_lea.vmem %s6, %s250
      %v253 = vld [vmem:[%s246] sm:$0xff]
      %v254 = vld [vmem:[%s246 + $0x8] sm:$0xff]
      %v255 = vld [vmem:[%s246 + $0x10] sm:$0xff]
      %v256 = vld [vmem:[%s246 + $0x18] sm:$0xff]
      %v257 = vld [vmem:[%s246 + $0x20] sm:$0xff]
      %v258 = vld [vmem:[%s246 + $0x28] sm:$0xff]
      %v259 = vld [vmem:[%s246 + $0x30] sm:$0xff]
      %v260 = vld [vmem:[%s246 + $0x38] sm:$0xff]
      %v261 = vld [vmem:[%s246 + $0x40] sm:$0xff]
      %v262 = vld [vmem:[%s246 + $0x48] sm:$0xff]
      %v263 = vld [vmem:[%s246 + $0x50] sm:$0xff]
      %v264 = vld [vmem:[%s246 + $0x58] sm:$0xff]
      %v265 = vld [vmem:[%s246 + $0x60] sm:$0xff]
      %v266 = vld [vmem:[%s246 + $0x68] sm:$0xff]
      %v267 = vld [vmem:[%s246 + $0x70] sm:$0xff]
      %v268 = vld [vmem:[%s246 + $0x78] sm:$0xff]
      %v269 = vld [vmem:[%s246 + $0x80] sm:$0xff]
      %v270 = vld [vmem:[%s246 + $0x88] sm:$0xff]
      %v271 = vld [vmem:[%s246 + $0x90] sm:$0xff]
      %v272 = vld [vmem:[%s246 + $0x98] sm:$0xff]
      %v273 = vld [vmem:[%s246 + $0xa0] sm:$0xff]
      %v274 = vld [vmem:[%s246 + $0xa8] sm:$0xff]
      %v275 = vld [vmem:[%s246 + $0xb0] sm:$0xff]
      %v276 = vld [vmem:[%s246 + $0xb8] sm:$0xff]
      %v277 = vld [vmem:[%s246 + $0xc0] sm:$0xff]
      %v278 = vld [vmem:[%s246 + $0xc8] sm:$0xff]
      %v279 = vld [vmem:[%s246 + $0xd0] sm:$0xff]
      %v280 = vld [vmem:[%s246 + $0xd8] sm:$0xff]
      %v281 = vld [vmem:[%s246 + $0xe0] sm:$0xff]
      %v282 = vld [vmem:[%s246 + $0xe8] sm:$0xff]
      %v283 = vld [vmem:[%s246 + $0xf0] sm:$0xff]
      %v284 = vld [vmem:[%s246 + $0xf8] sm:$0xff]
      %v285 = vld [vmem:[%s246 + $0x100] sm:$0xff]
      %v286 = vld [vmem:[%s246 + $0x108] sm:$0xff]
      %v287 = vld [vmem:[%s246 + $0x110] sm:$0xff]
      %v288 = vld [vmem:[%s246 + $0x118] sm:$0xff]
      %v289 = vld [vmem:[%s2] sm:$0xff]
      %v290 = vld [vmem:[%s2 + $0x8] sm:$0xff]
      %v291 = vld [vmem:[%s2 + $0x10] sm:$0xff]
      %v292 = vld [vmem:[%s2 + $0x18] sm:$0x7]
      %v293 = vld [vmem:[%s3] sm:$0x1]
      %v295 = vperm.slane %v293, 0
      %vm297 = vcmask 220160
      %v299 = vsel %vm297, %v253, 0
      %v302 = vsel %vm297, %v254, 0
      %v305 = vsel %vm297, %v255, 0
      %v308 = vsel %vm297, %v256, 0
      %v311 = vsel %vm297, %v257, 0
      %v314 = vsel %vm297, %v258, 0
      %v317 = vsel %vm297, %v259, 0
      %v320 = vsel %vm297, %v260, 0
      %v323 = vsel %vm297, %v261, 0
      %v326 = vsel %vm297, %v262, 0
      %v329 = vsel %vm297, %v263, 0
      %v332 = vsel %vm297, %v264, 0
      %v335 = vsel %vm297, %v265, 0
      %v338 = vsel %vm297, %v266, 0
      %v341 = vsel %vm297, %v267, 0
      %v344 = vsel %vm297, %v268, 0
      %v347 = vsel %vm297, %v269, 0
      %v350 = vsel %vm297, %v270, 0
      %v353 = vsel %vm297, %v271, 0
      %v356 = vsel %vm297, %v272, 0
      %v359 = vsel %vm297, %v273, 0
      %v362 = vsel %vm297, %v274, 0
      %v365 = vsel %vm297, %v275, 0
      %v368 = vsel %vm297, %v276, 0
      %v371 = vsel %vm297, %v277, 0
      %v374 = vsel %vm297, %v278, 0
      %v377 = vsel %vm297, %v279, 0
      %v380 = vsel %vm297, %v280, 0
      %v383 = vsel %vm297, %v281, 0
      %v386 = vsel %vm297, %v282, 0
      %v389 = vsel %vm297, %v283, 0
      %v392 = vsel %vm297, %v284, 0
      %v395 = vsel %vm297, %v285, 0
      %v398 = vsel %vm297, %v286, 0
      %v401 = vsel %vm297, %v287, 0
      %v404 = vsel %vm297, %v288, 0
      %vm406 = vcmask 1042432
      %v408 = vsel %vm406, %v292, 0
      %410 = vmatpush.msra.mxu0 0.0
      %411 = vmatpush.msra.mxu0 0.0
      %412 = vmatpush.msra.mxu0 0.0
      %413 = vmatpush.msra.mxu0 0.0
      %414 = vmatpush.msra.mxu0 0.0
      %415 = vmatpush.msra.mxu0 0.0
      %416 = vmatpush.msra.mxu0 0.0
      %417 = vmatpush.msra.mxu0 0.0
      %418 = vmatpush.msra.mxu0 0.0
      %419 = vmatpush.msra.mxu0 0.0
      %420 = vmatpush.msra.mxu0 0.0
      %421 = vmatpush.msra.mxu0 0.0
      %422 = vmatpush.msra.mxu0 %v408
      %423 = vmatpush.msra.mxu0 %v291
      %424 = vmatpush.msra.mxu0 %v290
      %425 = vmatpush.msra.mxu0 %v289
      %426 = vmatmul.f32.gmra.mxu0 %v299
      %v427 = vpop.f32.mrf.mxu0
      %v428 = vadd.f32 %v295, %v427
      %429 = vmatmul.f32.gmra.mxu0 %v302
      %v430 = vpop.f32.mrf.mxu0
      %v431 = vadd.f32 %v295, %v430
      %432 = vmatmul.f32.gmra.mxu0 %v305
      %v433 = vpop.f32.mrf.mxu0
      %v434 = vadd.f32 %v295, %v433
      %435 = vmatmul.f32.gmra.mxu0 %v308
      %v436 = vpop.f32.mrf.mxu0
      %v437 = vadd.f32 %v295, %v436
      %438 = vmatmul.f32.gmra.mxu0 %v311
      %v439 = vpop.f32.mrf.mxu0
      %v440 = vadd.f32 %v295, %v439
      %441 = vmatmul.f32.gmra.mxu0 %v314
      %v442 = vpop.f32.mrf.mxu0
      %v443 = vadd.f32 %v295, %v442
      %444 = vmatmul.f32.gmra.mxu0 %v317
      %v445 = vpop.f32.mrf.mxu0
      %v446 = vadd.f32 %v295, %v445
      %447 = vmatmul.f32.gmra.mxu0 %v320
      %v448 = vpop.f32.mrf.mxu0
      %v449 = vadd.f32 %v295, %v448
      %450 = vmatmul.f32.gmra.mxu0 %v323
      %v451 = vpop.f32.mrf.mxu0
      %v452 = vadd.f32 %v295, %v451
      %453 = vmatmul.f32.gmra.mxu0 %v326
      %v454 = vpop.f32.mrf.mxu0
      %v455 = vadd.f32 %v295, %v454
      %456 = vmatmul.f32.gmra.mxu0 %v329
      %v457 = vpop.f32.mrf.mxu0
      %v458 = vadd.f32 %v295, %v457
      %459 = vmatmul.f32.gmra.mxu0 %v332
      %v460 = vpop.f32.mrf.mxu0
      %v461 = vadd.f32 %v295, %v460
      %462 = vmatmul.f32.gmra.mxu0 %v335
      %v463 = vpop.f32.mrf.mxu0
      %v464 = vadd.f32 %v295, %v463
      %465 = vmatmul.f32.gmra.mxu0 %v338
      %v466 = vpop.f32.mrf.mxu0
      %v467 = vadd.f32 %v295, %v466
      %468 = vmatmul.f32.gmra.mxu0 %v341
      %v469 = vpop.f32.mrf.mxu0
      %v470 = vadd.f32 %v295, %v469
      %471 = vmatmul.f32.gmra.mxu0 %v344
      %v472 = vpop.f32.mrf.mxu0
      %v473 = vadd.f32 %v295, %v472
      %474 = vmatmul.f32.gmra.mxu0 %v347
      %v475 = vpop.f32.mrf.mxu0
      %v476 = vadd.f32 %v295, %v475
      %477 = vmatmul.f32.gmra.mxu0 %v350
      %v478 = vpop.f32.mrf.mxu0
      %v479 = vadd.f32 %v295, %v478
      %480 = vmatmul.f32.gmra.mxu0 %v353
      %v481 = vpop.f32.mrf.mxu0
      %v482 = vadd.f32 %v295, %v481
      %483 = vmatmul.f32.gmra.mxu0 %v356
      %v484 = vpop.f32.mrf.mxu0
      %v485 = vadd.f32 %v295, %v484
      %486 = vmatmul.f32.gmra.mxu0 %v359
      %v487 = vpop.f32.mrf.mxu0
      %v488 = vadd.f32 %v295, %v487
      %489 = vmatmul.f32.gmra.mxu0 %v362
      %v490 = vpop.f32.mrf.mxu0
      %v491 = vadd.f32 %v295, %v490
      %492 = vmatmul.f32.gmra.mxu0 %v365
      %v493 = vpop.f32.mrf.mxu0
      %v494 = vadd.f32 %v295, %v493
      %495 = vmatmul.f32.gmra.mxu0 %v368
      %v496 = vpop.f32.mrf.mxu0
      %v497 = vadd.f32 %v295, %v496
      %498 = vmatmul.f32.gmra.mxu0 %v371
      %v499 = vpop.f32.mrf.mxu0
      %v500 = vadd.f32 %v295, %v499
      %501 = vmatmul.f32.gmra.mxu0 %v374
      %v502 = vpop.f32.mrf.mxu0
      %v503 = vadd.f32 %v295, %v502
      %504 = vmatmul.f32.gmra.mxu0 %v377
      %v505 = vpop.f32.mrf.mxu0
      %v506 = vadd.f32 %v295, %v505
      %507 = vmatmul.f32.gmra.mxu0 %v380
      %v508 = vpop.f32.mrf.mxu0
      %v509 = vadd.f32 %v295, %v508
      %510 = vmatmul.f32.gmra.mxu0 %v383
      %v511 = vpop.f32.mrf.mxu0
      %v512 = vadd.f32 %v295, %v511
      %513 = vmatmul.f32.gmra.mxu0 %v386
      %v514 = vpop.f32.mrf.mxu0
      %v515 = vadd.f32 %v295, %v514
      %516 = vmatmul.f32.gmra.mxu0 %v389
      %v517 = vpop.f32.mrf.mxu0
      %v518 = vadd.f32 %v295, %v517
      %519 = vmatmul.f32.gmra.mxu0 %v392
      %v520 = vpop.f32.mrf.mxu0
      %v521 = vadd.f32 %v295, %v520
      %522 = vmatmul.f32.gmra.mxu0 %v395
      %v523 = vpop.f32.mrf.mxu0
      %v524 = vadd.f32 %v295, %v523
      %525 = vmatmul.f32.gmra.mxu0 %v398
      %v526 = vpop.f32.mrf.mxu0
      %v527 = vadd.f32 %v295, %v526
      %528 = vmatmul.f32.gmra.mxu0 %v401
      %v529 = vpop.f32.mrf.mxu0
      %v530 = vadd.f32 %v295, %v529
      %531 = vmatmul.f32.gmra.mxu0 %v404
      %v532 = vpop.f32.mrf.mxu0
      %v533 = vadd.f32 %v295, %v532
      %534 = vdwg.mxu0
      %v535 = vld [vmem:[%s1] sm:$0xff]
      %v536 = vld [vmem:[%s1 + $0x8] sm:$0xff]
      %v537 = vld [vmem:[%s1 + $0x10] sm:$0xff]
      %v538 = vld [vmem:[%s1 + $0x18] sm:$0xff]
      %v539 = vld [vmem:[%s1 + $0x20] sm:$0xff]
      %v540 = vld [vmem:[%s1 + $0x28] sm:$0xff]
      %v541 = vld [vmem:[%s1 + $0x30] sm:$0xff]
      %v542 = vld [vmem:[%s1 + $0x38] sm:$0xff]
      %v543 = vld [vmem:[%s1 + $0x40] sm:$0xff]
      %v544 = vld [vmem:[%s1 + $0x48] sm:$0xff]
      %v545 = vld [vmem:[%s1 + $0x50] sm:$0xff]
      %v546 = vld [vmem:[%s1 + $0x58] sm:$0xff]
      %v547 = vld [vmem:[%s1 + $0x60] sm:$0xff]
      %v548 = vld [vmem:[%s1 + $0x68] sm:$0xff]
      %v549 = vld [vmem:[%s1 + $0x70] sm:$0xff]
      %v550 = vld [vmem:[%s1 + $0x78] sm:$0xff]
      %v551 = vld [vmem:[%s1 + $0x80] sm:$0xff]
      %v552 = vld [vmem:[%s1 + $0x88] sm:$0xff]
      %v553 = vld [vmem:[%s1 + $0x90] sm:$0xff]
      %v554 = vld [vmem:[%s1 + $0x98] sm:$0xff]
      %v555 = vld [vmem:[%s1 + $0xa0] sm:$0xff]
      %v556 = vld [vmem:[%s1 + $0xa8] sm:$0xff]
      %v557 = vld [vmem:[%s1 + $0xb0] sm:$0xff]
      %v558 = vld [vmem:[%s1 + $0xb8] sm:$0xff]
      %v559 = vld [vmem:[%s1 + $0xc0] sm:$0xff]
      %v560 = vld [vmem:[%s1 + $0xc8] sm:$0xff]
      %v561 = vld [vmem:[%s1 + $0xd0] sm:$0xff]
      %v562 = vld [vmem:[%s1 + $0xd8] sm:$0xff]
      %v563 = vld [vmem:[%s1 + $0xe0] sm:$0xff]
      %v564 = vld [vmem:[%s1 + $0xe8] sm:$0xff]
      %v565 = vld [vmem:[%s1 + $0xf0] sm:$0xff]
      %v566 = vld [vmem:[%s1 + $0xf8] sm:$0xff]
      %v567 = vld [vmem:[%s1 + $0x100] sm:$0xff]
      %v568 = vld [vmem:[%s1 + $0x108] sm:$0xff]
      %v569 = vld [vmem:[%s1 + $0x110] sm:$0xff]
      %v570 = vld [vmem:[%s1 + $0x118] sm:$0xff]
      %572 = vset.pattern.permute.xlu0 0
      %573 = vperm.xlu0 %572, %v535
      %v574 = vpop.permute.xlu0 %573
      %577 = vset.pattern.permute.xlu0 0
      %578 = vperm.xlu0 %577, %v536
      %v579 = vpop.permute.xlu0 %578
      %582 = vset.pattern.permute.xlu0 0
      %583 = vperm.xlu0 %582, %v537
      %v584 = vpop.permute.xlu0 %583
      %587 = vset.pattern.permute.xlu0 0
      %588 = vperm.xlu0 %587, %v538
      %v589 = vpop.permute.xlu0 %588
      %592 = vset.pattern.permute.xlu0 0
      %593 = vperm.xlu0 %592, %v539
      %v594 = vpop.permute.xlu0 %593
      %597 = vset.pattern.permute.xlu0 0
      %598 = vperm.xlu0 %597, %v540
      %v599 = vpop.permute.xlu0 %598
      %602 = vset.pattern.permute.xlu0 0
      %603 = vperm.xlu0 %602, %v541
      %v604 = vpop.permute.xlu0 %603
      %607 = vset.pattern.permute.xlu0 0
      %608 = vperm.xlu0 %607, %v542
      %v609 = vpop.permute.xlu0 %608
      %612 = vset.pattern.permute.xlu0 0
      %613 = vperm.xlu0 %612, %v543
      %v614 = vpop.permute.xlu0 %613
      %617 = vset.pattern.permute.xlu0 0
      %618 = vperm.xlu0 %617, %v544
      %v619 = vpop.permute.xlu0 %618
      %622 = vset.pattern.permute.xlu0 0
      %623 = vperm.xlu0 %622, %v545
      %v624 = vpop.permute.xlu0 %623
      %627 = vset.pattern.permute.xlu0 0
      %628 = vperm.xlu0 %627, %v546
      %v629 = vpop.permute.xlu0 %628
      %632 = vset.pattern.permute.xlu0 0
      %633 = vperm.xlu0 %632, %v547
      %v634 = vpop.permute.xlu0 %633
      %637 = vset.pattern.permute.xlu0 0
      %638 = vperm.xlu0 %637, %v548
      %v639 = vpop.permute.xlu0 %638
      %642 = vset.pattern.permute.xlu0 0
      %643 = vperm.xlu0 %642, %v549
      %v644 = vpop.permute.xlu0 %643
      %647 = vset.pattern.permute.xlu0 0
      %648 = vperm.xlu0 %647, %v550
      %v649 = vpop.permute.xlu0 %648
      %652 = vset.pattern.permute.xlu0 0
      %653 = vperm.xlu0 %652, %v551
      %v654 = vpop.permute.xlu0 %653
      %657 = vset.pattern.permute.xlu0 0
      %658 = vperm.xlu0 %657, %v552
      %v659 = vpop.permute.xlu0 %658
      %662 = vset.pattern.permute.xlu0 0
      %663 = vperm.xlu0 %662, %v553
      %v664 = vpop.permute.xlu0 %663
      %667 = vset.pattern.permute.xlu0 0
      %668 = vperm.xlu0 %667, %v554
      %v669 = vpop.permute.xlu0 %668
      %672 = vset.pattern.permute.xlu0 0
      %673 = vperm.xlu0 %672, %v555
      %v674 = vpop.permute.xlu0 %673
      %677 = vset.pattern.permute.xlu0 0
      %678 = vperm.xlu0 %677, %v556
      %v679 = vpop.permute.xlu0 %678
      %682 = vset.pattern.permute.xlu0 0
      %683 = vperm.xlu0 %682, %v557
      %v684 = vpop.permute.xlu0 %683
      %687 = vset.pattern.permute.xlu0 0
      %688 = vperm.xlu0 %687, %v558
      %v689 = vpop.permute.xlu0 %688
      %692 = vset.pattern.permute.xlu0 0
      %693 = vperm.xlu0 %692, %v559
      %v694 = vpop.permute.xlu0 %693
      %697 = vset.pattern.permute.xlu0 0
      %698 = vperm.xlu0 %697, %v560
      %v699 = vpop.permute.xlu0 %698
      %702 = vset.pattern.permute.xlu0 0
      %703 = vperm.xlu0 %702, %v561
      %v704 = vpop.permute.xlu0 %703
      %707 = vset.pattern.permute.xlu0 0
      %708 = vperm.xlu0 %707, %v562
      %v709 = vpop.permute.xlu0 %708
      %712 = vset.pattern.permute.xlu0 0
      %713 = vperm.xlu0 %712, %v563
      %v714 = vpop.permute.xlu0 %713
      %717 = vset.pattern.permute.xlu0 0
      %718 = vperm.xlu0 %717, %v564
      %v719 = vpop.permute.xlu0 %718
      %722 = vset.pattern.permute.xlu0 0
      %723 = vperm.xlu0 %722, %v565
      %v724 = vpop.permute.xlu0 %723
      %727 = vset.pattern.permute.xlu0 0
      %728 = vperm.xlu0 %727, %v566
      %v729 = vpop.permute.xlu0 %728
      %732 = vset.pattern.permute.xlu0 0
      %733 = vperm.xlu0 %732, %v567
      %v734 = vpop.permute.xlu0 %733
      %737 = vset.pattern.permute.xlu0 0
      %738 = vperm.xlu0 %737, %v568
      %v739 = vpop.permute.xlu0 %738
      %742 = vset.pattern.permute.xlu0 0
      %743 = vperm.xlu0 %742, %v569
      %v744 = vpop.permute.xlu0 %743
      %747 = vset.pattern.permute.xlu0 0
      %748 = vperm.xlu0 %747, %v570
      %v749 = vpop.permute.xlu0 %748
      %v751 = vmul.f32 %v428, %v574
      %v752 = vmul.f32 %v431, %v579
      %v753 = vmul.f32 %v434, %v584
      %v754 = vmul.f32 %v437, %v589
      %v755 = vmul.f32 %v440, %v594
      %v756 = vmul.f32 %v443, %v599
      %v757 = vmul.f32 %v446, %v604
      %v758 = vmul.f32 %v449, %v609
      %v759 = vmul.f32 %v452, %v614
      %v760 = vmul.f32 %v455, %v619
      %v761 = vmul.f32 %v458, %v624
      %v762 = vmul.f32 %v461, %v629
      %v763 = vmul.f32 %v464, %v634
      %v764 = vmul.f32 %v467, %v639
      %v765 = vmul.f32 %v470, %v644
      %v766 = vmul.f32 %v473, %v649
      %v767 = vmul.f32 %v476, %v654
      %v768 = vmul.f32 %v479, %v659
      %v769 = vmul.f32 %v482, %v664
      %v770 = vmul.f32 %v485, %v669
      %v771 = vmul.f32 %v488, %v674
      %v772 = vmul.f32 %v491, %v679
      %v773 = vmul.f32 %v494, %v684
      %v774 = vmul.f32 %v497, %v689
      %v775 = vmul.f32 %v500, %v694
      %v776 = vmul.f32 %v503, %v699
      %v777 = vmul.f32 %v506, %v704
      %v778 = vmul.f32 %v509, %v709
      %v779 = vmul.f32 %v512, %v714
      %v780 = vmul.f32 %v515, %v719
      %v781 = vmul.f32 %v518, %v724
      %v782 = vmul.f32 %v521, %v729
      %v783 = vmul.f32 %v524, %v734
      %v784 = vmul.f32 %v527, %v739
      %v785 = vmul.f32 %v530, %v744
      %v786 = vmul.f32 %v533, %v749
      %vm787 = vcmask 130048
      %788 = vst.msk [vmem:[#allocation2] sm:$0xff] %vm787, 0.0
      %789 = vst.msk [vmem:[#allocation2 + $0x8] sm:$0xff] %vm787, 0.0
      %790 = vst.msk [vmem:[#allocation2 + $0x10] sm:$0xff] %vm787, 0.0
      %791 = vst.msk [vmem:[#allocation2 + $0x18] sm:$0xff] %vm787, 0.0
      %792 = vst.msk [vmem:[#allocation2 + $0x20] sm:$0xff] %vm787, 0.0
      %793 = vst.msk [vmem:[#allocation2 + $0x28] sm:$0xff] %vm787, 0.0
      %794 = vst.msk [vmem:[#allocation2 + $0x30] sm:$0xff] %vm787, 0.0
      %795 = vst.msk [vmem:[#allocation2 + $0x38] sm:$0xff] %vm787, 0.0
      %796 = vst.msk [vmem:[#allocation2 + $0x40] sm:$0xff] %vm787, 0.0
      %797 = vst.msk [vmem:[#allocation2 + $0x48] sm:$0xff] %vm787, 0.0
      %798 = vst.msk [vmem:[#allocation2 + $0x50] sm:$0xff] %vm787, 0.0
      %799 = vst.msk [vmem:[#allocation2 + $0x58] sm:$0xff] %vm787, 0.0
      %800 = vst.msk [vmem:[#allocation2 + $0x60] sm:$0xff] %vm787, 0.0
      %801 = vst.msk [vmem:[#allocation2 + $0x68] sm:$0xff] %vm787, 0.0
      %802 = vst.msk [vmem:[#allocation2 + $0x70] sm:$0xff] %vm787, 0.0
      %803 = vst.msk [vmem:[#allocation2 + $0x78] sm:$0xff] %vm787, 0.0
      %804 = vst.msk [vmem:[#allocation2 + $0x80] sm:$0xff] %vm787, 0.0
      %805 = vst.msk [vmem:[#allocation2 + $0x88] sm:$0xff] %vm787, 0.0
      %806 = vst.msk [vmem:[#allocation2 + $0x90] sm:$0xff] %vm787, 0.0
      %807 = vst.msk [vmem:[#allocation2 + $0x98] sm:$0xff] %vm787, 0.0
      %808 = vst.msk [vmem:[#allocation2 + $0xa0] sm:$0xff] %vm787, 0.0
      %809 = vst.msk [vmem:[#allocation2 + $0xa8] sm:$0xff] %vm787, 0.0
      %810 = vst.msk [vmem:[#allocation2 + $0xb0] sm:$0xff] %vm787, 0.0
      %811 = vst.msk [vmem:[#allocation2 + $0xb8] sm:$0xff] %vm787, 0.0
      %812 = vst.msk [vmem:[#allocation2 + $0xc0] sm:$0xff] %vm787, 0.0
      %813 = vst.msk [vmem:[#allocation2 + $0xc8] sm:$0xff] %vm787, 0.0
      %814 = vst.msk [vmem:[#allocation2 + $0xd0] sm:$0xff] %vm787, 0.0
      %815 = vst.msk [vmem:[#allocation2 + $0xd8] sm:$0xff] %vm787, 0.0
      %816 = vst.msk [vmem:[#allocation2 + $0xe0] sm:$0xff] %vm787, 0.0
      %817 = vst.msk [vmem:[#allocation2 + $0xe8] sm:$0xff] %vm787, 0.0
      %818 = vst.msk [vmem:[#allocation2 + $0xf0] sm:$0xff] %vm787, 0.0
      %819 = vst.msk [vmem:[#allocation2 + $0xf8] sm:$0xff] %vm787, 0.0
      %820 = vst.msk [vmem:[#allocation2 + $0x100] sm:$0xff] %vm787, 0.0
      %821 = vst.msk [vmem:[#allocation2 + $0x108] sm:$0xff] %vm787, 0.0
      %822 = vst.msk [vmem:[#allocation2 + $0x110] sm:$0xff] %vm787, 0.0
      %823 = vst.msk [vmem:[#allocation2 + $0x118] sm:$0xff] %vm787, 0.0
      %824 = vst.msk [vmem:[#allocation2 + $0x120] sm:$0xff] %vm787, 0.0
      %825 = vst.msk [vmem:[#allocation2 + $0x128] sm:$0xff] %vm787, 0.0
      %826 = vst.msk [vmem:[#allocation2 + $0x130] sm:$0xff] %vm787, 0.0
      %827 = vst.msk [vmem:[#allocation2 + $0x138] sm:$0xff] %vm787, 0.0
      %828 = vst.msk [vmem:[#allocation2 + $0x140] sm:$0xff] %vm787, 0.0
      %829 = vst.msk [vmem:[#allocation2 + $0x148] sm:$0xff] %vm787, 0.0
      %830 = vst.msk [vmem:[#allocation2 + $0x150] sm:$0xff] %vm787, 0.0
      %vm831 = vcmask 124928
      %832 = vst.msk [vmem:[#allocation2 + $0x158] sm:$0x7] %vm831, 0.0
      %833 = vst.msk [vmem:[#allocation2 + $0x18] sm:$0xff] %vm787, %v751
      %834 = vst.msk [vmem:[#allocation2 + $0x20] sm:$0xff] %vm787, %v752
      %835 = vst.msk [vmem:[#allocation2 + $0x28] sm:$0xff] %vm787, %v753
      %836 = vst.msk [vmem:[#allocation2 + $0x30] sm:$0xff] %vm787, %v754
      %837 = vst.msk [vmem:[#allocation2 + $0x38] sm:$0xff] %vm787, %v755
      %838 = vst.msk [vmem:[#allocation2 + $0x40] sm:$0xff] %vm787, %v756
      %839 = vst.msk [vmem:[#allocation2 + $0x48] sm:$0xff] %vm787, %v757
      %840 = vst.msk [vmem:[#allocation2 + $0x50] sm:$0xff] %vm787, %v758
      %841 = vst.msk [vmem:[#allocation2 + $0x58] sm:$0xff] %vm787, %v759
      %842 = vst.msk [vmem:[#allocation2 + $0x60] sm:$0xff] %vm787, %v760
      %843 = vst.msk [vmem:[#allocation2 + $0x68] sm:$0xff] %vm787, %v761
      %844 = vst.msk [vmem:[#allocation2 + $0x70] sm:$0xff] %vm787, %v762
      %845 = vst.msk [vmem:[#allocation2 + $0x78] sm:$0xff] %vm787, %v763
      %846 = vst.msk [vmem:[#allocation2 + $0x80] sm:$0xff] %vm787, %v764
      %847 = vst.msk [vmem:[#allocation2 + $0x88] sm:$0xff] %vm787, %v765
      %848 = vst.msk [vmem:[#allocation2 + $0x90] sm:$0xff] %vm787, %v766
      %849 = vst.msk [vmem:[#allocation2 + $0x98] sm:$0xff] %vm787, %v767
      %850 = vst.msk [vmem:[#allocation2 + $0xa0] sm:$0xff] %vm787, %v768
      %851 = vst.msk [vmem:[#allocation2 + $0xa8] sm:$0xff] %vm787, %v769
      %852 = vst.msk [vmem:[#allocation2 + $0xb0] sm:$0xff] %vm787, %v770
      %853 = vst.msk [vmem:[#allocation2 + $0xb8] sm:$0xff] %vm787, %v771
      %854 = vst.msk [vmem:[#allocation2 + $0xc0] sm:$0xff] %vm787, %v772
      %855 = vst.msk [vmem:[#allocation2 + $0xc8] sm:$0xff] %vm787, %v773
      %856 = vst.msk [vmem:[#allocation2 + $0xd0] sm:$0xff] %vm787, %v774
      %857 = vst.msk [vmem:[#allocation2 + $0xd8] sm:$0xff] %vm787, %v775
      %858 = vst.msk [vmem:[#allocation2 + $0xe0] sm:$0xff] %vm787, %v776
      %859 = vst.msk [vmem:[#allocation2 + $0xe8] sm:$0xff] %vm787, %v777
      %860 = vst.msk [vmem:[#allocation2 + $0xf0] sm:$0xff] %vm787, %v778
      %861 = vst.msk [vmem:[#allocation2 + $0xf8] sm:$0xff] %vm787, %v779
      %862 = vst.msk [vmem:[#allocation2 + $0x100] sm:$0xff] %vm787, %v780
      %863 = vst.msk [vmem:[#allocation2 + $0x108] sm:$0xff] %vm787, %v781
      %864 = vst.msk [vmem:[#allocation2 + $0x110] sm:$0xff] %vm787, %v782
      %865 = vst.msk [vmem:[#allocation2 + $0x118] sm:$0xff] %vm787, %v783
      %866 = vst.msk [vmem:[#allocation2 + $0x120] sm:$0xff] %vm787, %v784
      %867 = vst.msk [vmem:[#allocation2 + $0x128] sm:$0xff] %vm787, %v785
      %868 = vst.msk [vmem:[#allocation2 + $0x130] sm:$0xff] %vm787, %v786
      %v869 = vld [vmem:[#allocation2 + $0x5] sm:$0xff]
      %v870 = vld [vmem:[#allocation2 + $0xd] sm:$0xff]
      %v871 = vld [vmem:[#allocation2 + $0x15] sm:$0xff]
      %v872 = vld [vmem:[#allocation2 + $0x1d] sm:$0xff]
      %v873 = vld [vmem:[#allocation2 + $0x25] sm:$0xff]
      %v874 = vld [vmem:[#allocation2 + $0x2d] sm:$0xff]
      %v875 = vld [vmem:[#allocation2 + $0x35] sm:$0xff]
      %v876 = vld [vmem:[#allocation2 + $0x3d] sm:$0xff]
      %v877 = vld [vmem:[#allocation2 + $0x45] sm:$0xff]
      %v878 = vld [vmem:[#allocation2 + $0x4d] sm:$0xff]
      %v879 = vld [vmem:[#allocation2 + $0x55] sm:$0xff]
      %v880 = vld [vmem:[#allocation2 + $0x5d] sm:$0xff]
      %v881 = vld [vmem:[#allocation2 + $0x65] sm:$0xff]
      %v882 = vld [vmem:[#allocation2 + $0x6d] sm:$0xff]
      %v883 = vld [vmem:[#allocation2 + $0x75] sm:$0xff]
      %v884 = vld [vmem:[#allocation2 + $0x7d] sm:$0xff]
      %v885 = vld [vmem:[#allocation2 + $0x85] sm:$0xff]
      %v886 = vld [vmem:[#allocation2 + $0x8d] sm:$0xff]
      %v887 = vld [vmem:[#allocation2 + $0x95] sm:$0xff]
      %v888 = vld [vmem:[#allocation2 + $0x9d] sm:$0xff]
      %v889 = vld [vmem:[#allocation2 + $0xa5] sm:$0xff]
      %v890 = vld [vmem:[#allocation2 + $0xad] sm:$0xff]
      %v891 = vld [vmem:[#allocation2 + $0xb5] sm:$0xff]
      %v892 = vld [vmem:[#allocation2 + $0xbd] sm:$0xff]
      %v893 = vld [vmem:[#allocation2 + $0xc5] sm:$0xff]
      %v894 = vld [vmem:[#allocation2 + $0xcd] sm:$0xff]
      %v895 = vld [vmem:[#allocation2 + $0xd5] sm:$0xff]
      %v896 = vld [vmem:[#allocation2 + $0xdd] sm:$0xff]
      %v897 = vld [vmem:[#allocation2 + $0xe5] sm:$0xff]
      %v898 = vld [vmem:[#allocation2 + $0xed] sm:$0xff]
      %v899 = vld [vmem:[#allocation2 + $0xf5] sm:$0xff]
      %v900 = vld [vmem:[#allocation2 + $0xfd] sm:$0xff]
      %v901 = vld [vmem:[#allocation2 + $0x105] sm:$0xff]
      %v902 = vld [vmem:[#allocation2 + $0x10d] sm:$0xff]
      %v903 = vld [vmem:[#allocation2 + $0x115] sm:$0xff]
      %v904 = vld [vmem:[#allocation2 + $0x11d] sm:$0xff]
      %v905 = vld [vmem:[#allocation2 + $0x6] sm:$0xff]
      %v906 = vld [vmem:[#allocation2 + $0xe] sm:$0xff]
      %v907 = vld [vmem:[#allocation2 + $0x16] sm:$0xff]
      %v908 = vld [vmem:[#allocation2 + $0x1e] sm:$0xff]
      %v909 = vld [vmem:[#allocation2 + $0x26] sm:$0xff]
      %v910 = vld [vmem:[#allocation2 + $0x2e] sm:$0xff]
      %v911 = vld [vmem:[#allocation2 + $0x36] sm:$0xff]
      %v912 = vld [vmem:[#allocation2 + $0x3e] sm:$0xff]
      %v913 = vld [vmem:[#allocation2 + $0x46] sm:$0xff]
      %v914 = vld [vmem:[#allocation2 + $0x4e] sm:$0xff]
      %v915 = vld [vmem:[#allocation2 + $0x56] sm:$0xff]
      %v916 = vld [vmem:[#allocation2 + $0x5e] sm:$0xff]
      %v917 = vld [vmem:[#allocation2 + $0x66] sm:$0xff]
      %v918 = vld [vmem:[#allocation2 + $0x6e] sm:$0xff]
      %v919 = vld [vmem:[#allocation2 + $0x76] sm:$0xff]
      %v920 = vld [vmem:[#allocation2 + $0x7e] sm:$0xff]
      %v921 = vld [vmem:[#allocation2 + $0x86] sm:$0xff]
      %v922 = vld [vmem:[#allocation2 + $0x8e] sm:$0xff]
      %v923 = vld [vmem:[#allocation2 + $0x96] sm:$0xff]
      %v924 = vld [vmem:[#allocation2 + $0x9e] sm:$0xff]
      %v925 = vld [vmem:[#allocation2 + $0xa6] sm:$0xff]
      %v926 = vld [vmem:[#allocation2 + $0xae] sm:$0xff]
      %v927 = vld [vmem:[#allocation2 + $0xb6] sm:$0xff]
      %v928 = vld [vmem:[#allocation2 + $0xbe] sm:$0xff]
      %v929 = vld [vmem:[#allocation2 + $0xc6] sm:$0xff]
      %v930 = vld [vmem:[#allocation2 + $0xce] sm:$0xff]
      %v931 = vld [vmem:[#allocation2 + $0xd6] sm:$0xff]
      %v932 = vld [vmem:[#allocation2 + $0xde] sm:$0xff]
      %v933 = vld [vmem:[#allocation2 + $0xe6] sm:$0xff]
      %v934 = vld [vmem:[#allocation2 + $0xee] sm:$0xff]
      %v935 = vld [vmem:[#allocation2 + $0xf6] sm:$0xff]
      %v936 = vld [vmem:[#allocation2 + $0xfe] sm:$0xff]
      %v937 = vld [vmem:[#allocation2 + $0x106] sm:$0xff]
      %v938 = vld [vmem:[#allocation2 + $0x10e] sm:$0xff]
      %v939 = vld [vmem:[#allocation2 + $0x116] sm:$0xff]
      %v940 = vld [vmem:[#allocation2 + $0x11e] sm:$0xff]
      %v941 = vld [vmem:[#allocation2 + $0x7] sm:$0xff]
      %v942 = vld [vmem:[#allocation2 + $0xf] sm:$0xff]
      %v943 = vld [vmem:[#allocation2 + $0x17] sm:$0xff]
      %v944 = vld [vmem:[#allocation2 + $0x1f] sm:$0xff]
      %v945 = vld [vmem:[#allocation2 + $0x27] sm:$0xff]
      %v946 = vld [vmem:[#allocation2 + $0x2f] sm:$0xff]
      %v947 = vld [vmem:[#allocation2 + $0x37] sm:$0xff]
      %v948 = vld [vmem:[#allocation2 + $0x3f] sm:$0xff]
      %v949 = vld [vmem:[#allocation2 + $0x47] sm:$0xff]
      %v950 = vld [vmem:[#allocation2 + $0x4f] sm:$0xff]
      %v951 = vld [vmem:[#allocation2 + $0x57] sm:$0xff]
      %v952 = vld [vmem:[#allocation2 + $0x5f] sm:$0xff]
      %v953 = vld [vmem:[#allocation2 + $0x67] sm:$0xff]
      %v954 = vld [vmem:[#allocation2 + $0x6f] sm:$0xff]
      %v955 = vld [vmem:[#allocation2 + $0x77] sm:$0xff]
      %v956 = vld [vmem:[#allocation2 + $0x7f] sm:$0xff]
      %v957 = vld [vmem:[#allocation2 + $0x87] sm:$0xff]
      %v958 = vld [vmem:[#allocation2 + $0x8f] sm:$0xff]
      %v959 = vld [vmem:[#allocation2 + $0x97] sm:$0xff]
      %v960 = vld [vmem:[#allocation2 + $0x9f] sm:$0xff]
      %v961 = vld [vmem:[#allocation2 + $0xa7] sm:$0xff]
      %v962 = vld [vmem:[#allocation2 + $0xaf] sm:$0xff]
      %v963 = vld [vmem:[#allocation2 + $0xb7] sm:$0xff]
      %v964 = vld [vmem:[#allocation2 + $0xbf] sm:$0xff]
      %v965 = vld [vmem:[#allocation2 + $0xc7] sm:$0xff]
      %v966 = vld [vmem:[#allocation2 + $0xcf] sm:$0xff]
      %v967 = vld [vmem:[#allocation2 + $0xd7] sm:$0xff]
      %v968 = vld [vmem:[#allocation2 + $0xdf] sm:$0xff]
      %v969 = vld [vmem:[#allocation2 + $0xe7] sm:$0xff]
      %v970 = vld [vmem:[#allocation2 + $0xef] sm:$0xff]
      %v971 = vld [vmem:[#allocation2 + $0xf7] sm:$0xff]
      %v972 = vld [vmem:[#allocation2 + $0xff] sm:$0xff]
      %v973 = vld [vmem:[#allocation2 + $0x107] sm:$0xff]
      %v974 = vld [vmem:[#allocation2 + $0x10f] sm:$0xff]
      %v975 = vld [vmem:[#allocation2 + $0x117] sm:$0xff]
      %v976 = vld [vmem:[#allocation2 + $0x11f] sm:$0xff]
      %v977 = vld [vmem:[#allocation2 + $0x127] sm:$0xff]
      %v978 = vld [vmem:[#allocation2 + $0x12f] sm:$0xff]
      %v979 = vld [vmem:[#allocation2 + $0x18] sm:$0xff]
      %v980 = vld [vmem:[#allocation2 + $0x20] sm:$0xff]
      %v981 = vld [vmem:[#allocation2 + $0x28] sm:$0xff]
      %v982 = vld [vmem:[#allocation2 + $0x30] sm:$0xff]
      %v983 = vld [vmem:[#allocation2 + $0x38] sm:$0xff]
      %v984 = vld [vmem:[#allocation2 + $0x40] sm:$0xff]
      %v985 = vld [vmem:[#allocation2 + $0x48] sm:$0xff]
      %v986 = vld [vmem:[#allocation2 + $0x50] sm:$0xff]
      %v987 = vld [vmem:[#allocation2 + $0x58] sm:$0xff]
      %v988 = vld [vmem:[#allocation2 + $0x60] sm:$0xff]
      %v989 = vld [vmem:[#allocation2 + $0x68] sm:$0xff]
      %v990 = vld [vmem:[#allocation2 + $0x70] sm:$0xff]
      %v991 = vld [vmem:[#allocation2 + $0x78] sm:$0xff]
      %v992 = vld [vmem:[#allocation2 + $0x80] sm:$0xff]
      %v993 = vld [vmem:[#allocation2 + $0x88] sm:$0xff]
      %v994 = vld [vmem:[#allocation2 + $0x90] sm:$0xff]
      %v995 = vld [vmem:[#allocation2 + $0x98] sm:$0xff]
      %v996 = vld [vmem:[#allocation2 + $0xa0] sm:$0xff]
      %v997 = vld [vmem:[#allocation2 + $0xa8] sm:$0xff]
      %v998 = vld [vmem:[#allocation2 + $0xb0] sm:$0xff]
      %v999 = vld [vmem:[#allocation2 + $0xb8] sm:$0xff]
      %v1000 = vld [vmem:[#allocation2 + $0xc0] sm:$0xff]
      %v1001 = vld [vmem:[#allocation2 + $0xc8] sm:$0xff]
      %v1002 = vld [vmem:[#allocation2 + $0xd0] sm:$0xff]
      %v1003 = vld [vmem:[#allocation2 + $0xd8] sm:$0xff]
      %v1004 = vld [vmem:[#allocation2 + $0xe0] sm:$0xff]
      %v1005 = vld [vmem:[#allocation2 + $0xe8] sm:$0xff]
      %v1006 = vld [vmem:[#allocation2 + $0xf0] sm:$0xff]
      %v1007 = vld [vmem:[#allocation2 + $0xf8] sm:$0xff]
      %v1008 = vld [vmem:[#allocation2 + $0x100] sm:$0xff]
      %v1009 = vld [vmem:[#allocation2 + $0x108] sm:$0xff]
      %v1010 = vld [vmem:[#allocation2 + $0x110] sm:$0xff]
      %v1011 = vld [vmem:[#allocation2 + $0x118] sm:$0xff]
      %v1012 = vld [vmem:[#allocation2 + $0x120] sm:$0xff]
      %v1013 = vld [vmem:[#allocation2 + $0x128] sm:$0xff]
      %v1014 = vld [vmem:[#allocation2 + $0x130] sm:$0xff]
      %v1015 = vld [vmem:[#allocation2 + $0x19] sm:$0xff]
      %v1016 = vld [vmem:[#allocation2 + $0x21] sm:$0xff]
      %v1017 = vld [vmem:[#allocation2 + $0x29] sm:$0xff]
      %v1018 = vld [vmem:[#allocation2 + $0x31] sm:$0xff]
      %v1019 = vld [vmem:[#allocation2 + $0x39] sm:$0xff]
      %v1020 = vld [vmem:[#allocation2 + $0x41] sm:$0xff]
      %v1021 = vld [vmem:[#allocation2 + $0x49] sm:$0xff]
      %v1022 = vld [vmem:[#allocation2 + $0x51] sm:$0xff]
      %v1023 = vld [vmem:[#allocation2 + $0x59] sm:$0xff]
      %v1024 = vld [vmem:[#allocation2 + $0x61] sm:$0xff]
      %v1025 = vld [vmem:[#allocation2 + $0x69] sm:$0xff]
      %v1026 = vld [vmem:[#allocation2 + $0x71] sm:$0xff]
      %v1027 = vld [vmem:[#allocation2 + $0x79] sm:$0xff]
      %v1028 = vld [vmem:[#allocation2 + $0x81] sm:$0xff]
      %v1029 = vld [vmem:[#allocation2 + $0x89] sm:$0xff]
      %v1030 = vld [vmem:[#allocation2 + $0x91] sm:$0xff]
      %v1031 = vld [vmem:[#allocation2 + $0x99] sm:$0xff]
      %v1032 = vld [vmem:[#allocation2 + $0xa1] sm:$0xff]
      %v1033 = vld [vmem:[#allocation2 + $0xa9] sm:$0xff]
      %v1034 = vld [vmem:[#allocation2 + $0xb1] sm:$0xff]
      %v1035 = vld [vmem:[#allocation2 + $0xb9] sm:$0xff]
      %v1036 = vld [vmem:[#allocation2 + $0xc1] sm:$0xff]
      %v1037 = vld [vmem:[#allocation2 + $0xc9] sm:$0xff]
      %v1038 = vld [vmem:[#allocation2 + $0xd1] sm:$0xff]
      %v1039 = vld [vmem:[#allocation2 + $0xd9] sm:$0xff]
      %v1040 = vld [vmem:[#allocation2 + $0xe1] sm:$0xff]
      %v1041 = vld [vmem:[#allocation2 + $0xe9] sm:$0xff]
      %v1042 = vld [vmem:[#allocation2 + $0xf1] sm:$0xff]
      %v1043 = vld [vmem:[#allocation2 + $0xf9] sm:$0xff]
      %v1044 = vld [vmem:[#allocation2 + $0x101] sm:$0xff]
      %v1045 = vld [vmem:[#allocation2 + $0x109] sm:$0xff]
      %v1046 = vld [vmem:[#allocation2 + $0x111] sm:$0xff]
      %v1047 = vld [vmem:[#allocation2 + $0x119] sm:$0xff]
      %v1048 = vld [vmem:[#allocation2 + $0x121] sm:$0xff]
      %v1049 = vld [vmem:[#allocation2 + $0x129] sm:$0xff]
      %v1050 = vld [vmem:[#allocation2 + $0x131] sm:$0xff]
      %v1051 = vld [vmem:[#allocation2 + $0x139] sm:$0xff]
      %v1052 = vld [vmem:[#allocation2 + $0x141] sm:$0xff]
      %v1053 = vld [vmem:[#allocation2 + $0x2a] sm:$0xff]
      %v1054 = vld [vmem:[#allocation2 + $0x32] sm:$0xff]
      %v1055 = vld [vmem:[#allocation2 + $0x3a] sm:$0xff]
      %v1056 = vld [vmem:[#allocation2 + $0x42] sm:$0xff]
      %v1057 = vld [vmem:[#allocation2 + $0x4a] sm:$0xff]
      %v1058 = vld [vmem:[#allocation2 + $0x52] sm:$0xff]
      %v1059 = vld [vmem:[#allocation2 + $0x5a] sm:$0xff]
      %v1060 = vld [vmem:[#allocation2 + $0x62] sm:$0xff]
      %v1061 = vld [vmem:[#allocation2 + $0x6a] sm:$0xff]
      %v1062 = vld [vmem:[#allocation2 + $0x72] sm:$0xff]
      %v1063 = vld [vmem:[#allocation2 + $0x7a] sm:$0xff]
      %v1064 = vld [vmem:[#allocation2 + $0x82] sm:$0xff]
      %v1065 = vld [vmem:[#allocation2 + $0x8a] sm:$0xff]
      %v1066 = vld [vmem:[#allocation2 + $0x92] sm:$0xff]
      %v1067 = vld [vmem:[#allocation2 + $0x9a] sm:$0xff]
      %v1068 = vld [vmem:[#allocation2 + $0xa2] sm:$0xff]
      %v1069 = vld [vmem:[#allocation2 + $0xaa] sm:$0xff]
      %v1070 = vld [vmem:[#allocation2 + $0xb2] sm:$0xff]
      %v1071 = vld [vmem:[#allocation2 + $0xba] sm:$0xff]
      %v1072 = vld [vmem:[#allocation2 + $0xc2] sm:$0xff]
      %v1073 = vld [vmem:[#allocation2 + $0xca] sm:$0xff]
      %v1074 = vld [vmem:[#allocation2 + $0xd2] sm:$0xff]
      %v1075 = vld [vmem:[#allocation2 + $0xda] sm:$0xff]
      %v1076 = vld [vmem:[#allocation2 + $0xe2] sm:$0xff]
      %v1077 = vld [vmem:[#allocation2 + $0xea] sm:$0xff]
      %v1078 = vld [vmem:[#allocation2 + $0xf2] sm:$0xff]
      %v1079 = vld [vmem:[#allocation2 + $0xfa] sm:$0xff]
      %v1080 = vld [vmem:[#allocation2 + $0x102] sm:$0xff]
      %v1081 = vld [vmem:[#allocation2 + $0x10a] sm:$0xff]
      %v1082 = vld [vmem:[#allocation2 + $0x112] sm:$0xff]
      %v1083 = vld [vmem:[#allocation2 + $0x11a] sm:$0xff]
      %v1084 = vld [vmem:[#allocation2 + $0x122] sm:$0xff]
      %v1085 = vld [vmem:[#allocation2 + $0x12a] sm:$0xff]
      %v1086 = vld [vmem:[#allocation2 + $0x132] sm:$0xff]
      %v1087 = vld [vmem:[#allocation2 + $0x13a] sm:$0xff]
      %v1088 = vld [vmem:[#allocation2 + $0x142] sm:$0xff]
      %v1089 = vld [vmem:[#allocation2 + $0x2b] sm:$0xff]
      %v1090 = vld [vmem:[#allocation2 + $0x33] sm:$0xff]
      %v1091 = vld [vmem:[#allocation2 + $0x3b] sm:$0xff]
      %v1092 = vld [vmem:[#allocation2 + $0x43] sm:$0xff]
      %v1093 = vld [vmem:[#allocation2 + $0x4b] sm:$0xff]
      %v1094 = vld [vmem:[#allocation2 + $0x53] sm:$0xff]
      %v1095 = vld [vmem:[#allocation2 + $0x5b] sm:$0xff]
      %v1096 = vld [vmem:[#allocation2 + $0x63] sm:$0xff]
      %v1097 = vld [vmem:[#allocation2 + $0x6b] sm:$0xff]
      %v1098 = vld [vmem:[#allocation2 + $0x73] sm:$0xff]
      %v1099 = vld [vmem:[#allocation2 + $0x7b] sm:$0xff]
      %v1100 = vld [vmem:[#allocation2 + $0x83] sm:$0xff]
      %v1101 = vld [vmem:[#allocation2 + $0x8b] sm:$0xff]
      %v1102 = vld [vmem:[#allocation2 + $0x93] sm:$0xff]
      %v1103 = vld [vmem:[#allocation2 + $0x9b] sm:$0xff]
      %v1104 = vld [vmem:[#allocation2 + $0xa3] sm:$0xff]
      %v1105 = vld [vmem:[#allocation2 + $0xab] sm:$0xff]
      %v1106 = vld [vmem:[#allocation2 + $0xb3] sm:$0xff]
      %v1107 = vld [vmem:[#allocation2 + $0xbb] sm:$0xff]
      %v1108 = vld [vmem:[#allocation2 + $0xc3] sm:$0xff]
      %v1109 = vld [vmem:[#allocation2 + $0xcb] sm:$0xff]
      %v1110 = vld [vmem:[#allocation2 + $0xd3] sm:$0xff]
      %v1111 = vld [vmem:[#allocation2 + $0xdb] sm:$0xff]
      %v1112 = vld [vmem:[#allocation2 + $0xe3] sm:$0xff]
      %v1113 = vld [vmem:[#allocation2 + $0xeb] sm:$0xff]
      %v1114 = vld [vmem:[#allocation2 + $0xf3] sm:$0xff]
      %v1115 = vld [vmem:[#allocation2 + $0xfb] sm:$0xff]
      %v1116 = vld [vmem:[#allocation2 + $0x103] sm:$0xff]
      %v1117 = vld [vmem:[#allocation2 + $0x10b] sm:$0xff]
      %v1118 = vld [vmem:[#allocation2 + $0x113] sm:$0xff]
      %v1119 = vld [vmem:[#allocation2 + $0x11b] sm:$0xff]
      %v1120 = vld [vmem:[#allocation2 + $0x123] sm:$0xff]
      %v1121 = vld [vmem:[#allocation2 + $0x12b] sm:$0xff]
      %v1122 = vld [vmem:[#allocation2 + $0x133] sm:$0xff]
      %v1123 = vld [vmem:[#allocation2 + $0x13b] sm:$0xff]
      %v1124 = vld [vmem:[#allocation2 + $0x143] sm:$0xff]
      %1161 = vrot.lane.b32.xlu0 %v905, 16
      %v1162 = vpop.permute.xlu0 %1161
      %1163 = vrot.lane.b32.xlu0 %v906, 16
      %v1164 = vpop.permute.xlu0 %1163
      %1165 = vrot.lane.b32.xlu0 %v907, 16
      %v1166 = vpop.permute.xlu0 %1165
      %1167 = vrot.lane.b32.xlu0 %v908, 16
      %v1168 = vpop.permute.xlu0 %1167
      %1169 = vrot.lane.b32.xlu0 %v909, 16
      %v1170 = vpop.permute.xlu0 %1169
      %1171 = vrot.lane.b32.xlu0 %v910, 16
      %v1172 = vpop.permute.xlu0 %1171
      %1173 = vrot.lane.b32.xlu0 %v911, 16
      %v1174 = vpop.permute.xlu0 %1173
      %1175 = vrot.lane.b32.xlu0 %v912, 16
      %v1176 = vpop.permute.xlu0 %1175
      %1177 = vrot.lane.b32.xlu0 %v913, 16
      %v1178 = vpop.permute.xlu0 %1177
      %1179 = vrot.lane.b32.xlu0 %v914, 16
      %v1180 = vpop.permute.xlu0 %1179
      %1181 = vrot.lane.b32.xlu0 %v915, 16
      %v1182 = vpop.permute.xlu0 %1181
      %1183 = vrot.lane.b32.xlu0 %v916, 16
      %v1184 = vpop.permute.xlu0 %1183
      %1185 = vrot.lane.b32.xlu0 %v917, 16
      %v1186 = vpop.permute.xlu0 %1185
      %1187 = vrot.lane.b32.xlu0 %v918, 16
      %v1188 = vpop.permute.xlu0 %1187
      %1189 = vrot.lane.b32.xlu0 %v919, 16
      %v1190 = vpop.permute.xlu0 %1189
      %1191 = vrot.lane.b32.xlu0 %v920, 16
      %v1192 = vpop.permute.xlu0 %1191
      %1193 = vrot.lane.b32.xlu0 %v921, 16
      %v1194 = vpop.permute.xlu0 %1193
      %1195 = vrot.lane.b32.xlu0 %v922, 16
      %v1196 = vpop.permute.xlu0 %1195
      %1197 = vrot.lane.b32.xlu0 %v923, 16
      %v1198 = vpop.permute.xlu0 %1197
      %1199 = vrot.lane.b32.xlu0 %v924, 16
      %v1200 = vpop.permute.xlu0 %1199
      %1201 = vrot.lane.b32.xlu0 %v925, 16
      %v1202 = vpop.permute.xlu0 %1201
      %1203 = vrot.lane.b32.xlu0 %v926, 16
      %v1204 = vpop.permute.xlu0 %1203
      %1205 = vrot.lane.b32.xlu0 %v927, 16
      %v1206 = vpop.permute.xlu0 %1205
      %1207 = vrot.lane.b32.xlu0 %v928, 16
      %v1208 = vpop.permute.xlu0 %1207
      %1209 = vrot.lane.b32.xlu0 %v929, 16
      %v1210 = vpop.permute.xlu0 %1209
      %1211 = vrot.lane.b32.xlu0 %v930, 16
      %v1212 = vpop.permute.xlu0 %1211
      %1213 = vrot.lane.b32.xlu0 %v931, 16
      %v1214 = vpop.permute.xlu0 %1213
      %1215 = vrot.lane.b32.xlu0 %v932, 16
      %v1216 = vpop.permute.xlu0 %1215
      %1217 = vrot.lane.b32.xlu0 %v933, 16
      %v1218 = vpop.permute.xlu0 %1217
      %1219 = vrot.lane.b32.xlu0 %v934, 16
      %v1220 = vpop.permute.xlu0 %1219
      %1221 = vrot.lane.b32.xlu0 %v935, 16
      %v1222 = vpop.permute.xlu0 %1221
      %1223 = vrot.lane.b32.xlu0 %v936, 16
      %v1224 = vpop.permute.xlu0 %1223
      %1225 = vrot.lane.b32.xlu0 %v937, 16
      %v1226 = vpop.permute.xlu0 %1225
      %1227 = vrot.lane.b32.xlu0 %v938, 16
      %v1228 = vpop.permute.xlu0 %1227
      %1229 = vrot.lane.b32.xlu0 %v939, 16
      %v1230 = vpop.permute.xlu0 %1229
      %1231 = vrot.lane.b32.xlu0 %v940, 16
      %v1232 = vpop.permute.xlu0 %1231
      %1305 = vrot.lane.b32.xlu0 %v941, 32
      %v1306 = vpop.permute.xlu0 %1305
      %1307 = vrot.lane.b32.xlu0 %v942, 32
      %v1308 = vpop.permute.xlu0 %1307
      %1309 = vrot.lane.b32.xlu0 %v943, 32
      %v1310 = vpop.permute.xlu0 %1309
      %1311 = vrot.lane.b32.xlu0 %v944, 32
      %v1312 = vpop.permute.xlu0 %1311
      %1313 = vrot.lane.b32.xlu0 %v945, 32
      %v1314 = vpop.permute.xlu0 %1313
      %1315 = vrot.lane.b32.xlu0 %v946, 32
      %v1316 = vpop.permute.xlu0 %1315
      %1317 = vrot.lane.b32.xlu0 %v947, 32
      %v1318 = vpop.permute.xlu0 %1317
      %1319 = vrot.lane.b32.xlu0 %v948, 32
      %v1320 = vpop.permute.xlu0 %1319
      %1321 = vrot.lane.b32.xlu0 %v949, 32
      %v1322 = vpop.permute.xlu0 %1321
      %1323 = vrot.lane.b32.xlu0 %v950, 32
      %v1324 = vpop.permute.xlu0 %1323
      %1325 = vrot.lane.b32.xlu0 %v951, 32
      %v1326 = vpop.permute.xlu0 %1325
      %1327 = vrot.lane.b32.xlu0 %v952, 32
      %v1328 = vpop.permute.xlu0 %1327
      %1329 = vrot.lane.b32.xlu0 %v953, 32
      %v1330 = vpop.permute.xlu0 %1329
      %1331 = vrot.lane.b32.xlu0 %v954, 32
      %v1332 = vpop.permute.xlu0 %1331
      %1333 = vrot.lane.b32.xlu0 %v955, 32
      %v1334 = vpop.permute.xlu0 %1333
      %1335 = vrot.lane.b32.xlu0 %v956, 32
      %v1336 = vpop.permute.xlu0 %1335
      %1337 = vrot.lane.b32.xlu0 %v957, 32
      %v1338 = vpop.permute.xlu0 %1337
      %1339 = vrot.lane.b32.xlu0 %v958, 32
      %v1340 = vpop.permute.xlu0 %1339
      %1341 = vrot.lane.b32.xlu0 %v959, 32
      %v1342 = vpop.permute.xlu0 %1341
      %1343 = vrot.lane.b32.xlu0 %v960, 32
      %v1344 = vpop.permute.xlu0 %1343
      %1345 = vrot.lane.b32.xlu0 %v961, 32
      %v1346 = vpop.permute.xlu0 %1345
      %1347 = vrot.lane.b32.xlu0 %v962, 32
      %v1348 = vpop.permute.xlu0 %1347
      %1349 = vrot.lane.b32.xlu0 %v963, 32
      %v1350 = vpop.permute.xlu0 %1349
      %1351 = vrot.lane.b32.xlu0 %v964, 32
      %v1352 = vpop.permute.xlu0 %1351
      %1353 = vrot.lane.b32.xlu0 %v965, 32
      %v1354 = vpop.permute.xlu0 %1353
      %1355 = vrot.lane.b32.xlu0 %v966, 32
      %v1356 = vpop.permute.xlu0 %1355
      %1357 = vrot.lane.b32.xlu0 %v967, 32
      %v1358 = vpop.permute.xlu0 %1357
      %1359 = vrot.lane.b32.xlu0 %v968, 32
      %v1360 = vpop.permute.xlu0 %1359
      %1361 = vrot.lane.b32.xlu0 %v969, 32
      %v1362 = vpop.permute.xlu0 %1361
      %1363 = vrot.lane.b32.xlu0 %v970, 32
      %v1364 = vpop.permute.xlu0 %1363
      %1365 = vrot.lane.b32.xlu0 %v971, 32
      %v1366 = vpop.permute.xlu0 %1365
      %1367 = vrot.lane.b32.xlu0 %v972, 32
      %v1368 = vpop.permute.xlu0 %1367
      %1369 = vrot.lane.b32.xlu0 %v973, 32
      %v1370 = vpop.permute.xlu0 %1369
      %1371 = vrot.lane.b32.xlu0 %v974, 32
      %v1372 = vpop.permute.xlu0 %1371
      %1373 = vrot.lane.b32.xlu0 %v975, 32
      %v1374 = vpop.permute.xlu0 %1373
      %1375 = vrot.lane.b32.xlu0 %v976, 32
      %v1376 = vpop.permute.xlu0 %1375
      %1415 = vrot.lane.b32.xlu0 %v943, 48
      %v1416 = vpop.permute.xlu0 %1415
      %1417 = vrot.lane.b32.xlu0 %v944, 48
      %v1418 = vpop.permute.xlu0 %1417
      %1419 = vrot.lane.b32.xlu0 %v945, 48
      %v1420 = vpop.permute.xlu0 %1419
      %1421 = vrot.lane.b32.xlu0 %v946, 48
      %v1422 = vpop.permute.xlu0 %1421
      %1423 = vrot.lane.b32.xlu0 %v947, 48
      %v1424 = vpop.permute.xlu0 %1423
      %1425 = vrot.lane.b32.xlu0 %v948, 48
      %v1426 = vpop.permute.xlu0 %1425
      %1427 = vrot.lane.b32.xlu0 %v949, 48
      %v1428 = vpop.permute.xlu0 %1427
      %1429 = vrot.lane.b32.xlu0 %v950, 48
      %v1430 = vpop.permute.xlu0 %1429
      %1431 = vrot.lane.b32.xlu0 %v951, 48
      %v1432 = vpop.permute.xlu0 %1431
      %1433 = vrot.lane.b32.xlu0 %v952, 48
      %v1434 = vpop.permute.xlu0 %1433
      %1435 = vrot.lane.b32.xlu0 %v953, 48
      %v1436 = vpop.permute.xlu0 %1435
      %1437 = vrot.lane.b32.xlu0 %v954, 48
      %v1438 = vpop.permute.xlu0 %1437
      %1439 = vrot.lane.b32.xlu0 %v955, 48
      %v1440 = vpop.permute.xlu0 %1439
      %1441 = vrot.lane.b32.xlu0 %v956, 48
      %v1442 = vpop.permute.xlu0 %1441
      %1443 = vrot.lane.b32.xlu0 %v957, 48
      %v1444 = vpop.permute.xlu0 %1443
      %1445 = vrot.lane.b32.xlu0 %v958, 48
      %v1446 = vpop.permute.xlu0 %1445
      %1447 = vrot.lane.b32.xlu0 %v959, 48
      %v1448 = vpop.permute.xlu0 %1447
      %1449 = vrot.lane.b32.xlu0 %v960, 48
      %v1450 = vpop.permute.xlu0 %1449
      %1451 = vrot.lane.b32.xlu0 %v961, 48
      %v1452 = vpop.permute.xlu0 %1451
      %1453 = vrot.lane.b32.xlu0 %v962, 48
      %v1454 = vpop.permute.xlu0 %1453
      %1455 = vrot.lane.b32.xlu0 %v963, 48
      %v1456 = vpop.permute.xlu0 %1455
      %1457 = vrot.lane.b32.xlu0 %v964, 48
      %v1458 = vpop.permute.xlu0 %1457
      %1459 = vrot.lane.b32.xlu0 %v965, 48
      %v1460 = vpop.permute.xlu0 %1459
      %1461 = vrot.lane.b32.xlu0 %v966, 48
      %v1462 = vpop.permute.xlu0 %1461
      %1463 = vrot.lane.b32.xlu0 %v967, 48
      %v1464 = vpop.permute.xlu0 %1463
      %1465 = vrot.lane.b32.xlu0 %v968, 48
      %v1466 = vpop.permute.xlu0 %1465
      %1467 = vrot.lane.b32.xlu0 %v969, 48
      %v1468 = vpop.permute.xlu0 %1467
      %1469 = vrot.lane.b32.xlu0 %v970, 48
      %v1470 = vpop.permute.xlu0 %1469
      %1471 = vrot.lane.b32.xlu0 %v971, 48
      %v1472 = vpop.permute.xlu0 %1471
      %1473 = vrot.lane.b32.xlu0 %v972, 48
      %v1474 = vpop.permute.xlu0 %1473
      %1475 = vrot.lane.b32.xlu0 %v973, 48
      %v1476 = vpop.permute.xlu0 %1475
      %1477 = vrot.lane.b32.xlu0 %v974, 48
      %v1478 = vpop.permute.xlu0 %1477
      %1479 = vrot.lane.b32.xlu0 %v975, 48
      %v1480 = vpop.permute.xlu0 %1479
      %1481 = vrot.lane.b32.xlu0 %v976, 48
      %v1482 = vpop.permute.xlu0 %1481
      %1483 = vrot.lane.b32.xlu0 %v977, 48
      %v1484 = vpop.permute.xlu0 %1483
      %1485 = vrot.lane.b32.xlu0 %v978, 48
      %v1486 = vpop.permute.xlu0 %1485
      %1559 = vrot.lane.b32.xlu0 %v979, 64
      %v1560 = vpop.permute.xlu0 %1559
      %1561 = vrot.lane.b32.xlu0 %v980, 64
      %v1562 = vpop.permute.xlu0 %1561
      %1563 = vrot.lane.b32.xlu0 %v981, 64
      %v1564 = vpop.permute.xlu0 %1563
      %1565 = vrot.lane.b32.xlu0 %v982, 64
      %v1566 = vpop.permute.xlu0 %1565
      %1567 = vrot.lane.b32.xlu0 %v983, 64
      %v1568 = vpop.permute.xlu0 %1567
      %1569 = vrot.lane.b32.xlu0 %v984, 64
      %v1570 = vpop.permute.xlu0 %1569
      %1571 = vrot.lane.b32.xlu0 %v985, 64
      %v1572 = vpop.permute.xlu0 %1571
      %1573 = vrot.lane.b32.xlu0 %v986, 64
      %v1574 = vpop.permute.xlu0 %1573
      %1575 = vrot.lane.b32.xlu0 %v987, 64
      %v1576 = vpop.permute.xlu0 %1575
      %1577 = vrot.lane.b32.xlu0 %v988, 64
      %v1578 = vpop.permute.xlu0 %1577
      %1579 = vrot.lane.b32.xlu0 %v989, 64
      %v1580 = vpop.permute.xlu0 %1579
      %1581 = vrot.lane.b32.xlu0 %v990, 64
      %v1582 = vpop.permute.xlu0 %1581
      %1583 = vrot.lane.b32.xlu0 %v991, 64
      %v1584 = vpop.permute.xlu0 %1583
      %1585 = vrot.lane.b32.xlu0 %v992, 64
      %v1586 = vpop.permute.xlu0 %1585
      %1587 = vrot.lane.b32.xlu0 %v993, 64
      %v1588 = vpop.permute.xlu0 %1587
      %1589 = vrot.lane.b32.xlu0 %v994, 64
      %v1590 = vpop.permute.xlu0 %1589
      %1591 = vrot.lane.b32.xlu0 %v995, 64
      %v1592 = vpop.permute.xlu0 %1591
      %1593 = vrot.lane.b32.xlu0 %v996, 64
      %v1594 = vpop.permute.xlu0 %1593
      %1595 = vrot.lane.b32.xlu0 %v997, 64
      %v1596 = vpop.permute.xlu0 %1595
      %1597 = vrot.lane.b32.xlu0 %v998, 64
      %v1598 = vpop.permute.xlu0 %1597
      %1599 = vrot.lane.b32.xlu0 %v999, 64
      %v1600 = vpop.permute.xlu0 %1599
      %1601 = vrot.lane.b32.xlu0 %v1000, 64
      %v1602 = vpop.permute.xlu0 %1601
      %1603 = vrot.lane.b32.xlu0 %v1001, 64
      %v1604 = vpop.permute.xlu0 %1603
      %1605 = vrot.lane.b32.xlu0 %v1002, 64
      %v1606 = vpop.permute.xlu0 %1605
      %1607 = vrot.lane.b32.xlu0 %v1003, 64
      %v1608 = vpop.permute.xlu0 %1607
      %1609 = vrot.lane.b32.xlu0 %v1004, 64
      %v1610 = vpop.permute.xlu0 %1609
      %1611 = vrot.lane.b32.xlu0 %v1005, 64
      %v1612 = vpop.permute.xlu0 %1611
      %1613 = vrot.lane.b32.xlu0 %v1006, 64
      %v1614 = vpop.permute.xlu0 %1613
      %1615 = vrot.lane.b32.xlu0 %v1007, 64
      %v1616 = vpop.permute.xlu0 %1615
      %1617 = vrot.lane.b32.xlu0 %v1008, 64
      %v1618 = vpop.permute.xlu0 %1617
      %1619 = vrot.lane.b32.xlu0 %v1009, 64
      %v1620 = vpop.permute.xlu0 %1619
      %1621 = vrot.lane.b32.xlu0 %v1010, 64
      %v1622 = vpop.permute.xlu0 %1621
      %1623 = vrot.lane.b32.xlu0 %v1011, 64
      %v1624 = vpop.permute.xlu0 %1623
      %1625 = vrot.lane.b32.xlu0 %v1012, 64
      %v1626 = vpop.permute.xlu0 %1625
      %1627 = vrot.lane.b32.xlu0 %v1013, 64
      %v1628 = vpop.permute.xlu0 %1627
      %1629 = vrot.lane.b32.xlu0 %v1014, 64
      %v1630 = vpop.permute.xlu0 %1629
      %1703 = vrot.lane.b32.xlu0 %v1015, 80
      %v1704 = vpop.permute.xlu0 %1703
      %1705 = vrot.lane.b32.xlu0 %v1016, 80
      %v1706 = vpop.permute.xlu0 %1705
      %1707 = vrot.lane.b32.xlu0 %v1017, 80
      %v1708 = vpop.permute.xlu0 %1707
      %1709 = vrot.lane.b32.xlu0 %v1018, 80
      %v1710 = vpop.permute.xlu0 %1709
      %1711 = vrot.lane.b32.xlu0 %v1019, 80
      %v1712 = vpop.permute.xlu0 %1711
      %1713 = vrot.lane.b32.xlu0 %v1020, 80
      %v1714 = vpop.permute.xlu0 %1713
      %1715 = vrot.lane.b32.xlu0 %v1021, 80
      %v1716 = vpop.permute.xlu0 %1715
      %1717 = vrot.lane.b32.xlu0 %v1022, 80
      %v1718 = vpop.permute.xlu0 %1717
      %1719 = vrot.lane.b32.xlu0 %v1023, 80
      %v1720 = vpop.permute.xlu0 %1719
      %1721 = vrot.lane.b32.xlu0 %v1024, 80
      %v1722 = vpop.permute.xlu0 %1721
      %1723 = vrot.lane.b32.xlu0 %v1025, 80
      %v1724 = vpop.permute.xlu0 %1723
      %1725 = vrot.lane.b32.xlu0 %v1026, 80
      %v1726 = vpop.permute.xlu0 %1725
      %1727 = vrot.lane.b32.xlu0 %v1027, 80
      %v1728 = vpop.permute.xlu0 %1727
      %1729 = vrot.lane.b32.xlu0 %v1028, 80
      %v1730 = vpop.permute.xlu0 %1729
      %1731 = vrot.lane.b32.xlu0 %v1029, 80
      %v1732 = vpop.permute.xlu0 %1731
      %1733 = vrot.lane.b32.xlu0 %v1030, 80
      %v1734 = vpop.permute.xlu0 %1733
      %1735 = vrot.lane.b32.xlu0 %v1031, 80
      %v1736 = vpop.permute.xlu0 %1735
      %1737 = vrot.lane.b32.xlu0 %v1032, 80
      %v1738 = vpop.permute.xlu0 %1737
      %1739 = vrot.lane.b32.xlu0 %v1033, 80
      %v1740 = vpop.permute.xlu0 %1739
      %1741 = vrot.lane.b32.xlu0 %v1034, 80
      %v1742 = vpop.permute.xlu0 %1741
      %1743 = vrot.lane.b32.xlu0 %v1035, 80
      %v1744 = vpop.permute.xlu0 %1743
      %1745 = vrot.lane.b32.xlu0 %v1036, 80
      %v1746 = vpop.permute.xlu0 %1745
      %1747 = vrot.lane.b32.xlu0 %v1037, 80
      %v1748 = vpop.permute.xlu0 %1747
      %1749 = vrot.lane.b32.xlu0 %v1038, 80
      %v1750 = vpop.permute.xlu0 %1749
      %1751 = vrot.lane.b32.xlu0 %v1039, 80
      %v1752 = vpop.permute.xlu0 %1751
      %1753 = vrot.lane.b32.xlu0 %v1040, 80
      %v1754 = vpop.permute.xlu0 %1753
      %1755 = vrot.lane.b32.xlu0 %v1041, 80
      %v1756 = vpop.permute.xlu0 %1755
      %1757 = vrot.lane.b32.xlu0 %v1042, 80
      %v1758 = vpop.permute.xlu0 %1757
      %1759 = vrot.lane.b32.xlu0 %v1043, 80
      %v1760 = vpop.permute.xlu0 %1759
      %1761 = vrot.lane.b32.xlu0 %v1044, 80
      %v1762 = vpop.permute.xlu0 %1761
      %1763 = vrot.lane.b32.xlu0 %v1045, 80
      %v1764 = vpop.permute.xlu0 %1763
      %1765 = vrot.lane.b32.xlu0 %v1046, 80
      %v1766 = vpop.permute.xlu0 %1765
      %1767 = vrot.lane.b32.xlu0 %v1047, 80
      %v1768 = vpop.permute.xlu0 %1767
      %1769 = vrot.lane.b32.xlu0 %v1048, 80
      %v1770 = vpop.permute.xlu0 %1769
      %1771 = vrot.lane.b32.xlu0 %v1049, 80
      %v1772 = vpop.permute.xlu0 %1771
      %1773 = vrot.lane.b32.xlu0 %v1050, 80
      %v1774 = vpop.permute.xlu0 %1773
      %1813 = vrot.lane.b32.xlu0 %v1017, 96
      %v1814 = vpop.permute.xlu0 %1813
      %1815 = vrot.lane.b32.xlu0 %v1018, 96
      %v1816 = vpop.permute.xlu0 %1815
      %1817 = vrot.lane.b32.xlu0 %v1019, 96
      %v1818 = vpop.permute.xlu0 %1817
      %1819 = vrot.lane.b32.xlu0 %v1020, 96
      %v1820 = vpop.permute.xlu0 %1819
      %1821 = vrot.lane.b32.xlu0 %v1021, 96
      %v1822 = vpop.permute.xlu0 %1821
      %1823 = vrot.lane.b32.xlu0 %v1022, 96
      %v1824 = vpop.permute.xlu0 %1823
      %1825 = vrot.lane.b32.xlu0 %v1023, 96
      %v1826 = vpop.permute.xlu0 %1825
      %1827 = vrot.lane.b32.xlu0 %v1024, 96
      %v1828 = vpop.permute.xlu0 %1827
      %1829 = vrot.lane.b32.xlu0 %v1025, 96
      %v1830 = vpop.permute.xlu0 %1829
      %1831 = vrot.lane.b32.xlu0 %v1026, 96
      %v1832 = vpop.permute.xlu0 %1831
      %1833 = vrot.lane.b32.xlu0 %v1027, 96
      %v1834 = vpop.permute.xlu0 %1833
      %1835 = vrot.lane.b32.xlu0 %v1028, 96
      %v1836 = vpop.permute.xlu0 %1835
      %1837 = vrot.lane.b32.xlu0 %v1029, 96
      %v1838 = vpop.permute.xlu0 %1837
      %1839 = vrot.lane.b32.xlu0 %v1030, 96
      %v1840 = vpop.permute.xlu0 %1839
      %1841 = vrot.lane.b32.xlu0 %v1031, 96
      %v1842 = vpop.permute.xlu0 %1841
      %1843 = vrot.lane.b32.xlu0 %v1032, 96
      %v1844 = vpop.permute.xlu0 %1843
      %1845 = vrot.lane.b32.xlu0 %v1033, 96
      %v1846 = vpop.permute.xlu0 %1845
      %1847 = vrot.lane.b32.xlu0 %v1034, 96
      %v1848 = vpop.permute.xlu0 %1847
      %1849 = vrot.lane.b32.xlu0 %v1035, 96
      %v1850 = vpop.permute.xlu0 %1849
      %1851 = vrot.lane.b32.xlu0 %v1036, 96
      %v1852 = vpop.permute.xlu0 %1851
      %1853 = vrot.lane.b32.xlu0 %v1037, 96
      %v1854 = vpop.permute.xlu0 %1853
      %1855 = vrot.lane.b32.xlu0 %v1038, 96
      %v1856 = vpop.permute.xlu0 %1855
      %1857 = vrot.lane.b32.xlu0 %v1039, 96
      %v1858 = vpop.permute.xlu0 %1857
      %1859 = vrot.lane.b32.xlu0 %v1040, 96
      %v1860 = vpop.permute.xlu0 %1859
      %1861 = vrot.lane.b32.xlu0 %v1041, 96
      %v1862 = vpop.permute.xlu0 %1861
      %1863 = vrot.lane.b32.xlu0 %v1042, 96
      %v1864 = vpop.permute.xlu0 %1863
      %1865 = vrot.lane.b32.xlu0 %v1043, 96
      %v1866 = vpop.permute.xlu0 %1865
      %1867 = vrot.lane.b32.xlu0 %v1044, 96
      %v1868 = vpop.permute.xlu0 %1867
      %1869 = vrot.lane.b32.xlu0 %v1045, 96
      %v1870 = vpop.permute.xlu0 %1869
      %1871 = vrot.lane.b32.xlu0 %v1046, 96
      %v1872 = vpop.permute.xlu0 %1871
      %1873 = vrot.lane.b32.xlu0 %v1047, 96
      %v1874 = vpop.permute.xlu0 %1873
      %1875 = vrot.lane.b32.xlu0 %v1048, 96
      %v1876 = vpop.permute.xlu0 %1875
      %1877 = vrot.lane.b32.xlu0 %v1049, 96
      %v1878 = vpop.permute.xlu0 %1877
      %1879 = vrot.lane.b32.xlu0 %v1050, 96
      %v1880 = vpop.permute.xlu0 %1879
      %1881 = vrot.lane.b32.xlu0 %v1051, 96
      %v1882 = vpop.permute.xlu0 %1881
      %1883 = vrot.lane.b32.xlu0 %v1052, 96
      %v1884 = vpop.permute.xlu0 %1883
      %1957 = vrot.lane.b32.xlu0 %v1053, 112
      %v1958 = vpop.permute.xlu0 %1957
      %1959 = vrot.lane.b32.xlu0 %v1054, 112
      %v1960 = vpop.permute.xlu0 %1959
      %1961 = vrot.lane.b32.xlu0 %v1055, 112
      %v1962 = vpop.permute.xlu0 %1961
      %1963 = vrot.lane.b32.xlu0 %v1056, 112
      %v1964 = vpop.permute.xlu0 %1963
      %1965 = vrot.lane.b32.xlu0 %v1057, 112
      %v1966 = vpop.permute.xlu0 %1965
      %1967 = vrot.lane.b32.xlu0 %v1058, 112
      %v1968 = vpop.permute.xlu0 %1967
      %1969 = vrot.lane.b32.xlu0 %v1059, 112
      %v1970 = vpop.permute.xlu0 %1969
      %1971 = vrot.lane.b32.xlu0 %v1060, 112
      %v1972 = vpop.permute.xlu0 %1971
      %1973 = vrot.lane.b32.xlu0 %v1061, 112
      %v1974 = vpop.permute.xlu0 %1973
      %1975 = vrot.lane.b32.xlu0 %v1062, 112
      %v1976 = vpop.permute.xlu0 %1975
      %1977 = vrot.lane.b32.xlu0 %v1063, 112
      %v1978 = vpop.permute.xlu0 %1977
      %1979 = vrot.lane.b32.xlu0 %v1064, 112
      %v1980 = vpop.permute.xlu0 %1979
      %1981 = vrot.lane.b32.xlu0 %v1065, 112
      %v1982 = vpop.permute.xlu0 %1981
      %1983 = vrot.lane.b32.xlu0 %v1066, 112
      %v1984 = vpop.permute.xlu0 %1983
      %1985 = vrot.lane.b32.xlu0 %v1067, 112
      %v1986 = vpop.permute.xlu0 %1985
      %1987 = vrot.lane.b32.xlu0 %v1068, 112
      %v1988 = vpop.permute.xlu0 %1987
      %1989 = vrot.lane.b32.xlu0 %v1069, 112
      %v1990 = vpop.permute.xlu0 %1989
      %1991 = vrot.lane.b32.xlu0 %v1070, 112
      %v1992 = vpop.permute.xlu0 %1991
      %1993 = vrot.lane.b32.xlu0 %v1071, 112
      %v1994 = vpop.permute.xlu0 %1993
      %1995 = vrot.lane.b32.xlu0 %v1072, 112
      %v1996 = vpop.permute.xlu0 %1995
      %1997 = vrot.lane.b32.xlu0 %v1073, 112
      %v1998 = vpop.permute.xlu0 %1997
      %1999 = vrot.lane.b32.xlu0 %v1074, 112
      %v2000 = vpop.permute.xlu0 %1999
      %2001 = vrot.lane.b32.xlu0 %v1075, 112
      %v2002 = vpop.permute.xlu0 %2001
      %2003 = vrot.lane.b32.xlu0 %v1076, 112
      %v2004 = vpop.permute.xlu0 %2003
      %2005 = vrot.lane.b32.xlu0 %v1077, 112
      %v2006 = vpop.permute.xlu0 %2005
      %2007 = vrot.lane.b32.xlu0 %v1078, 112
      %v2008 = vpop.permute.xlu0 %2007
      %2009 = vrot.lane.b32.xlu0 %v1079, 112
      %v2010 = vpop.permute.xlu0 %2009
      %2011 = vrot.lane.b32.xlu0 %v1080, 112
      %v2012 = vpop.permute.xlu0 %2011
      %2013 = vrot.lane.b32.xlu0 %v1081, 112
      %v2014 = vpop.permute.xlu0 %2013
      %2015 = vrot.lane.b32.xlu0 %v1082, 112
      %v2016 = vpop.permute.xlu0 %2015
      %2017 = vrot.lane.b32.xlu0 %v1083, 112
      %v2018 = vpop.permute.xlu0 %2017
      %2019 = vrot.lane.b32.xlu0 %v1084, 112
      %v2020 = vpop.permute.xlu0 %2019
      %2021 = vrot.lane.b32.xlu0 %v1085, 112
      %v2022 = vpop.permute.xlu0 %2021
      %2023 = vrot.lane.b32.xlu0 %v1086, 112
      %v2024 = vpop.permute.xlu0 %2023
      %2025 = vrot.lane.b32.xlu0 %v1087, 112
      %v2026 = vpop.permute.xlu0 %2025
      %2027 = vrot.lane.b32.xlu0 %v1088, 112
      %v2028 = vpop.permute.xlu0 %2027
      %v2065 = vsel %vm787, %v869, %v1162
      %v2066 = vsel %vm787, %v870, %v1164
      %v2067 = vsel %vm787, %v871, %v1166
      %v2068 = vsel %vm787, %v872, %v1168
      %v2069 = vsel %vm787, %v873, %v1170
      %v2070 = vsel %vm787, %v874, %v1172
      %v2071 = vsel %vm787, %v875, %v1174
      %v2072 = vsel %vm787, %v876, %v1176
      %v2073 = vsel %vm787, %v877, %v1178
      %v2074 = vsel %vm787, %v878, %v1180
      %v2075 = vsel %vm787, %v879, %v1182
      %v2076 = vsel %vm787, %v880, %v1184
      %v2077 = vsel %vm787, %v881, %v1186
      %v2078 = vsel %vm787, %v882, %v1188
      %v2079 = vsel %vm787, %v883, %v1190
      %v2080 = vsel %vm787, %v884, %v1192
      %v2081 = vsel %vm787, %v885, %v1194
      %v2082 = vsel %vm787, %v886, %v1196
      %v2083 = vsel %vm787, %v887, %v1198
      %v2084 = vsel %vm787, %v888, %v1200
      %v2085 = vsel %vm787, %v889, %v1202
      %v2086 = vsel %vm787, %v890, %v1204
      %v2087 = vsel %vm787, %v891, %v1206
      %v2088 = vsel %vm787, %v892, %v1208
      %v2089 = vsel %vm787, %v893, %v1210
      %v2090 = vsel %vm787, %v894, %v1212
      %v2091 = vsel %vm787, %v895, %v1214
      %v2092 = vsel %vm787, %v896, %v1216
      %v2093 = vsel %vm787, %v897, %v1218
      %v2094 = vsel %vm787, %v898, %v1220
      %v2095 = vsel %vm787, %v899, %v1222
      %v2096 = vsel %vm787, %v900, %v1224
      %v2097 = vsel %vm787, %v901, %v1226
      %v2098 = vsel %vm787, %v902, %v1228
      %v2099 = vsel %vm787, %v903, %v1230
      %v2100 = vsel %vm787, %v904, %v1232
      %vm2101 = vcmask 261120
      %v2102 = vsel %vm2101, %v2065, %v1306
      %v2103 = vsel %vm2101, %v2066, %v1308
      %v2104 = vsel %vm2101, %v2067, %v1310
      %v2105 = vsel %vm2101, %v2068, %v1312
      %v2106 = vsel %vm2101, %v2069, %v1314
      %v2107 = vsel %vm2101, %v2070, %v1316
      %v2108 = vsel %vm2101, %v2071, %v1318
      %v2109 = vsel %vm2101, %v2072, %v1320
      %v2110 = vsel %vm2101, %v2073, %v1322
      %v2111 = vsel %vm2101, %v2074, %v1324
      %v2112 = vsel %vm2101, %v2075, %v1326
      %v2113 = vsel %vm2101, %v2076, %v1328
      %v2114 = vsel %vm2101, %v2077, %v1330
      %v2115 = vsel %vm2101, %v2078, %v1332
      %v2116 = vsel %vm2101, %v2079, %v1334
      %v2117 = vsel %vm2101, %v2080, %v1336
      %v2118 = vsel %vm2101, %v2081, %v1338
      %v2119 = vsel %vm2101, %v2082, %v1340
      %v2120 = vsel %vm2101, %v2083, %v1342
      %v2121 = vsel %vm2101, %v2084, %v1344
      %v2122 = vsel %vm2101, %v2085, %v1346
      %v2123 = vsel %vm2101, %v2086, %v1348
      %v2124 = vsel %vm2101, %v2087, %v1350
      %v2125 = vsel %vm2101, %v2088, %v1352
      %v2126 = vsel %vm2101, %v2089, %v1354
      %v2127 = vsel %vm2101, %v2090, %v1356
      %v2128 = vsel %vm2101, %v2091, %v1358
      %v2129 = vsel %vm2101, %v2092, %v1360
      %v2130 = vsel %vm2101, %v2093, %v1362
      %v2131 = vsel %vm2101, %v2094, %v1364
      %v2132 = vsel %vm2101, %v2095, %v1366
      %v2133 = vsel %vm2101, %v2096, %v1368
      %v2134 = vsel %vm2101, %v2097, %v1370
      %v2135 = vsel %vm2101, %v2098, %v1372
      %v2136 = vsel %vm2101, %v2099, %v1374
      %v2137 = vsel %vm2101, %v2100, %v1376
      %vm2138 = vcmask 392192
      %v2139 = vsel %vm2138, %v2102, %v1416
      %v2140 = vsel %vm2138, %v2103, %v1418
      %v2141 = vsel %vm2138, %v2104, %v1420
      %v2142 = vsel %vm2138, %v2105, %v1422
      %v2143 = vsel %vm2138, %v2106, %v1424
      %v2144 = vsel %vm2138, %v2107, %v1426
      %v2145 = vsel %vm2138, %v2108, %v1428
      %v2146 = vsel %vm2138, %v2109, %v1430
      %v2147 = vsel %vm2138, %v2110, %v1432
      %v2148 = vsel %vm2138, %v2111, %v1434
      %v2149 = vsel %vm2138, %v2112, %v1436
      %v2150 = vsel %vm2138, %v2113, %v1438
      %v2151 = vsel %vm2138, %v2114, %v1440
      %v2152 = vsel %vm2138, %v2115, %v1442
      %v2153 = vsel %vm2138, %v2116, %v1444
      %v2154 = vsel %vm2138, %v2117, %v1446
      %v2155 = vsel %vm2138, %v2118, %v1448
      %v2156 = vsel %vm2138, %v2119, %v1450
      %v2157 = vsel %vm2138, %v2120, %v1452
      %v2158 = vsel %vm2138, %v2121, %v1454
      %v2159 = vsel %vm2138, %v2122, %v1456
      %v2160 = vsel %vm2138, %v2123, %v1458
      %v2161 = vsel %vm2138, %v2124, %v1460
      %v2162 = vsel %vm2138, %v2125, %v1462
      %v2163 = vsel %vm2138, %v2126, %v1464
      %v2164 = vsel %vm2138, %v2127, %v1466
      %v2165 = vsel %vm2138, %v2128, %v1468
      %v2166 = vsel %vm2138, %v2129, %v1470
      %v2167 = vsel %vm2138, %v2130, %v1472
      %v2168 = vsel %vm2138, %v2131, %v1474
      %v2169 = vsel %vm2138, %v2132, %v1476
      %v2170 = vsel %vm2138, %v2133, %v1478
      %v2171 = vsel %vm2138, %v2134, %v1480
      %v2172 = vsel %vm2138, %v2135, %v1482
      %v2173 = vsel %vm2138, %v2136, %v1484
      %v2174 = vsel %vm2138, %v2137, %v1486
      %vm2175 = vcmask 523264
      %v2176 = vsel %vm2175, %v2139, %v1560
      %v2177 = vsel %vm2175, %v2140, %v1562
      %v2178 = vsel %vm2175, %v2141, %v1564
      %v2179 = vsel %vm2175, %v2142, %v1566
      %v2180 = vsel %vm2175, %v2143, %v1568
      %v2181 = vsel %vm2175, %v2144, %v1570
      %v2182 = vsel %vm2175, %v2145, %v1572
      %v2183 = vsel %vm2175, %v2146, %v1574
      %v2184 = vsel %vm2175, %v2147, %v1576
      %v2185 = vsel %vm2175, %v2148, %v1578
      %v2186 = vsel %vm2175, %v2149, %v1580
      %v2187 = vsel %vm2175, %v2150, %v1582
      %v2188 = vsel %vm2175, %v2151, %v1584
      %v2189 = vsel %vm2175, %v2152, %v1586
      %v2190 = vsel %vm2175, %v2153, %v1588
      %v2191 = vsel %vm2175, %v2154, %v1590
      %v2192 = vsel %vm2175, %v2155, %v1592
      %v2193 = vsel %vm2175, %v2156, %v1594
      %v2194 = vsel %vm2175, %v2157, %v1596
      %v2195 = vsel %vm2175, %v2158, %v1598
      %v2196 = vsel %vm2175, %v2159, %v1600
      %v2197 = vsel %vm2175, %v2160, %v1602
      %v2198 = vsel %vm2175, %v2161, %v1604
      %v2199 = vsel %vm2175, %v2162, %v1606
      %v2200 = vsel %vm2175, %v2163, %v1608
      %v2201 = vsel %vm2175, %v2164, %v1610
      %v2202 = vsel %vm2175, %v2165, %v1612
      %v2203 = vsel %vm2175, %v2166, %v1614
      %v2204 = vsel %vm2175, %v2167, %v1616
      %v2205 = vsel %vm2175, %v2168, %v1618
      %v2206 = vsel %vm2175, %v2169, %v1620
      %v2207 = vsel %vm2175, %v2170, %v1622
      %v2208 = vsel %vm2175, %v2171, %v1624
      %v2209 = vsel %vm2175, %v2172, %v1626
      %v2210 = vsel %vm2175, %v2173, %v1628
      %v2211 = vsel %vm2175, %v2174, %v1630
      %vm2212 = vcmask 654336
      %v2213 = vsel %vm2212, %v2176, %v1704
      %v2214 = vsel %vm2212, %v2177, %v1706
      %v2215 = vsel %vm2212, %v2178, %v1708
      %v2216 = vsel %vm2212, %v2179, %v1710
      %v2217 = vsel %vm2212, %v2180, %v1712
      %v2218 = vsel %vm2212, %v2181, %v1714
      %v2219 = vsel %vm2212, %v2182, %v1716
      %v2220 = vsel %vm2212, %v2183, %v1718
      %v2221 = vsel %vm2212, %v2184, %v1720
      %v2222 = vsel %vm2212, %v2185, %v1722
      %v2223 = vsel %vm2212, %v2186, %v1724
      %v2224 = vsel %vm2212, %v2187, %v1726
      %v2225 = vsel %vm2212, %v2188, %v1728
      %v2226 = vsel %vm2212, %v2189, %v1730
      %v2227 = vsel %vm2212, %v2190, %v1732
      %v2228 = vsel %vm2212, %v2191, %v1734
      %v2229 = vsel %vm2212, %v2192, %v1736
      %v2230 = vsel %vm2212, %v2193, %v1738
      %v2231 = vsel %vm2212, %v2194, %v1740
      %v2232 = vsel %vm2212, %v2195, %v1742
      %v2233 = vsel %vm2212, %v2196, %v1744
      %v2234 = vsel %vm2212, %v2197, %v1746
      %v2235 = vsel %vm2212, %v2198, %v1748
      %v2236 = vsel %vm2212, %v2199, %v1750
      %v2237 = vsel %vm2212, %v2200, %v1752
      %v2238 = vsel %vm2212, %v2201, %v1754
      %v2239 = vsel %vm2212, %v2202, %v1756
      %v2240 = vsel %vm2212, %v2203, %v1758
      %v2241 = vsel %vm2212, %v2204, %v1760
      %v2242 = vsel %vm2212, %v2205, %v1762
      %v2243 = vsel %vm2212, %v2206, %v1764
      %v2244 = vsel %vm2212, %v2207, %v1766
      %v2245 = vsel %vm2212, %v2208, %v1768
      %v2246 = vsel %vm2212, %v2209, %v1770
      %v2247 = vsel %vm2212, %v2210, %v1772
      %v2248 = vsel %vm2212, %v2211, %v1774
      %vm2249 = vcmask 785408
      %v2250 = vsel %vm2249, %v2213, %v1814
      %v2251 = vsel %vm2249, %v2214, %v1816
      %v2252 = vsel %vm2249, %v2215, %v1818
      %v2253 = vsel %vm2249, %v2216, %v1820
      %v2254 = vsel %vm2249, %v2217, %v1822
      %v2255 = vsel %vm2249, %v2218, %v1824
      %v2256 = vsel %vm2249, %v2219, %v1826
      %v2257 = vsel %vm2249, %v2220, %v1828
      %v2258 = vsel %vm2249, %v2221, %v1830
      %v2259 = vsel %vm2249, %v2222, %v1832
      %v2260 = vsel %vm2249, %v2223, %v1834
      %v2261 = vsel %vm2249, %v2224, %v1836
      %v2262 = vsel %vm2249, %v2225, %v1838
      %v2263 = vsel %vm2249, %v2226, %v1840
      %v2264 = vsel %vm2249, %v2227, %v1842
      %v2265 = vsel %vm2249, %v2228, %v1844
      %v2266 = vsel %vm2249, %v2229, %v1846
      %v2267 = vsel %vm2249, %v2230, %v1848
      %v2268 = vsel %vm2249, %v2231, %v1850
      %v2269 = vsel %vm2249, %v2232, %v1852
      %v2270 = vsel %vm2249, %v2233, %v1854
      %v2271 = vsel %vm2249, %v2234, %v1856
      %v2272 = vsel %vm2249, %v2235, %v1858
      %v2273 = vsel %vm2249, %v2236, %v1860
      %v2274 = vsel %vm2249, %v2237, %v1862
      %v2275 = vsel %vm2249, %v2238, %v1864
      %v2276 = vsel %vm2249, %v2239, %v1866
      %v2277 = vsel %vm2249, %v2240, %v1868
      %v2278 = vsel %vm2249, %v2241, %v1870
      %v2279 = vsel %vm2249, %v2242, %v1872
      %v2280 = vsel %vm2249, %v2243, %v1874
      %v2281 = vsel %vm2249, %v2244, %v1876
      %v2282 = vsel %vm2249, %v2245, %v1878
      %v2283 = vsel %vm2249, %v2246, %v1880
      %v2284 = vsel %vm2249, %v2247, %v1882
      %v2285 = vsel %vm2249, %v2248, %v1884
      %vm2286 = vcmask 916480
      %v2287 = vsel %vm2286, %v2250, %v1958
      %v2288 = vsel %vm2286, %v2251, %v1960
      %v2289 = vsel %vm2286, %v2252, %v1962
      %v2290 = vsel %vm2286, %v2253, %v1964
      %v2291 = vsel %vm2286, %v2254, %v1966
      %v2292 = vsel %vm2286, %v2255, %v1968
      %v2293 = vsel %vm2286, %v2256, %v1970
      %v2294 = vsel %vm2286, %v2257, %v1972
      %v2295 = vsel %vm2286, %v2258, %v1974
      %v2296 = vsel %vm2286, %v2259, %v1976
      %v2297 = vsel %vm2286, %v2260, %v1978
      %v2298 = vsel %vm2286, %v2261, %v1980
      %v2299 = vsel %vm2286, %v2262, %v1982
      %v2300 = vsel %vm2286, %v2263, %v1984
      %v2301 = vsel %vm2286, %v2264, %v1986
      %v2302 = vsel %vm2286, %v2265, %v1988
      %v2303 = vsel %vm2286, %v2266, %v1990
      %v2304 = vsel %vm2286, %v2267, %v1992
      %v2305 = vsel %vm2286, %v2268, %v1994
      %v2306 = vsel %vm2286, %v2269, %v1996
      %v2307 = vsel %vm2286, %v2270, %v1998
      %v2308 = vsel %vm2286, %v2271, %v2000
      %v2309 = vsel %vm2286, %v2272, %v2002
      %v2310 = vsel %vm2286, %v2273, %v2004
      %v2311 = vsel %vm2286, %v2274, %v2006
      %v2312 = vsel %vm2286, %v2275, %v2008
      %v2313 = vsel %vm2286, %v2276, %v2010
      %v2314 = vsel %vm2286, %v2277, %v2012
      %v2315 = vsel %vm2286, %v2278, %v2014
      %v2316 = vsel %vm2286, %v2279, %v2016
      %v2317 = vsel %vm2286, %v2280, %v2018
      %v2318 = vsel %vm2286, %v2281, %v2020
      %v2319 = vsel %vm2286, %v2282, %v2022
      %v2320 = vsel %vm2286, %v2283, %v2024
      %v2321 = vsel %vm2286, %v2284, %v2026
      %v2322 = vsel %vm2286, %v2285, %v2028
      %v2323 = vpack.c.bf16 %v2288, %v2287
      %v2324 = vpack.c.bf16 %v1090, %v1089
      %v2325 = vpack.c.bf16 %v2290, %v2289
      %v2326 = vpack.c.bf16 %v1092, %v1091
      %v2327 = vpack.c.bf16 %v2292, %v2291
      %v2328 = vpack.c.bf16 %v1094, %v1093
      %v2329 = vpack.c.bf16 %v2294, %v2293
      %v2330 = vpack.c.bf16 %v1096, %v1095
      %v2331 = vpack.c.bf16 %v2296, %v2295
      %v2332 = vpack.c.bf16 %v1098, %v1097
      %v2333 = vpack.c.bf16 %v2298, %v2297
      %v2334 = vpack.c.bf16 %v1100, %v1099
      %v2335 = vpack.c.bf16 %v2300, %v2299
      %v2336 = vpack.c.bf16 %v1102, %v1101
      %v2337 = vpack.c.bf16 %v2302, %v2301
      %v2338 = vpack.c.bf16 %v1104, %v1103
      %v2339 = vpack.c.bf16 %v2304, %v2303
      %v2340 = vpack.c.bf16 %v1106, %v1105
      %v2341 = vpack.c.bf16 %v2306, %v2305
      %v2342 = vpack.c.bf16 %v1108, %v1107
      %v2343 = vpack.c.bf16 %v2308, %v2307
      %v2344 = vpack.c.bf16 %v1110, %v1109
      %v2345 = vpack.c.bf16 %v2310, %v2309
      %v2346 = vpack.c.bf16 %v1112, %v1111
      %v2347 = vpack.c.bf16 %v2312, %v2311
      %v2348 = vpack.c.bf16 %v1114, %v1113
      %v2349 = vpack.c.bf16 %v2314, %v2313
      %v2350 = vpack.c.bf16 %v1116, %v1115
      %v2351 = vpack.c.bf16 %v2316, %v2315
      %v2352 = vpack.c.bf16 %v1118, %v1117
      %v2353 = vpack.c.bf16 %v2318, %v2317
      %v2354 = vpack.c.bf16 %v1120, %v1119
      %v2355 = vpack.c.bf16 %v2320, %v2319
      %v2356 = vpack.c.bf16 %v1122, %v1121
      %v2357 = vpack.c.bf16 %v2322, %v2321
      %v2358 = vpack.c.bf16 %v1124, %v1123
      %v2359 = vld [vmem:[%s4] sm:$0xf]
      %v2360 = vld [vmem:[%s4 + $0x4] sm:$0xf]
      %v2361 = vld [vmem:[%s4 + $0x8] sm:$0xf]
      %v2362 = vld [vmem:[%s4 + $0xc] sm:$0xf]
      %v2363 = vld [vmem:[%s4 + $0x10] sm:$0xf]
      %v2364 = vld [vmem:[%s4 + $0x14] sm:$0xf]
      %v2365 = vld [vmem:[%s4 + $0x18] sm:$0xf]
      %v2366 = vld [vmem:[%s4 + $0x1c] sm:$0xf]
      %v2367 = vld [vmem:[%s4 + $0x20] sm:$0xf]
      %v2368 = vld [vmem:[%s4 + $0x24] sm:$0xf]
      %v2369 = vld [vmem:[%s4 + $0x28] sm:$0xf]
      %v2370 = vld [vmem:[%s4 + $0x2c] sm:$0xf]
      %v2371 = vld [vmem:[%s4 + $0x30] sm:$0xf]
      %v2372 = vld [vmem:[%s4 + $0x34] sm:$0xf]
      %v2373 = vld [vmem:[%s4 + $0x38] sm:$0xf]
      %v2374 = vld [vmem:[%s4 + $0x3c] sm:$0xf]
      %v2375 = vld [vmem:[%s4 + $0x40] sm:$0xf]
      %v2376 = vld [vmem:[%s4 + $0x44] sm:$0xf]
      %v2377 = vld [vmem:[%s5] sm:$0x1]
      %v2379 = vperm.slane %v2377, 0
      %v2399 = vunpack.c.l.b16 %v2359
      %v2400 = vunpack.c.l.b16 %v2360
      %v2401 = vunpack.c.l.b16 %v2361
      %v2402 = vunpack.c.l.b16 %v2362
      %v2403 = vunpack.c.l.b16 %v2363
      %v2404 = vunpack.c.l.b16 %v2364
      %v2405 = vunpack.c.l.b16 %v2365
      %v2406 = vunpack.c.l.b16 %v2366
      %v2407 = vunpack.c.l.b16 %v2367
      %v2408 = vunpack.c.l.b16 %v2368
      %v2409 = vunpack.c.l.b16 %v2369
      %v2410 = vunpack.c.l.b16 %v2370
      %v2411 = vunpack.c.l.b16 %v2371
      %v2412 = vunpack.c.l.b16 %v2372
      %v2413 = vunpack.c.l.b16 %v2373
      %v2414 = vunpack.c.l.b16 %v2374
      %v2415 = vunpack.c.l.b16 %v2375
      %v2416 = vunpack.c.l.b16 %v2376
      %v2417 = vpack.c.b16 %v2400, %v2399
      %v2418 = vpack.c.b16 %v2402, %v2401
      %v2419 = vpack.c.b16 %v2404, %v2403
      %v2420 = vpack.c.b16 %v2406, %v2405
      %v2421 = vpack.c.b16 %v2408, %v2407
      %v2422 = vpack.c.b16 %v2410, %v2409
      %v2423 = vpack.c.b16 %v2412, %v2411
      %v2424 = vpack.c.b16 %v2414, %v2413
      %v2425 = vpack.c.b16 %v2416, %v2415
      %v2436 = vsel %vm787, %v2324, 0
      %v2439 = vsel %vm787, %v2326, 0
      %v2442 = vsel %vm787, %v2328, 0
      %v2445 = vsel %vm787, %v2330, 0
      %v2448 = vsel %vm787, %v2332, 0
      %v2451 = vsel %vm787, %v2334, 0
      %v2454 = vsel %vm787, %v2336, 0
      %v2457 = vsel %vm787, %v2338, 0
      %v2460 = vsel %vm787, %v2340, 0
      %v2463 = vsel %vm787, %v2342, 0
      %v2466 = vsel %vm787, %v2344, 0
      %v2469 = vsel %vm787, %v2346, 0
      %v2472 = vsel %vm787, %v2348, 0
      %v2475 = vsel %vm787, %v2350, 0
      %v2478 = vsel %vm787, %v2352, 0
      %v2481 = vsel %vm787, %v2354, 0
      %v2484 = vsel %vm787, %v2356, 0
      %v2487 = vsel %vm787, %v2358, 0
      %2489 = vmatpush.bf16.msra.mxu0 %v2424
      %2490 = vmatpush.bf16.msra.mxu0 %v2423
      %2491 = vmatpush.bf16.msra.mxu0 %v2422
      %2492 = vmatpush.bf16.msra.mxu0 %v2421
      %2493 = vmatpush.bf16.msra.mxu0 %v2420
      %2494 = vmatpush.bf16.msra.mxu0 %v2419
      %2495 = vmatpush.bf16.msra.mxu0 %v2418
      %2496 = vmatpush.bf16.msra.mxu0 %v2417
      %2497 = vmatmul.bf16.gmra.mxu0 %v2323
      %v2498 = vpop.f32.mrf.mxu0
      %v2499 = vadd.f32 %v2379, %v2498
      %v2500 = vpop.f32.mrf.mxu0
      %v2501 = vadd.f32 %v2379, %v2500
      %2502 = vmatmul.bf16.gmra.mxu0 %v2325
      %v2503 = vpop.f32.mrf.mxu0
      %v2504 = vadd.f32 %v2379, %v2503
      %v2505 = vpop.f32.mrf.mxu0
      %v2506 = vadd.f32 %v2379, %v2505
      %2507 = vmatmul.bf16.gmra.mxu0 %v2327
      %v2508 = vpop.f32.mrf.mxu0
      %v2509 = vadd.f32 %v2379, %v2508
      %v2510 = vpop.f32.mrf.mxu0
      %v2511 = vadd.f32 %v2379, %v2510
      %2512 = vmatmul.bf16.gmra.mxu0 %v2329
      %v2513 = vpop.f32.mrf.mxu0
      %v2514 = vadd.f32 %v2379, %v2513
      %v2515 = vpop.f32.mrf.mxu0
      %v2516 = vadd.f32 %v2379, %v2515
      %2517 = vmatmul.bf16.gmra.mxu0 %v2331
      %v2518 = vpop.f32.mrf.mxu0
      %v2519 = vadd.f32 %v2379, %v2518
      %v2520 = vpop.f32.mrf.mxu0
      %v2521 = vadd.f32 %v2379, %v2520
      %2522 = vmatmul.bf16.gmra.mxu0 %v2333
      %v2523 = vpop.f32.mrf.mxu0
      %v2524 = vadd.f32 %v2379, %v2523
      %v2525 = vpop.f32.mrf.mxu0
      %v2526 = vadd.f32 %v2379, %v2525
      %2527 = vmatmul.bf16.gmra.mxu0 %v2335
      %v2528 = vpop.f32.mrf.mxu0
      %v2529 = vadd.f32 %v2379, %v2528
      %v2530 = vpop.f32.mrf.mxu0
      %v2531 = vadd.f32 %v2379, %v2530
      %2532 = vmatmul.bf16.gmra.mxu0 %v2337
      %v2533 = vpop.f32.mrf.mxu0
      %v2534 = vadd.f32 %v2379, %v2533
      %v2535 = vpop.f32.mrf.mxu0
      %v2536 = vadd.f32 %v2379, %v2535
      %2537 = vmatmul.bf16.gmra.mxu0 %v2339
      %v2538 = vpop.f32.mrf.mxu0
      %v2539 = vadd.f32 %v2379, %v2538
      %v2540 = vpop.f32.mrf.mxu0
      %v2541 = vadd.f32 %v2379, %v2540
      %2542 = vmatmul.bf16.gmra.mxu0 %v2341
      %v2543 = vpop.f32.mrf.mxu0
      %v2544 = vadd.f32 %v2379, %v2543
      %v2545 = vpop.f32.mrf.mxu0
      %v2546 = vadd.f32 %v2379, %v2545
      %2547 = vmatmul.bf16.gmra.mxu0 %v2343
      %v2548 = vpop.f32.mrf.mxu0
      %v2549 = vadd.f32 %v2379, %v2548
      %v2550 = vpop.f32.mrf.mxu0
      %v2551 = vadd.f32 %v2379, %v2550
      %2552 = vmatmul.bf16.gmra.mxu0 %v2345
      %v2553 = vpop.f32.mrf.mxu0
      %v2554 = vadd.f32 %v2379, %v2553
      %v2555 = vpop.f32.mrf.mxu0
      %v2556 = vadd.f32 %v2379, %v2555
      %2557 = vmatmul.bf16.gmra.mxu0 %v2347
      %v2558 = vpop.f32.mrf.mxu0
      %v2559 = vadd.f32 %v2379, %v2558
      %v2560 = vpop.f32.mrf.mxu0
      %v2561 = vadd.f32 %v2379, %v2560
      %2562 = vmatmul.bf16.gmra.mxu0 %v2349
      %v2563 = vpop.f32.mrf.mxu0
      %v2564 = vadd.f32 %v2379, %v2563
      %v2565 = vpop.f32.mrf.mxu0
      %v2566 = vadd.f32 %v2379, %v2565
      %2567 = vmatmul.bf16.gmra.mxu0 %v2351
      %v2568 = vpop.f32.mrf.mxu0
      %v2569 = vadd.f32 %v2379, %v2568
      %v2570 = vpop.f32.mrf.mxu0
      %v2571 = vadd.f32 %v2379, %v2570
      %2572 = vmatmul.bf16.gmra.mxu0 %v2353
      %v2573 = vpop.f32.mrf.mxu0
      %v2574 = vadd.f32 %v2379, %v2573
      %v2575 = vpop.f32.mrf.mxu0
      %v2576 = vadd.f32 %v2379, %v2575
      %2577 = vmatmul.bf16.gmra.mxu0 %v2355
      %v2578 = vpop.f32.mrf.mxu0
      %v2579 = vadd.f32 %v2379, %v2578
      %v2580 = vpop.f32.mrf.mxu0
      %v2581 = vadd.f32 %v2379, %v2580
      %2582 = vmatmul.bf16.gmra.mxu0 %v2357
      %v2583 = vpop.f32.mrf.mxu0
      %v2584 = vadd.f32 %v2379, %v2583
      %v2585 = vpop.f32.mrf.mxu0
      %v2586 = vadd.f32 %v2379, %v2585
      %2587 = vdwg.mxu0
      %2588 = vmatpush.bf16.msra.mxu0 0
      %2589 = vmatpush.bf16.msra.mxu0 0
      %2590 = vmatpush.bf16.msra.mxu0 0
      %2591 = vmatpush.bf16.msra.mxu0 0
      %2592 = vmatpush.bf16.msra.mxu0 0
      %2593 = vmatpush.bf16.msra.mxu0 0
      %2594 = vmatpush.bf16.msra.mxu0 0
      %2595 = vmatpush.bf16.msra.mxu0 %v2425
      %2596 = vmatmul.bf16.gmra.mxu0 %v2436
      %v2597 = vpop.f32.mrf.mxu0
      %v2598 = vadd.f32 %v2499, %v2597
      %v2599 = vpop.f32.mrf.mxu0
      %v2600 = vadd.f32 %v2501, %v2599
      %2601 = vmatmul.bf16.gmra.mxu0 %v2439
      %v2602 = vpop.f32.mrf.mxu0
      %v2603 = vadd.f32 %v2504, %v2602
      %v2604 = vpop.f32.mrf.mxu0
      %v2605 = vadd.f32 %v2506, %v2604
      %2606 = vmatmul.bf16.gmra.mxu0 %v2442
      %v2607 = vpop.f32.mrf.mxu0
      %v2608 = vadd.f32 %v2509, %v2607
      %v2609 = vpop.f32.mrf.mxu0
      %v2610 = vadd.f32 %v2511, %v2609
      %2611 = vmatmul.bf16.gmra.mxu0 %v2445
      %v2612 = vpop.f32.mrf.mxu0
      %v2613 = vadd.f32 %v2514, %v2612
      %v2614 = vpop.f32.mrf.mxu0
      %v2615 = vadd.f32 %v2516, %v2614
      %2616 = vmatmul.bf16.gmra.mxu0 %v2448
      %v2617 = vpop.f32.mrf.mxu0
      %v2618 = vadd.f32 %v2519, %v2617
      %v2619 = vpop.f32.mrf.mxu0
      %v2620 = vadd.f32 %v2521, %v2619
      %2621 = vmatmul.bf16.gmra.mxu0 %v2451
      %v2622 = vpop.f32.mrf.mxu0
      %v2623 = vadd.f32 %v2524, %v2622
      %v2624 = vpop.f32.mrf.mxu0
      %v2625 = vadd.f32 %v2526, %v2624
      %2626 = vmatmul.bf16.gmra.mxu0 %v2454
      %v2627 = vpop.f32.mrf.mxu0
      %v2628 = vadd.f32 %v2529, %v2627
      %v2629 = vpop.f32.mrf.mxu0
      %v2630 = vadd.f32 %v2531, %v2629
      %2631 = vmatmul.bf16.gmra.mxu0 %v2457
      %v2632 = vpop.f32.mrf.mxu0
      %v2633 = vadd.f32 %v2534, %v2632
      %v2634 = vpop.f32.mrf.mxu0
      %v2635 = vadd.f32 %v2536, %v2634
      %2636 = vmatmul.bf16.gmra.mxu0 %v2460
      %v2637 = vpop.f32.mrf.mxu0
      %v2638 = vadd.f32 %v2539, %v2637
      %v2639 = vpop.f32.mrf.mxu0
      %v2640 = vadd.f32 %v2541, %v2639
      %2641 = vmatmul.bf16.gmra.mxu0 %v2463
      %v2642 = vpop.f32.mrf.mxu0
      %v2643 = vadd.f32 %v2544, %v2642
      %v2644 = vpop.f32.mrf.mxu0
      %v2645 = vadd.f32 %v2546, %v2644
      %2646 = vmatmul.bf16.gmra.mxu0 %v2466
      %v2647 = vpop.f32.mrf.mxu0
      %v2648 = vadd.f32 %v2549, %v2647
      %v2649 = vpop.f32.mrf.mxu0
      %v2650 = vadd.f32 %v2551, %v2649
      %2651 = vmatmul.bf16.gmra.mxu0 %v2469
      %v2652 = vpop.f32.mrf.mxu0
      %v2653 = vadd.f32 %v2554, %v2652
      %v2654 = vpop.f32.mrf.mxu0
      %v2655 = vadd.f32 %v2556, %v2654
      %2656 = vmatmul.bf16.gmra.mxu0 %v2472
      %v2657 = vpop.f32.mrf.mxu0
      %v2658 = vadd.f32 %v2559, %v2657
      %v2659 = vpop.f32.mrf.mxu0
      %v2660 = vadd.f32 %v2561, %v2659
      %2661 = vmatmul.bf16.gmra.mxu0 %v2475
      %v2662 = vpop.f32.mrf.mxu0
      %v2663 = vadd.f32 %v2564, %v2662
      %v2664 = vpop.f32.mrf.mxu0
      %v2665 = vadd.f32 %v2566, %v2664
      %2666 = vmatmul.bf16.gmra.mxu0 %v2478
      %v2667 = vpop.f32.mrf.mxu0
      %v2668 = vadd.f32 %v2569, %v2667
      %v2669 = vpop.f32.mrf.mxu0
      %v2670 = vadd.f32 %v2571, %v2669
      %2671 = vmatmul.bf16.gmra.mxu0 %v2481
      %v2672 = vpop.f32.mrf.mxu0
      %v2673 = vadd.f32 %v2574, %v2672
      %v2674 = vpop.f32.mrf.mxu0
      %v2675 = vadd.f32 %v2576, %v2674
      %2676 = vmatmul.bf16.gmra.mxu0 %v2484
      %v2677 = vpop.f32.mrf.mxu0
      %v2678 = vadd.f32 %v2579, %v2677
      %v2679 = vpop.f32.mrf.mxu0
      %v2680 = vadd.f32 %v2581, %v2679
      %2681 = vmatmul.bf16.gmra.mxu0 %v2487
      %v2682 = vpop.f32.mrf.mxu0
      %v2683 = vadd.f32 %v2584, %v2682
      %v2684 = vpop.f32.mrf.mxu0
      %v2685 = vadd.f32 %v2586, %v2684
      %2686 = vdwg.mxu0
      %2687 = vst [vmem:[%s251] sm:$0xff] %v2598
      %2688 = vst [vmem:[%s251 + $0x8] sm:$0xff] %v2600
      %2689 = vst [vmem:[%s251 + $0x10] sm:$0xff] %v2603
      %2690 = vst [vmem:[%s251 + $0x18] sm:$0xff] %v2605
      %2691 = vst [vmem:[%s251 + $0x20] sm:$0xff] %v2608
      %2692 = vst [vmem:[%s251 + $0x28] sm:$0xff] %v2610
      %2693 = vst [vmem:[%s251 + $0x30] sm:$0xff] %v2613
      %2694 = vst [vmem:[%s251 + $0x38] sm:$0xff] %v2615
      %2695 = vst [vmem:[%s251 + $0x40] sm:$0xff] %v2618
      %2696 = vst [vmem:[%s251 + $0x48] sm:$0xff] %v2620
      %2697 = vst [vmem:[%s251 + $0x50] sm:$0xff] %v2623
      %2698 = vst [vmem:[%s251 + $0x58] sm:$0xff] %v2625
      %2699 = vst [vmem:[%s251 + $0x60] sm:$0xff] %v2628
      %2700 = vst [vmem:[%s251 + $0x68] sm:$0xff] %v2630
      %2701 = vst [vmem:[%s251 + $0x70] sm:$0xff] %v2633
      %2702 = vst [vmem:[%s251 + $0x78] sm:$0xff] %v2635
      %2703 = vst [vmem:[%s251 + $0x80] sm:$0xff] %v2638
      %2704 = vst [vmem:[%s251 + $0x88] sm:$0xff] %v2640
      %2705 = vst [vmem:[%s251 + $0x90] sm:$0xff] %v2643
      %2706 = vst [vmem:[%s251 + $0x98] sm:$0xff] %v2645
      %2707 = vst [vmem:[%s251 + $0xa0] sm:$0xff] %v2648
      %2708 = vst [vmem:[%s251 + $0xa8] sm:$0xff] %v2650
      %2709 = vst [vmem:[%s251 + $0xb0] sm:$0xff] %v2653
      %2710 = vst [vmem:[%s251 + $0xb8] sm:$0xff] %v2655
      %2711 = vst [vmem:[%s251 + $0xc0] sm:$0xff] %v2658
      %2712 = vst [vmem:[%s251 + $0xc8] sm:$0xff] %v2660
      %2713 = vst [vmem:[%s251 + $0xd0] sm:$0xff] %v2663
      %2714 = vst [vmem:[%s251 + $0xd8] sm:$0xff] %v2665
      %2715 = vst [vmem:[%s251 + $0xe0] sm:$0xff] %v2668
      %2716 = vst [vmem:[%s251 + $0xe8] sm:$0xff] %v2670
      %2717 = vst [vmem:[%s251 + $0xf0] sm:$0xff] %v2673
      %2718 = vst [vmem:[%s251 + $0xf8] sm:$0xff] %v2675
      %2719 = vst [vmem:[%s251 + $0x100] sm:$0xff] %v2678
      %2720 = vst [vmem:[%s251 + $0x108] sm:$0xff] %v2680
      %2721 = vst [vmem:[%s251 + $0x110] sm:$0xff] %v2683
      %2722 = vst [vmem:[%s251 + $0x118] sm:$0xff] %v2685
      %p2723 = scmp.lt.s32.totalorder %s17, 1
      %s2724 = scalar_select %p2723, %s17, 1
      %s2725 = smul.addr %s2724, 36
      %s2726 = smul.addr %s2725, 8
      %s2727 = scalar_lea.vmem %s6, %s2726
      // Predicated region
      $region45: #{abcd_forward.2} parent=43 // pred_check
        %p2728 = pneg %p166
      $region46: #{abcd_forward.2} parent=43 // pred_check_branch
        %2730 = sbr.rel (%p2728) target = $region48
      $region47: #{abcd_forward.2} parent=43 // pred_region
        _
      $region48: #{abcd_forward.2} parent=43 // pred_fallthru
        _
    $region44: #{abcd_forward.2} parent=5 // pred_fallthru
      _
    %p2731 = scmp.le.s32.totalorder 2, %s12
    // Predicated region
    $region49: #{abcd_forward.2} parent=5 // pred_check
      %p2732 = pneg %p2731
    $region50: #{abcd_forward.2} parent=5 // pred_check_branch
      %2734 = sbr.rel (%p2732) target = $region52
    $region51: #{abcd_forward.2} parent=5 // pred_region
      %s2735 = ssub.s32 %s12, 2
      // Predicated region
      $region53: #{abcd_forward.2} parent=51 // pred_check
        %p2736 = pneg %p172
      $region54: #{abcd_forward.2} parent=51 // pred_check_branch
        %2738 = sbr.rel (%p2736) target = $region56
      $region55: #{abcd_forward.2} parent=51 // pred_region
        %p2739 = scmp.lt.s32.totalorder %s18, 1
        %s2740 = scalar_select %p2739, %s18, 1
        %s2741 = smul.addr %s2740, 36
        %s2742 = smul.addr %s2741, 8
        %s2743 = scalar_lea.vmem %s6, %s2742
      $region56: #{abcd_forward.2} parent=51 // pred_fallthru
        _
    $region52: #{abcd_forward.2} parent=5 // pred_fallthru
      _
  $region6: #{abcd_forward.2} parent=0 // loop_footer
    %s16 = sadd.s32 1, %s12
  $region7: #{abcd_forward.2} parent=0 // loop_footer_branch
    %11 = sbr.rel target = $region3
  $region8: #{abcd_forward.2} parent=0 // loop_exit
    _

// kernel: abcd_forward.3
$region0: #{abcd_forward.3}
  #allocation0 [shape = 'u32[]', space=smem, size = 0x4, offset = 0x4, fixed_abs, tag = 'smem constant byte address 0x4 - core index']
  #allocation1 [shape = 'u32[72,128]{1,0:T(1,128)}', space=vmem, size = 0x9000, scoped, tag = 'internal scratch']
  %s0 = inlined_call_operand.vmem [shape: s32[2,256,1], index: 0, kind: input, shape index: {}]
  %s1 = inlined_call_operand.vmem [shape: f32[2,256,1], index: 1, kind: input, shape index: {}]
  %s2 = inlined_call_operand.vmem [shape: f32[2,288,128], index: 2, kind: input, shape index: {}]
  %s3 = inlined_call_operand.vmem [shape: f32[64,64], index: 3, kind: input, shape index: {}]
  %s4 = inlined_call_operand.vmem [shape: f32[1,64], index: 4, kind: input, shape index: {}]
  %s5 = inlined_call_operand.vmem [shape: f32[1,64], index: 5, kind: input, shape index: {}]
  %s6 = inlined_call_operand.vmem [shape: f32[64,64], index: 6, kind: input, shape index: {}]
  %s7 = inlined_call_operand.vmem [shape: f32[1,64], index: 7, kind: input, shape index: {}]
  %s8 = inlined_call_operand.vmem [shape: f32[64,8], index: 8, kind: input, shape index: {}]
  %s9 = inlined_call_operand.vmem [shape: f32[1,8], index: 9, kind: input, shape index: {}]
  %s10 = inlined_call_operand.vmem [shape: f32[2,8,256], index: 10, kind: output, shape index: {}]
  %s11 = sld [smem:[#allocation0]]
  $region73: #{abcd_forward.3} parent=0
    _
  %s13 = ssub.s32 1, %s11
  %s14 = scalar_select 0, %s13, %s11
  loop: start=0, step=1, limit=6
  $region2: #{abcd_forward.3} parent=0 // loop_pre_header
    _
  $region3: #{abcd_forward.3} parent=0 // loop_header
    %s16 = sphi 0, %s20
    %p17 = scmp.ge.s32.totalorder %s16, 6
    %s23 = sphi 0, %s35
    %s24 = sphi 0, %s31
    %s25 = sphi 0, %s23
    %s26 = sphi 0, %s24
    %s27 = sphi 0, %s25
    %s28 = sphi 0, %s26
    %s40 = sphi 0, %s42
    %s43 = sphi 0, %s40
    %s44 = sphi 0, %s43
    %s60 = sphi 0, %s44
    %s68 = sphi 0, %s70
    %s71 = sphi 0, %s68
    %s72 = sphi 0, %s71
    %s88 = sphi 0, %s72
    %s94 = sphi 0, %s96
    %s97 = sphi 0, %s94
    %s98 = sphi 0, %s97
    %s114 = sphi 0, %s98
    %s118 = sphi 0, %s118
    %s120 = sphi 0, %s118
    %s121 = sphi 0, %s120
    %s135 = sphi 0, %s121
    %s139 = sphi 0, %s139
    %s141 = sphi 0, %s139
    %s142 = sphi 0, %s141
    %s156 = sphi 0, %s142
    %s160 = sphi 0, %s160
    %s162 = sphi 0, %s160
    %s163 = sphi 0, %s162
    %s177 = sphi 0, %s163
    %s181 = sphi 0, %s181
    %s183 = sphi 0, %s181
    %s184 = sphi 0, %s183
    %s198 = sphi 0, %s184
    %s202 = sphi 0, %s202
    %s204 = sphi 0, %s202
    %s205 = sphi 0, %s204
    %s219 = sphi 0, %s205
    %s223 = sphi 0, %s223
    %s225 = sphi 0, %s223
    %s226 = sphi 0, %s225
    %s240 = sphi 0, %s226
    %s244 = sphi 0, %s244
    %s246 = sphi 0, %s244
    %s247 = sphi 0, %s246
    %s261 = sphi 0, %s247
    %s269 = sphi 0, %s271
    %s272 = sphi 0, %s269
    %s273 = sphi 0, %s272
    %s289 = sphi 0, %s273
  $region4: #{abcd_forward.3} parent=0 // loop_header_branch
    %19 = sbr.rel (%p17) target = $region8
  $region5: #{abcd_forward.3} parent=0 // loop_body
    %s21 = ssub.s32 %s16, 1
    %s22 = ssub.s32 %s16, 2
    %s29 = sadd.s32 1, %s24
    %p30 = scmp.ge.s32.totalorder %s29, 2
    %s31 = scalar_select %p30, 0, %s29
    %s32 = sadd.s32 1, %s23
    %s33 = scalar_select %p30, %s32, %s23
    %p34 = scmp.ge.s32.totalorder %s33, 2
    %s35 = scalar_select %p34, 0, %s33
    %s36 = ssub.s32 %s23, %s35
    %s37 = ssub.s32 %s24, %s31
    %s38 = sor.u32 %s36, %s37
    %p39 = scmp.eq.s32.totalorder %s38, 0
    %s41 = sadd.s32 %s40, 1
    %s42 = scalar_select %p39, %s40, %s41
    %p45 = pneg %p39
    %p46 = scmp.eq.s32.totalorder %s16, 3
    %p47 = por %p45, %p46
    %p48 = scmp.ne.s32.totalorder %s40, %s43
    %p49 = scmp.eq.s32.totalorder %s16, 0
    %p50 = por %p48, %p49
    %p51 = scmp.ne.s32.totalorder %s40, %s43
    %p52 = scmp.eq.s32.totalorder %s21, 3
    %p53 = por %p51, %p52
    %p54 = scmp.ne.s32.totalorder %s43, %s44
    %p55 = scmp.eq.s32.totalorder %s21, 0
    %p56 = por %p54, %p55
    %p57 = scmp.ne.s32.totalorder %s43, %s44
    %p58 = scmp.eq.s32.totalorder %s22, 3
    %p59 = por %p57, %p58
    %p61 = scmp.ne.s32.totalorder %s44, %s60
    %p62 = scmp.eq.s32.totalorder %s22, 0
    %p63 = por %p61, %p62
    %s64 = ssub.s32 %s23, %s35
    %s65 = ssub.s32 %s24, %s31
    %s66 = sor.u32 %s64, %s65
    %p67 = scmp.eq.s32.totalorder %s66, 0
    %s69 = sadd.s32 %s68, 1
    %s70 = scalar_select %p67, %s68, %s69
    %p73 = pneg %p67
    %p74 = scmp.eq.s32.totalorder %s16, 3
    %p75 = por %p73, %p74
    %p76 = scmp.ne.s32.totalorder %s68, %s71
    %p77 = scmp.eq.s32.totalorder %s16, 0
    %p78 = por %p76, %p77
    %p79 = scmp.ne.s32.totalorder %s68, %s71
    %p80 = scmp.eq.s32.totalorder %s21, 3
    %p81 = por %p79, %p80
    %p82 = scmp.ne.s32.totalorder %s71, %s72
    %p83 = scmp.eq.s32.totalorder %s21, 0
    %p84 = por %p82, %p83
    %p85 = scmp.ne.s32.totalorder %s71, %s72
    %p86 = scmp.eq.s32.totalorder %s22, 3
    %p87 = por %p85, %p86
    %p89 = scmp.ne.s32.totalorder %s72, %s88
    %p90 = scmp.eq.s32.totalorder %s22, 0
    %p91 = por %p89, %p90
    %s92 = ssub.s32 %s23, %s35
    %p93 = scmp.eq.s32.totalorder %s92, 0
    %s95 = sadd.s32 %s94, 1
    %s96 = scalar_select %p93, %s94, %s95
    %p99 = pneg %p93
    %p100 = scmp.eq.s32.totalorder %s16, 3
    %p101 = por %p99, %p100
    %p102 = scmp.ne.s32.totalorder %s94, %s97
    %p103 = scmp.eq.s32.totalorder %s16, 0
    %p104 = por %p102, %p103
    %p105 = scmp.ne.s32.totalorder %s94, %s97
    %p106 = scmp.eq.s32.totalorder %s21, 3
    %p107 = por %p105, %p106
    %p108 = scmp.ne.s32.totalorder %s97, %s98
    %p109 = scmp.eq.s32.totalorder %s21, 0
    %p110 = por %p108, %p109
    %p111 = scmp.ne.s32.totalorder %s97, %s98
    %p112 = scmp.eq.s32.totalorder %s22, 3
    %p113 = por %p111, %p112
    %p115 = scmp.ne.s32.totalorder %s98, %s114
    %p116 = scmp.eq.s32.totalorder %s22, 0
    %p117 = por %p115, %p116
    %s119 = sadd.s32 %s118, 1
    %p122 = scmp.eq.s32.totalorder %s16, 3
    %p123 = scmp.ne.s32.totalorder %s118, %s120
    %p124 = scmp.eq.s32.totalorder %s16, 0
    %p125 = por %p123, %p124
    %p126 = scmp.ne.s32.totalorder %s118, %s120
    %p127 = scmp.eq.s32.totalorder %s21, 3
    %p128 = por %p126, %p127
    %p129 = scmp.ne.s32.totalorder %s120, %s121
    %p130 = scmp.eq.s32.totalorder %s21, 0
    %p131 = por %p129, %p130
    %p132 = scmp.ne.s32.totalorder %s120, %s121
    %p133 = scmp.eq.s32.totalorder %s22, 3
    %p134 = por %p132, %p133
    %p136 = scmp.ne.s32.totalorder %s121, %s135
    %p137 = scmp.eq.s32.totalorder %s22, 0
    %p138 = por %p136, %p137
    %s140 = sadd.s32 %s139, 1
    %p143 = scmp.eq.s32.totalorder %s16, 3
    %p144 = scmp.ne.s32.totalorder %s139, %s141
    %p145 = scmp.eq.s32.totalorder %s16, 0
    %p146 = por %p144, %p145
    %p147 = scmp.ne.s32.totalorder %s139, %s141
    %p148 = scmp.eq.s32.totalorder %s21, 3
    %p149 = por %p147, %p148
    %p150 = scmp.ne.s32.totalorder %s141, %s142
    %p151 = scmp.eq.s32.totalorder %s21, 0
    %p152 = por %p150, %p151
    %p153 = scmp.ne.s32.totalorder %s141, %s142
    %p154 = scmp.eq.s32.totalorder %s22, 3
    %p155 = por %p153, %p154
    %p157 = scmp.ne.s32.totalorder %s142, %s156
    %p158 = scmp.eq.s32.totalorder %s22, 0
    %p159 = por %p157, %p158
    %s161 = sadd.s32 %s160, 1
    %p164 = scmp.eq.s32.totalorder %s16, 3
    %p165 = scmp.ne.s32.totalorder %s160, %s162
    %p166 = scmp.eq.s32.totalorder %s16, 0
    %p167 = por %p165, %p166
    %p168 = scmp.ne.s32.totalorder %s160, %s162
    %p169 = scmp.eq.s32.totalorder %s21, 3
    %p170 = por %p168, %p169
    %p171 = scmp.ne.s32.totalorder %s162, %s163
    %p172 = scmp.eq.s32.totalorder %s21, 0
    %p173 = por %p171, %p172
    %p174 = scmp.ne.s32.totalorder %s162, %s163
    %p175 = scmp.eq.s32.totalorder %s22, 3
    %p176 = por %p174, %p175
    %p178 = scmp.ne.s32.totalorder %s163, %s177
    %p179 = scmp.eq.s32.totalorder %s22, 0
    %p180 = por %p178, %p179
    %s182 = sadd.s32 %s181, 1
    %p185 = scmp.eq.s32.totalorder %s16, 3
    %p186 = scmp.ne.s32.totalorder %s181, %s183
    %p187 = scmp.eq.s32.totalorder %s16, 0
    %p188 = por %p186, %p187
    %p189 = scmp.ne.s32.totalorder %s181, %s183
    %p190 = scmp.eq.s32.totalorder %s21, 3
    %p191 = por %p189, %p190
    %p192 = scmp.ne.s32.totalorder %s183, %s184
    %p193 = scmp.eq.s32.totalorder %s21, 0
    %p194 = por %p192, %p193
    %p195 = scmp.ne.s32.totalorder %s183, %s184
    %p196 = scmp.eq.s32.totalorder %s22, 3
    %p197 = por %p195, %p196
    %p199 = scmp.ne.s32.totalorder %s184, %s198
    %p200 = scmp.eq.s32.totalorder %s22, 0
    %p201 = por %p199, %p200
    %s203 = sadd.s32 %s202, 1
    %p206 = scmp.eq.s32.totalorder %s16, 3
    %p207 = scmp.ne.s32.totalorder %s202, %s204
    %p208 = scmp.eq.s32.totalorder %s16, 0
    %p209 = por %p207, %p208
    %p210 = scmp.ne.s32.totalorder %s202, %s204
    %p211 = scmp.eq.s32.totalorder %s21, 3
    %p212 = por %p210, %p211
    %p213 = scmp.ne.s32.totalorder %s204, %s205
    %p214 = scmp.eq.s32.totalorder %s21, 0
    %p215 = por %p213, %p214
    %p216 = scmp.ne.s32.totalorder %s204, %s205
    %p217 = scmp.eq.s32.totalorder %s22, 3
    %p218 = por %p216, %p217
    %p220 = scmp.ne.s32.totalorder %s205, %s219
    %p221 = scmp.eq.s32.totalorder %s22, 0
    %p222 = por %p220, %p221
    %s224 = sadd.s32 %s223, 1
    %p227 = scmp.eq.s32.totalorder %s16, 3
    %p228 = scmp.ne.s32.totalorder %s223, %s225
    %p229 = scmp.eq.s32.totalorder %s16, 0
    %p230 = por %p228, %p229
    %p231 = scmp.ne.s32.totalorder %s223, %s225
    %p232 = scmp.eq.s32.totalorder %s21, 3
    %p233 = por %p231, %p232
    %p234 = scmp.ne.s32.totalorder %s225, %s226
    %p235 = scmp.eq.s32.totalorder %s21, 0
    %p236 = por %p234, %p235
    %p237 = scmp.ne.s32.totalorder %s225, %s226
    %p238 = scmp.eq.s32.totalorder %s22, 3
    %p239 = por %p237, %p238
    %p241 = scmp.ne.s32.totalorder %s226, %s240
    %p242 = scmp.eq.s32.totalorder %s22, 0
    %p243 = por %p241, %p242
    %s245 = sadd.s32 %s244, 1
    %p248 = scmp.eq.s32.totalorder %s16, 3
    %p249 = scmp.ne.s32.totalorder %s244, %s246
    %p250 = scmp.eq.s32.totalorder %s16, 0
    %p251 = por %p249, %p250
    %p252 = scmp.ne.s32.totalorder %s244, %s246
    %p253 = scmp.eq.s32.totalorder %s21, 3
    %p254 = por %p252, %p253
    %p255 = scmp.ne.s32.totalorder %s246, %s247
    %p256 = scmp.eq.s32.totalorder %s21, 0
    %p257 = por %p255, %p256
    %p258 = scmp.ne.s32.totalorder %s246, %s247
    %p259 = scmp.eq.s32.totalorder %s22, 3
    %p260 = por %p258, %p259
    %p262 = scmp.ne.s32.totalorder %s247, %s261
    %p263 = scmp.eq.s32.totalorder %s22, 0
    %p264 = por %p262, %p263
    %s265 = ssub.s32 %s23, %s35
    %s266 = ssub.s32 %s24, %s31
    %s267 = sor.u32 %s265, %s266
    %p268 = scmp.eq.s32.totalorder %s267, 0
    %s270 = sadd.s32 %s269, 1
    %s271 = scalar_select %p268, %s269, %s270
    %p274 = pneg %p268
    %p275 = scmp.eq.s32.totalorder %s16, 3
    %p276 = por %p274, %p275
    %p277 = scmp.ne.s32.totalorder %s269, %s272
    %p278 = scmp.eq.s32.totalorder %s16, 0
    %p279 = por %p277, %p278
    %p280 = scmp.ne.s32.totalorder %s269, %s272
    %p281 = scmp.eq.s32.totalorder %s21, 3
    %p282 = por %p280, %p281
    %p283 = scmp.ne.s32.totalorder %s272, %s273
    %p284 = scmp.eq.s32.totalorder %s21, 0
    %p285 = por %p283, %p284
    %p286 = scmp.ne.s32.totalorder %s272, %s273
    %p287 = scmp.eq.s32.totalorder %s22, 3
    %p288 = por %p286, %p287
    %p290 = scmp.ne.s32.totalorder %s273, %s289
    %p291 = scmp.eq.s32.totalorder %s22, 0
    %p292 = por %p290, %p291
    %p293 = scmp.le.s32.totalorder 1, %s16
    %p294 = scmp.lt.s32.totalorder %s16, 5
    %p295 = pnand %p293, %p294
    %p296 = pneg %p295
    // Predicated region
    $region9: #{abcd_forward.3} parent=5 // pred_check
      _
    $region10: #{abcd_forward.3} parent=5 // pred_check_branch
      %298 = sbr.rel (%p295) target = $region12
    $region11: #{abcd_forward.3} parent=5 // pred_region
      %s299 = ssub.s32 %s16, 1
      // Predicated region
      $region13: #{abcd_forward.3} parent=11 // pred_check
        %p300 = pneg %p131
      $region14: #{abcd_forward.3} parent=11 // pred_check_branch
        %302 = sbr.rel (%p300) target = $region16
      $region15: #{abcd_forward.3} parent=11 // pred_region
        _
      $region16: #{abcd_forward.3} parent=11 // pred_fallthru
        _
      // Predicated region
      $region17: #{abcd_forward.3} parent=11 // pred_check
        %p303 = pneg %p152
      $region18: #{abcd_forward.3} parent=11 // pred_check_branch
        %305 = sbr.rel (%p303) target = $region20
      $region19: #{abcd_forward.3} parent=11 // pred_region
        _
      $region20: #{abcd_forward.3} parent=11 // pred_fallthru
        _
      // Predicated region
      $region21: #{abcd_forward.3} parent=11 // pred_check
        %p306 = pneg %p173
      $region22: #{abcd_forward.3} parent=11 // pred_check_branch
        %308 = sbr.rel (%p306) target = $region24
      $region23: #{abcd_forward.3} parent=11 // pred_region
        _
      $region24: #{abcd_forward.3} parent=11 // pred_fallthru
        _
      // Predicated region
      $region25: #{abcd_forward.3} parent=11 // pred_check
        %p309 = pneg %p194
      $region26: #{abcd_forward.3} parent=11 // pred_check_branch
        %311 = sbr.rel (%p309) target = $region28
      $region27: #{abcd_forward.3} parent=11 // pred_region
        _
      $region28: #{abcd_forward.3} parent=11 // pred_fallthru
        _
      // Predicated region
      $region29: #{abcd_forward.3} parent=11 // pred_check
        %p312 = pneg %p215
      $region30: #{abcd_forward.3} parent=11 // pred_check_branch
        %314 = sbr.rel (%p312) target = $region32
      $region31: #{abcd_forward.3} parent=11 // pred_region
        _
      $region32: #{abcd_forward.3} parent=11 // pred_fallthru
        _
      // Predicated region
      $region33: #{abcd_forward.3} parent=11 // pred_check
        %p315 = pneg %p236
      $region34: #{abcd_forward.3} parent=11 // pred_check_branch
        %317 = sbr.rel (%p315) target = $region36
      $region35: #{abcd_forward.3} parent=11 // pred_region
        _
      $region36: #{abcd_forward.3} parent=11 // pred_fallthru
        _
      // Predicated region
      $region37: #{abcd_forward.3} parent=11 // pred_check
        %p318 = pneg %p257
      $region38: #{abcd_forward.3} parent=11 // pred_check_branch
        %320 = sbr.rel (%p318) target = $region40
      $region39: #{abcd_forward.3} parent=11 // pred_region
        _
      $region40: #{abcd_forward.3} parent=11 // pred_fallthru
        _
    $region12: #{abcd_forward.3} parent=5 // pred_fallthru
      _
    %p321 = scmp.lt.s32.totalorder %s16, 4
    // Predicated region
    $region41: #{abcd_forward.3} parent=5 // pred_check
      %p322 = pneg %p321
    $region42: #{abcd_forward.3} parent=5 // pred_check_branch
      %324 = sbr.rel (%p322) target = $region44
    $region43: #{abcd_forward.3} parent=5 // pred_region
      // Predicated region
      $region45: #{abcd_forward.3} parent=43 // pred_check
        %p325 = pneg %p50
      $region46: #{abcd_forward.3} parent=43 // pred_check_branch
        %327 = sbr.rel (%p325) target = $region48
      $region47: #{abcd_forward.3} parent=43 // pred_region
        %s328 = smul.u32 16, %s24
        %p329 = scmp.lt.s32.totalorder %s23, 1
        %s330 = scalar_select %p329, %s23, 1
        %p331 = scmp.lt.s32.totalorder %s328, 31
        %s332 = scalar_select %p331, %s328, 31
        %s333 = smul.addr %s330, 32
        %s334 = sadd.s32 %s332, %s333
        %s335 = smul.addr %s334, 8
        %s336 = scalar_lea.vmem %s0, %s335
        %s337 = smul.u32 16, %s24
      $region48: #{abcd_forward.3} parent=43 // pred_fallthru
        _
      // Predicated region
      $region49: #{abcd_forward.3} parent=43 // pred_check
        %p338 = pneg %p78
      $region50: #{abcd_forward.3} parent=43 // pred_check_branch
        %340 = sbr.rel (%p338) target = $region52
      $region51: #{abcd_forward.3} parent=43 // pred_region
        %s341 = smul.u32 16, %s24
        %p342 = scmp.lt.s32.totalorder %s23, 1
        %s343 = scalar_select %p342, %s23, 1
        %p344 = scmp.lt.s32.totalorder %s341, 31
        %s345 = scalar_select %p344, %s341, 31
        %s346 = smul.addr %s343, 32
        %s347 = sadd.s32 %s345, %s346
        %s348 = smul.addr %s347, 8
        %s349 = scalar_lea.vmem %s1, %s348
        %s350 = smul.u32 16, %s24
      $region52: #{abcd_forward.3} parent=43 // pred_fallthru
        _
      // Predicated region
      $region53: #{abcd_forward.3} parent=43 // pred_check
        %p351 = pneg %p104
      $region54: #{abcd_forward.3} parent=43 // pred_check_branch
        %353 = sbr.rel (%p351) target = $region56
      $region55: #{abcd_forward.3} parent=43 // pred_region
        %p354 = scmp.lt.s32.totalorder %s23, 1
        %s355 = scalar_select %p354, %s23, 1
        %s356 = smul.addr %s355, 36
        %s357 = smul.addr %s356, 8
        %s358 = scalar_lea.vmem %s2, %s357
      $region56: #{abcd_forward.3} parent=43 // pred_fallthru
        _
    $region44: #{abcd_forward.3} parent=5 // pred_fallthru
      _
    %p359 = scmp.le.s32.totalorder 1, %s16
    %p360 = scmp.lt.s32.totalorder %s16, 5
    %p361 = pnand %p359, %p360
    %p362 = pneg %p361
    // Predicated region
    $region57: #{abcd_forward.3} parent=5 // pred_check
      _
    $region58: #{abcd_forward.3} parent=5 // pred_check_branch
      %364 = sbr.rel (%p361) target = $region60
    $region59: #{abcd_forward.3} parent=5 // pred_region
      %s365 = ssub.s32 %s16, 1
      %s366 = smul.u32 16, %s26
      %p367 = scmp.lt.s32.totalorder %s25, 1
      %s368 = scalar_select %p367, %s25, 1
      %p369 = scmp.lt.s32.totalorder %s366, 31
      %s370 = scalar_select %p369, %s366, 31
      %s371 = smul.addr %s368, 32
      %s372 = sadd.s32 %s370, %s371
      %s373 = smul.addr %s372, 8
      %s374 = scalar_lea.vmem %s0, %s373
      %p375 = pneg %p56
      %p376 = pneg %p53
      %s377 = smul.u32 16, %s26
      %p378 = scmp.lt.s32.totalorder %s25, 1
      %s379 = scalar_select %p378, %s25, 1
      %p380 = scmp.lt.s32.totalorder %s377, 31
      %s381 = scalar_select %p380, %s377, 31
      %s382 = smul.addr %s379, 32
      %s383 = sadd.s32 %s381, %s382
      %s384 = smul.addr %s383, 8
      %s385 = scalar_lea.vmem %s1, %s384
      %p386 = pneg %p84
      %p387 = pneg %p81
      %p388 = scmp.lt.s32.totalorder %s25, 1
      %s389 = scalar_select %p388, %s25, 1
      %s390 = smul.addr %s389, 36
      %s391 = smul.addr %s390, 8
      %s392 = scalar_lea.vmem %s2, %s391
      %p393 = pneg %p110
      %p394 = pneg %p107
      %p395 = pneg %p131
      %p396 = pneg %p128
      %p397 = pneg %p152
      %p398 = pneg %p149
      %p399 = pneg %p173
      %p400 = pneg %p170
      %p401 = pneg %p194
      %p402 = pneg %p191
      %p403 = pneg %p215
      %p404 = pneg %p212
      %p405 = pneg %p236
      %p406 = pneg %p233
      %p407 = pneg %p257
      %p408 = pneg %p254
      %p409 = pneg %p285
      %p410 = pneg %p282
      %p411 = scmp.lt.s32.totalorder %s25, 1
      %s412 = scalar_select %p411, %s25, 1
      %p413 = scmp.lt.s32.totalorder %s26, 1
      %s414 = scalar_select %p413, %s26, 1
      %s415 = smul.addr %s412, 2
      %s416 = sadd.s32 %s414, %s415
      %s417 = smul.addr %s416, 8
      %s418 = scalar_lea.vmem %s10, %s417
      %s419 = smul.u32 16, %s26
      %p420 = scmp.lt.s32.totalorder %s25, 1
      %s421 = scalar_select %p420, %s25, 1
      %p422 = scmp.lt.s32.totalorder %s419, 31
      %s423 = scalar_select %p422, %s419, 31
      %s424 = smul.addr %s421, 32
      %s425 = sadd.s32 %s423, %s424
      %s426 = smul.addr %s425, 8
      %s427 = scalar_lea.vmem %s0, %s426
      %s428 = smul.u32 16, %s26
      %s429 = smul.u32 16, %s26
      %p430 = scmp.lt.s32.totalorder %s25, 1
      %s431 = scalar_select %p430, %s25, 1
      %p432 = scmp.lt.s32.totalorder %s429, 31
      %s433 = scalar_select %p432, %s429, 31
      %s434 = smul.addr %s431, 32
      %s435 = sadd.s32 %s433, %s434
      %s436 = smul.addr %s435, 8
      %s437 = scalar_lea.vmem %s1, %s436
      %s438 = smul.u32 16, %s26
      %p439 = scmp.lt.s32.totalorder %s25, 1
      %s440 = scalar_select %p439, %s25, 1
      %s441 = smul.addr %s440, 36
      %s442 = smul.addr %s441, 8
      %s443 = scalar_lea.vmem %s2, %s442
      %p444 = scmp.lt.s32.totalorder %s25, 1
      %s445 = scalar_select %p444, %s25, 1
      %p446 = scmp.lt.s32.totalorder %s26, 1
      %s447 = scalar_select %p446, %s26, 1
      %s448 = smul.addr %s445, 2
      %s449 = sadd.s32 %s447, %s448
      %s450 = smul.addr %s449, 8
      %s451 = scalar_lea.vmem %s10, %s450
      %v452 = vlaneseq
      %v453 = vand.u32 %v452, 127
      %v454 = vadd.s32 %v453, 128
      %v455 = vadd.s32 %v453, 256
      %v456 = vld [vmem:[%s427] sm:$0xff]
      %v457 = vld [vmem:[%s427 + $0x8] sm:$0xff]
      %v458 = vld [vmem:[%s427 + $0x10] sm:$0xff]
      %v459 = vld [vmem:[%s427 + $0x18] sm:$0xff]
      %v460 = vld [vmem:[%s427 + $0x20] sm:$0xff]
      %v461 = vld [vmem:[%s427 + $0x28] sm:$0xff]
      %v462 = vld [vmem:[%s427 + $0x30] sm:$0xff]
      %v463 = vld [vmem:[%s427 + $0x38] sm:$0xff]
      %v464 = vld [vmem:[%s427 + $0x40] sm:$0xff]
      %v465 = vld [vmem:[%s427 + $0x48] sm:$0xff]
      %v466 = vld [vmem:[%s427 + $0x50] sm:$0xff]
      %v467 = vld [vmem:[%s427 + $0x58] sm:$0xff]
      %v468 = vld [vmem:[%s427 + $0x60] sm:$0xff]
      %v469 = vld [vmem:[%s427 + $0x68] sm:$0xff]
      %v470 = vld [vmem:[%s427 + $0x70] sm:$0xff]
      %v471 = vld [vmem:[%s427 + $0x78] sm:$0xff]
      %472 = vset.pattern.permute.xlu0 0
      %473 = vperm.xlu0 %472, %v456
      %v474 = vpop.permute.xlu0 %473
      %475 = vset.pattern.permute.xlu0 0
      %476 = vperm.xlu0 %475, %v457
      %v477 = vpop.permute.xlu0 %476
      %478 = vset.pattern.permute.xlu0 0
      %479 = vperm.xlu0 %478, %v458
      %v480 = vpop.permute.xlu0 %479
      %481 = vset.pattern.permute.xlu0 0
      %482 = vperm.xlu0 %481, %v459
      %v483 = vpop.permute.xlu0 %482
      %484 = vset.pattern.permute.xlu0 0
      %485 = vperm.xlu0 %484, %v460
      %v486 = vpop.permute.xlu0 %485
      %487 = vset.pattern.permute.xlu0 0
      %488 = vperm.xlu0 %487, %v461
      %v489 = vpop.permute.xlu0 %488
      %490 = vset.pattern.permute.xlu0 0
      %491 = vperm.xlu0 %490, %v462
      %v492 = vpop.permute.xlu0 %491
      %493 = vset.pattern.permute.xlu0 0
      %494 = vperm.xlu0 %493, %v463
      %v495 = vpop.permute.xlu0 %494
      %496 = vset.pattern.permute.xlu0 0
      %497 = vperm.xlu0 %496, %v464
      %v498 = vpop.permute.xlu0 %497
      %499 = vset.pattern.permute.xlu0 0
      %500 = vperm.xlu0 %499, %v465
      %v501 = vpop.permute.xlu0 %500
      %502 = vset.pattern.permute.xlu0 0
      %503 = vperm.xlu0 %502, %v466
      %v504 = vpop.permute.xlu0 %503
      %505 = vset.pattern.permute.xlu0 0
      %506 = vperm.xlu0 %505, %v467
      %v507 = vpop.permute.xlu0 %506
      %508 = vset.pattern.permute.xlu0 0
      %509 = vperm.xlu0 %508, %v468
      %v510 = vpop.permute.xlu0 %509
      %511 = vset.pattern.permute.xlu0 0
      %512 = vperm.xlu0 %511, %v469
      %v513 = vpop.permute.xlu0 %512
      %514 = vset.pattern.permute.xlu0 0
      %515 = vperm.xlu0 %514, %v470
      %v516 = vpop.permute.xlu0 %515
      %517 = vset.pattern.permute.xlu0 0
      %518 = vperm.xlu0 %517, %v471
      %v519 = vpop.permute.xlu0 %518
      %vm520 = vcmp.eq.s32.totalorder %v474, %v453
      %vm521 = vcmp.eq.s32.totalorder %v474, %v454
      %vm522 = vcmp.eq.s32.totalorder %v474, %v455
      %vm523 = vcmp.eq.s32.totalorder %v477, %v453
      %vm524 = vcmp.eq.s32.totalorder %v477, %v454
      %vm525 = vcmp.eq.s32.totalorder %v477, %v455
      %vm526 = vcmp.eq.s32.totalorder %v480, %v453
      %vm527 = vcmp.eq.s32.totalorder %v480, %v454
      %vm528 = vcmp.eq.s32.totalorder %v480, %v455
      %vm529 = vcmp.eq.s32.totalorder %v483, %v453
      %vm530 = vcmp.eq.s32.totalorder %v483, %v454
      %vm531 = vcmp.eq.s32.totalorder %v483, %v455
      %vm532 = vcmp.eq.s32.totalorder %v486, %v453
      %vm533 = vcmp.eq.s32.totalorder %v486, %v454
      %vm534 = vcmp.eq.s32.totalorder %v486, %v455
      %vm535 = vcmp.eq.s32.totalorder %v489, %v453
      %vm536 = vcmp.eq.s32.totalorder %v489, %v454
      %vm537 = vcmp.eq.s32.totalorder %v489, %v455
      %vm538 = vcmp.eq.s32.totalorder %v492, %v453
      %vm539 = vcmp.eq.s32.totalorder %v492, %v454
      %vm540 = vcmp.eq.s32.totalorder %v492, %v455
      %vm541 = vcmp.eq.s32.totalorder %v495, %v453
      %vm542 = vcmp.eq.s32.totalorder %v495, %v454
      %vm543 = vcmp.eq.s32.totalorder %v495, %v455
      %vm544 = vcmp.eq.s32.totalorder %v498, %v453
      %vm545 = vcmp.eq.s32.totalorder %v498, %v454
      %vm546 = vcmp.eq.s32.totalorder %v498, %v455
      %vm547 = vcmp.eq.s32.totalorder %v501, %v453
      %vm548 = vcmp.eq.s32.totalorder %v501, %v454
      %vm549 = vcmp.eq.s32.totalorder %v501, %v455
      %vm550 = vcmp.eq.s32.totalorder %v504, %v453
      %vm551 = vcmp.eq.s32.totalorder %v504, %v454
      %vm552 = vcmp.eq.s32.totalorder %v504, %v455
      %vm553 = vcmp.eq.s32.totalorder %v507, %v453
      %vm554 = vcmp.eq.s32.totalorder %v507, %v454
      %vm555 = vcmp.eq.s32.totalorder %v507, %v455
      %vm556 = vcmp.eq.s32.totalorder %v510, %v453
      %vm557 = vcmp.eq.s32.totalorder %v510, %v454
      %vm558 = vcmp.eq.s32.totalorder %v510, %v455
      %vm559 = vcmp.eq.s32.totalorder %v513, %v453
      %vm560 = vcmp.eq.s32.totalorder %v513, %v454
      %vm561 = vcmp.eq.s32.totalorder %v513, %v455
      %vm562 = vcmp.eq.s32.totalorder %v516, %v453
      %vm563 = vcmp.eq.s32.totalorder %v516, %v454
      %vm564 = vcmp.eq.s32.totalorder %v516, %v455
      %vm565 = vcmp.eq.s32.totalorder %v519, %v453
      %vm566 = vcmp.eq.s32.totalorder %v519, %v454
      %vm567 = vcmp.eq.s32.totalorder %v519, %v455
      %v568 = vsel %vm520, 1, 0
      %v569 = vsel %vm521, 1, 0
      %v570 = vsel %vm522, 1, 0
      %v571 = vsel %vm523, 1, 0
      %v572 = vsel %vm524, 1, 0
      %v573 = vsel %vm525, 1, 0
      %v574 = vsel %vm526, 1, 0
      %v575 = vsel %vm527, 1, 0
      %v576 = vsel %vm528, 1, 0
      %v577 = vsel %vm529, 1, 0
      %v578 = vsel %vm530, 1, 0
      %v579 = vsel %vm531, 1, 0
      %v580 = vsel %vm532, 1, 0
      %v581 = vsel %vm533, 1, 0
      %v582 = vsel %vm534, 1, 0
      %v583 = vsel %vm535, 1, 0
      %v584 = vsel %vm536, 1, 0
      %v585 = vsel %vm537, 1, 0
      %v586 = vsel %vm538, 1, 0
      %v587 = vsel %vm539, 1, 0
      %v588 = vsel %vm540, 1, 0
      %v589 = vsel %vm541, 1, 0
      %v590 = vsel %vm542, 1, 0
      %v591 = vsel %vm543, 1, 0
      %v592 = vsel %vm544, 1, 0
      %v593 = vsel %vm545, 1, 0
      %v594 = vsel %vm546, 1, 0
      %v595 = vsel %vm547, 1, 0
      %v596 = vsel %vm548, 1, 0
      %v597 = vsel %vm549, 1, 0
      %v598 = vsel %vm550, 1, 0
      %v599 = vsel %vm551, 1, 0
      %v600 = vsel %vm552, 1, 0
      %v601 = vsel %vm553, 1, 0
      %v602 = vsel %vm554, 1, 0
      %v603 = vsel %vm555, 1, 0
      %v604 = vsel %vm556, 1, 0
      %v605 = vsel %vm557, 1, 0
      %v606 = vsel %vm558, 1, 0
      %v607 = vsel %vm559, 1, 0
      %v608 = vsel %vm560, 1, 0
      %v609 = vsel %vm561, 1, 0
      %v610 = vsel %vm562, 1, 0
      %v611 = vsel %vm563, 1, 0
      %v612 = vsel %vm564, 1, 0
      %v613 = vsel %vm565, 1, 0
      %v614 = vsel %vm566, 1, 0
      %v615 = vsel %vm567, 1, 0
      %v616 = vcvt.s32.f32 %v568
      %v617 = vcvt.s32.f32 %v569
      %v618 = vcvt.s32.f32 %v570
      %v619 = vcvt.s32.f32 %v571
      %v620 = vcvt.s32.f32 %v572
      %v621 = vcvt.s32.f32 %v573
      %v622 = vcvt.s32.f32 %v574
      %v623 = vcvt.s32.f32 %v575
      %v624 = vcvt.s32.f32 %v576
      %v625 = vcvt.s32.f32 %v577
      %v626 = vcvt.s32.f32 %v578
      %v627 = vcvt.s32.f32 %v579
      %v628 = vcvt.s32.f32 %v580
      %v629 = vcvt.s32.f32 %v581
      %v630 = vcvt.s32.f32 %v582
      %v631 = vcvt.s32.f32 %v583
      %v632 = vcvt.s32.f32 %v584
      %v633 = vcvt.s32.f32 %v585
      %v634 = vcvt.s32.f32 %v586
      %v635 = vcvt.s32.f32 %v587
      %v636 = vcvt.s32.f32 %v588
      %v637 = vcvt.s32.f32 %v589
      %v638 = vcvt.s32.f32 %v590
      %v639 = vcvt.s32.f32 %v591
      %v640 = vcvt.s32.f32 %v592
      %v641 = vcvt.s32.f32 %v593
      %v642 = vcvt.s32.f32 %v594
      %v643 = vcvt.s32.f32 %v595
      %v644 = vcvt.s32.f32 %v596
      %v645 = vcvt.s32.f32 %v597
      %v646 = vcvt.s32.f32 %v598
      %v647 = vcvt.s32.f32 %v599
      %v648 = vcvt.s32.f32 %v600
      %v649 = vcvt.s32.f32 %v601
      %v650 = vcvt.s32.f32 %v602
      %v651 = vcvt.s32.f32 %v603
      %v652 = vcvt.s32.f32 %v604
      %v653 = vcvt.s32.f32 %v605
      %v654 = vcvt.s32.f32 %v606
      %v655 = vcvt.s32.f32 %v607
      %v656 = vcvt.s32.f32 %v608
      %v657 = vcvt.s32.f32 %v609
      %v658 = vcvt.s32.f32 %v610
      %v659 = vcvt.s32.f32 %v611
      %v660 = vcvt.s32.f32 %v612
      %v661 = vcvt.s32.f32 %v613
      %v662 = vcvt.s32.f32 %v614
      %v663 = vcvt.s32.f32 %v615
      %v664 = vld [vmem:[%s443] sm:$0xff]
      %v665 = vld [vmem:[%s443 + $0x8] sm:$0xff]
      %v666 = vld [vmem:[%s443 + $0x10] sm:$0xff]
      %v667 = vld [vmem:[%s443 + $0x18] sm:$0xff]
      %v668 = vld [vmem:[%s443 + $0x20] sm:$0xff]
      %v669 = vld [vmem:[%s443 + $0x28] sm:$0xff]
      %v670 = vld [vmem:[%s443 + $0x30] sm:$0xff]
      %v671 = vld [vmem:[%s443 + $0x38] sm:$0xff]
      %v672 = vld [vmem:[%s443 + $0x40] sm:$0xff]
      %v673 = vld [vmem:[%s443 + $0x48] sm:$0xff]
      %v674 = vld [vmem:[%s443 + $0x50] sm:$0xff]
      %v675 = vld [vmem:[%s443 + $0x58] sm:$0xff]
      %v676 = vld [vmem:[%s443 + $0x60] sm:$0xff]
      %v677 = vld [vmem:[%s443 + $0x68] sm:$0xff]
      %v678 = vld [vmem:[%s443 + $0x70] sm:$0xff]
      %v679 = vld [vmem:[%s443 + $0x78] sm:$0xff]
      %v680 = vld [vmem:[%s443 + $0x80] sm:$0xff]
      %v681 = vld [vmem:[%s443 + $0x88] sm:$0xff]
      %v682 = vld [vmem:[%s443 + $0x90] sm:$0xff]
      %v683 = vld [vmem:[%s443 + $0x98] sm:$0xff]
      %v684 = vld [vmem:[%s443 + $0xa0] sm:$0xff]
      %v685 = vld [vmem:[%s443 + $0xa8] sm:$0xff]
      %v686 = vld [vmem:[%s443 + $0xb0] sm:$0xff]
      %v687 = vld [vmem:[%s443 + $0xb8] sm:$0xff]
      %v688 = vld [vmem:[%s443 + $0xc0] sm:$0xff]
      %v689 = vld [vmem:[%s443 + $0xc8] sm:$0xff]
      %v690 = vld [vmem:[%s443 + $0xd0] sm:$0xff]
      %v691 = vld [vmem:[%s443 + $0xd8] sm:$0xff]
      %v692 = vld [vmem:[%s443 + $0xe0] sm:$0xff]
      %v693 = vld [vmem:[%s443 + $0xe8] sm:$0xff]
      %v694 = vld [vmem:[%s443 + $0xf0] sm:$0xff]
      %v695 = vld [vmem:[%s443 + $0xf8] sm:$0xff]
      %v696 = vld [vmem:[%s443 + $0x100] sm:$0xff]
      %v697 = vld [vmem:[%s443 + $0x108] sm:$0xff]
      %v698 = vld [vmem:[%s443 + $0x110] sm:$0xff]
      %v699 = vld [vmem:[%s443 + $0x118] sm:$0xff]
      %vm700 = vcmask 261120
      %v702 = vsel %vm700, %v618, 0
      %v705 = vsel %vm700, %v621, 0
      %v708 = vsel %vm700, %v624, 0
      %v711 = vsel %vm700, %v627, 0
      %v714 = vsel %vm700, %v630, 0
      %v717 = vsel %vm700, %v633, 0
      %v720 = vsel %vm700, %v636, 0
      %v723 = vsel %vm700, %v639, 0
      %v726 = vsel %vm700, %v642, 0
      %v729 = vsel %vm700, %v645, 0
      %v732 = vsel %vm700, %v648, 0
      %v735 = vsel %vm700, %v651, 0
      %v738 = vsel %vm700, %v654, 0
      %v741 = vsel %vm700, %v657, 0
      %v744 = vsel %vm700, %v660, 0
      %v747 = vsel %vm700, %v663, 0
      %749 = vmatpush.msra.mxu0 %v679
      %750 = vmatpush.msra.mxu0 %v678
      %751 = vmatpush.msra.mxu0 %v677
      %752 = vmatpush.msra.mxu0 %v676
      %753 = vmatpush.msra.mxu0 %v675
      %754 = vmatpush.msra.mxu0 %v674
      %755 = vmatpush.msra.mxu0 %v673
      %756 = vmatpush.msra.mxu0 %v672
      %757 = vmatpush.msra.mxu0 %v671
      %758 = vmatpush.msra.mxu0 %v670
      %759 = vmatpush.msra.mxu0 %v669
      %760 = vmatpush.msra.mxu0 %v668
      %761 = vmatpush.msra.mxu0 %v667
      %762 = vmatpush.msra.mxu0 %v666
      %763 = vmatpush.msra.mxu0 %v665
      %764 = vmatpush.msra.mxu0 %v664
      %765 = vmatmul.f32.gmra.mxu0 %v616
      %v766 = vpop.f32.mrf.mxu0
      %v767 = vadd.f32 0.0, %v766
      %768 = vmatmul.f32.gmra.mxu0 %v619
      %v769 = vpop.f32.mrf.mxu0
      %v770 = vadd.f32 0.0, %v769
      %771 = vmatmul.f32.gmra.mxu0 %v622
      %v772 = vpop.f32.mrf.mxu0
      %v773 = vadd.f32 0.0, %v772
      %774 = vmatmul.f32.gmra.mxu0 %v625
      %v775 = vpop.f32.mrf.mxu0
      %v776 = vadd.f32 0.0, %v775
      %777 = vmatmul.f32.gmra.mxu0 %v628
      %v778 = vpop.f32.mrf.mxu0
      %v779 = vadd.f32 0.0, %v778
      %780 = vmatmul.f32.gmra.mxu0 %v631
      %v781 = vpop.f32.mrf.mxu0
      %v782 = vadd.f32 0.0, %v781
      %783 = vmatmul.f32.gmra.mxu0 %v634
      %v784 = vpop.f32.mrf.mxu0
      %v785 = vadd.f32 0.0, %v784
      %786 = vmatmul.f32.gmra.mxu0 %v637
      %v787 = vpop.f32.mrf.mxu0
      %v788 = vadd.f32 0.0, %v787
      %789 = vmatmul.f32.gmra.mxu0 %v640
      %v790 = vpop.f32.mrf.mxu0
      %v791 = vadd.f32 0.0, %v790
      %792 = vmatmul.f32.gmra.mxu0 %v643
      %v793 = vpop.f32.mrf.mxu0
      %v794 = vadd.f32 0.0, %v793
      %795 = vmatmul.f32.gmra.mxu0 %v646
      %v796 = vpop.f32.mrf.mxu0
      %v797 = vadd.f32 0.0, %v796
      %798 = vmatmul.f32.gmra.mxu0 %v649
      %v799 = vpop.f32.mrf.mxu0
      %v800 = vadd.f32 0.0, %v799
      %801 = vmatmul.f32.gmra.mxu0 %v652
      %v802 = vpop.f32.mrf.mxu0
      %v803 = vadd.f32 0.0, %v802
      %804 = vmatmul.f32.gmra.mxu0 %v655
      %v805 = vpop.f32.mrf.mxu0
      %v806 = vadd.f32 0.0, %v805
      %807 = vmatmul.f32.gmra.mxu0 %v658
      %v808 = vpop.f32.mrf.mxu0
      %v809 = vadd.f32 0.0, %v808
      %810 = vmatmul.f32.gmra.mxu0 %v661
      %v811 = vpop.f32.mrf.mxu0
      %v812 = vadd.f32 0.0, %v811
      %813 = vdwg.mxu0
      %814 = vmatpush.msra.mxu0 %v695
      %815 = vmatpush.msra.mxu0 %v694
      %816 = vmatpush.msra.mxu0 %v693
      %817 = vmatpush.msra.mxu0 %v692
      %818 = vmatpush.msra.mxu0 %v691
      %819 = vmatpush.msra.mxu0 %v690
      %820 = vmatpush.msra.mxu0 %v689
      %821 = vmatpush.msra.mxu0 %v688
      %822 = vmatpush.msra.mxu0 %v687
      %823 = vmatpush.msra.mxu0 %v686
      %824 = vmatpush.msra.mxu0 %v685
      %825 = vmatpush.msra.mxu0 %v684
      %826 = vmatpush.msra.mxu0 %v683
      %827 = vmatpush.msra.mxu0 %v682
      %828 = vmatpush.msra.mxu0 %v681
      %829 = vmatpush.msra.mxu0 %v680
      %830 = vmatmul.f32.gmra.mxu0 %v617
      %v831 = vpop.f32.mrf.mxu0
      %v832 = vadd.f32 %v767, %v831
      %833 = vmatmul.f32.gmra.mxu0 %v620
      %v834 = vpop.f32.mrf.mxu0
      %v835 = vadd.f32 %v770, %v834
      %836 = vmatmul.f32.gmra.mxu0 %v623
      %v837 = vpop.f32.mrf.mxu0
      %v838 = vadd.f32 %v773, %v837
      %839 = vmatmul.f32.gmra.mxu0 %v626
      %v840 = vpop.f32.mrf.mxu0
      %v841 = vadd.f32 %v776, %v840
      %842 = vmatmul.f32.gmra.mxu0 %v629
      %v843 = vpop.f32.mrf.mxu0
      %v844 = vadd.f32 %v779, %v843
      %845 = vmatmul.f32.gmra.mxu0 %v632
      %v846 = vpop.f32.mrf.mxu0
      %v847 = vadd.f32 %v782, %v846
      %848 = vmatmul.f32.gmra.mxu0 %v635
      %v849 = vpop.f32.mrf.mxu0
      %v850 = vadd.f32 %v785, %v849
      %851 = vmatmul.f32.gmra.mxu0 %v638
      %v852 = vpop.f32.mrf.mxu0
      %v853 = vadd.f32 %v788, %v852
      %854 = vmatmul.f32.gmra.mxu0 %v641
      %v855 = vpop.f32.mrf.mxu0
      %v856 = vadd.f32 %v791, %v855
      %857 = vmatmul.f32.gmra.mxu0 %v644
      %v858 = vpop.f32.mrf.mxu0
      %v859 = vadd.f32 %v794, %v858
      %860 = vmatmul.f32.gmra.mxu0 %v647
      %v861 = vpop.f32.mrf.mxu0
      %v862 = vadd.f32 %v797, %v861
      %863 = vmatmul.f32.gmra.mxu0 %v650
      %v864 = vpop.f32.mrf.mxu0
      %v865 = vadd.f32 %v800, %v864
      %866 = vmatmul.f32.gmra.mxu0 %v653
      %v867 = vpop.f32.mrf.mxu0
      %v868 = vadd.f32 %v803, %v867
      %869 = vmatmul.f32.gmra.mxu0 %v656
      %v870 = vpop.f32.mrf.mxu0
      %v871 = vadd.f32 %v806, %v870
      %872 = vmatmul.f32.gmra.mxu0 %v659
      %v873 = vpop.f32.mrf.mxu0
      %v874 = vadd.f32 %v809, %v873
      %875 = vmatmul.f32.gmra.mxu0 %v662
      %v876 = vpop.f32.mrf.mxu0
      %v877 = vadd.f32 %v812, %v876
      %878 = vdwg.mxu0
      %879 = vmatpush.msra.mxu0 0.0
      %880 = vmatpush.msra.mxu0 0.0
      %881 = vmatpush.msra.mxu0 0.0
      %882 = vmatpush.msra.mxu0 0.0
      %883 = vmatpush.msra.mxu0 0.0
      %884 = vmatpush.msra.mxu0 0.0
      %885 = vmatpush.msra.mxu0 0.0
      %886 = vmatpush.msra.mxu0 0.0
      %887 = vmatpush.msra.mxu0 0.0
      %888 = vmatpush.msra.mxu0 0.0
      %889 = vmatpush.msra.mxu0 0.0
      %890 = vmatpush.msra.mxu0 0.0
      %891 = vmatpush.msra.mxu0 %v699
      %892 = vmatpush.msra.mxu0 %v698
      %893 = vmatpush.msra.mxu0 %v697
      %894 = vmatpush.msra.mxu0 %v696
      %895 = vmatmul.f32.gmra.mxu0 %v702
      %v896 = vpop.f32.mrf.mxu0
      %v897 = vadd.f32 %v832, %v896
      %898 = vmatmul.f32.gmra.mxu0 %v705
      %v899 = vpop.f32.mrf.mxu0
      %v900 = vadd.f32 %v835, %v899
      %901 = vmatmul.f32.gmra.mxu0 %v708
      %v902 = vpop.f32.mrf.mxu0
      %v903 = vadd.f32 %v838, %v902
      %904 = vmatmul.f32.gmra.mxu0 %v711
      %v905 = vpop.f32.mrf.mxu0
      %v906 = vadd.f32 %v841, %v905
      %907 = vmatmul.f32.gmra.mxu0 %v714
      %v908 = vpop.f32.mrf.mxu0
      %v909 = vadd.f32 %v844, %v908
      %910 = vmatmul.f32.gmra.mxu0 %v717
      %v911 = vpop.f32.mrf.mxu0
      %v912 = vadd.f32 %v847, %v911
      %913 = vmatmul.f32.gmra.mxu0 %v720
      %v914 = vpop.f32.mrf.mxu0
      %v915 = vadd.f32 %v850, %v914
      %916 = vmatmul.f32.gmra.mxu0 %v723
      %v917 = vpop.f32.mrf.mxu0
      %v918 = vadd.f32 %v853, %v917
      %919 = vmatmul.f32.gmra.mxu0 %v726
      %v920 = vpop.f32.mrf.mxu0
      %v921 = vadd.f32 %v856, %v920
      %922 = vmatmul.f32.gmra.mxu0 %v729
      %v923 = vpop.f32.mrf.mxu0
      %v924 = vadd.f32 %v859, %v923
      %925 = vmatmul.f32.gmra.mxu0 %v732
      %v926 = vpop.f32.mrf.mxu0
      %v927 = vadd.f32 %v862, %v926
      %928 = vmatmul.f32.gmra.mxu0 %v735
      %v929 = vpop.f32.mrf.mxu0
      %v930 = vadd.f32 %v865, %v929
      %931 = vmatmul.f32.gmra.mxu0 %v738
      %v932 = vpop.f32.mrf.mxu0
      %v933 = vadd.f32 %v868, %v932
      %934 = vmatmul.f32.gmra.mxu0 %v741
      %v935 = vpop.f32.mrf.mxu0
      %v936 = vadd.f32 %v871, %v935
      %937 = vmatmul.f32.gmra.mxu0 %v744
      %v938 = vpop.f32.mrf.mxu0
      %v939 = vadd.f32 %v874, %v938
      %940 = vmatmul.f32.gmra.mxu0 %v747
      %v941 = vpop.f32.mrf.mxu0
      %v942 = vadd.f32 %v877, %v941
      %943 = vdwg.mxu0
      %v944 = vand.u32 2147483647, %v897
      %vm945 = vcmp.le.f32.partialorder %v944, 0.7853982
      %vm946 = vcmp.lt.s32.totalorder %v897, 0
      %v947 = vand.u32 %v897, 2139095040
      %v948 = vshrl.u32 %v947, 23
      %v949 = vsub.s32 %v948, 127
      %v950 = vand.u32 2147483647, %v897
      %v951 = vand.u32 %v950, 8388607
      %v952 = vor.u32 %v951, 8388608
      %v953 = vsub.s32 0, %v952
      %v954 = vadd.s32 %v949, 1
      %vm955 = vcmp.gt.s32.totalorder %v954, 0
      %v956 = vsel %vm955, %v954, 0
      %v957 = vshrl.u32 %v956, 5
      %v958 = vand.u32 %v956, 31
      %v959 = vsub.s32 32, %v958
      %v960 = vshrl.u32 683565275, %v959
      %v961 = vshll.u32 683565275, %v958
      %v962 = vshrl.u32 2475754826, %v959
      %v963 = vor.u32 %v961, %v962
      %v964 = vshll.u32 2475754826, %v958
      %v965 = vshrl.u32 2131351028, %v959
      %v966 = vor.u32 %v964, %v965
      %v967 = vshll.u32 2131351028, %v958
      %v968 = vshrl.u32 2102212464, %v959
      %v969 = vor.u32 %v967, %v968
      %v970 = vshll.u32 2102212464, %v958
      %v971 = vshrl.u32 920167782, %v959
      %v972 = vor.u32 %v970, %v971
      %v973 = vshll.u32 920167782, %v958
      %v974 = vshrl.u32 1326507024, %v959
      %v975 = vor.u32 %v973, %v974
      %vm976 = vcmp.lt.s32.totalorder %v957, 1
      %vm977 = vcmp.lt.s32.totalorder %v957, 2
      %vm978 = vcmp.lt.s32.totalorder %v957, 3
      %vm979 = vcmp.lt.s32.totalorder %v957, 4
      %v980 = vsel %vm976, %v960, %v963
      %v981 = vsel %vm979, %v969, 2102212464
      %v982 = vsel %vm978, %v966, %v981
      %v983 = vsel %vm977, %v980, %v982
      %v984 = vsel %vm976, %v963, %v966
      %v985 = vsel %vm979, %v972, 920167782
      %v986 = vsel %vm978, %v969, %v985
      %v987 = vsel %vm977, %v984, %v986
      %v988 = vsel %vm976, %v966, %v969
      %v989 = vsel %vm979, %v975, 1326507024
      %v990 = vsel %vm978, %v972, %v989
      %v991 = vsel %vm977, %v988, %v990
      %v992 = vshll.u32 %v952, 8
      %v993 = vand.u32 %v992, 65535
      %v994 = vshrl.u32 %v992, 16
      %v995 = vand.u32 %v991, 65535
      %v996 = vshrl.u32 %v991, 16
      %v997 = vmul.u32 %v993, %v995
      %v998 = vmul.u32 %v993, %v996
      %v999 = vmul.u32 %v994, %v995
      %v1000 = vmul.u32 %v994, %v996
      %v1001 = vshll.u32 %v998, 16
      %v1002 = vshrl.u32 %v998, 16
      %v1003 = vshll.u32 %v999, 16
      %v1004 = vshrl.u32 %v999, 16
      %vm1005 = vc.u32 %v997, %v1001
      %v1006 = vsel %vm1005, 1, 0
      %v1007 = vadd.s32 %v997, %v1001
      %v1008 = vadd.s32 %v1000, %v1006
      %vm1009 = vc.u32 %v1007, %v1003
      %v1010 = vsel %vm1009, 1, 0
      %v1011 = vadd.s32 %v1007, %v1003
      %v1012 = vadd.s32 %v1008, %v1010
      %v1013 = vadd.s32 %v1012, %v1002
      %v1014 = vadd.s32 %v1013, %v1004
      %v1015 = vand.u32 %v992, 65535
      %v1016 = vshrl.u32 %v992, 16
      %v1017 = vand.u32 %v987, 65535
      %v1018 = vshrl.u32 %v987, 16
      %v1019 = vmul.u32 %v1015, %v1017
      %v1020 = vmul.u32 %v1015, %v1018
      %v1021 = vmul.u32 %v1016, %v1017
      %v1022 = vmul.u32 %v1016, %v1018
      %v1023 = vshll.u32 %v1020, 16
      %v1024 = vshrl.u32 %v1020, 16
      %v1025 = vshll.u32 %v1021, 16
      %v1026 = vshrl.u32 %v1021, 16
      %vm1027 = vc.u32 %v1019, %v1023
      %v1028 = vsel %vm1027, 1, 0
      %v1029 = vadd.s32 %v1019, %v1023
      %v1030 = vadd.s32 %v1022, %v1028
      %vm1031 = vc.u32 %v1029, %v1025
      %v1032 = vsel %vm1031, 1, 0
      %v1033 = vadd.s32 %v1029, %v1025
      %v1034 = vadd.s32 %v1030, %v1032
      %v1035 = vadd.s32 %v1034, %v1024
      %v1036 = vadd.s32 %v1035, %v1026
      %v1037 = vmul.u32 %v992, %v983
      %v1038 = vadd.s32 %v1014, %v1033
      %vm1039 = vc.u32 %v1014, %v1033
      %v1040 = vadd.s32 %v1036, 1
      %v1041 = vsel %vm1039, %v1040, %v1036
      %v1042 = vadd.s32 %v1037, %v1041
      %v1043 = vadd.s32 %v1042, 536870912
      %v1044 = vshrl.u32 %v1043, 30
      %v1045 = vshll.u32 %v1044, 30
      %v1046 = vsub.s32 %v1042, %v1045
      %vm1047 = vcmp.lt.s32.totalorder %v1046, 0
      %v1048 = vsub.s32 0, %v1046
      %v1049 = vsel %vm1047, %v1048, %v1046
      %v1050 = vclz %v1049
      %v1051 = vsub.s32 %v1050, 2
      %vm1052 = vcmp.gt.s32.totalorder 0, %v1051
      %v1053 = vsel %vm1052, 0, %v1051
      %v1054 = vsub.s32 32, %v1053
      %v1055 = vshll.u32 %v1046, %v1053
      %v1056 = vshrl.u32 %v1038, %v1054
      %v1057 = vor.u32 %v1055, %v1056
      %v1058 = vsub.s32 4294967266, %v1053
      %v1059 = vadd.s32 %v1058, 127
      %v1060 = vshll.u32 %v1059, 23
      %v1061 = vor.u32 4788187, %v1060
      %v1062 = vand.u32 2147483647, %v1061
      %v1064 = vcvt.s32.f32 %v1057
      %v1065 = vmul.f32 %v1064, %v1062
      %v1066 = vxor.u32 %v1065, 2147483648
      %v1067 = vsel %vm946, %v1066, %v1065
      %v1068 = vsub.s32 4, %v1044
      %v1069 = vsel %vm946, %v1068, %v1044
      %v1070 = vsel %vm945, %v897, %v1067
      %v1071 = vsel %vm945, 0, %v1069
      %v1072 = vmul.f32 %v1070, %v1070
      %v1073 = vmul.f32 %v1072, -0.001358992
      %v1074 = vadd.f32 %v1073, 0.041655596
      %v1075 = vmul.f32 %v1072, %v1074
      %v1076 = vadd.f32 %v1075, -0.4999988
      %v1077 = vmul.f32 %v1072, %v1076
      %v1078 = vadd.f32 1.0, %v1077
      %v1079 = vmul.f32 %v1070, %v1070
      %v1080 = vmul.f32 %v1079, -0.00019511016
      %v1081 = vadd.f32 %v1080, 0.008332121
      %v1082 = vmul.f32 %v1079, %v1081
      %v1083 = vadd.f32 %v1082, -0.16666654
      %v1084 = vmul.f32 %v1079, %v1083
      %v1085 = vadd.f32 %v1084, 1.0
      %v1086 = vmul.f32 %v1085, %v1070
      %vm1087 = vweird.f32 %v897
      %v1088 = vand.u32 %v1071, 3
      %vm1089 = vcmp.lt.s32.totalorder %v1088, 2
      %vm1090 = vcmp.eq.s32.totalorder %v1088, 0
      %v1091 = vxor.u32 %v1086, 2147483648
      %v1092 = vsel %vm1090, %v1078, %v1091
      %vm1093 = vcmp.eq.s32.totalorder %v1088, 2
      %v1094 = vxor.u32 %v1078, 2147483648
      %v1095 = vsel %vm1093, %v1094, %v1086
      %v1096 = vsel %vm1089, %v1092, %v1095
      %v1097 = vsel %vm1087, nan, %v1096
      %v1098 = vand.u32 2147483647, %v900
      %vm1099 = vcmp.le.f32.partialorder %v1098, 0.7853982
      %vm1100 = vcmp.lt.s32.totalorder %v900, 0
      %v1101 = vand.u32 %v900, 2139095040
      %v1102 = vshrl.u32 %v1101, 23
      %v1103 = vsub.s32 %v1102, 127
      %v1104 = vand.u32 2147483647, %v900
      %v1105 = vand.u32 %v1104, 8388607
      %v1106 = vor.u32 %v1105, 8388608
      %v1107 = vsub.s32 0, %v1106
      %v1108 = vadd.s32 %v1103, 1
      %vm1109 = vcmp.gt.s32.totalorder %v1108, 0
      %v1110 = vsel %vm1109, %v1108, 0
      %v1111 = vshrl.u32 %v1110, 5
      %v1112 = vand.u32 %v1110, 31
      %v1113 = vsub.s32 32, %v1112
      %v1114 = vshrl.u32 683565275, %v1113
      %v1115 = vshll.u32 683565275, %v1112
      %v1116 = vshrl.u32 2475754826, %v1113
      %v1117 = vor.u32 %v1115, %v1116
      %v1118 = vshll.u32 2475754826, %v1112
      %v1119 = vshrl.u32 2131351028, %v1113
      %v1120 = vor.u32 %v1118, %v1119
      %v1121 = vshll.u32 2131351028, %v1112
      %v1122 = vshrl.u32 2102212464, %v1113
      %v1123 = vor.u32 %v1121, %v1122
      %v1124 = vshll.u32 2102212464, %v1112
      %v1125 = vshrl.u32 920167782, %v1113
      %v1126 = vor.u32 %v1124, %v1125
      %v1127 = vshll.u32 920167782, %v1112
      %v1128 = vshrl.u32 1326507024, %v1113
      %v1129 = vor.u32 %v1127, %v1128
      %vm1130 = vcmp.lt.s32.totalorder %v1111, 1
      %vm1131 = vcmp.lt.s32.totalorder %v1111, 2
      %vm1132 = vcmp.lt.s32.totalorder %v1111, 3
      %vm1133 = vcmp.lt.s32.totalorder %v1111, 4
      %v1134 = vsel %vm1130, %v1114, %v1117
      %v1135 = vsel %vm1133, %v1123, 2102212464
      %v1136 = vsel %vm1132, %v1120, %v1135
      %v1137 = vsel %vm1131, %v1134, %v1136
      %v1138 = vsel %vm1130, %v1117, %v1120
      %v1139 = vsel %vm1133, %v1126, 920167782
      %v1140 = vsel %vm1132, %v1123, %v1139
      %v1141 = vsel %vm1131, %v1138, %v1140
      %v1142 = vsel %vm1130, %v1120, %v1123
      %v1143 = vsel %vm1133, %v1129, 1326507024
      %v1144 = vsel %vm1132, %v1126, %v1143
      %v1145 = vsel %vm1131, %v1142, %v1144
      %v1146 = vshll.u32 %v1106, 8
      %v1147 = vand.u32 %v1146, 65535
      %v1148 = vshrl.u32 %v1146, 16
      %v1149 = vand.u32 %v1145, 65535
      %v1150 = vshrl.u32 %v1145, 16
      %v1151 = vmul.u32 %v1147, %v1149
      %v1152 = vmul.u32 %v1147, %v1150
      %v1153 = vmul.u32 %v1148, %v1149
      %v1154 = vmul.u32 %v1148, %v1150
      %v1155 = vshll.u32 %v1152, 16
      %v1156 = vshrl.u32 %v1152, 16
      %v1157 = vshll.u32 %v1153, 16
      %v1158 = vshrl.u32 %v1153, 16
      %vm1159 = vc.u32 %v1151, %v1155
      %v1160 = vsel %vm1159, 1, 0
      %v1161 = vadd.s32 %v1151, %v1155
      %v1162 = vadd.s32 %v1154, %v1160
      %vm1163 = vc.u32 %v1161, %v1157
      %v1164 = vsel %vm1163, 1, 0
      %v1165 = vadd.s32 %v1161, %v1157
      %v1166 = vadd.s32 %v1162, %v1164
      %v1167 = vadd.s32 %v1166, %v1156
      %v1168 = vadd.s32 %v1167, %v1158
      %v1169 = vand.u32 %v1146, 65535
      %v1170 = vshrl.u32 %v1146, 16
      %v1171 = vand.u32 %v1141, 65535
      %v1172 = vshrl.u32 %v1141, 16
      %v1173 = vmul.u32 %v1169, %v1171
      %v1174 = vmul.u32 %v1169, %v1172
      %v1175 = vmul.u32 %v1170, %v1171
      %v1176 = vmul.u32 %v1170, %v1172
      %v1177 = vshll.u32 %v1174, 16
      %v1178 = vshrl.u32 %v1174, 16
      %v1179 = vshll.u32 %v1175, 16
      %v1180 = vshrl.u32 %v1175, 16
      %vm1181 = vc.u32 %v1173, %v1177
      %v1182 = vsel %vm1181, 1, 0
      %v1183 = vadd.s32 %v1173, %v1177
      %v1184 = vadd.s32 %v1176, %v1182
      %vm1185 = vc.u32 %v1183, %v1179
      %v1186 = vsel %vm1185, 1, 0
      %v1187 = vadd.s32 %v1183, %v1179
      %v1188 = vadd.s32 %v1184, %v1186
      %v1189 = vadd.s32 %v1188, %v1178
      %v1190 = vadd.s32 %v1189, %v1180
      %v1191 = vmul.u32 %v1146, %v1137
      %v1192 = vadd.s32 %v1168, %v1187
      %vm1193 = vc.u32 %v1168, %v1187
      %v1194 = vadd.s32 %v1190, 1
      %v1195 = vsel %vm1193, %v1194, %v1190
      %v1196 = vadd.s32 %v1191, %v1195
      %v1197 = vadd.s32 %v1196, 536870912
      %v1198 = vshrl.u32 %v1197, 30
      %v1199 = vshll.u32 %v1198, 30
      %v1200 = vsub.s32 %v1196, %v1199
      %vm1201 = vcmp.lt.s32.totalorder %v1200, 0
      %v1202 = vsub.s32 0, %v1200
      %v1203 = vsel %vm1201, %v1202, %v1200
      %v1204 = vclz %v1203
      %v1205 = vsub.s32 %v1204, 2
      %vm1206 = vcmp.gt.s32.totalorder 0, %v1205
      %v1207 = vsel %vm1206, 0, %v1205
      %v1208 = vsub.s32 32, %v1207
      %v1209 = vshll.u32 %v1200, %v1207
      %v1210 = vshrl.u32 %v1192, %v1208
      %v1211 = vor.u32 %v1209, %v1210
      %v1212 = vsub.s32 4294967266, %v1207
      %v1213 = vadd.s32 %v1212, 127
      %v1214 = vshll.u32 %v1213, 23
      %v1215 = vor.u32 4788187, %v1214
      %v1216 = vand.u32 2147483647, %v1215
      %v1218 = vcvt.s32.f32 %v1211
      %v1219 = vmul.f32 %v1218, %v1216
      %v1220 = vxor.u32 %v1219, 2147483648
      %v1221 = vsel %vm1100, %v1220, %v1219
      %v1222 = vsub.s32 4, %v1198
      %v1223 = vsel %vm1100, %v1222, %v1198
      %v1224 = vsel %vm1099, %v900, %v1221
      %v1225 = vsel %vm1099, 0, %v1223
      %v1226 = vmul.f32 %v1224, %v1224
      %v1227 = vmul.f32 %v1226, -0.001358992
      %v1228 = vadd.f32 %v1227, 0.041655596
      %v1229 = vmul.f32 %v1226, %v1228
      %v1230 = vadd.f32 %v1229, -0.4999988
      %v1231 = vmul.f32 %v1226, %v1230
      %v1232 = vadd.f32 1.0, %v1231
      %v1233 = vmul.f32 %v1224, %v1224
      %v1234 = vmul.f32 %v1233, -0.00019511016
      %v1235 = vadd.f32 %v1234, 0.008332121
      %v1236 = vmul.f32 %v1233, %v1235
      %v1237 = vadd.f32 %v1236, -0.16666654
      %v1238 = vmul.f32 %v1233, %v1237
      %v1239 = vadd.f32 %v1238, 1.0
      %v1240 = vmul.f32 %v1239, %v1224
      %vm1241 = vweird.f32 %v900
      %v1242 = vand.u32 %v1225, 3
      %vm1243 = vcmp.lt.s32.totalorder %v1242, 2
      %vm1244 = vcmp.eq.s32.totalorder %v1242, 0
      %v1245 = vxor.u32 %v1240, 2147483648
      %v1246 = vsel %vm1244, %v1232, %v1245
      %vm1247 = vcmp.eq.s32.totalorder %v1242, 2
      %v1248 = vxor.u32 %v1232, 2147483648
      %v1249 = vsel %vm1247, %v1248, %v1240
      %v1250 = vsel %vm1243, %v1246, %v1249
      %v1251 = vsel %vm1241, nan, %v1250
      %v1252 = vand.u32 2147483647, %v903
      %vm1253 = vcmp.le.f32.partialorder %v1252, 0.7853982
      %vm1254 = vcmp.lt.s32.totalorder %v903, 0
      %v1255 = vand.u32 %v903, 2139095040
      %v1256 = vshrl.u32 %v1255, 23
      %v1257 = vsub.s32 %v1256, 127
      %v1258 = vand.u32 2147483647, %v903
      %v1259 = vand.u32 %v1258, 8388607
      %v1260 = vor.u32 %v1259, 8388608
      %v1261 = vsub.s32 0, %v1260
      %v1262 = vadd.s32 %v1257, 1
      %vm1263 = vcmp.gt.s32.totalorder %v1262, 0
      %v1264 = vsel %vm1263, %v1262, 0
      %v1265 = vshrl.u32 %v1264, 5
      %v1266 = vand.u32 %v1264, 31
      %v1267 = vsub.s32 32, %v1266
      %v1268 = vshrl.u32 683565275, %v1267
      %v1269 = vshll.u32 683565275, %v1266
      %v1270 = vshrl.u32 2475754826, %v1267
      %v1271 = vor.u32 %v1269, %v1270
      %v1272 = vshll.u32 2475754826, %v1266
      %v1273 = vshrl.u32 2131351028, %v1267
      %v1274 = vor.u32 %v1272, %v1273
      %v1275 = vshll.u32 2131351028, %v1266
      %v1276 = vshrl.u32 2102212464, %v1267
      %v1277 = vor.u32 %v1275, %v1276
      %v1278 = vshll.u32 2102212464, %v1266
      %v1279 = vshrl.u32 920167782, %v1267
      %v1280 = vor.u32 %v1278, %v1279
      %v1281 = vshll.u32 920167782, %v1266
      %v1282 = vshrl.u32 1326507024, %v1267
      %v1283 = vor.u32 %v1281, %v1282
      %vm1284 = vcmp.lt.s32.totalorder %v1265, 1
      %vm1285 = vcmp.lt.s32.totalorder %v1265, 2
      %vm1286 = vcmp.lt.s32.totalorder %v1265, 3
      %vm1287 = vcmp.lt.s32.totalorder %v1265, 4
      %v1288 = vsel %vm1284, %v1268, %v1271
      %v1289 = vsel %vm1287, %v1277, 2102212464
      %v1290 = vsel %vm1286, %v1274, %v1289
      %v1291 = vsel %vm1285, %v1288, %v1290
      %v1292 = vsel %vm1284, %v1271, %v1274
      %v1293 = vsel %vm1287, %v1280, 920167782
      %v1294 = vsel %vm1286, %v1277, %v1293
      %v1295 = vsel %vm1285, %v1292, %v1294
      %v1296 = vsel %vm1284, %v1274, %v1277
      %v1297 = vsel %vm1287, %v1283, 1326507024
      %v1298 = vsel %vm1286, %v1280, %v1297
      %v1299 = vsel %vm1285, %v1296, %v1298
      %v1300 = vshll.u32 %v1260, 8
      %v1301 = vand.u32 %v1300, 65535
      %v1302 = vshrl.u32 %v1300, 16
      %v1303 = vand.u32 %v1299, 65535
      %v1304 = vshrl.u32 %v1299, 16
      %v1305 = vmul.u32 %v1301, %v1303
      %v1306 = vmul.u32 %v1301, %v1304
      %v1307 = vmul.u32 %v1302, %v1303
      %v1308 = vmul.u32 %v1302, %v1304
      %v1309 = vshll.u32 %v1306, 16
      %v1310 = vshrl.u32 %v1306, 16
      %v1311 = vshll.u32 %v1307, 16
      %v1312 = vshrl.u32 %v1307, 16
      %vm1313 = vc.u32 %v1305, %v1309
      %v1314 = vsel %vm1313, 1, 0
      %v1315 = vadd.s32 %v1305, %v1309
      %v1316 = vadd.s32 %v1308, %v1314
      %vm1317 = vc.u32 %v1315, %v1311
      %v1318 = vsel %vm1317, 1, 0
      %v1319 = vadd.s32 %v1315, %v1311
      %v1320 = vadd.s32 %v1316, %v1318
      %v1321 = vadd.s32 %v1320, %v1310
      %v1322 = vadd.s32 %v1321, %v1312
      %v1323 = vand.u32 %v1300, 65535
      %v1324 = vshrl.u32 %v1300, 16
      %v1325 = vand.u32 %v1295, 65535
      %v1326 = vshrl.u32 %v1295, 16
      %v1327 = vmul.u32 %v1323, %v1325
      %v1328 = vmul.u32 %v1323, %v1326
      %v1329 = vmul.u32 %v1324, %v1325
      %v1330 = vmul.u32 %v1324, %v1326
      %v1331 = vshll.u32 %v1328, 16
      %v1332 = vshrl.u32 %v1328, 16
      %v1333 = vshll.u32 %v1329, 16
      %v1334 = vshrl.u32 %v1329, 16
      %vm1335 = vc.u32 %v1327, %v1331
      %v1336 = vsel %vm1335, 1, 0
      %v1337 = vadd.s32 %v1327, %v1331
      %v1338 = vadd.s32 %v1330, %v1336
      %vm1339 = vc.u32 %v1337, %v1333
      %v1340 = vsel %vm1339, 1, 0
      %v1341 = vadd.s32 %v1337, %v1333
      %v1342 = vadd.s32 %v1338, %v1340
      %v1343 = vadd.s32 %v1342, %v1332
      %v1344 = vadd.s32 %v1343, %v1334
      %v1345 = vmul.u32 %v1300, %v1291
      %v1346 = vadd.s32 %v1322, %v1341
      %vm1347 = vc.u32 %v1322, %v1341
      %v1348 = vadd.s32 %v1344, 1
      %v1349 = vsel %vm1347, %v1348, %v1344
      %v1350 = vadd.s32 %v1345, %v1349
      %v1351 = vadd.s32 %v1350, 536870912
      %v1352 = vshrl.u32 %v1351, 30
      %v1353 = vshll.u32 %v1352, 30
      %v1354 = vsub.s32 %v1350, %v1353
      %vm1355 = vcmp.lt.s32.totalorder %v1354, 0
      %v1356 = vsub.s32 0, %v1354
      %v1357 = vsel %vm1355, %v1356, %v1354
      %v1358 = vclz %v1357
      %v1359 = vsub.s32 %v1358, 2
      %vm1360 = vcmp.gt.s32.totalorder 0, %v1359
      %v1361 = vsel %vm1360, 0, %v1359
      %v1362 = vsub.s32 32, %v1361
      %v1363 = vshll.u32 %v1354, %v1361
      %v1364 = vshrl.u32 %v1346, %v1362
      %v1365 = vor.u32 %v1363, %v1364
      %v1366 = vsub.s32 4294967266, %v1361
      %v1367 = vadd.s32 %v1366, 127
      %v1368 = vshll.u32 %v1367, 23
      %v1369 = vor.u32 4788187, %v1368
      %v1370 = vand.u32 2147483647, %v1369
      %v1372 = vcvt.s32.f32 %v1365
      %v1373 = vmul.f32 %v1372, %v1370
      %v1374 = vxor.u32 %v1373, 2147483648
      %v1375 = vsel %vm1254, %v1374, %v1373
      %v1376 = vsub.s32 4, %v1352
      %v1377 = vsel %vm1254, %v1376, %v1352
      %v1378 = vsel %vm1253, %v903, %v1375
      %v1379 = vsel %vm1253, 0, %v1377
      %v1380 = vmul.f32 %v1378, %v1378
      %v1381 = vmul.f32 %v1380, -0.001358992
      %v1382 = vadd.f32 %v1381, 0.041655596
      %v1383 = vmul.f32 %v1380, %v1382
      %v1384 = vadd.f32 %v1383, -0.4999988
      %v1385 = vmul.f32 %v1380, %v1384
      %v1386 = vadd.f32 1.0, %v1385
      %v1387 = vmul.f32 %v1378, %v1378
      %v1388 = vmul.f32 %v1387, -0.00019511016
      %v1389 = vadd.f32 %v1388, 0.008332121
      %v1390 = vmul.f32 %v1387, %v1389
      %v1391 = vadd.f32 %v1390, -0.16666654
      %v1392 = vmul.f32 %v1387, %v1391
      %v1393 = vadd.f32 %v1392, 1.0
      %v1394 = vmul.f32 %v1393, %v1378
      %vm1395 = vweird.f32 %v903
      %v1396 = vand.u32 %v1379, 3
      %vm1397 = vcmp.lt.s32.totalorder %v1396, 2
      %vm1398 = vcmp.eq.s32.totalorder %v1396, 0
      %v1399 = vxor.u32 %v1394, 2147483648
      %v1400 = vsel %vm1398, %v1386, %v1399
      %vm1401 = vcmp.eq.s32.totalorder %v1396, 2
      %v1402 = vxor.u32 %v1386, 2147483648
      %v1403 = vsel %vm1401, %v1402, %v1394
      %v1404 = vsel %vm1397, %v1400, %v1403
      %v1405 = vsel %vm1395, nan, %v1404
      %v1406 = vand.u32 2147483647, %v906
      %vm1407 = vcmp.le.f32.partialorder %v1406, 0.7853982
      %vm1408 = vcmp.lt.s32.totalorder %v906, 0
      %v1409 = vand.u32 %v906, 2139095040
      %v1410 = vshrl.u32 %v1409, 23
      %v1411 = vsub.s32 %v1410, 127
      %v1412 = vand.u32 2147483647, %v906
      %v1413 = vand.u32 %v1412, 8388607
      %v1414 = vor.u32 %v1413, 8388608
      %v1415 = vsub.s32 0, %v1414
      %v1416 = vadd.s32 %v1411, 1
      %vm1417 = vcmp.gt.s32.totalorder %v1416, 0
      %v1418 = vsel %vm1417, %v1416, 0
      %v1419 = vshrl.u32 %v1418, 5
      %v1420 = vand.u32 %v1418, 31
      %v1421 = vsub.s32 32, %v1420
      %v1422 = vshrl.u32 683565275, %v1421
      %v1423 = vshll.u32 683565275, %v1420
      %v1424 = vshrl.u32 2475754826, %v1421
      %v1425 = vor.u32 %v1423, %v1424
      %v1426 = vshll.u32 2475754826, %v1420
      %v1427 = vshrl.u32 2131351028, %v1421
      %v1428 = vor.u32 %v1426, %v1427
      %v1429 = vshll.u32 2131351028, %v1420
      %v1430 = vshrl.u32 2102212464, %v1421
      %v1431 = vor.u32 %v1429, %v1430
      %v1432 = vshll.u32 2102212464, %v1420
      %v1433 = vshrl.u32 920167782, %v1421
      %v1434 = vor.u32 %v1432, %v1433
      %v1435 = vshll.u32 920167782, %v1420
      %v1436 = vshrl.u32 1326507024, %v1421
      %v1437 = vor.u32 %v1435, %v1436
      %vm1438 = vcmp.lt.s32.totalorder %v1419, 1
      %vm1439 = vcmp.lt.s32.totalorder %v1419, 2
      %vm1440 = vcmp.lt.s32.totalorder %v1419, 3
      %vm1441 = vcmp.lt.s32.totalorder %v1419, 4
      %v1442 = vsel %vm1438, %v1422, %v1425
      %v1443 = vsel %vm1441, %v1431, 2102212464
      %v1444 = vsel %vm1440, %v1428, %v1443
      %v1445 = vsel %vm1439, %v1442, %v1444
      %v1446 = vsel %vm1438, %v1425, %v1428
      %v1447 = vsel %vm1441, %v1434, 920167782
      %v1448 = vsel %vm1440, %v1431, %v1447
      %v1449 = vsel %vm1439, %v1446, %v1448
      %v1450 = vsel %vm1438, %v1428, %v1431
      %v1451 = vsel %vm1441, %v1437, 1326507024
      %v1452 = vsel %vm1440, %v1434, %v1451
      %v1453 = vsel %vm1439, %v1450, %v1452
      %v1454 = vshll.u32 %v1414, 8
      %v1455 = vand.u32 %v1454, 65535
      %v1456 = vshrl.u32 %v1454, 16
      %v1457 = vand.u32 %v1453, 65535
      %v1458 = vshrl.u32 %v1453, 16
      %v1459 = vmul.u32 %v1455, %v1457
      %v1460 = vmul.u32 %v1455, %v1458
      %v1461 = vmul.u32 %v1456, %v1457
      %v1462 = vmul.u32 %v1456, %v1458
      %v1463 = vshll.u32 %v1460, 16
      %v1464 = vshrl.u32 %v1460, 16
      %v1465 = vshll.u32 %v1461, 16
      %v1466 = vshrl.u32 %v1461, 16
      %vm1467 = vc.u32 %v1459, %v1463
      %v1468 = vsel %vm1467, 1, 0
      %v1469 = vadd.s32 %v1459, %v1463
      %v1470 = vadd.s32 %v1462, %v1468
      %vm1471 = vc.u32 %v1469, %v1465
      %v1472 = vsel %vm1471, 1, 0
      %v1473 = vadd.s32 %v1469, %v1465
      %v1474 = vadd.s32 %v1470, %v1472
      %v1475 = vadd.s32 %v1474, %v1464
      %v1476 = vadd.s32 %v1475, %v1466
      %v1477 = vand.u32 %v1454, 65535
      %v1478 = vshrl.u32 %v1454, 16
      %v1479 = vand.u32 %v1449, 65535
      %v1480 = vshrl.u32 %v1449, 16
      %v1481 = vmul.u32 %v1477, %v1479
      %v1482 = vmul.u32 %v1477, %v1480
      %v1483 = vmul.u32 %v1478, %v1479
      %v1484 = vmul.u32 %v1478, %v1480
      %v1485 = vshll.u32 %v1482, 16
      %v1486 = vshrl.u32 %v1482, 16
      %v1487 = vshll.u32 %v1483, 16
      %v1488 = vshrl.u32 %v1483, 16
      %vm1489 = vc.u32 %v1481, %v1485
      %v1490 = vsel %vm1489, 1, 0
      %v1491 = vadd.s32 %v1481, %v1485
      %v1492 = vadd.s32 %v1484, %v1490
      %vm1493 = vc.u32 %v1491, %v1487
      %v1494 = vsel %vm1493, 1, 0
      %v1495 = vadd.s32 %v1491, %v1487
      %v1496 = vadd.s32 %v1492, %v1494
      %v1497 = vadd.s32 %v1496, %v1486
      %v1498 = vadd.s32 %v1497, %v1488
      %v1499 = vmul.u32 %v1454, %v1445
      %v1500 = vadd.s32 %v1476, %v1495
      %vm1501 = vc.u32 %v1476, %v1495
      %v1502 = vadd.s32 %v1498, 1
      %v1503 = vsel %vm1501, %v1502, %v1498
      %v1504 = vadd.s32 %v1499, %v1503
      %v1505 = vadd.s32 %v1504, 536870912
      %v1506 = vshrl.u32 %v1505, 30
      %v1507 = vshll.u32 %v1506, 30
      %v1508 = vsub.s32 %v1504, %v1507
      %vm1509 = vcmp.lt.s32.totalorder %v1508, 0
      %v1510 = vsub.s32 0, %v1508
      %v1511 = vsel %vm1509, %v1510, %v1508
      %v1512 = vclz %v1511
      %v1513 = vsub.s32 %v1512, 2
      %vm1514 = vcmp.gt.s32.totalorder 0, %v1513
      %v1515 = vsel %vm1514, 0, %v1513
      %v1516 = vsub.s32 32, %v1515
      %v1517 = vshll.u32 %v1508, %v1515
      %v1518 = vshrl.u32 %v1500, %v1516
      %v1519 = vor.u32 %v1517, %v1518
      %v1520 = vsub.s32 4294967266, %v1515
      %v1521 = vadd.s32 %v1520, 127
      %v1522 = vshll.u32 %v1521, 23
      %v1523 = vor.u32 4788187, %v1522
      %v1524 = vand.u32 2147483647, %v1523
      %v1526 = vcvt.s32.f32 %v1519
      %v1527 = vmul.f32 %v1526, %v1524
      %v1528 = vxor.u32 %v1527, 2147483648
      %v1529 = vsel %vm1408, %v1528, %v1527
      %v1530 = vsub.s32 4, %v1506
      %v1531 = vsel %vm1408, %v1530, %v1506
      %v1532 = vsel %vm1407, %v906, %v1529
      %v1533 = vsel %vm1407, 0, %v1531
      %v1534 = vmul.f32 %v1532, %v1532
      %v1535 = vmul.f32 %v1534, -0.001358992
      %v1536 = vadd.f32 %v1535, 0.041655596
      %v1537 = vmul.f32 %v1534, %v1536
      %v1538 = vadd.f32 %v1537, -0.4999988
      %v1539 = vmul.f32 %v1534, %v1538
      %v1540 = vadd.f32 1.0, %v1539
      %v1541 = vmul.f32 %v1532, %v1532
      %v1542 = vmul.f32 %v1541, -0.00019511016
      %v1543 = vadd.f32 %v1542, 0.008332121
      %v1544 = vmul.f32 %v1541, %v1543
      %v1545 = vadd.f32 %v1544, -0.16666654
      %v1546 = vmul.f32 %v1541, %v1545
      %v1547 = vadd.f32 %v1546, 1.0
      %v1548 = vmul.f32 %v1547, %v1532
      %vm1549 = vweird.f32 %v906
      %v1550 = vand.u32 %v1533, 3
      %vm1551 = vcmp.lt.s32.totalorder %v1550, 2
      %vm1552 = vcmp.eq.s32.totalorder %v1550, 0
      %v1553 = vxor.u32 %v1548, 2147483648
      %v1554 = vsel %vm1552, %v1540, %v1553
      %vm1555 = vcmp.eq.s32.totalorder %v1550, 2
      %v1556 = vxor.u32 %v1540, 2147483648
      %v1557 = vsel %vm1555, %v1556, %v1548
      %v1558 = vsel %vm1551, %v1554, %v1557
      %v1559 = vsel %vm1549, nan, %v1558
      %v1560 = vand.u32 2147483647, %v909
      %vm1561 = vcmp.le.f32.partialorder %v1560, 0.7853982
      %vm1562 = vcmp.lt.s32.totalorder %v909, 0
      %v1563 = vand.u32 %v909, 2139095040
      %v1564 = vshrl.u32 %v1563, 23
      %v1565 = vsub.s32 %v1564, 127
      %v1566 = vand.u32 2147483647, %v909
      %v1567 = vand.u32 %v1566, 8388607
      %v1568 = vor.u32 %v1567, 8388608
      %v1569 = vsub.s32 0, %v1568
      %v1570 = vadd.s32 %v1565, 1
      %vm1571 = vcmp.gt.s32.totalorder %v1570, 0
      %v1572 = vsel %vm1571, %v1570, 0
      %v1573 = vshrl.u32 %v1572, 5
      %v1574 = vand.u32 %v1572, 31
      %v1575 = vsub.s32 32, %v1574
      %v1576 = vshrl.u32 683565275, %v1575
      %v1577 = vshll.u32 683565275, %v1574
      %v1578 = vshrl.u32 2475754826, %v1575
      %v1579 = vor.u32 %v1577, %v1578
      %v1580 = vshll.u32 2475754826, %v1574
      %v1581 = vshrl.u32 2131351028, %v1575
      %v1582 = vor.u32 %v1580, %v1581
      %v1583 = vshll.u32 2131351028, %v1574
      %v1584 = vshrl.u32 2102212464, %v1575
      %v1585 = vor.u32 %v1583, %v1584
      %v1586 = vshll.u32 2102212464, %v1574
      %v1587 = vshrl.u32 920167782, %v1575
      %v1588 = vor.u32 %v1586, %v1587
      %v1589 = vshll.u32 920167782, %v1574
      %v1590 = vshrl.u32 1326507024, %v1575
      %v1591 = vor.u32 %v1589, %v1590
      %vm1592 = vcmp.lt.s32.totalorder %v1573, 1
      %vm1593 = vcmp.lt.s32.totalorder %v1573, 2
      %vm1594 = vcmp.lt.s32.totalorder %v1573, 3
      %vm1595 = vcmp.lt.s32.totalorder %v1573, 4
      %v1596 = vsel %vm1592, %v1576, %v1579
      %v1597 = vsel %vm1595, %v1585, 2102212464
      %v1598 = vsel %vm1594, %v1582, %v1597
      %v1599 = vsel %vm1593, %v1596, %v1598
      %v1600 = vsel %vm1592, %v1579, %v1582
      %v1601 = vsel %vm1595, %v1588, 920167782
      %v1602 = vsel %vm1594, %v1585, %v1601
      %v1603 = vsel %vm1593, %v1600, %v1602
      %v1604 = vsel %vm1592, %v1582, %v1585
      %v1605 = vsel %vm1595, %v1591, 1326507024
      %v1606 = vsel %vm1594, %v1588, %v1605
      %v1607 = vsel %vm1593, %v1604, %v1606
      %v1608 = vshll.u32 %v1568, 8
      %v1609 = vand.u32 %v1608, 65535
      %v1610 = vshrl.u32 %v1608, 16
      %v1611 = vand.u32 %v1607, 65535
      %v1612 = vshrl.u32 %v1607, 16
      %v1613 = vmul.u32 %v1609, %v1611
      %v1614 = vmul.u32 %v1609, %v1612
      %v1615 = vmul.u32 %v1610, %v1611
      %v1616 = vmul.u32 %v1610, %v1612
      %v1617 = vshll.u32 %v1614, 16
      %v1618 = vshrl.u32 %v1614, 16
      %v1619 = vshll.u32 %v1615, 16
      %v1620 = vshrl.u32 %v1615, 16
      %vm1621 = vc.u32 %v1613, %v1617
      %v1622 = vsel %vm1621, 1, 0
      %v1623 = vadd.s32 %v1613, %v1617
      %v1624 = vadd.s32 %v1616, %v1622
      %vm1625 = vc.u32 %v1623, %v1619
      %v1626 = vsel %vm1625, 1, 0
      %v1627 = vadd.s32 %v1623, %v1619
      %v1628 = vadd.s32 %v1624, %v1626
      %v1629 = vadd.s32 %v1628, %v1618
      %v1630 = vadd.s32 %v1629, %v1620
      %v1631 = vand.u32 %v1608, 65535
      %v1632 = vshrl.u32 %v1608, 16
      %v1633 = vand.u32 %v1603, 65535
      %v1634 = vshrl.u32 %v1603, 16
      %v1635 = vmul.u32 %v1631, %v1633
      %v1636 = vmul.u32 %v1631, %v1634
      %v1637 = vmul.u32 %v1632, %v1633
      %v1638 = vmul.u32 %v1632, %v1634
      %v1639 = vshll.u32 %v1636, 16
      %v1640 = vshrl.u32 %v1636, 16
      %v1641 = vshll.u32 %v1637, 16
      %v1642 = vshrl.u32 %v1637, 16
      %vm1643 = vc.u32 %v1635, %v1639
      %v1644 = vsel %vm1643, 1, 0
      %v1645 = vadd.s32 %v1635, %v1639
      %v1646 = vadd.s32 %v1638, %v1644
      %vm1647 = vc.u32 %v1645, %v1641
      %v1648 = vsel %vm1647, 1, 0
      %v1649 = vadd.s32 %v1645, %v1641
      %v1650 = vadd.s32 %v1646, %v1648
      %v1651 = vadd.s32 %v1650, %v1640
      %v1652 = vadd.s32 %v1651, %v1642
      %v1653 = vmul.u32 %v1608, %v1599
      %v1654 = vadd.s32 %v1630, %v1649
      %vm1655 = vc.u32 %v1630, %v1649
      %v1656 = vadd.s32 %v1652, 1
      %v1657 = vsel %vm1655, %v1656, %v1652
      %v1658 = vadd.s32 %v1653, %v1657
      %v1659 = vadd.s32 %v1658, 536870912
      %v1660 = vshrl.u32 %v1659, 30
      %v1661 = vshll.u32 %v1660, 30
      %v1662 = vsub.s32 %v1658, %v1661
      %vm1663 = vcmp.lt.s32.totalorder %v1662, 0
      %v1664 = vsub.s32 0, %v1662
      %v1665 = vsel %vm1663, %v1664, %v1662
      %v1666 = vclz %v1665
      %v1667 = vsub.s32 %v1666, 2
      %vm1668 = vcmp.gt.s32.totalorder 0, %v1667
      %v1669 = vsel %vm1668, 0, %v1667
      %v1670 = vsub.s32 32, %v1669
      %v1671 = vshll.u32 %v1662, %v1669
      %v1672 = vshrl.u32 %v1654, %v1670
      %v1673 = vor.u32 %v1671, %v1672
      %v1674 = vsub.s32 4294967266, %v1669
      %v1675 = vadd.s32 %v1674, 127
      %v1676 = vshll.u32 %v1675, 23
      %v1677 = vor.u32 4788187, %v1676
      %v1678 = vand.u32 2147483647, %v1677
      %v1680 = vcvt.s32.f32 %v1673
      %v1681 = vmul.f32 %v1680, %v1678
      %v1682 = vxor.u32 %v1681, 2147483648
      %v1683 = vsel %vm1562, %v1682, %v1681
      %v1684 = vsub.s32 4, %v1660
      %v1685 = vsel %vm1562, %v1684, %v1660
      %v1686 = vsel %vm1561, %v909, %v1683
      %v1687 = vsel %vm1561, 0, %v1685
      %v1688 = vmul.f32 %v1686, %v1686
      %v1689 = vmul.f32 %v1688, -0.001358992
      %v1690 = vadd.f32 %v1689, 0.041655596
      %v1691 = vmul.f32 %v1688, %v1690
      %v1692 = vadd.f32 %v1691, -0.4999988
      %v1693 = vmul.f32 %v1688, %v1692
      %v1694 = vadd.f32 1.0, %v1693
      %v1695 = vmul.f32 %v1686, %v1686
      %v1696 = vmul.f32 %v1695, -0.00019511016
      %v1697 = vadd.f32 %v1696, 0.008332121
      %v1698 = vmul.f32 %v1695, %v1697
      %v1699 = vadd.f32 %v1698, -0.16666654
      %v1700 = vmul.f32 %v1695, %v1699
      %v1701 = vadd.f32 %v1700, 1.0
      %v1702 = vmul.f32 %v1701, %v1686
      %vm1703 = vweird.f32 %v909
      %v1704 = vand.u32 %v1687, 3
      %vm1705 = vcmp.lt.s32.totalorder %v1704, 2
      %vm1706 = vcmp.eq.s32.totalorder %v1704, 0
      %v1707 = vxor.u32 %v1702, 2147483648
      %v1708 = vsel %vm1706, %v1694, %v1707
      %vm1709 = vcmp.eq.s32.totalorder %v1704, 2
      %v1710 = vxor.u32 %v1694, 2147483648
      %v1711 = vsel %vm1709, %v1710, %v1702
      %v1712 = vsel %vm1705, %v1708, %v1711
      %v1713 = vsel %vm1703, nan, %v1712
      %v1714 = vand.u32 2147483647, %v912
      %vm1715 = vcmp.le.f32.partialorder %v1714, 0.7853982
      %vm1716 = vcmp.lt.s32.totalorder %v912, 0
      %v1717 = vand.u32 %v912, 2139095040
      %v1718 = vshrl.u32 %v1717, 23
      %v1719 = vsub.s32 %v1718, 127
      %v1720 = vand.u32 2147483647, %v912
      %v1721 = vand.u32 %v1720, 8388607
      %v1722 = vor.u32 %v1721, 8388608
      %v1723 = vsub.s32 0, %v1722
      %v1724 = vadd.s32 %v1719, 1
      %vm1725 = vcmp.gt.s32.totalorder %v1724, 0
      %v1726 = vsel %vm1725, %v1724, 0
      %v1727 = vshrl.u32 %v1726, 5
      %v1728 = vand.u32 %v1726, 31
      %v1729 = vsub.s32 32, %v1728
      %v1730 = vshrl.u32 683565275, %v1729
      %v1731 = vshll.u32 683565275, %v1728
      %v1732 = vshrl.u32 2475754826, %v1729
      %v1733 = vor.u32 %v1731, %v1732
      %v1734 = vshll.u32 2475754826, %v1728
      %v1735 = vshrl.u32 2131351028, %v1729
      %v1736 = vor.u32 %v1734, %v1735
      %v1737 = vshll.u32 2131351028, %v1728
      %v1738 = vshrl.u32 2102212464, %v1729
      %v1739 = vor.u32 %v1737, %v1738
      %v1740 = vshll.u32 2102212464, %v1728
      %v1741 = vshrl.u32 920167782, %v1729
      %v1742 = vor.u32 %v1740, %v1741
      %v1743 = vshll.u32 920167782, %v1728
      %v1744 = vshrl.u32 1326507024, %v1729
      %v1745 = vor.u32 %v1743, %v1744
      %vm1746 = vcmp.lt.s32.totalorder %v1727, 1
      %vm1747 = vcmp.lt.s32.totalorder %v1727, 2
      %vm1748 = vcmp.lt.s32.totalorder %v1727, 3
      %vm1749 = vcmp.lt.s32.totalorder %v1727, 4
      %v1750 = vsel %vm1746, %v1730, %v1733
      %v1751 = vsel %vm1749, %v1739, 2102212464
      %v1752 = vsel %vm1748, %v1736, %v1751
      %v1753 = vsel %vm1747, %v1750, %v1752
      %v1754 = vsel %vm1746, %v1733, %v1736
      %v1755 = vsel %vm1749, %v1742, 920167782
      %v1756 = vsel %vm1748, %v1739, %v1755
      %v1757 = vsel %vm1747, %v1754, %v1756
      %v1758 = vsel %vm1746, %v1736, %v1739
      %v1759 = vsel %vm1749, %v1745, 1326507024
      %v1760 = vsel %vm1748, %v1742, %v1759
      %v1761 = vsel %vm1747, %v1758, %v1760
      %v1762 = vshll.u32 %v1722, 8
      %v1763 = vand.u32 %v1762, 65535
      %v1764 = vshrl.u32 %v1762, 16
      %v1765 = vand.u32 %v1761, 65535
      %v1766 = vshrl.u32 %v1761, 16
      %v1767 = vmul.u32 %v1763, %v1765
      %v1768 = vmul.u32 %v1763, %v1766
      %v1769 = vmul.u32 %v1764, %v1765
      %v1770 = vmul.u32 %v1764, %v1766
      %v1771 = vshll.u32 %v1768, 16
      %v1772 = vshrl.u32 %v1768, 16
      %v1773 = vshll.u32 %v1769, 16
      %v1774 = vshrl.u32 %v1769, 16
      %vm1775 = vc.u32 %v1767, %v1771
      %v1776 = vsel %vm1775, 1, 0
      %v1777 = vadd.s32 %v1767, %v1771
      %v1778 = vadd.s32 %v1770, %v1776
      %vm1779 = vc.u32 %v1777, %v1773
      %v1780 = vsel %vm1779, 1, 0
      %v1781 = vadd.s32 %v1777, %v1773
      %v1782 = vadd.s32 %v1778, %v1780
      %v1783 = vadd.s32 %v1782, %v1772
      %v1784 = vadd.s32 %v1783, %v1774
      %v1785 = vand.u32 %v1762, 65535
      %v1786 = vshrl.u32 %v1762, 16
      %v1787 = vand.u32 %v1757, 65535
      %v1788 = vshrl.u32 %v1757, 16
      %v1789 = vmul.u32 %v1785, %v1787
      %v1790 = vmul.u32 %v1785, %v1788
      %v1791 = vmul.u32 %v1786, %v1787
      %v1792 = vmul.u32 %v1786, %v1788
      %v1793 = vshll.u32 %v1790, 16
      %v1794 = vshrl.u32 %v1790, 16
      %v1795 = vshll.u32 %v1791, 16
      %v1796 = vshrl.u32 %v1791, 16
      %vm1797 = vc.u32 %v1789, %v1793
      %v1798 = vsel %vm1797, 1, 0
      %v1799 = vadd.s32 %v1789, %v1793
      %v1800 = vadd.s32 %v1792, %v1798
      %vm1801 = vc.u32 %v1799, %v1795
      %v1802 = vsel %vm1801, 1, 0
      %v1803 = vadd.s32 %v1799, %v1795
      %v1804 = vadd.s32 %v1800, %v1802
      %v1805 = vadd.s32 %v1804, %v1794
      %v1806 = vadd.s32 %v1805, %v1796
      %v1807 = vmul.u32 %v1762, %v1753
      %v1808 = vadd.s32 %v1784, %v1803
      %vm1809 = vc.u32 %v1784, %v1803
      %v1810 = vadd.s32 %v1806, 1
      %v1811 = vsel %vm1809, %v1810, %v1806
      %v1812 = vadd.s32 %v1807, %v1811
      %v1813 = vadd.s32 %v1812, 536870912
      %v1814 = vshrl.u32 %v1813, 30
      %v1815 = vshll.u32 %v1814, 30
      %v1816 = vsub.s32 %v1812, %v1815
      %vm1817 = vcmp.lt.s32.totalorder %v1816, 0
      %v1818 = vsub.s32 0, %v1816
      %v1819 = vsel %vm1817, %v1818, %v1816
      %v1820 = vclz %v1819
      %v1821 = vsub.s32 %v1820, 2
      %vm1822 = vcmp.gt.s32.totalorder 0, %v1821
      %v1823 = vsel %vm1822, 0, %v1821
      %v1824 = vsub.s32 32, %v1823
      %v1825 = vshll.u32 %v1816, %v1823
      %v1826 = vshrl.u32 %v1808, %v1824
      %v1827 = vor.u32 %v1825, %v1826
      %v1828 = vsub.s32 4294967266, %v1823
      %v1829 = vadd.s32 %v1828, 127
      %v1830 = vshll.u32 %v1829, 23
      %v1831 = vor.u32 4788187, %v1830
      %v1832 = vand.u32 2147483647, %v1831
      %v1834 = vcvt.s32.f32 %v1827
      %v1835 = vmul.f32 %v1834, %v1832
      %v1836 = vxor.u32 %v1835, 2147483648
      %v1837 = vsel %vm1716, %v1836, %v1835
      %v1838 = vsub.s32 4, %v1814
      %v1839 = vsel %vm1716, %v1838, %v1814
      %v1840 = vsel %vm1715, %v912, %v1837
      %v1841 = vsel %vm1715, 0, %v1839
      %v1842 = vmul.f32 %v1840, %v1840
      %v1843 = vmul.f32 %v1842, -0.001358992
      %v1844 = vadd.f32 %v1843, 0.041655596
      %v1845 = vmul.f32 %v1842, %v1844
      %v1846 = vadd.f32 %v1845, -0.4999988
      %v1847 = vmul.f32 %v1842, %v1846
      %v1848 = vadd.f32 1.0, %v1847
      %v1849 = vmul.f32 %v1840, %v1840
      %v1850 = vmul.f32 %v1849, -0.00019511016
      %v1851 = vadd.f32 %v1850, 0.008332121
      %v1852 = vmul.f32 %v1849, %v1851
      %v1853 = vadd.f32 %v1852, -0.16666654
      %v1854 = vmul.f32 %v1849, %v1853
      %v1855 = vadd.f32 %v1854, 1.0
      %v1856 = vmul.f32 %v1855, %v1840
      %vm1857 = vweird.f32 %v912
      %v1858 = vand.u32 %v1841, 3
      %vm1859 = vcmp.lt.s32.totalorder %v1858, 2
      %vm1860 = vcmp.eq.s32.totalorder %v1858, 0
      %v1861 = vxor.u32 %v1856, 2147483648
      %v1862 = vsel %vm1860, %v1848, %v1861
      %vm1863 = vcmp.eq.s32.totalorder %v1858, 2
      %v1864 = vxor.u32 %v1848, 2147483648
      %v1865 = vsel %vm1863, %v1864, %v1856
      %v1866 = vsel %vm1859, %v1862, %v1865
      %v1867 = vsel %vm1857, nan, %v1866
      %v1868 = vand.u32 2147483647, %v915
      %vm1869 = vcmp.le.f32.partialorder %v1868, 0.7853982
      %vm1870 = vcmp.lt.s32.totalorder %v915, 0
      %v1871 = vand.u32 %v915, 2139095040
      %v1872 = vshrl.u32 %v1871, 23
      %v1873 = vsub.s32 %v1872, 127
      %v1874 = vand.u32 2147483647, %v915
      %v1875 = vand.u32 %v1874, 8388607
      %v1876 = vor.u32 %v1875, 8388608
      %v1877 = vsub.s32 0, %v1876
      %v1878 = vadd.s32 %v1873, 1
      %vm1879 = vcmp.gt.s32.totalorder %v1878, 0
      %v1880 = vsel %vm1879, %v1878, 0
      %v1881 = vshrl.u32 %v1880, 5
      %v1882 = vand.u32 %v1880, 31
      %v1883 = vsub.s32 32, %v1882
      %v1884 = vshrl.u32 683565275, %v1883
      %v1885 = vshll.u32 683565275, %v1882
      %v1886 = vshrl.u32 2475754826, %v1883
      %v1887 = vor.u32 %v1885, %v1886
      %v1888 = vshll.u32 2475754826, %v1882
      %v1889 = vshrl.u32 2131351028, %v1883
      %v1890 = vor.u32 %v1888, %v1889
      %v1891 = vshll.u32 2131351028, %v1882
      %v1892 = vshrl.u32 2102212464, %v1883
      %v1893 = vor.u32 %v1891, %v1892
      %v1894 = vshll.u32 2102212464, %v1882
      %v1895 = vshrl.u32 920167782, %v1883
      %v1896 = vor.u32 %v1894, %v1895
      %v1897 = vshll.u32 920167782, %v1882
      %v1898 = vshrl.u32 1326507024, %v1883
      %v1899 = vor.u32 %v1897, %v1898
      %vm1900 = vcmp.lt.s32.totalorder %v1881, 1
      %vm1901 = vcmp.lt.s32.totalorder %v1881, 2
      %vm1902 = vcmp.lt.s32.totalorder %v1881, 3
      %vm1903 = vcmp.lt.s32.totalorder %v1881, 4
      %v1904 = vsel %vm1900, %v1884, %v1887
      %v1905 = vsel %vm1903, %v1893, 2102212464
      %v1906 = vsel %vm1902, %v1890, %v1905
      %v1907 = vsel %vm1901, %v1904, %v1906
      %v1908 = vsel %vm1900, %v1887, %v1890
      %v1909 = vsel %vm1903, %v1896, 920167782
      %v1910 = vsel %vm1902, %v1893, %v1909
      %v1911 = vsel %vm1901, %v1908, %v1910
      %v1912 = vsel %vm1900, %v1890, %v1893
      %v1913 = vsel %vm1903, %v1899, 1326507024
      %v1914 = vsel %vm1902, %v1896, %v1913
      %v1915 = vsel %vm1901, %v1912, %v1914
      %v1916 = vshll.u32 %v1876, 8
      %v1917 = vand.u32 %v1916, 65535
      %v1918 = vshrl.u32 %v1916, 16
      %v1919 = vand.u32 %v1915, 65535
      %v1920 = vshrl.u32 %v1915, 16
      %v1921 = vmul.u32 %v1917, %v1919
      %v1922 = vmul.u32 %v1917, %v1920
      %v1923 = vmul.u32 %v1918, %v1919
      %v1924 = vmul.u32 %v1918, %v1920
      %v1925 = vshll.u32 %v1922, 16
      %v1926 = vshrl.u32 %v1922, 16
      %v1927 = vshll.u32 %v1923, 16
      %v1928 = vshrl.u32 %v1923, 16
      %vm1929 = vc.u32 %v1921, %v1925
      %v1930 = vsel %vm1929, 1, 0
      %v1931 = vadd.s32 %v1921, %v1925
      %v1932 = vadd.s32 %v1924, %v1930
      %vm1933 = vc.u32 %v1931, %v1927
      %v1934 = vsel %vm1933, 1, 0
      %v1935 = vadd.s32 %v1931, %v1927
      %v1936 = vadd.s32 %v1932, %v1934
      %v1937 = vadd.s32 %v1936, %v1926
      %v1938 = vadd.s32 %v1937, %v1928
      %v1939 = vand.u32 %v1916, 65535
      %v1940 = vshrl.u32 %v1916, 16
      %v1941 = vand.u32 %v1911, 65535
      %v1942 = vshrl.u32 %v1911, 16
      %v1943 = vmul.u32 %v1939, %v1941
      %v1944 = vmul.u32 %v1939, %v1942
      %v1945 = vmul.u32 %v1940, %v1941
      %v1946 = vmul.u32 %v1940, %v1942
      %v1947 = vshll.u32 %v1944, 16
      %v1948 = vshrl.u32 %v1944, 16
      %v1949 = vshll.u32 %v1945, 16
      %v1950 = vshrl.u32 %v1945, 16
      %vm1951 = vc.u32 %v1943, %v1947
      %v1952 = vsel %vm1951, 1, 0
      %v1953 = vadd.s32 %v1943, %v1947
      %v1954 = vadd.s32 %v1946, %v1952
      %vm1955 = vc.u32 %v1953, %v1949
      %v1956 = vsel %vm1955, 1, 0
      %v1957 = vadd.s32 %v1953, %v1949
      %v1958 = vadd.s32 %v1954, %v1956
      %v1959 = vadd.s32 %v1958, %v1948
      %v1960 = vadd.s32 %v1959, %v1950
      %v1961 = vmul.u32 %v1916, %v1907
      %v1962 = vadd.s32 %v1938, %v1957
      %vm1963 = vc.u32 %v1938, %v1957
      %v1964 = vadd.s32 %v1960, 1
      %v1965 = vsel %vm1963, %v1964, %v1960
      %v1966 = vadd.s32 %v1961, %v1965
      %v1967 = vadd.s32 %v1966, 536870912
      %v1968 = vshrl.u32 %v1967, 30
      %v1969 = vshll.u32 %v1968, 30
      %v1970 = vsub.s32 %v1966, %v1969
      %vm1971 = vcmp.lt.s32.totalorder %v1970, 0
      %v1972 = vsub.s32 0, %v1970
      %v1973 = vsel %vm1971, %v1972, %v1970
      %v1974 = vclz %v1973
      %v1975 = vsub.s32 %v1974, 2
      %vm1976 = vcmp.gt.s32.totalorder 0, %v1975
      %v1977 = vsel %vm1976, 0, %v1975
      %v1978 = vsub.s32 32, %v1977
      %v1979 = vshll.u32 %v1970, %v1977
      %v1980 = vshrl.u32 %v1962, %v1978
      %v1981 = vor.u32 %v1979, %v1980
      %v1982 = vsub.s32 4294967266, %v1977
      %v1983 = vadd.s32 %v1982, 127
      %v1984 = vshll.u32 %v1983, 23
      %v1985 = vor.u32 4788187, %v1984
      %v1986 = vand.u32 2147483647, %v1985
      %v1988 = vcvt.s32.f32 %v1981
      %v1989 = vmul.f32 %v1988, %v1986
      %v1990 = vxor.u32 %v1989, 2147483648
      %v1991 = vsel %vm1870, %v1990, %v1989
      %v1992 = vsub.s32 4, %v1968
      %v1993 = vsel %vm1870, %v1992, %v1968
      %v1994 = vsel %vm1869, %v915, %v1991
      %v1995 = vsel %vm1869, 0, %v1993
      %v1996 = vmul.f32 %v1994, %v1994
      %v1997 = vmul.f32 %v1996, -0.001358992
      %v1998 = vadd.f32 %v1997, 0.041655596
      %v1999 = vmul.f32 %v1996, %v1998
      %v2000 = vadd.f32 %v1999, -0.4999988
      %v2001 = vmul.f32 %v1996, %v2000
      %v2002 = vadd.f32 1.0, %v2001
      %v2003 = vmul.f32 %v1994, %v1994
      %v2004 = vmul.f32 %v2003, -0.00019511016
      %v2005 = vadd.f32 %v2004, 0.008332121
      %v2006 = vmul.f32 %v2003, %v2005
      %v2007 = vadd.f32 %v2006, -0.16666654
      %v2008 = vmul.f32 %v2003, %v2007
      %v2009 = vadd.f32 %v2008, 1.0
      %v2010 = vmul.f32 %v2009, %v1994
      %vm2011 = vweird.f32 %v915
      %v2012 = vand.u32 %v1995, 3
      %vm2013 = vcmp.lt.s32.totalorder %v2012, 2
      %vm2014 = vcmp.eq.s32.totalorder %v2012, 0
      %v2015 = vxor.u32 %v2010, 2147483648
      %v2016 = vsel %vm2014, %v2002, %v2015
      %vm2017 = vcmp.eq.s32.totalorder %v2012, 2
      %v2018 = vxor.u32 %v2002, 2147483648
      %v2019 = vsel %vm2017, %v2018, %v2010
      %v2020 = vsel %vm2013, %v2016, %v2019
      %v2021 = vsel %vm2011, nan, %v2020
      %v2022 = vand.u32 2147483647, %v918
      %vm2023 = vcmp.le.f32.partialorder %v2022, 0.7853982
      %vm2024 = vcmp.lt.s32.totalorder %v918, 0
      %v2025 = vand.u32 %v918, 2139095040
      %v2026 = vshrl.u32 %v2025, 23
      %v2027 = vsub.s32 %v2026, 127
      %v2028 = vand.u32 2147483647, %v918
      %v2029 = vand.u32 %v2028, 8388607
      %v2030 = vor.u32 %v2029, 8388608
      %v2031 = vsub.s32 0, %v2030
      %v2032 = vadd.s32 %v2027, 1
      %vm2033 = vcmp.gt.s32.totalorder %v2032, 0
      %v2034 = vsel %vm2033, %v2032, 0
      %v2035 = vshrl.u32 %v2034, 5
      %v2036 = vand.u32 %v2034, 31
      %v2037 = vsub.s32 32, %v2036
      %v2038 = vshrl.u32 683565275, %v2037
      %v2039 = vshll.u32 683565275, %v2036
      %v2040 = vshrl.u32 2475754826, %v2037
      %v2041 = vor.u32 %v2039, %v2040
      %v2042 = vshll.u32 2475754826, %v2036
      %v2043 = vshrl.u32 2131351028, %v2037
      %v2044 = vor.u32 %v2042, %v2043
      %v2045 = vshll.u32 2131351028, %v2036
      %v2046 = vshrl.u32 2102212464, %v2037
      %v2047 = vor.u32 %v2045, %v2046
      %v2048 = vshll.u32 2102212464, %v2036
      %v2049 = vshrl.u32 920167782, %v2037
      %v2050 = vor.u32 %v2048, %v2049
      %v2051 = vshll.u32 920167782, %v2036
      %v2052 = vshrl.u32 1326507024, %v2037
      %v2053 = vor.u32 %v2051, %v2052
      %vm2054 = vcmp.lt.s32.totalorder %v2035, 1
      %vm2055 = vcmp.lt.s32.totalorder %v2035, 2
      %vm2056 = vcmp.lt.s32.totalorder %v2035, 3
      %vm2057 = vcmp.lt.s32.totalorder %v2035, 4
      %v2058 = vsel %vm2054, %v2038, %v2041
      %v2059 = vsel %vm2057, %v2047, 2102212464
      %v2060 = vsel %vm2056, %v2044, %v2059
      %v2061 = vsel %vm2055, %v2058, %v2060
      %v2062 = vsel %vm2054, %v2041, %v2044
      %v2063 = vsel %vm2057, %v2050, 920167782
      %v2064 = vsel %vm2056, %v2047, %v2063
      %v2065 = vsel %vm2055, %v2062, %v2064
      %v2066 = vsel %vm2054, %v2044, %v2047
      %v2067 = vsel %vm2057, %v2053, 1326507024
      %v2068 = vsel %vm2056, %v2050, %v2067
      %v2069 = vsel %vm2055, %v2066, %v2068
      %v2070 = vshll.u32 %v2030, 8
      %v2071 = vand.u32 %v2070, 65535
      %v2072 = vshrl.u32 %v2070, 16
      %v2073 = vand.u32 %v2069, 65535
      %v2074 = vshrl.u32 %v2069, 16
      %v2075 = vmul.u32 %v2071, %v2073
      %v2076 = vmul.u32 %v2071, %v2074
      %v2077 = vmul.u32 %v2072, %v2073
      %v2078 = vmul.u32 %v2072, %v2074
      %v2079 = vshll.u32 %v2076, 16
      %v2080 = vshrl.u32 %v2076, 16
      %v2081 = vshll.u32 %v2077, 16
      %v2082 = vshrl.u32 %v2077, 16
      %vm2083 = vc.u32 %v2075, %v2079
      %v2084 = vsel %vm2083, 1, 0
      %v2085 = vadd.s32 %v2075, %v2079
      %v2086 = vadd.s32 %v2078, %v2084
      %vm2087 = vc.u32 %v2085, %v2081
      %v2088 = vsel %vm2087, 1, 0
      %v2089 = vadd.s32 %v2085, %v2081
      %v2090 = vadd.s32 %v2086, %v2088
      %v2091 = vadd.s32 %v2090, %v2080
      %v2092 = vadd.s32 %v2091, %v2082
      %v2093 = vand.u32 %v2070, 65535
      %v2094 = vshrl.u32 %v2070, 16
      %v2095 = vand.u32 %v2065, 65535
      %v2096 = vshrl.u32 %v2065, 16
      %v2097 = vmul.u32 %v2093, %v2095
      %v2098 = vmul.u32 %v2093, %v2096
      %v2099 = vmul.u32 %v2094, %v2095
      %v2100 = vmul.u32 %v2094, %v2096
      %v2101 = vshll.u32 %v2098, 16
      %v2102 = vshrl.u32 %v2098, 16
      %v2103 = vshll.u32 %v2099, 16
      %v2104 = vshrl.u32 %v2099, 16
      %vm2105 = vc.u32 %v2097, %v2101
      %v2106 = vsel %vm2105, 1, 0
      %v2107 = vadd.s32 %v2097, %v2101
      %v2108 = vadd.s32 %v2100, %v2106
      %vm2109 = vc.u32 %v2107, %v2103
      %v2110 = vsel %vm2109, 1, 0
      %v2111 = vadd.s32 %v2107, %v2103
      %v2112 = vadd.s32 %v2108, %v2110
      %v2113 = vadd.s32 %v2112, %v2102
      %v2114 = vadd.s32 %v2113, %v2104
      %v2115 = vmul.u32 %v2070, %v2061
      %v2116 = vadd.s32 %v2092, %v2111
      %vm2117 = vc.u32 %v2092, %v2111
      %v2118 = vadd.s32 %v2114, 1
      %v2119 = vsel %vm2117, %v2118, %v2114
      %v2120 = vadd.s32 %v2115, %v2119
      %v2121 = vadd.s32 %v2120, 536870912
      %v2122 = vshrl.u32 %v2121, 30
      %v2123 = vshll.u32 %v2122, 30
      %v2124 = vsub.s32 %v2120, %v2123
      %vm2125 = vcmp.lt.s32.totalorder %v2124, 0
      %v2126 = vsub.s32 0, %v2124
      %v2127 = vsel %vm2125, %v2126, %v2124
      %v2128 = vclz %v2127
      %v2129 = vsub.s32 %v2128, 2
      %vm2130 = vcmp.gt.s32.totalorder 0, %v2129
      %v2131 = vsel %vm2130, 0, %v2129
      %v2132 = vsub.s32 32, %v2131
      %v2133 = vshll.u32 %v2124, %v2131
      %v2134 = vshrl.u32 %v2116, %v2132
      %v2135 = vor.u32 %v2133, %v2134
      %v2136 = vsub.s32 4294967266, %v2131
      %v2137 = vadd.s32 %v2136, 127
      %v2138 = vshll.u32 %v2137, 23
      %v2139 = vor.u32 4788187, %v2138
      %v2140 = vand.u32 2147483647, %v2139
      %v2142 = vcvt.s32.f32 %v2135
      %v2143 = vmul.f32 %v2142, %v2140
      %v2144 = vxor.u32 %v2143, 2147483648
      %v2145 = vsel %vm2024, %v2144, %v2143
      %v2146 = vsub.s32 4, %v2122
      %v2147 = vsel %vm2024, %v2146, %v2122
      %v2148 = vsel %vm2023, %v918, %v2145
      %v2149 = vsel %vm2023, 0, %v2147
      %v2150 = vmul.f32 %v2148, %v2148
      %v2151 = vmul.f32 %v2150, -0.001358992
      %v2152 = vadd.f32 %v2151, 0.041655596
      %v2153 = vmul.f32 %v2150, %v2152
      %v2154 = vadd.f32 %v2153, -0.4999988
      %v2155 = vmul.f32 %v2150, %v2154
      %v2156 = vadd.f32 1.0, %v2155
      %v2157 = vmul.f32 %v2148, %v2148
      %v2158 = vmul.f32 %v2157, -0.00019511016
      %v2159 = vadd.f32 %v2158, 0.008332121
      %v2160 = vmul.f32 %v2157, %v2159
      %v2161 = vadd.f32 %v2160, -0.16666654
      %v2162 = vmul.f32 %v2157, %v2161
      %v2163 = vadd.f32 %v2162, 1.0
      %v2164 = vmul.f32 %v2163, %v2148
      %vm2165 = vweird.f32 %v918
      %v2166 = vand.u32 %v2149, 3
      %vm2167 = vcmp.lt.s32.totalorder %v2166, 2
      %vm2168 = vcmp.eq.s32.totalorder %v2166, 0
      %v2169 = vxor.u32 %v2164, 2147483648
      %v2170 = vsel %vm2168, %v2156, %v2169
      %vm2171 = vcmp.eq.s32.totalorder %v2166, 2
      %v2172 = vxor.u32 %v2156, 2147483648
      %v2173 = vsel %vm2171, %v2172, %v2164
      %v2174 = vsel %vm2167, %v2170, %v2173
      %v2175 = vsel %vm2165, nan, %v2174
      %v2176 = vand.u32 2147483647, %v921
      %vm2177 = vcmp.le.f32.partialorder %v2176, 0.7853982
      %vm2178 = vcmp.lt.s32.totalorder %v921, 0
      %v2179 = vand.u32 %v921, 2139095040
      %v2180 = vshrl.u32 %v2179, 23
      %v2181 = vsub.s32 %v2180, 127
      %v2182 = vand.u32 2147483647, %v921
      %v2183 = vand.u32 %v2182, 8388607
      %v2184 = vor.u32 %v2183, 8388608
      %v2185 = vsub.s32 0, %v2184
      %v2186 = vadd.s32 %v2181, 1
      %vm2187 = vcmp.gt.s32.totalorder %v2186, 0
      %v2188 = vsel %vm2187, %v2186, 0
      %v2189 = vshrl.u32 %v2188, 5
      %v2190 = vand.u32 %v2188, 31
      %v2191 = vsub.s32 32, %v2190
      %v2192 = vshrl.u32 683565275, %v2191
      %v2193 = vshll.u32 683565275, %v2190
      %v2194 = vshrl.u32 2475754826, %v2191
      %v2195 = vor.u32 %v2193, %v2194
      %v2196 = vshll.u32 2475754826, %v2190
      %v2197 = vshrl.u32 2131351028, %v2191
      %v2198 = vor.u32 %v2196, %v2197
      %v2199 = vshll.u32 2131351028, %v2190
      %v2200 = vshrl.u32 2102212464, %v2191
      %v2201 = vor.u32 %v2199, %v2200
      %v2202 = vshll.u32 2102212464, %v2190
      %v2203 = vshrl.u32 920167782, %v2191
      %v2204 = vor.u32 %v2202, %v2203
      %v2205 = vshll.u32 920167782, %v2190
      %v2206 = vshrl.u32 1326507024, %v2191
      %v2207 = vor.u32 %v2205, %v2206
      %vm2208 = vcmp.lt.s32.totalorder %v2189, 1
      %vm2209 = vcmp.lt.s32.totalorder %v2189, 2
      %vm2210 = vcmp.lt.s32.totalorder %v2189, 3
      %vm2211 = vcmp.lt.s32.totalorder %v2189, 4
      %v2212 = vsel %vm2208, %v2192, %v2195
      %v2213 = vsel %vm2211, %v2201, 2102212464
      %v2214 = vsel %vm2210, %v2198, %v2213
      %v2215 = vsel %vm2209, %v2212, %v2214
      %v2216 = vsel %vm2208, %v2195, %v2198
      %v2217 = vsel %vm2211, %v2204, 920167782
      %v2218 = vsel %vm2210, %v2201, %v2217
      %v2219 = vsel %vm2209, %v2216, %v2218
      %v2220 = vsel %vm2208, %v2198, %v2201
      %v2221 = vsel %vm2211, %v2207, 1326507024
      %v2222 = vsel %vm2210, %v2204, %v2221
      %v2223 = vsel %vm2209, %v2220, %v2222
      %v2224 = vshll.u32 %v2184, 8
      %v2225 = vand.u32 %v2224, 65535
      %v2226 = vshrl.u32 %v2224, 16
      %v2227 = vand.u32 %v2223, 65535
      %v2228 = vshrl.u32 %v2223, 16
      %v2229 = vmul.u32 %v2225, %v2227
      %v2230 = vmul.u32 %v2225, %v2228
      %v2231 = vmul.u32 %v2226, %v2227
      %v2232 = vmul.u32 %v2226, %v2228
      %v2233 = vshll.u32 %v2230, 16
      %v2234 = vshrl.u32 %v2230, 16
      %v2235 = vshll.u32 %v2231, 16
      %v2236 = vshrl.u32 %v2231, 16
      %vm2237 = vc.u32 %v2229, %v2233
      %v2238 = vsel %vm2237, 1, 0
      %v2239 = vadd.s32 %v2229, %v2233
      %v2240 = vadd.s32 %v2232, %v2238
      %vm2241 = vc.u32 %v2239, %v2235
      %v2242 = vsel %vm2241, 1, 0
      %v2243 = vadd.s32 %v2239, %v2235
      %v2244 = vadd.s32 %v2240, %v2242
      %v2245 = vadd.s32 %v2244, %v2234
      %v2246 = vadd.s32 %v2245, %v2236
      %v2247 = vand.u32 %v2224, 65535
      %v2248 = vshrl.u32 %v2224, 16
      %v2249 = vand.u32 %v2219, 65535
      %v2250 = vshrl.u32 %v2219, 16
      %v2251 = vmul.u32 %v2247, %v2249
      %v2252 = vmul.u32 %v2247, %v2250
      %v2253 = vmul.u32 %v2248, %v2249
      %v2254 = vmul.u32 %v2248, %v2250
      %v2255 = vshll.u32 %v2252, 16
      %v2256 = vshrl.u32 %v2252, 16
      %v2257 = vshll.u32 %v2253, 16
      %v2258 = vshrl.u32 %v2253, 16
      %vm2259 = vc.u32 %v2251, %v2255
      %v2260 = vsel %vm2259, 1, 0
      %v2261 = vadd.s32 %v2251, %v2255
      %v2262 = vadd.s32 %v2254, %v2260
      %vm2263 = vc.u32 %v2261, %v2257
      %v2264 = vsel %vm2263, 1, 0
      %v2265 = vadd.s32 %v2261, %v2257
      %v2266 = vadd.s32 %v2262, %v2264
      %v2267 = vadd.s32 %v2266, %v2256
      %v2268 = vadd.s32 %v2267, %v2258
      %v2269 = vmul.u32 %v2224, %v2215
      %v2270 = vadd.s32 %v2246, %v2265
      %vm2271 = vc.u32 %v2246, %v2265
      %v2272 = vadd.s32 %v2268, 1
      %v2273 = vsel %vm2271, %v2272, %v2268
      %v2274 = vadd.s32 %v2269, %v2273
      %v2275 = vadd.s32 %v2274, 536870912
      %v2276 = vshrl.u32 %v2275, 30
      %v2277 = vshll.u32 %v2276, 30
      %v2278 = vsub.s32 %v2274, %v2277
      %vm2279 = vcmp.lt.s32.totalorder %v2278, 0
      %v2280 = vsub.s32 0, %v2278
      %v2281 = vsel %vm2279, %v2280, %v2278
      %v2282 = vclz %v2281
      %v2283 = vsub.s32 %v2282, 2
      %vm2284 = vcmp.gt.s32.totalorder 0, %v2283
      %v2285 = vsel %vm2284, 0, %v2283
      %v2286 = vsub.s32 32, %v2285
      %v2287 = vshll.u32 %v2278, %v2285
      %v2288 = vshrl.u32 %v2270, %v2286
      %v2289 = vor.u32 %v2287, %v2288
      %v2290 = vsub.s32 4294967266, %v2285
      %v2291 = vadd.s32 %v2290, 127
      %v2292 = vshll.u32 %v2291, 23
      %v2293 = vor.u32 4788187, %v2292
      %v2294 = vand.u32 2147483647, %v2293
      %v2296 = vcvt.s32.f32 %v2289
      %v2297 = vmul.f32 %v2296, %v2294
      %v2298 = vxor.u32 %v2297, 2147483648
      %v2299 = vsel %vm2178, %v2298, %v2297
      %v2300 = vsub.s32 4, %v2276
      %v2301 = vsel %vm2178, %v2300, %v2276
      %v2302 = vsel %vm2177, %v921, %v2299
      %v2303 = vsel %vm2177, 0, %v2301
      %v2304 = vmul.f32 %v2302, %v2302
      %v2305 = vmul.f32 %v2304, -0.001358992
      %v2306 = vadd.f32 %v2305, 0.041655596
      %v2307 = vmul.f32 %v2304, %v2306
      %v2308 = vadd.f32 %v2307, -0.4999988
      %v2309 = vmul.f32 %v2304, %v2308
      %v2310 = vadd.f32 1.0, %v2309
      %v2311 = vmul.f32 %v2302, %v2302
      %v2312 = vmul.f32 %v2311, -0.00019511016
      %v2313 = vadd.f32 %v2312, 0.008332121
      %v2314 = vmul.f32 %v2311, %v2313
      %v2315 = vadd.f32 %v2314, -0.16666654
      %v2316 = vmul.f32 %v2311, %v2315
      %v2317 = vadd.f32 %v2316, 1.0
      %v2318 = vmul.f32 %v2317, %v2302
      %vm2319 = vweird.f32 %v921
      %v2320 = vand.u32 %v2303, 3
      %vm2321 = vcmp.lt.s32.totalorder %v2320, 2
      %vm2322 = vcmp.eq.s32.totalorder %v2320, 0
      %v2323 = vxor.u32 %v2318, 2147483648
      %v2324 = vsel %vm2322, %v2310, %v2323
      %vm2325 = vcmp.eq.s32.totalorder %v2320, 2
      %v2326 = vxor.u32 %v2310, 2147483648
      %v2327 = vsel %vm2325, %v2326, %v2318
      %v2328 = vsel %vm2321, %v2324, %v2327
      %v2329 = vsel %vm2319, nan, %v2328
      %v2330 = vand.u32 2147483647, %v924
      %vm2331 = vcmp.le.f32.partialorder %v2330, 0.7853982
      %vm2332 = vcmp.lt.s32.totalorder %v924, 0
      %v2333 = vand.u32 %v924, 2139095040
      %v2334 = vshrl.u32 %v2333, 23
      %v2335 = vsub.s32 %v2334, 127
      %v2336 = vand.u32 2147483647, %v924
      %v2337 = vand.u32 %v2336, 8388607
      %v2338 = vor.u32 %v2337, 8388608
      %v2339 = vsub.s32 0, %v2338
      %v2340 = vadd.s32 %v2335, 1
      %vm2341 = vcmp.gt.s32.totalorder %v2340, 0
      %v2342 = vsel %vm2341, %v2340, 0
      %v2343 = vshrl.u32 %v2342, 5
      %v2344 = vand.u32 %v2342, 31
      %v2345 = vsub.s32 32, %v2344
      %v2346 = vshrl.u32 683565275, %v2345
      %v2347 = vshll.u32 683565275, %v2344
      %v2348 = vshrl.u32 2475754826, %v2345
      %v2349 = vor.u32 %v2347, %v2348
      %v2350 = vshll.u32 2475754826, %v2344
      %v2351 = vshrl.u32 2131351028, %v2345
      %v2352 = vor.u32 %v2350, %v2351
      %v2353 = vshll.u32 2131351028, %v2344
      %v2354 = vshrl.u32 2102212464, %v2345
      %v2355 = vor.u32 %v2353, %v2354
      %v2356 = vshll.u32 2102212464, %v2344
      %v2357 = vshrl.u32 920167782, %v2345
      %v2358 = vor.u32 %v2356, %v2357
      %v2359 = vshll.u32 920167782, %v2344
      %v2360 = vshrl.u32 1326507024, %v2345
      %v2361 = vor.u32 %v2359, %v2360
      %vm2362 = vcmp.lt.s32.totalorder %v2343, 1
      %vm2363 = vcmp.lt.s32.totalorder %v2343, 2
      %vm2364 = vcmp.lt.s32.totalorder %v2343, 3
      %vm2365 = vcmp.lt.s32.totalorder %v2343, 4
      %v2366 = vsel %vm2362, %v2346, %v2349
      %v2367 = vsel %vm2365, %v2355, 2102212464
      %v2368 = vsel %vm2364, %v2352, %v2367
      %v2369 = vsel %vm2363, %v2366, %v2368
      %v2370 = vsel %vm2362, %v2349, %v2352
      %v2371 = vsel %vm2365, %v2358, 920167782
      %v2372 = vsel %vm2364, %v2355, %v2371
      %v2373 = vsel %vm2363, %v2370, %v2372
      %v2374 = vsel %vm2362, %v2352, %v2355
      %v2375 = vsel %vm2365, %v2361, 1326507024
      %v2376 = vsel %vm2364, %v2358, %v2375
      %v2377 = vsel %vm2363, %v2374, %v2376
      %v2378 = vshll.u32 %v2338, 8
      %v2379 = vand.u32 %v2378, 65535
      %v2380 = vshrl.u32 %v2378, 16
      %v2381 = vand.u32 %v2377, 65535
      %v2382 = vshrl.u32 %v2377, 16
      %v2383 = vmul.u32 %v2379, %v2381
      %v2384 = vmul.u32 %v2379, %v2382
      %v2385 = vmul.u32 %v2380, %v2381
      %v2386 = vmul.u32 %v2380, %v2382
      %v2387 = vshll.u32 %v2384, 16
      %v2388 = vshrl.u32 %v2384, 16
      %v2389 = vshll.u32 %v2385, 16
      %v2390 = vshrl.u32 %v2385, 16
      %vm2391 = vc.u32 %v2383, %v2387
      %v2392 = vsel %vm2391, 1, 0
      %v2393 = vadd.s32 %v2383, %v2387
      %v2394 = vadd.s32 %v2386, %v2392
      %vm2395 = vc.u32 %v2393, %v2389
      %v2396 = vsel %vm2395, 1, 0
      %v2397 = vadd.s32 %v2393, %v2389
      %v2398 = vadd.s32 %v2394, %v2396
      %v2399 = vadd.s32 %v2398, %v2388
      %v2400 = vadd.s32 %v2399, %v2390
      %v2401 = vand.u32 %v2378, 65535
      %v2402 = vshrl.u32 %v2378, 16
      %v2403 = vand.u32 %v2373, 65535
      %v2404 = vshrl.u32 %v2373, 16
      %v2405 = vmul.u32 %v2401, %v2403
      %v2406 = vmul.u32 %v2401, %v2404
      %v2407 = vmul.u32 %v2402, %v2403
      %v2408 = vmul.u32 %v2402, %v2404
      %v2409 = vshll.u32 %v2406, 16
      %v2410 = vshrl.u32 %v2406, 16
      %v2411 = vshll.u32 %v2407, 16
      %v2412 = vshrl.u32 %v2407, 16
      %vm2413 = vc.u32 %v2405, %v2409
      %v2414 = vsel %vm2413, 1, 0
      %v2415 = vadd.s32 %v2405, %v2409
      %v2416 = vadd.s32 %v2408, %v2414
      %vm2417 = vc.u32 %v2415, %v2411
      %v2418 = vsel %vm2417, 1, 0
      %v2419 = vadd.s32 %v2415, %v2411
      %v2420 = vadd.s32 %v2416, %v2418
      %v2421 = vadd.s32 %v2420, %v2410
      %v2422 = vadd.s32 %v2421, %v2412
      %v2423 = vmul.u32 %v2378, %v2369
      %v2424 = vadd.s32 %v2400, %v2419
      %vm2425 = vc.u32 %v2400, %v2419
      %v2426 = vadd.s32 %v2422, 1
      %v2427 = vsel %vm2425, %v2426, %v2422
      %v2428 = vadd.s32 %v2423, %v2427
      %v2429 = vadd.s32 %v2428, 536870912
      %v2430 = vshrl.u32 %v2429, 30
      %v2431 = vshll.u32 %v2430, 30
      %v2432 = vsub.s32 %v2428, %v2431
      %vm2433 = vcmp.lt.s32.totalorder %v2432, 0
      %v2434 = vsub.s32 0, %v2432
      %v2435 = vsel %vm2433, %v2434, %v2432
      %v2436 = vclz %v2435
      %v2437 = vsub.s32 %v2436, 2
      %vm2438 = vcmp.gt.s32.totalorder 0, %v2437
      %v2439 = vsel %vm2438, 0, %v2437
      %v2440 = vsub.s32 32, %v2439
      %v2441 = vshll.u32 %v2432, %v2439
      %v2442 = vshrl.u32 %v2424, %v2440
      %v2443 = vor.u32 %v2441, %v2442
      %v2444 = vsub.s32 4294967266, %v2439
      %v2445 = vadd.s32 %v2444, 127
      %v2446 = vshll.u32 %v2445, 23
      %v2447 = vor.u32 4788187, %v2446
      %v2448 = vand.u32 2147483647, %v2447
      %v2450 = vcvt.s32.f32 %v2443
      %v2451 = vmul.f32 %v2450, %v2448
      %v2452 = vxor.u32 %v2451, 2147483648
      %v2453 = vsel %vm2332, %v2452, %v2451
      %v2454 = vsub.s32 4, %v2430
      %v2455 = vsel %vm2332, %v2454, %v2430
      %v2456 = vsel %vm2331, %v924, %v2453
      %v2457 = vsel %vm2331, 0, %v2455
      %v2458 = vmul.f32 %v2456, %v2456
      %v2459 = vmul.f32 %v2458, -0.001358992
      %v2460 = vadd.f32 %v2459, 0.041655596
      %v2461 = vmul.f32 %v2458, %v2460
      %v2462 = vadd.f32 %v2461, -0.4999988
      %v2463 = vmul.f32 %v2458, %v2462
      %v2464 = vadd.f32 1.0, %v2463
      %v2465 = vmul.f32 %v2456, %v2456
      %v2466 = vmul.f32 %v2465, -0.00019511016
      %v2467 = vadd.f32 %v2466, 0.008332121
      %v2468 = vmul.f32 %v2465, %v2467
      %v2469 = vadd.f32 %v2468, -0.16666654
      %v2470 = vmul.f32 %v2465, %v2469
      %v2471 = vadd.f32 %v2470, 1.0
      %v2472 = vmul.f32 %v2471, %v2456
      %vm2473 = vweird.f32 %v924
      %v2474 = vand.u32 %v2457, 3
      %vm2475 = vcmp.lt.s32.totalorder %v2474, 2
      %vm2476 = vcmp.eq.s32.totalorder %v2474, 0
      %v2477 = vxor.u32 %v2472, 2147483648
      %v2478 = vsel %vm2476, %v2464, %v2477
      %vm2479 = vcmp.eq.s32.totalorder %v2474, 2
      %v2480 = vxor.u32 %v2464, 2147483648
      %v2481 = vsel %vm2479, %v2480, %v2472
      %v2482 = vsel %vm2475, %v2478, %v2481
      %v2483 = vsel %vm2473, nan, %v2482
      %v2484 = vand.u32 2147483647, %v927
      %vm2485 = vcmp.le.f32.partialorder %v2484, 0.7853982
      %vm2486 = vcmp.lt.s32.totalorder %v927, 0
      %v2487 = vand.u32 %v927, 2139095040
      %v2488 = vshrl.u32 %v2487, 23
      %v2489 = vsub.s32 %v2488, 127
      %v2490 = vand.u32 2147483647, %v927
      %v2491 = vand.u32 %v2490, 8388607
      %v2492 = vor.u32 %v2491, 8388608
      %v2493 = vsub.s32 0, %v2492
      %v2494 = vadd.s32 %v2489, 1
      %vm2495 = vcmp.gt.s32.totalorder %v2494, 0
      %v2496 = vsel %vm2495, %v2494, 0
      %v2497 = vshrl.u32 %v2496, 5
      %v2498 = vand.u32 %v2496, 31
      %v2499 = vsub.s32 32, %v2498
      %v2500 = vshrl.u32 683565275, %v2499
      %v2501 = vshll.u32 683565275, %v2498
      %v2502 = vshrl.u32 2475754826, %v2499
      %v2503 = vor.u32 %v2501, %v2502
      %v2504 = vshll.u32 2475754826, %v2498
      %v2505 = vshrl.u32 2131351028, %v2499
      %v2506 = vor.u32 %v2504, %v2505
      %v2507 = vshll.u32 2131351028, %v2498
      %v2508 = vshrl.u32 2102212464, %v2499
      %v2509 = vor.u32 %v2507, %v2508
      %v2510 = vshll.u32 2102212464, %v2498
      %v2511 = vshrl.u32 920167782, %v2499
      %v2512 = vor.u32 %v2510, %v2511
      %v2513 = vshll.u32 920167782, %v2498
      %v2514 = vshrl.u32 1326507024, %v2499
      %v2515 = vor.u32 %v2513, %v2514
      %vm2516 = vcmp.lt.s32.totalorder %v2497, 1
      %vm2517 = vcmp.lt.s32.totalorder %v2497, 2
      %vm2518 = vcmp.lt.s32.totalorder %v2497, 3
      %vm2519 = vcmp.lt.s32.totalorder %v2497, 4
      %v2520 = vsel %vm2516, %v2500, %v2503
      %v2521 = vsel %vm2519, %v2509, 2102212464
      %v2522 = vsel %vm2518, %v2506, %v2521
      %v2523 = vsel %vm2517, %v2520, %v2522
      %v2524 = vsel %vm2516, %v2503, %v2506
      %v2525 = vsel %vm2519, %v2512, 920167782
      %v2526 = vsel %vm2518, %v2509, %v2525
      %v2527 = vsel %vm2517, %v2524, %v2526
      %v2528 = vsel %vm2516, %v2506, %v2509
      %v2529 = vsel %vm2519, %v2515, 1326507024
      %v2530 = vsel %vm2518, %v2512, %v2529
      %v2531 = vsel %vm2517, %v2528, %v2530
      %v2532 = vshll.u32 %v2492, 8
      %v2533 = vand.u32 %v2532, 65535
      %v2534 = vshrl.u32 %v2532, 16
      %v2535 = vand.u32 %v2531, 65535
      %v2536 = vshrl.u32 %v2531, 16
      %v2537 = vmul.u32 %v2533, %v2535
      %v2538 = vmul.u32 %v2533, %v2536
      %v2539 = vmul.u32 %v2534, %v2535
      %v2540 = vmul.u32 %v2534, %v2536
      %v2541 = vshll.u32 %v2538, 16
      %v2542 = vshrl.u32 %v2538, 16
      %v2543 = vshll.u32 %v2539, 16
      %v2544 = vshrl.u32 %v2539, 16
      %vm2545 = vc.u32 %v2537, %v2541
      %v2546 = vsel %vm2545, 1, 0
      %v2547 = vadd.s32 %v2537, %v2541
      %v2548 = vadd.s32 %v2540, %v2546
      %vm2549 = vc.u32 %v2547, %v2543
      %v2550 = vsel %vm2549, 1, 0
      %v2551 = vadd.s32 %v2547, %v2543
      %v2552 = vadd.s32 %v2548, %v2550
      %v2553 = vadd.s32 %v2552, %v2542
      %v2554 = vadd.s32 %v2553, %v2544
      %v2555 = vand.u32 %v2532, 65535
      %v2556 = vshrl.u32 %v2532, 16
      %v2557 = vand.u32 %v2527, 65535
      %v2558 = vshrl.u32 %v2527, 16
      %v2559 = vmul.u32 %v2555, %v2557
      %v2560 = vmul.u32 %v2555, %v2558
      %v2561 = vmul.u32 %v2556, %v2557
      %v2562 = vmul.u32 %v2556, %v2558
      %v2563 = vshll.u32 %v2560, 16
      %v2564 = vshrl.u32 %v2560, 16
      %v2565 = vshll.u32 %v2561, 16
      %v2566 = vshrl.u32 %v2561, 16
      %vm2567 = vc.u32 %v2559, %v2563
      %v2568 = vsel %vm2567, 1, 0
      %v2569 = vadd.s32 %v2559, %v2563
      %v2570 = vadd.s32 %v2562, %v2568
      %vm2571 = vc.u32 %v2569, %v2565
      %v2572 = vsel %vm2571, 1, 0
      %v2573 = vadd.s32 %v2569, %v2565
      %v2574 = vadd.s32 %v2570, %v2572
      %v2575 = vadd.s32 %v2574, %v2564
      %v2576 = vadd.s32 %v2575, %v2566
      %v2577 = vmul.u32 %v2532, %v2523
      %v2578 = vadd.s32 %v2554, %v2573
      %vm2579 = vc.u32 %v2554, %v2573
      %v2580 = vadd.s32 %v2576, 1
      %v2581 = vsel %vm2579, %v2580, %v2576
      %v2582 = vadd.s32 %v2577, %v2581
      %v2583 = vadd.s32 %v2582, 536870912
      %v2584 = vshrl.u32 %v2583, 30
      %v2585 = vshll.u32 %v2584, 30
      %v2586 = vsub.s32 %v2582, %v2585
      %vm2587 = vcmp.lt.s32.totalorder %v2586, 0
      %v2588 = vsub.s32 0, %v2586
      %v2589 = vsel %vm2587, %v2588, %v2586
      %v2590 = vclz %v2589
      %v2591 = vsub.s32 %v2590, 2
      %vm2592 = vcmp.gt.s32.totalorder 0, %v2591
      %v2593 = vsel %vm2592, 0, %v2591
      %v2594 = vsub.s32 32, %v2593
      %v2595 = vshll.u32 %v2586, %v2593
      %v2596 = vshrl.u32 %v2578, %v2594
      %v2597 = vor.u32 %v2595, %v2596
      %v2598 = vsub.s32 4294967266, %v2593
      %v2599 = vadd.s32 %v2598, 127
      %v2600 = vshll.u32 %v2599, 23
      %v2601 = vor.u32 4788187, %v2600
      %v2602 = vand.u32 2147483647, %v2601
      %v2604 = vcvt.s32.f32 %v2597
      %v2605 = vmul.f32 %v2604, %v2602
      %v2606 = vxor.u32 %v2605, 2147483648
      %v2607 = vsel %vm2486, %v2606, %v2605
      %v2608 = vsub.s32 4, %v2584
      %v2609 = vsel %vm2486, %v2608, %v2584
      %v2610 = vsel %vm2485, %v927, %v2607
      %v2611 = vsel %vm2485, 0, %v2609
      %v2612 = vmul.f32 %v2610, %v2610
      %v2613 = vmul.f32 %v2612, -0.001358992
      %v2614 = vadd.f32 %v2613, 0.041655596
      %v2615 = vmul.f32 %v2612, %v2614
      %v2616 = vadd.f32 %v2615, -0.4999988
      %v2617 = vmul.f32 %v2612, %v2616
      %v2618 = vadd.f32 1.0, %v2617
      %v2619 = vmul.f32 %v2610, %v2610
      %v2620 = vmul.f32 %v2619, -0.00019511016
      %v2621 = vadd.f32 %v2620, 0.008332121
      %v2622 = vmul.f32 %v2619, %v2621
      %v2623 = vadd.f32 %v2622, -0.16666654
      %v2624 = vmul.f32 %v2619, %v2623
      %v2625 = vadd.f32 %v2624, 1.0
      %v2626 = vmul.f32 %v2625, %v2610
      %vm2627 = vweird.f32 %v927
      %v2628 = vand.u32 %v2611, 3
      %vm2629 = vcmp.lt.s32.totalorder %v2628, 2
      %vm2630 = vcmp.eq.s32.totalorder %v2628, 0
      %v2631 = vxor.u32 %v2626, 2147483648
      %v2632 = vsel %vm2630, %v2618, %v2631
      %vm2633 = vcmp.eq.s32.totalorder %v2628, 2
      %v2634 = vxor.u32 %v2618, 2147483648
      %v2635 = vsel %vm2633, %v2634, %v2626
      %v2636 = vsel %vm2629, %v2632, %v2635
      %v2637 = vsel %vm2627, nan, %v2636
      %v2638 = vand.u32 2147483647, %v930
      %vm2639 = vcmp.le.f32.partialorder %v2638, 0.7853982
      %vm2640 = vcmp.lt.s32.totalorder %v930, 0
      %v2641 = vand.u32 %v930, 2139095040
      %v2642 = vshrl.u32 %v2641, 23
      %v2643 = vsub.s32 %v2642, 127
      %v2644 = vand.u32 2147483647, %v930
      %v2645 = vand.u32 %v2644, 8388607
      %v2646 = vor.u32 %v2645, 8388608
      %v2647 = vsub.s32 0, %v2646
      %v2648 = vadd.s32 %v2643, 1
      %vm2649 = vcmp.gt.s32.totalorder %v2648, 0
      %v2650 = vsel %vm2649, %v2648, 0
      %v2651 = vshrl.u32 %v2650, 5
      %v2652 = vand.u32 %v2650, 31
      %v2653 = vsub.s32 32, %v2652
      %v2654 = vshrl.u32 683565275, %v2653
      %v2655 = vshll.u32 683565275, %v2652
      %v2656 = vshrl.u32 2475754826, %v2653
      %v2657 = vor.u32 %v2655, %v2656
      %v2658 = vshll.u32 2475754826, %v2652
      %v2659 = vshrl.u32 2131351028, %v2653
      %v2660 = vor.u32 %v2658, %v2659
      %v2661 = vshll.u32 2131351028, %v2652
      %v2662 = vshrl.u32 2102212464, %v2653
      %v2663 = vor.u32 %v2661, %v2662
      %v2664 = vshll.u32 2102212464, %v2652
      %v2665 = vshrl.u32 920167782, %v2653
      %v2666 = vor.u32 %v2664, %v2665
      %v2667 = vshll.u32 920167782, %v2652
      %v2668 = vshrl.u32 1326507024, %v2653
      %v2669 = vor.u32 %v2667, %v2668
      %vm2670 = vcmp.lt.s32.totalorder %v2651, 1
      %vm2671 = vcmp.lt.s32.totalorder %v2651, 2
      %vm2672 = vcmp.lt.s32.totalorder %v2651, 3
      %vm2673 = vcmp.lt.s32.totalorder %v2651, 4
      %v2674 = vsel %vm2670, %v2654, %v2657
      %v2675 = vsel %vm2673, %v2663, 2102212464
      %v2676 = vsel %vm2672, %v2660, %v2675
      %v2677 = vsel %vm2671, %v2674, %v2676
      %v2678 = vsel %vm2670, %v2657, %v2660
      %v2679 = vsel %vm2673, %v2666, 920167782
      %v2680 = vsel %vm2672, %v2663, %v2679
      %v2681 = vsel %vm2671, %v2678, %v2680
      %v2682 = vsel %vm2670, %v2660, %v2663
      %v2683 = vsel %vm2673, %v2669, 1326507024
      %v2684 = vsel %vm2672, %v2666, %v2683
      %v2685 = vsel %vm2671, %v2682, %v2684
      %v2686 = vshll.u32 %v2646, 8
      %v2687 = vand.u32 %v2686, 65535
      %v2688 = vshrl.u32 %v2686, 16
      %v2689 = vand.u32 %v2685, 65535
      %v2690 = vshrl.u32 %v2685, 16
      %v2691 = vmul.u32 %v2687, %v2689
      %v2692 = vmul.u32 %v2687, %v2690
      %v2693 = vmul.u32 %v2688, %v2689
      %v2694 = vmul.u32 %v2688, %v2690
      %v2695 = vshll.u32 %v2692, 16
      %v2696 = vshrl.u32 %v2692, 16
      %v2697 = vshll.u32 %v2693, 16
      %v2698 = vshrl.u32 %v2693, 16
      %vm2699 = vc.u32 %v2691, %v2695
      %v2700 = vsel %vm2699, 1, 0
      %v2701 = vadd.s32 %v2691, %v2695
      %v2702 = vadd.s32 %v2694, %v2700
      %vm2703 = vc.u32 %v2701, %v2697
      %v2704 = vsel %vm2703, 1, 0
      %v2705 = vadd.s32 %v2701, %v2697
      %v2706 = vadd.s32 %v2702, %v2704
      %v2707 = vadd.s32 %v2706, %v2696
      %v2708 = vadd.s32 %v2707, %v2698
      %v2709 = vand.u32 %v2686, 65535
      %v2710 = vshrl.u32 %v2686, 16
      %v2711 = vand.u32 %v2681, 65535
      %v2712 = vshrl.u32 %v2681, 16
      %v2713 = vmul.u32 %v2709, %v2711
      %v2714 = vmul.u32 %v2709, %v2712
      %v2715 = vmul.u32 %v2710, %v2711
      %v2716 = vmul.u32 %v2710, %v2712
      %v2717 = vshll.u32 %v2714, 16
      %v2718 = vshrl.u32 %v2714, 16
      %v2719 = vshll.u32 %v2715, 16
      %v2720 = vshrl.u32 %v2715, 16
      %vm2721 = vc.u32 %v2713, %v2717
      %v2722 = vsel %vm2721, 1, 0
      %v2723 = vadd.s32 %v2713, %v2717
      %v2724 = vadd.s32 %v2716, %v2722
      %vm2725 = vc.u32 %v2723, %v2719
      %v2726 = vsel %vm2725, 1, 0
      %v2727 = vadd.s32 %v2723, %v2719
      %v2728 = vadd.s32 %v2724, %v2726
      %v2729 = vadd.s32 %v2728, %v2718
      %v2730 = vadd.s32 %v2729, %v2720
      %v2731 = vmul.u32 %v2686, %v2677
      %v2732 = vadd.s32 %v2708, %v2727
      %vm2733 = vc.u32 %v2708, %v2727
      %v2734 = vadd.s32 %v2730, 1
      %v2735 = vsel %vm2733, %v2734, %v2730
      %v2736 = vadd.s32 %v2731, %v2735
      %v2737 = vadd.s32 %v2736, 536870912
      %v2738 = vshrl.u32 %v2737, 30
      %v2739 = vshll.u32 %v2738, 30
      %v2740 = vsub.s32 %v2736, %v2739
      %vm2741 = vcmp.lt.s32.totalorder %v2740, 0
      %v2742 = vsub.s32 0, %v2740
      %v2743 = vsel %vm2741, %v2742, %v2740
      %v2744 = vclz %v2743
      %v2745 = vsub.s32 %v2744, 2
      %vm2746 = vcmp.gt.s32.totalorder 0, %v2745
      %v2747 = vsel %vm2746, 0, %v2745
      %v2748 = vsub.s32 32, %v2747
      %v2749 = vshll.u32 %v2740, %v2747
      %v2750 = vshrl.u32 %v2732, %v2748
      %v2751 = vor.u32 %v2749, %v2750
      %v2752 = vsub.s32 4294967266, %v2747
      %v2753 = vadd.s32 %v2752, 127
      %v2754 = vshll.u32 %v2753, 23
      %v2755 = vor.u32 4788187, %v2754
      %v2756 = vand.u32 2147483647, %v2755
      %v2758 = vcvt.s32.f32 %v2751
      %v2759 = vmul.f32 %v2758, %v2756
      %v2760 = vxor.u32 %v2759, 2147483648
      %v2761 = vsel %vm2640, %v2760, %v2759
      %v2762 = vsub.s32 4, %v2738
      %v2763 = vsel %vm2640, %v2762, %v2738
      %v2764 = vsel %vm2639, %v930, %v2761
      %v2765 = vsel %vm2639, 0, %v2763
      %v2766 = vmul.f32 %v2764, %v2764
      %v2767 = vmul.f32 %v2766, -0.001358992
      %v2768 = vadd.f32 %v2767, 0.041655596
      %v2769 = vmul.f32 %v2766, %v2768
      %v2770 = vadd.f32 %v2769, -0.4999988
      %v2771 = vmul.f32 %v2766, %v2770
      %v2772 = vadd.f32 1.0, %v2771
      %v2773 = vmul.f32 %v2764, %v2764
      %v2774 = vmul.f32 %v2773, -0.00019511016
      %v2775 = vadd.f32 %v2774, 0.008332121
      %v2776 = vmul.f32 %v2773, %v2775
      %v2777 = vadd.f32 %v2776, -0.16666654
      %v2778 = vmul.f32 %v2773, %v2777
      %v2779 = vadd.f32 %v2778, 1.0
      %v2780 = vmul.f32 %v2779, %v2764
      %vm2781 = vweird.f32 %v930
      %v2782 = vand.u32 %v2765, 3
      %vm2783 = vcmp.lt.s32.totalorder %v2782, 2
      %vm2784 = vcmp.eq.s32.totalorder %v2782, 0
      %v2785 = vxor.u32 %v2780, 2147483648
      %v2786 = vsel %vm2784, %v2772, %v2785
      %vm2787 = vcmp.eq.s32.totalorder %v2782, 2
      %v2788 = vxor.u32 %v2772, 2147483648
      %v2789 = vsel %vm2787, %v2788, %v2780
      %v2790 = vsel %vm2783, %v2786, %v2789
      %v2791 = vsel %vm2781, nan, %v2790
      %v2792 = vand.u32 2147483647, %v933
      %vm2793 = vcmp.le.f32.partialorder %v2792, 0.7853982
      %vm2794 = vcmp.lt.s32.totalorder %v933, 0
      %v2795 = vand.u32 %v933, 2139095040
      %v2796 = vshrl.u32 %v2795, 23
      %v2797 = vsub.s32 %v2796, 127
      %v2798 = vand.u32 2147483647, %v933
      %v2799 = vand.u32 %v2798, 8388607
      %v2800 = vor.u32 %v2799, 8388608
      %v2801 = vsub.s32 0, %v2800
      %v2802 = vadd.s32 %v2797, 1
      %vm2803 = vcmp.gt.s32.totalorder %v2802, 0
      %v2804 = vsel %vm2803, %v2802, 0
      %v2805 = vshrl.u32 %v2804, 5
      %v2806 = vand.u32 %v2804, 31
      %v2807 = vsub.s32 32, %v2806
      %v2808 = vshrl.u32 683565275, %v2807
      %v2809 = vshll.u32 683565275, %v2806
      %v2810 = vshrl.u32 2475754826, %v2807
      %v2811 = vor.u32 %v2809, %v2810
      %v2812 = vshll.u32 2475754826, %v2806
      %v2813 = vshrl.u32 2131351028, %v2807
      %v2814 = vor.u32 %v2812, %v2813
      %v2815 = vshll.u32 2131351028, %v2806
      %v2816 = vshrl.u32 2102212464, %v2807
      %v2817 = vor.u32 %v2815, %v2816
      %v2818 = vshll.u32 2102212464, %v2806
      %v2819 = vshrl.u32 920167782, %v2807
      %v2820 = vor.u32 %v2818, %v2819
      %v2821 = vshll.u32 920167782, %v2806
      %v2822 = vshrl.u32 1326507024, %v2807
      %v2823 = vor.u32 %v2821, %v2822
      %vm2824 = vcmp.lt.s32.totalorder %v2805, 1
      %vm2825 = vcmp.lt.s32.totalorder %v2805, 2
      %vm2826 = vcmp.lt.s32.totalorder %v2805, 3
      %vm2827 = vcmp.lt.s32.totalorder %v2805, 4
      %v2828 = vsel %vm2824, %v2808, %v2811
      %v2829 = vsel %vm2827, %v2817, 2102212464
      %v2830 = vsel %vm2826, %v2814, %v2829
      %v2831 = vsel %vm2825, %v2828, %v2830
      %v2832 = vsel %vm2824, %v2811, %v2814
      %v2833 = vsel %vm2827, %v2820, 920167782
      %v2834 = vsel %vm2826, %v2817, %v2833
      %v2835 = vsel %vm2825, %v2832, %v2834
      %v2836 = vsel %vm2824, %v2814, %v2817
      %v2837 = vsel %vm2827, %v2823, 1326507024
      %v2838 = vsel %vm2826, %v2820, %v2837
      %v2839 = vsel %vm2825, %v2836, %v2838
      %v2840 = vshll.u32 %v2800, 8
      %v2841 = vand.u32 %v2840, 65535
      %v2842 = vshrl.u32 %v2840, 16
      %v2843 = vand.u32 %v2839, 65535
      %v2844 = vshrl.u32 %v2839, 16
      %v2845 = vmul.u32 %v2841, %v2843
      %v2846 = vmul.u32 %v2841, %v2844
      %v2847 = vmul.u32 %v2842, %v2843
      %v2848 = vmul.u32 %v2842, %v2844
      %v2849 = vshll.u32 %v2846, 16
      %v2850 = vshrl.u32 %v2846, 16
      %v2851 = vshll.u32 %v2847, 16
      %v2852 = vshrl.u32 %v2847, 16
      %vm2853 = vc.u32 %v2845, %v2849
      %v2854 = vsel %vm2853, 1, 0
      %v2855 = vadd.s32 %v2845, %v2849
      %v2856 = vadd.s32 %v2848, %v2854
      %vm2857 = vc.u32 %v2855, %v2851
      %v2858 = vsel %vm2857, 1, 0
      %v2859 = vadd.s32 %v2855, %v2851
      %v2860 = vadd.s32 %v2856, %v2858
      %v2861 = vadd.s32 %v2860, %v2850
      %v2862 = vadd.s32 %v2861, %v2852
      %v2863 = vand.u32 %v2840, 65535
      %v2864 = vshrl.u32 %v2840, 16
      %v2865 = vand.u32 %v2835, 65535
      %v2866 = vshrl.u32 %v2835, 16
      %v2867 = vmul.u32 %v2863, %v2865
      %v2868 = vmul.u32 %v2863, %v2866
      %v2869 = vmul.u32 %v2864, %v2865
      %v2870 = vmul.u32 %v2864, %v2866
      %v2871 = vshll.u32 %v2868, 16
      %v2872 = vshrl.u32 %v2868, 16
      %v2873 = vshll.u32 %v2869, 16
      %v2874 = vshrl.u32 %v2869, 16
      %vm2875 = vc.u32 %v2867, %v2871
      %v2876 = vsel %vm2875, 1, 0
      %v2877 = vadd.s32 %v2867, %v2871
      %v2878 = vadd.s32 %v2870, %v2876
      %vm2879 = vc.u32 %v2877, %v2873
      %v2880 = vsel %vm2879, 1, 0
      %v2881 = vadd.s32 %v2877, %v2873
      %v2882 = vadd.s32 %v2878, %v2880
      %v2883 = vadd.s32 %v2882, %v2872
      %v2884 = vadd.s32 %v2883, %v2874
      %v2885 = vmul.u32 %v2840, %v2831
      %v2886 = vadd.s32 %v2862, %v2881
      %vm2887 = vc.u32 %v2862, %v2881
      %v2888 = vadd.s32 %v2884, 1
      %v2889 = vsel %vm2887, %v2888, %v2884
      %v2890 = vadd.s32 %v2885, %v2889
      %v2891 = vadd.s32 %v2890, 536870912
      %v2892 = vshrl.u32 %v2891, 30
      %v2893 = vshll.u32 %v2892, 30
      %v2894 = vsub.s32 %v2890, %v2893
      %vm2895 = vcmp.lt.s32.totalorder %v2894, 0
      %v2896 = vsub.s32 0, %v2894
      %v2897 = vsel %vm2895, %v2896, %v2894
      %v2898 = vclz %v2897
      %v2899 = vsub.s32 %v2898, 2
      %vm2900 = vcmp.gt.s32.totalorder 0, %v2899
      %v2901 = vsel %vm2900, 0, %v2899
      %v2902 = vsub.s32 32, %v2901
      %v2903 = vshll.u32 %v2894, %v2901
      %v2904 = vshrl.u32 %v2886, %v2902
      %v2905 = vor.u32 %v2903, %v2904
      %v2906 = vsub.s32 4294967266, %v2901
      %v2907 = vadd.s32 %v2906, 127
      %v2908 = vshll.u32 %v2907, 23
      %v2909 = vor.u32 4788187, %v2908
      %v2910 = vand.u32 2147483647, %v2909
      %v2912 = vcvt.s32.f32 %v2905
      %v2913 = vmul.f32 %v2912, %v2910
      %v2914 = vxor.u32 %v2913, 2147483648
      %v2915 = vsel %vm2794, %v2914, %v2913
      %v2916 = vsub.s32 4, %v2892
      %v2917 = vsel %vm2794, %v2916, %v2892
      %v2918 = vsel %vm2793, %v933, %v2915
      %v2919 = vsel %vm2793, 0, %v2917
      %v2920 = vmul.f32 %v2918, %v2918
      %v2921 = vmul.f32 %v2920, -0.001358992
      %v2922 = vadd.f32 %v2921, 0.041655596
      %v2923 = vmul.f32 %v2920, %v2922
      %v2924 = vadd.f32 %v2923, -0.4999988
      %v2925 = vmul.f32 %v2920, %v2924
      %v2926 = vadd.f32 1.0, %v2925
      %v2927 = vmul.f32 %v2918, %v2918
      %v2928 = vmul.f32 %v2927, -0.00019511016
      %v2929 = vadd.f32 %v2928, 0.008332121
      %v2930 = vmul.f32 %v2927, %v2929
      %v2931 = vadd.f32 %v2930, -0.16666654
      %v2932 = vmul.f32 %v2927, %v2931
      %v2933 = vadd.f32 %v2932, 1.0
      %v2934 = vmul.f32 %v2933, %v2918
      %vm2935 = vweird.f32 %v933
      %v2936 = vand.u32 %v2919, 3
      %vm2937 = vcmp.lt.s32.totalorder %v2936, 2
      %vm2938 = vcmp.eq.s32.totalorder %v2936, 0
      %v2939 = vxor.u32 %v2934, 2147483648
      %v2940 = vsel %vm2938, %v2926, %v2939
      %vm2941 = vcmp.eq.s32.totalorder %v2936, 2
      %v2942 = vxor.u32 %v2926, 2147483648
      %v2943 = vsel %vm2941, %v2942, %v2934
      %v2944 = vsel %vm2937, %v2940, %v2943
      %v2945 = vsel %vm2935, nan, %v2944
      %v2946 = vand.u32 2147483647, %v936
      %vm2947 = vcmp.le.f32.partialorder %v2946, 0.7853982
      %vm2948 = vcmp.lt.s32.totalorder %v936, 0
      %v2949 = vand.u32 %v936, 2139095040
      %v2950 = vshrl.u32 %v2949, 23
      %v2951 = vsub.s32 %v2950, 127
      %v2952 = vand.u32 2147483647, %v936
      %v2953 = vand.u32 %v2952, 8388607
      %v2954 = vor.u32 %v2953, 8388608
      %v2955 = vsub.s32 0, %v2954
      %v2956 = vadd.s32 %v2951, 1
      %vm2957 = vcmp.gt.s32.totalorder %v2956, 0
      %v2958 = vsel %vm2957, %v2956, 0
      %v2959 = vshrl.u32 %v2958, 5
      %v2960 = vand.u32 %v2958, 31
      %v2961 = vsub.s32 32, %v2960
      %v2962 = vshrl.u32 683565275, %v2961
      %v2963 = vshll.u32 683565275, %v2960
      %v2964 = vshrl.u32 2475754826, %v2961
      %v2965 = vor.u32 %v2963, %v2964
      %v2966 = vshll.u32 2475754826, %v2960
      %v2967 = vshrl.u32 2131351028, %v2961
      %v2968 = vor.u32 %v2966, %v2967
      %v2969 = vshll.u32 2131351028, %v2960
      %v2970 = vshrl.u32 2102212464, %v2961
      %v2971 = vor.u32 %v2969, %v2970
      %v2972 = vshll.u32 2102212464, %v2960
      %v2973 = vshrl.u32 920167782, %v2961
      %v2974 = vor.u32 %v2972, %v2973
      %v2975 = vshll.u32 920167782, %v2960
      %v2976 = vshrl.u32 1326507024, %v2961
      %v2977 = vor.u32 %v2975, %v2976
      %vm2978 = vcmp.lt.s32.totalorder %v2959, 1
      %vm2979 = vcmp.lt.s32.totalorder %v2959, 2
      %vm2980 = vcmp.lt.s32.totalorder %v2959, 3
      %vm2981 = vcmp.lt.s32.totalorder %v2959, 4
      %v2982 = vsel %vm2978, %v2962, %v2965
      %v2983 = vsel %vm2981, %v2971, 2102212464
      %v2984 = vsel %vm2980, %v2968, %v2983
      %v2985 = vsel %vm2979, %v2982, %v2984
      %v2986 = vsel %vm2978, %v2965, %v2968
      %v2987 = vsel %vm2981, %v2974, 920167782
      %v2988 = vsel %vm2980, %v2971, %v2987
      %v2989 = vsel %vm2979, %v2986, %v2988
      %v2990 = vsel %vm2978, %v2968, %v2971
      %v2991 = vsel %vm2981, %v2977, 1326507024
      %v2992 = vsel %vm2980, %v2974, %v2991
      %v2993 = vsel %vm2979, %v2990, %v2992
      %v2994 = vshll.u32 %v2954, 8
      %v2995 = vand.u32 %v2994, 65535
      %v2996 = vshrl.u32 %v2994, 16
      %v2997 = vand.u32 %v2993, 65535
      %v2998 = vshrl.u32 %v2993, 16
      %v2999 = vmul.u32 %v2995, %v2997
      %v3000 = vmul.u32 %v2995, %v2998
      %v3001 = vmul.u32 %v2996, %v2997
      %v3002 = vmul.u32 %v2996, %v2998
      %v3003 = vshll.u32 %v3000, 16
      %v3004 = vshrl.u32 %v3000, 16
      %v3005 = vshll.u32 %v3001, 16
      %v3006 = vshrl.u32 %v3001, 16
      %vm3007 = vc.u32 %v2999, %v3003
      %v3008 = vsel %vm3007, 1, 0
      %v3009 = vadd.s32 %v2999, %v3003
      %v3010 = vadd.s32 %v3002, %v3008
      %vm3011 = vc.u32 %v3009, %v3005
      %v3012 = vsel %vm3011, 1, 0
      %v3013 = vadd.s32 %v3009, %v3005
      %v3014 = vadd.s32 %v3010, %v3012
      %v3015 = vadd.s32 %v3014, %v3004
      %v3016 = vadd.s32 %v3015, %v3006
      %v3017 = vand.u32 %v2994, 65535
      %v3018 = vshrl.u32 %v2994, 16
      %v3019 = vand.u32 %v2989, 65535
      %v3020 = vshrl.u32 %v2989, 16
      %v3021 = vmul.u32 %v3017, %v3019
      %v3022 = vmul.u32 %v3017, %v3020
      %v3023 = vmul.u32 %v3018, %v3019
      %v3024 = vmul.u32 %v3018, %v3020
      %v3025 = vshll.u32 %v3022, 16
      %v3026 = vshrl.u32 %v3022, 16
      %v3027 = vshll.u32 %v3023, 16
      %v3028 = vshrl.u32 %v3023, 16
      %vm3029 = vc.u32 %v3021, %v3025
      %v3030 = vsel %vm3029, 1, 0
      %v3031 = vadd.s32 %v3021, %v3025
      %v3032 = vadd.s32 %v3024, %v3030
      %vm3033 = vc.u32 %v3031, %v3027
      %v3034 = vsel %vm3033, 1, 0
      %v3035 = vadd.s32 %v3031, %v3027
      %v3036 = vadd.s32 %v3032, %v3034
      %v3037 = vadd.s32 %v3036, %v3026
      %v3038 = vadd.s32 %v3037, %v3028
      %v3039 = vmul.u32 %v2994, %v2985
      %v3040 = vadd.s32 %v3016, %v3035
      %vm3041 = vc.u32 %v3016, %v3035
      %v3042 = vadd.s32 %v3038, 1
      %v3043 = vsel %vm3041, %v3042, %v3038
      %v3044 = vadd.s32 %v3039, %v3043
      %v3045 = vadd.s32 %v3044, 536870912
      %v3046 = vshrl.u32 %v3045, 30
      %v3047 = vshll.u32 %v3046, 30
      %v3048 = vsub.s32 %v3044, %v3047
      %vm3049 = vcmp.lt.s32.totalorder %v3048, 0
      %v3050 = vsub.s32 0, %v3048
      %v3051 = vsel %vm3049, %v3050, %v3048
      %v3052 = vclz %v3051
      %v3053 = vsub.s32 %v3052, 2
      %vm3054 = vcmp.gt.s32.totalorder 0, %v3053
      %v3055 = vsel %vm3054, 0, %v3053
      %v3056 = vsub.s32 32, %v3055
      %v3057 = vshll.u32 %v3048, %v3055
      %v3058 = vshrl.u32 %v3040, %v3056
      %v3059 = vor.u32 %v3057, %v3058
      %v3060 = vsub.s32 4294967266, %v3055
      %v3061 = vadd.s32 %v3060, 127
      %v3062 = vshll.u32 %v3061, 23
      %v3063 = vor.u32 4788187, %v3062
      %v3064 = vand.u32 2147483647, %v3063
      %v3066 = vcvt.s32.f32 %v3059
      %v3067 = vmul.f32 %v3066, %v3064
      %v3068 = vxor.u32 %v3067, 2147483648
      %v3069 = vsel %vm2948, %v3068, %v3067
      %v3070 = vsub.s32 4, %v3046
      %v3071 = vsel %vm2948, %v3070, %v3046
      %v3072 = vsel %vm2947, %v936, %v3069
      %v3073 = vsel %vm2947, 0, %v3071
      %v3074 = vmul.f32 %v3072, %v3072
      %v3075 = vmul.f32 %v3074, -0.001358992
      %v3076 = vadd.f32 %v3075, 0.041655596
      %v3077 = vmul.f32 %v3074, %v3076
      %v3078 = vadd.f32 %v3077, -0.4999988
      %v3079 = vmul.f32 %v3074, %v3078
      %v3080 = vadd.f32 1.0, %v3079
      %v3081 = vmul.f32 %v3072, %v3072
      %v3082 = vmul.f32 %v3081, -0.00019511016
      %v3083 = vadd.f32 %v3082, 0.008332121
      %v3084 = vmul.f32 %v3081, %v3083
      %v3085 = vadd.f32 %v3084, -0.16666654
      %v3086 = vmul.f32 %v3081, %v3085
      %v3087 = vadd.f32 %v3086, 1.0
      %v3088 = vmul.f32 %v3087, %v3072
      %vm3089 = vweird.f32 %v936
      %v3090 = vand.u32 %v3073, 3
      %vm3091 = vcmp.lt.s32.totalorder %v3090, 2
      %vm3092 = vcmp.eq.s32.totalorder %v3090, 0
      %v3093 = vxor.u32 %v3088, 2147483648
      %v3094 = vsel %vm3092, %v3080, %v3093
      %vm3095 = vcmp.eq.s32.totalorder %v3090, 2
      %v3096 = vxor.u32 %v3080, 2147483648
      %v3097 = vsel %vm3095, %v3096, %v3088
      %v3098 = vsel %vm3091, %v3094, %v3097
      %v3099 = vsel %vm3089, nan, %v3098
      %v3100 = vand.u32 2147483647, %v939
      %vm3101 = vcmp.le.f32.partialorder %v3100, 0.7853982
      %vm3102 = vcmp.lt.s32.totalorder %v939, 0
      %v3103 = vand.u32 %v939, 2139095040
      %v3104 = vshrl.u32 %v3103, 23
      %v3105 = vsub.s32 %v3104, 127
      %v3106 = vand.u32 2147483647, %v939
      %v3107 = vand.u32 %v3106, 8388607
      %v3108 = vor.u32 %v3107, 8388608
      %v3109 = vsub.s32 0, %v3108
      %v3110 = vadd.s32 %v3105, 1
      %vm3111 = vcmp.gt.s32.totalorder %v3110, 0
      %v3112 = vsel %vm3111, %v3110, 0
      %v3113 = vshrl.u32 %v3112, 5
      %v3114 = vand.u32 %v3112, 31
      %v3115 = vsub.s32 32, %v3114
      %v3116 = vshrl.u32 683565275, %v3115
      %v3117 = vshll.u32 683565275, %v3114
      %v3118 = vshrl.u32 2475754826, %v3115
      %v3119 = vor.u32 %v3117, %v3118
      %v3120 = vshll.u32 2475754826, %v3114
      %v3121 = vshrl.u32 2131351028, %v3115
      %v3122 = vor.u32 %v3120, %v3121
      %v3123 = vshll.u32 2131351028, %v3114
      %v3124 = vshrl.u32 2102212464, %v3115
      %v3125 = vor.u32 %v3123, %v3124
      %v3126 = vshll.u32 2102212464, %v3114
      %v3127 = vshrl.u32 920167782, %v3115
      %v3128 = vor.u32 %v3126, %v3127
      %v3129 = vshll.u32 920167782, %v3114
      %v3130 = vshrl.u32 1326507024, %v3115
      %v3131 = vor.u32 %v3129, %v3130
      %vm3132 = vcmp.lt.s32.totalorder %v3113, 1
      %vm3133 = vcmp.lt.s32.totalorder %v3113, 2
      %vm3134 = vcmp.lt.s32.totalorder %v3113, 3
      %vm3135 = vcmp.lt.s32.totalorder %v3113, 4
      %v3136 = vsel %vm3132, %v3116, %v3119
      %v3137 = vsel %vm3135, %v3125, 2102212464
      %v3138 = vsel %vm3134, %v3122, %v3137
      %v3139 = vsel %vm3133, %v3136, %v3138
      %v3140 = vsel %vm3132, %v3119, %v3122
      %v3141 = vsel %vm3135, %v3128, 920167782
      %v3142 = vsel %vm3134, %v3125, %v3141
      %v3143 = vsel %vm3133, %v3140, %v3142
      %v3144 = vsel %vm3132, %v3122, %v3125
      %v3145 = vsel %vm3135, %v3131, 1326507024
      %v3146 = vsel %vm3134, %v3128, %v3145
      %v3147 = vsel %vm3133, %v3144, %v3146
      %v3148 = vshll.u32 %v3108, 8
      %v3149 = vand.u32 %v3148, 65535
      %v3150 = vshrl.u32 %v3148, 16
      %v3151 = vand.u32 %v3147, 65535
      %v3152 = vshrl.u32 %v3147, 16
      %v3153 = vmul.u32 %v3149, %v3151
      %v3154 = vmul.u32 %v3149, %v3152
      %v3155 = vmul.u32 %v3150, %v3151
      %v3156 = vmul.u32 %v3150, %v3152
      %v3157 = vshll.u32 %v3154, 16
      %v3158 = vshrl.u32 %v3154, 16
      %v3159 = vshll.u32 %v3155, 16
      %v3160 = vshrl.u32 %v3155, 16
      %vm3161 = vc.u32 %v3153, %v3157
      %v3162 = vsel %vm3161, 1, 0
      %v3163 = vadd.s32 %v3153, %v3157
      %v3164 = vadd.s32 %v3156, %v3162
      %vm3165 = vc.u32 %v3163, %v3159
      %v3166 = vsel %vm3165, 1, 0
      %v3167 = vadd.s32 %v3163, %v3159
      %v3168 = vadd.s32 %v3164, %v3166
      %v3169 = vadd.s32 %v3168, %v3158
      %v3170 = vadd.s32 %v3169, %v3160
      %v3171 = vand.u32 %v3148, 65535
      %v3172 = vshrl.u32 %v3148, 16
      %v3173 = vand.u32 %v3143, 65535
      %v3174 = vshrl.u32 %v3143, 16
      %v3175 = vmul.u32 %v3171, %v3173
      %v3176 = vmul.u32 %v3171, %v3174
      %v3177 = vmul.u32 %v3172, %v3173
      %v3178 = vmul.u32 %v3172, %v3174
      %v3179 = vshll.u32 %v3176, 16
      %v3180 = vshrl.u32 %v3176, 16
      %v3181 = vshll.u32 %v3177, 16
      %v3182 = vshrl.u32 %v3177, 16
      %vm3183 = vc.u32 %v3175, %v3179
      %v3184 = vsel %vm3183, 1, 0
      %v3185 = vadd.s32 %v3175, %v3179
      %v3186 = vadd.s32 %v3178, %v3184
      %vm3187 = vc.u32 %v3185, %v3181
      %v3188 = vsel %vm3187, 1, 0
      %v3189 = vadd.s32 %v3185, %v3181
      %v3190 = vadd.s32 %v3186, %v3188
      %v3191 = vadd.s32 %v3190, %v3180
      %v3192 = vadd.s32 %v3191, %v3182
      %v3193 = vmul.u32 %v3148, %v3139
      %v3194 = vadd.s32 %v3170, %v3189
      %vm3195 = vc.u32 %v3170, %v3189
      %v3196 = vadd.s32 %v3192, 1
      %v3197 = vsel %vm3195, %v3196, %v3192
      %v3198 = vadd.s32 %v3193, %v3197
      %v3199 = vadd.s32 %v3198, 536870912
      %v3200 = vshrl.u32 %v3199, 30
      %v3201 = vshll.u32 %v3200, 30
      %v3202 = vsub.s32 %v3198, %v3201
      %vm3203 = vcmp.lt.s32.totalorder %v3202, 0
      %v3204 = vsub.s32 0, %v3202
      %v3205 = vsel %vm3203, %v3204, %v3202
      %v3206 = vclz %v3205
      %v3207 = vsub.s32 %v3206, 2
      %vm3208 = vcmp.gt.s32.totalorder 0, %v3207
      %v3209 = vsel %vm3208, 0, %v3207
      %v3210 = vsub.s32 32, %v3209
      %v3211 = vshll.u32 %v3202, %v3209
      %v3212 = vshrl.u32 %v3194, %v3210
      %v3213 = vor.u32 %v3211, %v3212
      %v3214 = vsub.s32 4294967266, %v3209
      %v3215 = vadd.s32 %v3214, 127
      %v3216 = vshll.u32 %v3215, 23
      %v3217 = vor.u32 4788187, %v3216
      %v3218 = vand.u32 2147483647, %v3217
      %v3220 = vcvt.s32.f32 %v3213
      %v3221 = vmul.f32 %v3220, %v3218
      %v3222 = vxor.u32 %v3221, 2147483648
      %v3223 = vsel %vm3102, %v3222, %v3221
      %v3224 = vsub.s32 4, %v3200
      %v3225 = vsel %vm3102, %v3224, %v3200
      %v3226 = vsel %vm3101, %v939, %v3223
      %v3227 = vsel %vm3101, 0, %v3225
      %v3228 = vmul.f32 %v3226, %v3226
      %v3229 = vmul.f32 %v3228, -0.001358992
      %v3230 = vadd.f32 %v3229, 0.041655596
      %v3231 = vmul.f32 %v3228, %v3230
      %v3232 = vadd.f32 %v3231, -0.4999988
      %v3233 = vmul.f32 %v3228, %v3232
      %v3234 = vadd.f32 1.0, %v3233
      %v3235 = vmul.f32 %v3226, %v3226
      %v3236 = vmul.f32 %v3235, -0.00019511016
      %v3237 = vadd.f32 %v3236, 0.008332121
      %v3238 = vmul.f32 %v3235, %v3237
      %v3239 = vadd.f32 %v3238, -0.16666654
      %v3240 = vmul.f32 %v3235, %v3239
      %v3241 = vadd.f32 %v3240, 1.0
      %v3242 = vmul.f32 %v3241, %v3226
      %vm3243 = vweird.f32 %v939
      %v3244 = vand.u32 %v3227, 3
      %vm3245 = vcmp.lt.s32.totalorder %v3244, 2
      %vm3246 = vcmp.eq.s32.totalorder %v3244, 0
      %v3247 = vxor.u32 %v3242, 2147483648
      %v3248 = vsel %vm3246, %v3234, %v3247
      %vm3249 = vcmp.eq.s32.totalorder %v3244, 2
      %v3250 = vxor.u32 %v3234, 2147483648
      %v3251 = vsel %vm3249, %v3250, %v3242
      %v3252 = vsel %vm3245, %v3248, %v3251
      %v3253 = vsel %vm3243, nan, %v3252
      %v3254 = vand.u32 2147483647, %v942
      %vm3255 = vcmp.le.f32.partialorder %v3254, 0.7853982
      %vm3256 = vcmp.lt.s32.totalorder %v942, 0
      %v3257 = vand.u32 %v942, 2139095040
      %v3258 = vshrl.u32 %v3257, 23
      %v3259 = vsub.s32 %v3258, 127
      %v3260 = vand.u32 2147483647, %v942
      %v3261 = vand.u32 %v3260, 8388607
      %v3262 = vor.u32 %v3261, 8388608
      %v3263 = vsub.s32 0, %v3262
      %v3264 = vadd.s32 %v3259, 1
      %vm3265 = vcmp.gt.s32.totalorder %v3264, 0
      %v3266 = vsel %vm3265, %v3264, 0
      %v3267 = vshrl.u32 %v3266, 5
      %v3268 = vand.u32 %v3266, 31
      %v3269 = vsub.s32 32, %v3268
      %v3270 = vshrl.u32 683565275, %v3269
      %v3271 = vshll.u32 683565275, %v3268
      %v3272 = vshrl.u32 2475754826, %v3269
      %v3273 = vor.u32 %v3271, %v3272
      %v3274 = vshll.u32 2475754826, %v3268
      %v3275 = vshrl.u32 2131351028, %v3269
      %v3276 = vor.u32 %v3274, %v3275
      %v3277 = vshll.u32 2131351028, %v3268
      %v3278 = vshrl.u32 2102212464, %v3269
      %v3279 = vor.u32 %v3277, %v3278
      %v3280 = vshll.u32 2102212464, %v3268
      %v3281 = vshrl.u32 920167782, %v3269
      %v3282 = vor.u32 %v3280, %v3281
      %v3283 = vshll.u32 920167782, %v3268
      %v3284 = vshrl.u32 1326507024, %v3269
      %v3285 = vor.u32 %v3283, %v3284
      %vm3286 = vcmp.lt.s32.totalorder %v3267, 1
      %vm3287 = vcmp.lt.s32.totalorder %v3267, 2
      %vm3288 = vcmp.lt.s32.totalorder %v3267, 3
      %vm3289 = vcmp.lt.s32.totalorder %v3267, 4
      %v3290 = vsel %vm3286, %v3270, %v3273
      %v3291 = vsel %vm3289, %v3279, 2102212464
      %v3292 = vsel %vm3288, %v3276, %v3291
      %v3293 = vsel %vm3287, %v3290, %v3292
      %v3294 = vsel %vm3286, %v3273, %v3276
      %v3295 = vsel %vm3289, %v3282, 920167782
      %v3296 = vsel %vm3288, %v3279, %v3295
      %v3297 = vsel %vm3287, %v3294, %v3296
      %v3298 = vsel %vm3286, %v3276, %v3279
      %v3299 = vsel %vm3289, %v3285, 1326507024
      %v3300 = vsel %vm3288, %v3282, %v3299
      %v3301 = vsel %vm3287, %v3298, %v3300
      %v3302 = vshll.u32 %v3262, 8
      %v3303 = vand.u32 %v3302, 65535
      %v3304 = vshrl.u32 %v3302, 16
      %v3305 = vand.u32 %v3301, 65535
      %v3306 = vshrl.u32 %v3301, 16
      %v3307 = vmul.u32 %v3303, %v3305
      %v3308 = vmul.u32 %v3303, %v3306
      %v3309 = vmul.u32 %v3304, %v3305
      %v3310 = vmul.u32 %v3304, %v3306
      %v3311 = vshll.u32 %v3308, 16
      %v3312 = vshrl.u32 %v3308, 16
      %v3313 = vshll.u32 %v3309, 16
      %v3314 = vshrl.u32 %v3309, 16
      %vm3315 = vc.u32 %v3307, %v3311
      %v3316 = vsel %vm3315, 1, 0
      %v3317 = vadd.s32 %v3307, %v3311
      %v3318 = vadd.s32 %v3310, %v3316
      %vm3319 = vc.u32 %v3317, %v3313
      %v3320 = vsel %vm3319, 1, 0
      %v3321 = vadd.s32 %v3317, %v3313
      %v3322 = vadd.s32 %v3318, %v3320
      %v3323 = vadd.s32 %v3322, %v3312
      %v3324 = vadd.s32 %v3323, %v3314
      %v3325 = vand.u32 %v3302, 65535
      %v3326 = vshrl.u32 %v3302, 16
      %v3327 = vand.u32 %v3297, 65535
      %v3328 = vshrl.u32 %v3297, 16
      %v3329 = vmul.u32 %v3325, %v3327
      %v3330 = vmul.u32 %v3325, %v3328
      %v3331 = vmul.u32 %v3326, %v3327
      %v3332 = vmul.u32 %v3326, %v3328
      %v3333 = vshll.u32 %v3330, 16
      %v3334 = vshrl.u32 %v3330, 16
      %v3335 = vshll.u32 %v3331, 16
      %v3336 = vshrl.u32 %v3331, 16
      %vm3337 = vc.u32 %v3329, %v3333
      %v3338 = vsel %vm3337, 1, 0
      %v3339 = vadd.s32 %v3329, %v3333
      %v3340 = vadd.s32 %v3332, %v3338
      %vm3341 = vc.u32 %v3339, %v3335
      %v3342 = vsel %vm3341, 1, 0
      %v3343 = vadd.s32 %v3339, %v3335
      %v3344 = vadd.s32 %v3340, %v3342
      %v3345 = vadd.s32 %v3344, %v3334
      %v3346 = vadd.s32 %v3345, %v3336
      %v3347 = vmul.u32 %v3302, %v3293
      %v3348 = vadd.s32 %v3324, %v3343
      %vm3349 = vc.u32 %v3324, %v3343
      %v3350 = vadd.s32 %v3346, 1
      %v3351 = vsel %vm3349, %v3350, %v3346
      %v3352 = vadd.s32 %v3347, %v3351
      %v3353 = vadd.s32 %v3352, 536870912
      %v3354 = vshrl.u32 %v3353, 30
      %v3355 = vshll.u32 %v3354, 30
      %v3356 = vsub.s32 %v3352, %v3355
      %vm3357 = vcmp.lt.s32.totalorder %v3356, 0
      %v3358 = vsub.s32 0, %v3356
      %v3359 = vsel %vm3357, %v3358, %v3356
      %v3360 = vclz %v3359
      %v3361 = vsub.s32 %v3360, 2
      %vm3362 = vcmp.gt.s32.totalorder 0, %v3361
      %v3363 = vsel %vm3362, 0, %v3361
      %v3364 = vsub.s32 32, %v3363
      %v3365 = vshll.u32 %v3356, %v3363
      %v3366 = vshrl.u32 %v3348, %v3364
      %v3367 = vor.u32 %v3365, %v3366
      %v3368 = vsub.s32 4294967266, %v3363
      %v3369 = vadd.s32 %v3368, 127
      %v3370 = vshll.u32 %v3369, 23
      %v3371 = vor.u32 4788187, %v3370
      %v3372 = vand.u32 2147483647, %v3371
      %v3374 = vcvt.s32.f32 %v3367
      %v3375 = vmul.f32 %v3374, %v3372
      %v3376 = vxor.u32 %v3375, 2147483648
      %v3377 = vsel %vm3256, %v3376, %v3375
      %v3378 = vsub.s32 4, %v3354
      %v3379 = vsel %vm3256, %v3378, %v3354
      %v3380 = vsel %vm3255, %v942, %v3377
      %v3381 = vsel %vm3255, 0, %v3379
      %v3382 = vmul.f32 %v3380, %v3380
      %v3383 = vmul.f32 %v3382, -0.001358992
      %v3384 = vadd.f32 %v3383, 0.041655596
      %v3385 = vmul.f32 %v3382, %v3384
      %v3386 = vadd.f32 %v3385, -0.4999988
      %v3387 = vmul.f32 %v3382, %v3386
      %v3388 = vadd.f32 1.0, %v3387
      %v3389 = vmul.f32 %v3380, %v3380
      %v3390 = vmul.f32 %v3389, -0.00019511016
      %v3391 = vadd.f32 %v3390, 0.008332121
      %v3392 = vmul.f32 %v3389, %v3391
      %v3393 = vadd.f32 %v3392, -0.16666654
      %v3394 = vmul.f32 %v3389, %v3393
      %v3395 = vadd.f32 %v3394, 1.0
      %v3396 = vmul.f32 %v3395, %v3380
      %vm3397 = vweird.f32 %v942
      %v3398 = vand.u32 %v3381, 3
      %vm3399 = vcmp.lt.s32.totalorder %v3398, 2
      %vm3400 = vcmp.eq.s32.totalorder %v3398, 0
      %v3401 = vxor.u32 %v3396, 2147483648
      %v3402 = vsel %vm3400, %v3388, %v3401
      %vm3403 = vcmp.eq.s32.totalorder %v3398, 2
      %v3404 = vxor.u32 %v3388, 2147483648
      %v3405 = vsel %vm3403, %v3404, %v3396
      %v3406 = vsel %vm3399, %v3402, %v3405
      %v3407 = vsel %vm3397, nan, %v3406
      %3424 = vrot.lane.b32.xlu0 %v1097, 64
      %v3425 = vpop.permute.xlu0 %3424
      %3426 = vrot.lane.b32.xlu0 %v1251, 64
      %v3427 = vpop.permute.xlu0 %3426
      %3428 = vrot.lane.b32.xlu0 %v1405, 64
      %v3429 = vpop.permute.xlu0 %3428
      %3430 = vrot.lane.b32.xlu0 %v1559, 64
      %v3431 = vpop.permute.xlu0 %3430
      %3432 = vrot.lane.b32.xlu0 %v1713, 64
      %v3433 = vpop.permute.xlu0 %3432
      %3434 = vrot.lane.b32.xlu0 %v1867, 64
      %v3435 = vpop.permute.xlu0 %3434
      %3436 = vrot.lane.b32.xlu0 %v2021, 64
      %v3437 = vpop.permute.xlu0 %3436
      %3438 = vrot.lane.b32.xlu0 %v2175, 64
      %v3439 = vpop.permute.xlu0 %3438
      %3440 = vrot.lane.b32.xlu0 %v2329, 64
      %v3441 = vpop.permute.xlu0 %3440
      %3442 = vrot.lane.b32.xlu0 %v2483, 64
      %v3443 = vpop.permute.xlu0 %3442
      %3444 = vrot.lane.b32.xlu0 %v2637, 64
      %v3445 = vpop.permute.xlu0 %3444
      %3446 = vrot.lane.b32.xlu0 %v2791, 64
      %v3447 = vpop.permute.xlu0 %3446
      %3448 = vrot.lane.b32.xlu0 %v2945, 64
      %v3449 = vpop.permute.xlu0 %3448
      %3450 = vrot.lane.b32.xlu0 %v3099, 64
      %v3451 = vpop.permute.xlu0 %3450
      %3452 = vrot.lane.b32.xlu0 %v3253, 64
      %v3453 = vpop.permute.xlu0 %3452
      %3454 = vrot.lane.b32.xlu0 %v3407, 64
      %v3455 = vpop.permute.xlu0 %3454
      %v3472 = vmul.f32 %v897, %v3425
      %v3473 = vmul.f32 %v900, %v3427
      %v3474 = vmul.f32 %v903, %v3429
      %v3475 = vmul.f32 %v906, %v3431
      %v3476 = vmul.f32 %v909, %v3433
      %v3477 = vmul.f32 %v912, %v3435
      %v3478 = vmul.f32 %v915, %v3437
      %v3479 = vmul.f32 %v918, %v3439
      %v3480 = vmul.f32 %v921, %v3441
      %v3481 = vmul.f32 %v924, %v3443
      %v3482 = vmul.f32 %v927, %v3445
      %v3483 = vmul.f32 %v930, %v3447
      %v3484 = vmul.f32 %v933, %v3449
      %v3485 = vmul.f32 %v936, %v3451
      %v3486 = vmul.f32 %v939, %v3453
      %v3487 = vmul.f32 %v942, %v3455
      %v3488 = vld [vmem:[%s3] sm:$0xff]
      %v3489 = vld [vmem:[%s3 + $0x8] sm:$0xff]
      %v3490 = vld [vmem:[%s3 + $0x10] sm:$0xff]
      %v3491 = vld [vmem:[%s3 + $0x18] sm:$0xff]
      %v3492 = vld [vmem:[%s3 + $0x20] sm:$0xff]
      %v3493 = vld [vmem:[%s3 + $0x28] sm:$0xff]
      %v3494 = vld [vmem:[%s3 + $0x30] sm:$0xff]
      %v3495 = vld [vmem:[%s3 + $0x38] sm:$0xff]
      %v3496 = vld [vmem:[%s437] sm:$0xff]
      %v3497 = vld [vmem:[%s437 + $0x8] sm:$0xff]
      %v3498 = vld [vmem:[%s437 + $0x10] sm:$0xff]
      %v3499 = vld [vmem:[%s437 + $0x18] sm:$0xff]
      %v3500 = vld [vmem:[%s437 + $0x20] sm:$0xff]
      %v3501 = vld [vmem:[%s437 + $0x28] sm:$0xff]
      %v3502 = vld [vmem:[%s437 + $0x30] sm:$0xff]
      %v3503 = vld [vmem:[%s437 + $0x38] sm:$0xff]
      %v3504 = vld [vmem:[%s437 + $0x40] sm:$0xff]
      %v3505 = vld [vmem:[%s437 + $0x48] sm:$0xff]
      %v3506 = vld [vmem:[%s437 + $0x50] sm:$0xff]
      %v3507 = vld [vmem:[%s437 + $0x58] sm:$0xff]
      %v3508 = vld [vmem:[%s437 + $0x60] sm:$0xff]
      %v3509 = vld [vmem:[%s437 + $0x68] sm:$0xff]
      %v3510 = vld [vmem:[%s437 + $0x70] sm:$0xff]
      %v3511 = vld [vmem:[%s437 + $0x78] sm:$0xff]
      %v3512 = vld [vmem:[%s4] sm:$0x1]
      %3514 = vset.pattern.permute.xlu0 0
      %3515 = vperm.xlu0 %3514, %v3496
      %v3516 = vpop.permute.xlu0 %3515
      %3519 = vset.pattern.permute.xlu0 0
      %3520 = vperm.xlu0 %3519, %v3497
      %v3521 = vpop.permute.xlu0 %3520
      %3524 = vset.pattern.permute.xlu0 0
      %3525 = vperm.xlu0 %3524, %v3498
      %v3526 = vpop.permute.xlu0 %3525
      %3529 = vset.pattern.permute.xlu0 0
      %3530 = vperm.xlu0 %3529, %v3499
      %v3531 = vpop.permute.xlu0 %3530
      %3534 = vset.pattern.permute.xlu0 0
      %3535 = vperm.xlu0 %3534, %v3500
      %v3536 = vpop.permute.xlu0 %3535
      %3539 = vset.pattern.permute.xlu0 0
      %3540 = vperm.xlu0 %3539, %v3501
      %v3541 = vpop.permute.xlu0 %3540
      %3544 = vset.pattern.permute.xlu0 0
      %3545 = vperm.xlu0 %3544, %v3502
      %v3546 = vpop.permute.xlu0 %3545
      %3549 = vset.pattern.permute.xlu0 0
      %3550 = vperm.xlu0 %3549, %v3503
      %v3551 = vpop.permute.xlu0 %3550
      %3554 = vset.pattern.permute.xlu0 0
      %3555 = vperm.xlu0 %3554, %v3504
      %v3556 = vpop.permute.xlu0 %3555
      %3559 = vset.pattern.permute.xlu0 0
      %3560 = vperm.xlu0 %3559, %v3505
      %v3561 = vpop.permute.xlu0 %3560
      %3564 = vset.pattern.permute.xlu0 0
      %3565 = vperm.xlu0 %3564, %v3506
      %v3566 = vpop.permute.xlu0 %3565
      %3569 = vset.pattern.permute.xlu0 0
      %3570 = vperm.xlu0 %3569, %v3507
      %v3571 = vpop.permute.xlu0 %3570
      %3574 = vset.pattern.permute.xlu0 0
      %3575 = vperm.xlu0 %3574, %v3508
      %v3576 = vpop.permute.xlu0 %3575
      %3579 = vset.pattern.permute.xlu0 0
      %3580 = vperm.xlu0 %3579, %v3509
      %v3581 = vpop.permute.xlu0 %3580
      %3584 = vset.pattern.permute.xlu0 0
      %3585 = vperm.xlu0 %3584, %v3510
      %v3586 = vpop.permute.xlu0 %3585
      %3589 = vset.pattern.permute.xlu0 0
      %3590 = vperm.xlu0 %3589, %v3511
      %v3591 = vpop.permute.xlu0 %3590
      %v3594 = vperm.slane %v3512, 0
      %v3596 = vmul.f32 %v3516, %v3594
      %v3597 = vmul.f32 %v3521, %v3594
      %v3598 = vmul.f32 %v3526, %v3594
      %v3599 = vmul.f32 %v3531, %v3594
      %v3600 = vmul.f32 %v3536, %v3594
      %v3601 = vmul.f32 %v3541, %v3594
      %v3602 = vmul.f32 %v3546, %v3594
      %v3603 = vmul.f32 %v3551, %v3594
      %v3604 = vmul.f32 %v3556, %v3594
      %v3605 = vmul.f32 %v3561, %v3594
      %v3606 = vmul.f32 %v3566, %v3594
      %v3607 = vmul.f32 %v3571, %v3594
      %v3608 = vmul.f32 %v3576, %v3594
      %v3609 = vmul.f32 %v3581, %v3594
      %v3610 = vmul.f32 %v3586, %v3594
      %v3611 = vmul.f32 %v3591, %v3594
      %vm3612 = vcmask 523264
      %v3614 = vsel %vm3612, %v3472, 0
      %v3617 = vsel %vm3612, %v3473, 0
      %v3620 = vsel %vm3612, %v3474, 0
      %v3623 = vsel %vm3612, %v3475, 0
      %v3626 = vsel %vm3612, %v3476, 0
      %v3629 = vsel %vm3612, %v3477, 0
      %v3632 = vsel %vm3612, %v3478, 0
      %v3635 = vsel %vm3612, %v3479, 0
      %v3638 = vsel %vm3612, %v3480, 0
      %v3641 = vsel %vm3612, %v3481, 0
      %v3644 = vsel %vm3612, %v3482, 0
      %v3647 = vsel %vm3612, %v3483, 0
      %v3650 = vsel %vm3612, %v3484, 0
      %v3653 = vsel %vm3612, %v3485, 0
      %v3656 = vsel %vm3612, %v3486, 0
      %v3659 = vsel %vm3612, %v3487, 0
      %3661 = vmatpush.msra.mxu0 0.0
      %3662 = vmatpush.msra.mxu0 0.0
      %3663 = vmatpush.msra.mxu0 0.0
      %3664 = vmatpush.msra.mxu0 0.0
      %3665 = vmatpush.msra.mxu0 0.0
      %3666 = vmatpush.msra.mxu0 0.0
      %3667 = vmatpush.msra.mxu0 0.0
      %3668 = vmatpush.msra.mxu0 0.0
      %3669 = vmatpush.msra.mxu0 %v3495
      %3670 = vmatpush.msra.mxu0 %v3494
      %3671 = vmatpush.msra.mxu0 %v3493
      %3672 = vmatpush.msra.mxu0 %v3492
      %3673 = vmatpush.msra.mxu0 %v3491
      %3674 = vmatpush.msra.mxu0 %v3490
      %3675 = vmatpush.msra.mxu0 %v3489
      %3676 = vmatpush.msra.mxu0 %v3488
      %3677 = vmatmul.f32.gmra.mxu0 %v3614
      %v3678 = vpop.f32.mrf.mxu0
      %v3679 = vadd.f32 %v3596, %v3678
      %3680 = vmatmul.f32.gmra.mxu0 %v3617
      %v3681 = vpop.f32.mrf.mxu0
      %v3682 = vadd.f32 %v3597, %v3681
      %3683 = vmatmul.f32.gmra.mxu0 %v3620
      %v3684 = vpop.f32.mrf.mxu0
      %v3685 = vadd.f32 %v3598, %v3684
      %3686 = vmatmul.f32.gmra.mxu0 %v3623
      %v3687 = vpop.f32.mrf.mxu0
      %v3688 = vadd.f32 %v3599, %v3687
      %3689 = vmatmul.f32.gmra.mxu0 %v3626
      %v3690 = vpop.f32.mrf.mxu0
      %v3691 = vadd.f32 %v3600, %v3690
      %3692 = vmatmul.f32.gmra.mxu0 %v3629
      %v3693 = vpop.f32.mrf.mxu0
      %v3694 = vadd.f32 %v3601, %v3693
      %3695 = vmatmul.f32.gmra.mxu0 %v3632
      %v3696 = vpop.f32.mrf.mxu0
      %v3697 = vadd.f32 %v3602, %v3696
      %3698 = vmatmul.f32.gmra.mxu0 %v3635
      %v3699 = vpop.f32.mrf.mxu0
      %v3700 = vadd.f32 %v3603, %v3699
      %3701 = vmatmul.f32.gmra.mxu0 %v3638
      %v3702 = vpop.f32.mrf.mxu0
      %v3703 = vadd.f32 %v3604, %v3702
      %3704 = vmatmul.f32.gmra.mxu0 %v3641
      %v3705 = vpop.f32.mrf.mxu0
      %v3706 = vadd.f32 %v3605, %v3705
      %3707 = vmatmul.f32.gmra.mxu0 %v3644
      %v3708 = vpop.f32.mrf.mxu0
      %v3709 = vadd.f32 %v3606, %v3708
      %3710 = vmatmul.f32.gmra.mxu0 %v3647
      %v3711 = vpop.f32.mrf.mxu0
      %v3712 = vadd.f32 %v3607, %v3711
      %3713 = vmatmul.f32.gmra.mxu0 %v3650
      %v3714 = vpop.f32.mrf.mxu0
      %v3715 = vadd.f32 %v3608, %v3714
      %3716 = vmatmul.f32.gmra.mxu0 %v3653
      %v3717 = vpop.f32.mrf.mxu0
      %v3718 = vadd.f32 %v3609, %v3717
      %3719 = vmatmul.f32.gmra.mxu0 %v3656
      %v3720 = vpop.f32.mrf.mxu0
      %v3721 = vadd.f32 %v3610, %v3720
      %3722 = vmatmul.f32.gmra.mxu0 %v3659
      %v3723 = vpop.f32.mrf.mxu0
      %v3724 = vadd.f32 %v3611, %v3723
      %3725 = vdwg.mxu0
      %v3726 = vld [vmem:[%s5] sm:$0x1]
      %v3728 = vperm.slane %v3726, 0
      %v3730 = vadd.f32 %v3679, %v3728
      %v3731 = vadd.f32 %v3682, %v3728
      %v3732 = vadd.f32 %v3685, %v3728
      %v3733 = vadd.f32 %v3688, %v3728
      %v3734 = vadd.f32 %v3691, %v3728
      %v3735 = vadd.f32 %v3694, %v3728
      %v3736 = vadd.f32 %v3697, %v3728
      %v3737 = vadd.f32 %v3700, %v3728
      %v3738 = vadd.f32 %v3703, %v3728
      %v3739 = vadd.f32 %v3706, %v3728
      %v3740 = vadd.f32 %v3709, %v3728
      %v3741 = vadd.f32 %v3712, %v3728
      %v3742 = vadd.f32 %v3715, %v3728
      %v3743 = vadd.f32 %v3718, %v3728
      %v3744 = vadd.f32 %v3721, %v3728
      %v3745 = vadd.f32 %v3724, %v3728
      %v3746 = vmax.f32 %v3730, 0.0
      %v3747 = vmax.f32 %v3731, 0.0
      %v3748 = vmax.f32 %v3732, 0.0
      %v3749 = vmax.f32 %v3733, 0.0
      %v3750 = vmax.f32 %v3734, 0.0
      %v3751 = vmax.f32 %v3735, 0.0
      %v3752 = vmax.f32 %v3736, 0.0
      %v3753 = vmax.f32 %v3737, 0.0
      %v3754 = vmax.f32 %v3738, 0.0
      %v3755 = vmax.f32 %v3739, 0.0
      %v3756 = vmax.f32 %v3740, 0.0
      %v3757 = vmax.f32 %v3741, 0.0
      %v3758 = vmax.f32 %v3742, 0.0
      %v3759 = vmax.f32 %v3743, 0.0
      %v3760 = vmax.f32 %v3744, 0.0
      %v3761 = vmax.f32 %v3745, 0.0
      %v3762 = vld [vmem:[%s6] sm:$0xff]
      %v3763 = vld [vmem:[%s6 + $0x8] sm:$0xff]
      %v3764 = vld [vmem:[%s6 + $0x10] sm:$0xff]
      %v3765 = vld [vmem:[%s6 + $0x18] sm:$0xff]
      %v3766 = vld [vmem:[%s6 + $0x20] sm:$0xff]
      %v3767 = vld [vmem:[%s6 + $0x28] sm:$0xff]
      %v3768 = vld [vmem:[%s6 + $0x30] sm:$0xff]
      %v3769 = vld [vmem:[%s6 + $0x38] sm:$0xff]
      %v3770 = vld [vmem:[%s7] sm:$0x1]
      %v3772 = vperm.slane %v3770, 0
      %v3775 = vsel %vm3612, %v3746, 0
      %v3778 = vsel %vm3612, %v3747, 0
      %v3781 = vsel %vm3612, %v3748, 0
      %v3784 = vsel %vm3612, %v3749, 0
      %v3787 = vsel %vm3612, %v3750, 0
      %v3790 = vsel %vm3612, %v3751, 0
      %v3793 = vsel %vm3612, %v3752, 0
      %v3796 = vsel %vm3612, %v3753, 0
      %v3799 = vsel %vm3612, %v3754, 0
      %v3802 = vsel %vm3612, %v3755, 0
      %v3805 = vsel %vm3612, %v3756, 0
      %v3808 = vsel %vm3612, %v3757, 0
      %v3811 = vsel %vm3612, %v3758, 0
      %v3814 = vsel %vm3612, %v3759, 0
      %v3817 = vsel %vm3612, %v3760, 0
      %v3820 = vsel %vm3612, %v3761, 0
      %3822 = vmatpush.msra.mxu0 0.0
      %3823 = vmatpush.msra.mxu0 0.0
      %3824 = vmatpush.msra.mxu0 0.0
      %3825 = vmatpush.msra.mxu0 0.0
      %3826 = vmatpush.msra.mxu0 0.0
      %3827 = vmatpush.msra.mxu0 0.0
      %3828 = vmatpush.msra.mxu0 0.0
      %3829 = vmatpush.msra.mxu0 0.0
      %3830 = vmatpush.msra.mxu0 %v3769
      %3831 = vmatpush.msra.mxu0 %v3768
      %3832 = vmatpush.msra.mxu0 %v3767
      %3833 = vmatpush.msra.mxu0 %v3766
      %3834 = vmatpush.msra.mxu0 %v3765
      %3835 = vmatpush.msra.mxu0 %v3764
      %3836 = vmatpush.msra.mxu0 %v3763
      %3837 = vmatpush.msra.mxu0 %v3762
      %3838 = vmatmul.f32.gmra.mxu0 %v3775
      %v3839 = vpop.f32.mrf.mxu0
      %v3840 = vadd.f32 %v3772, %v3839
      %3841 = vmatmul.f32.gmra.mxu0 %v3778
      %v3842 = vpop.f32.mrf.mxu0
      %v3843 = vadd.f32 %v3772, %v3842
      %3844 = vmatmul.f32.gmra.mxu0 %v3781
      %v3845 = vpop.f32.mrf.mxu0
      %v3846 = vadd.f32 %v3772, %v3845
      %3847 = vmatmul.f32.gmra.mxu0 %v3784
      %v3848 = vpop.f32.mrf.mxu0
      %v3849 = vadd.f32 %v3772, %v3848
      %3850 = vmatmul.f32.gmra.mxu0 %v3787
      %v3851 = vpop.f32.mrf.mxu0
      %v3852 = vadd.f32 %v3772, %v3851
      %3853 = vmatmul.f32.gmra.mxu0 %v3790
      %v3854 = vpop.f32.mrf.mxu0
      %v3855 = vadd.f32 %v3772, %v3854
      %3856 = vmatmul.f32.gmra.mxu0 %v3793
      %v3857 = vpop.f32.mrf.mxu0
      %v3858 = vadd.f32 %v3772, %v3857
      %3859 = vmatmul.f32.gmra.mxu0 %v3796
      %v3860 = vpop.f32.mrf.mxu0
      %v3861 = vadd.f32 %v3772, %v3860
      %3862 = vmatmul.f32.gmra.mxu0 %v3799
      %v3863 = vpop.f32.mrf.mxu0
      %v3864 = vadd.f32 %v3772, %v3863
      %3865 = vmatmul.f32.gmra.mxu0 %v3802
      %v3866 = vpop.f32.mrf.mxu0
      %v3867 = vadd.f32 %v3772, %v3866
      %3868 = vmatmul.f32.gmra.mxu0 %v3805
      %v3869 = vpop.f32.mrf.mxu0
      %v3870 = vadd.f32 %v3772, %v3869
      %3871 = vmatmul.f32.gmra.mxu0 %v3808
      %v3872 = vpop.f32.mrf.mxu0
      %v3873 = vadd.f32 %v3772, %v3872
      %3874 = vmatmul.f32.gmra.mxu0 %v3811
      %v3875 = vpop.f32.mrf.mxu0
      %v3876 = vadd.f32 %v3772, %v3875
      %3877 = vmatmul.f32.gmra.mxu0 %v3814
      %v3878 = vpop.f32.mrf.mxu0
      %v3879 = vadd.f32 %v3772, %v3878
      %3880 = vmatmul.f32.gmra.mxu0 %v3817
      %v3881 = vpop.f32.mrf.mxu0
      %v3882 = vadd.f32 %v3772, %v3881
      %3883 = vmatmul.f32.gmra.mxu0 %v3820
      %v3884 = vpop.f32.mrf.mxu0
      %v3885 = vadd.f32 %v3772, %v3884
      %3886 = vdwg.mxu0
      %v3887 = vmax.f32 %v3840, 0.0
      %v3888 = vmax.f32 %v3843, 0.0
      %v3889 = vmax.f32 %v3846, 0.0
      %v3890 = vmax.f32 %v3849, 0.0
      %v3891 = vmax.f32 %v3852, 0.0
      %v3892 = vmax.f32 %v3855, 0.0
      %v3893 = vmax.f32 %v3858, 0.0
      %v3894 = vmax.f32 %v3861, 0.0
      %v3895 = vmax.f32 %v3864, 0.0
      %v3896 = vmax.f32 %v3867, 0.0
      %v3897 = vmax.f32 %v3870, 0.0
      %v3898 = vmax.f32 %v3873, 0.0
      %v3899 = vmax.f32 %v3876, 0.0
      %v3900 = vmax.f32 %v3879, 0.0
      %v3901 = vmax.f32 %v3882, 0.0
      %v3902 = vmax.f32 %v3885, 0.0
      %v3903 = vld [vmem:[%s8] sm:$0xff]
      %v3904 = vld [vmem:[%s8 + $0x8] sm:$0xff]
      %v3905 = vld [vmem:[%s8 + $0x10] sm:$0xff]
      %v3906 = vld [vmem:[%s8 + $0x18] sm:$0xff]
      %v3907 = vld [vmem:[%s8 + $0x20] sm:$0xff]
      %v3908 = vld [vmem:[%s8 + $0x28] sm:$0xff]
      %v3909 = vld [vmem:[%s8 + $0x30] sm:$0xff]
      %v3910 = vld [vmem:[%s8 + $0x38] sm:$0xff]
      %v3911 = vld [vmem:[%s9] sm:$0x1]
      %v3913 = vperm.slane %v3911, 0
      %v3916 = vsel %vm3612, %v3887, 0
      %v3919 = vsel %vm3612, %v3888, 0
      %v3922 = vsel %vm3612, %v3889, 0
      %v3925 = vsel %vm3612, %v3890, 0
      %v3928 = vsel %vm3612, %v3891, 0
      %v3931 = vsel %vm3612, %v3892, 0
      %v3934 = vsel %vm3612, %v3893, 0
      %v3937 = vsel %vm3612, %v3894, 0
      %v3940 = vsel %vm3612, %v3895, 0
      %v3943 = vsel %vm3612, %v3896, 0
      %v3946 = vsel %vm3612, %v3897, 0
      %v3949 = vsel %vm3612, %v3898, 0
      %v3952 = vsel %vm3612, %v3899, 0
      %v3955 = vsel %vm3612, %v3900, 0
      %v3958 = vsel %vm3612, %v3901, 0
      %v3961 = vsel %vm3612, %v3902, 0
      %3963 = vmatpush.msra.mxu0 0.0
      %3964 = vmatpush.msra.mxu0 0.0
      %3965 = vmatpush.msra.mxu0 0.0
      %3966 = vmatpush.msra.mxu0 0.0
      %3967 = vmatpush.msra.mxu0 0.0
      %3968 = vmatpush.msra.mxu0 0.0
      %3969 = vmatpush.msra.mxu0 0.0
      %3970 = vmatpush.msra.mxu0 0.0
      %3971 = vmatpush.msra.mxu0 %v3910
      %3972 = vmatpush.msra.mxu0 %v3909
      %3973 = vmatpush.msra.mxu0 %v3908
      %3974 = vmatpush.msra.mxu0 %v3907
      %3975 = vmatpush.msra.mxu0 %v3906
      %3976 = vmatpush.msra.mxu0 %v3905
      %3977 = vmatpush.msra.mxu0 %v3904
      %3978 = vmatpush.msra.mxu0 %v3903
      %3979 = vmatmul.f32.gmra.mxu0 %v3916
      %v3980 = vpop.f32.mrf.mxu0
      %v3981 = vadd.f32 %v3913, %v3980
      %3982 = vmatmul.f32.gmra.mxu0 %v3919
      %v3983 = vpop.f32.mrf.mxu0
      %v3984 = vadd.f32 %v3913, %v3983
      %3985 = vmatmul.f32.gmra.mxu0 %v3922
      %v3986 = vpop.f32.mrf.mxu0
      %v3987 = vadd.f32 %v3913, %v3986
      %3988 = vmatmul.f32.gmra.mxu0 %v3925
      %v3989 = vpop.f32.mrf.mxu0
      %v3990 = vadd.f32 %v3913, %v3989
      %3991 = vmatmul.f32.gmra.mxu0 %v3928
      %v3992 = vpop.f32.mrf.mxu0
      %v3993 = vadd.f32 %v3913, %v3992
      %3994 = vmatmul.f32.gmra.mxu0 %v3931
      %v3995 = vpop.f32.mrf.mxu0
      %v3996 = vadd.f32 %v3913, %v3995
      %3997 = vmatmul.f32.gmra.mxu0 %v3934
      %v3998 = vpop.f32.mrf.mxu0
      %v3999 = vadd.f32 %v3913, %v3998
      %4000 = vmatmul.f32.gmra.mxu0 %v3937
      %v4001 = vpop.f32.mrf.mxu0
      %v4002 = vadd.f32 %v3913, %v4001
      %4003 = vmatmul.f32.gmra.mxu0 %v3940
      %v4004 = vpop.f32.mrf.mxu0
      %v4005 = vadd.f32 %v3913, %v4004
      %4006 = vmatmul.f32.gmra.mxu0 %v3943
      %v4007 = vpop.f32.mrf.mxu0
      %v4008 = vadd.f32 %v3913, %v4007
      %4009 = vmatmul.f32.gmra.mxu0 %v3946
      %v4010 = vpop.f32.mrf.mxu0
      %v4011 = vadd.f32 %v3913, %v4010
      %4012 = vmatmul.f32.gmra.mxu0 %v3949
      %v4013 = vpop.f32.mrf.mxu0
      %v4014 = vadd.f32 %v3913, %v4013
      %4015 = vmatmul.f32.gmra.mxu0 %v3952
      %v4016 = vpop.f32.mrf.mxu0
      %v4017 = vadd.f32 %v3913, %v4016
      %4018 = vmatmul.f32.gmra.mxu0 %v3955
      %v4019 = vpop.f32.mrf.mxu0
      %v4020 = vadd.f32 %v3913, %v4019
      %4021 = vmatmul.f32.gmra.mxu0 %v3958
      %v4022 = vpop.f32.mrf.mxu0
      %v4023 = vadd.f32 %v3913, %v4022
      %4024 = vmatmul.f32.gmra.mxu0 %v3961
      %v4025 = vpop.f32.mrf.mxu0
      %v4026 = vadd.f32 %v3913, %v4025
      %4027 = vdwg.mxu0
      %4028 = vxpose.xlu0.b32.start [1/16] %v3981, 128
      %4029 = vxpose.xlu0.b32.cont [2/16] %v3984, 128
      %4030 = vxpose.xlu0.b32.cont [3/16] %v3987, 128
      %4031 = vxpose.xlu0.b32.cont [4/16] %v3990, 128
      %4032 = vxpose.xlu0.b32.cont [5/16] %v3993, 128
      %4033 = vxpose.xlu0.b32.cont [6/16] %v3996, 128
      %4034 = vxpose.xlu0.b32.cont [7/16] %v3999, 128
      %4035 = vxpose.xlu0.b32.cont [8/16] %v4002, 128
      %4036 = vxpose.xlu0.b32.cont [9/16] %v4005, 128
      %4037 = vxpose.xlu0.b32.cont [10/16] %v4008, 128
      %4038 = vxpose.xlu0.b32.cont [11/16] %v4011, 128
      %4039 = vxpose.xlu0.b32.cont [12/16] %v4014, 128
      %4040 = vxpose.xlu0.b32.cont [13/16] %v4017, 128
      %4041 = vxpose.xlu0.b32.cont [14/16] %v4020, 128
      %4042 = vxpose.xlu0.b32.cont [15/16] %v4023, 128
      %4043 = vxpose.xlu0.b32.end [16/16] %v4026, 128
      %v4044 = vpop.trf.xlu0
      %v4045 = vpop.trf.xlu0
      %v4046 = vpop.trf.xlu0
      %v4047 = vpop.trf.xlu0
      %v4048 = vpop.trf.xlu0
      %v4049 = vpop.trf.xlu0
      %v4050 = vpop.trf.xlu0
      %v4051 = vpop.trf.xlu0
      %v4052 = vpop.trf.xlu0
      %v4053 = vpop.trf.xlu0
      %v4054 = vpop.trf.xlu0
      %v4055 = vpop.trf.xlu0
      %v4056 = vpop.trf.xlu0
      %v4057 = vpop.trf.xlu0
      %v4058 = vpop.trf.xlu0
      %v4059 = vpop.trf.xlu0
      %v4060 = vtanh.pop %v4044
      %v4061 = vadd.f32 %v4060, 1.0
      %v4062 = vmul.f32 %v4061, 0.5
      %4063 = vst [vmem:[%s451] sm:$0xff] %v4062
      %p4064 = scmp.lt.s32.totalorder %s25, 1
      %s4065 = scalar_select %p4064, %s25, 1
      %p4066 = scmp.lt.s32.totalorder %s26, 1
      %s4067 = scalar_select %p4066, %s26, 1
      %s4068 = smul.addr %s4065, 2
      %s4069 = sadd.s32 %s4067, %s4068
      %s4070 = smul.addr %s4069, 8
      %s4071 = scalar_lea.vmem %s10, %s4070
      // Predicated region
      $region61: #{abcd_forward.3} parent=59 // pred_check
        %p4072 = pneg %p282
      $region62: #{abcd_forward.3} parent=59 // pred_check_branch
        %4074 = sbr.rel (%p4072) target = $region64
      $region63: #{abcd_forward.3} parent=59 // pred_region
        _
      $region64: #{abcd_forward.3} parent=59 // pred_fallthru
        _
    $region60: #{abcd_forward.3} parent=5 // pred_fallthru
      _
    %p4075 = scmp.le.s32.totalorder 2, %s16
    // Predicated region
    $region65: #{abcd_forward.3} parent=5 // pred_check
      %p4076 = pneg %p4075
    $region66: #{abcd_forward.3} parent=5 // pred_check_branch
      %4078 = sbr.rel (%p4076) target = $region68
    $region67: #{abcd_forward.3} parent=5 // pred_region
      %s4079 = ssub.s32 %s16, 2
      // Predicated region
      $region69: #{abcd_forward.3} parent=67 // pred_check
        %p4080 = pneg %p288
      $region70: #{abcd_forward.3} parent=67 // pred_check_branch
        %4082 = sbr.rel (%p4080) target = $region72
      $region71: #{abcd_forward.3} parent=67 // pred_region
        %p4083 = scmp.lt.s32.totalorder %s27, 1
        %s4084 = scalar_select %p4083, %s27, 1
        %p4085 = scmp.lt.s32.totalorder %s28, 1
        %s4086 = scalar_select %p4085, %s28, 1
        %s4087 = smul.addr %s4084, 2
        %s4088 = sadd.s32 %s4086, %s4087
        %s4089 = smul.addr %s4088, 8
        %s4090 = scalar_lea.vmem %s10, %s4089
      $region72: #{abcd_forward.3} parent=67 // pred_fallthru
        _
    $region68: #{abcd_forward.3} parent=5 // pred_fallthru
      _
  $region6: #{abcd_forward.3} parent=0 // loop_footer
    %s20 = sadd.s32 1, %s16
  $region7: #{abcd_forward.3} parent=0 // loop_footer_branch
    %15 = sbr.rel target = $region3
  $region8: #{abcd_forward.3} parent=0 // loop_exit
    _

</llo_original>
